<compile_context>
chip_gen: v6e
topology: v6e:2x2x1
jax: 0.10.0
libtpu: 0.0.40
codegen_flags: <defaults>
</compile_context>

<pallas_src>
import functools

import jax
import jax.numpy as jnp
from jax import lax
from jax.experimental import pallas as pl
from jax.experimental.pallas import tpu as pltpu


def _round_up(x, m):
    return (x + m - 1) // m * m


# ----------------------------------------------------------------------------
# Pallas kernels
# ----------------------------------------------------------------------------
def _linear_kernel(x_ref, w_ref, b_ref, o_ref, *, relu):
    """One row-tile of y = relu?(x @ w + b).  bf16 operands, f32 accumulate."""
    acc = jnp.dot(x_ref[...], w_ref[...], preferred_element_type=jnp.float32)
    acc = acc + b_ref[...]                 # (1, Np) bias row broadcasts
    if relu:
        acc = jnp.maximum(acc, 0.0)
    o_ref[...] = acc.astype(o_ref.dtype)


def _head_kernel(x_ref, w1_ref, b1_ref, w2_ref, b2_ref, o_ref):
    """Fused fc + Q head: q = relu(x @ w1 + b1) @ w2 + b2 in one kernel."""
    h = jnp.dot(x_ref[...], w1_ref[...], preferred_element_type=jnp.float32)
    h = jnp.maximum(h + b1_ref[...], 0.0)          # (TM, 512) f32, stays on-chip
    q = jnp.dot(h.astype(w2_ref.dtype), w2_ref[...],
                preferred_element_type=jnp.float32)
    o_ref[...] = (q + b2_ref[...]).astype(o_ref.dtype)


# ----------------------------------------------------------------------------
# Row tiling: 16-aligned (bf16 sublane packing); at most 2 blocks for the
# sizes this net sees (conv1 M=800 -> 2 x 400) so per-step pipeline overhead
# stays tiny while both v7x TensorCores still get a block each.
# ----------------------------------------------------------------------------
def _choose_m_tiling(m):
    mp = _round_up(m, 16)
    if mp <= 32:
        return mp, mp                       # batch-sized GEMM: single block
    tm = min(_round_up(-(-mp // 2), 16), 512)
    return _round_up(mp, tm), tm


def pallas_linear(x, w_p, b_p, n_out, *, relu, out_dtype):
    """y = relu?(x @ w + b); w_p/b_p pre-padded & pre-transposed at init."""
    M, K = x.shape
    Kp, Np = w_p.shape
    assert Kp >= K and Kp % 128 == 0 and Np % 128 == 0

    Mp, TM = _choose_m_tiling(M)
    # Zero pad (fuses under jit); padded K cols hit zero weight rows -> no-op.
    xp = jnp.pad(x.astype(jnp.bfloat16), ((0, Mp - M), (0, Kp - K)))

    out_isz = 2 if out_dtype == jnp.bfloat16 else 4
    # Conservative scoped-VMEM budget: 2 pipeline buffers per operand (the
    # weight/bias index_maps are constant so one buffer would do, but budget
    # the upper bound); capped at 32 MiB (safe on v5e/v6e/v7x).
    vmem_bytes = 2 * (TM * Kp * 2 + Kp * Np * 2 + Np * 4 + TM * Np * out_isz)
    vmem_bytes = min(max(vmem_bytes + (2 << 20), 4 << 20), 32 << 20)

    out = pl.pallas_call(
        functools.partial(_linear_kernel, relu=relu),
        out_shape=jax.ShapeDtypeStruct((Mp, Np), out_dtype),
        grid_spec=pltpu.PrefetchScalarGridSpec(
            num_scalar_prefetch=0,
            grid=(Mp // TM,),
            in_specs=[
                pl.BlockSpec((TM, Kp), lambda i: (i, 0)),   # row tile of x
                pl.BlockSpec((Kp, Np), lambda i: (0, 0)),   # full weight
                pl.BlockSpec((1, Np), lambda i: (0, 0)),    # bias row
            ],
            out_specs=pl.BlockSpec((TM, Np), lambda i: (i, 0)),
        ),
        compiler_params=pltpu.CompilerParams(
            dimension_semantics=("parallel",),
            vmem_limit_bytes=int(vmem_bytes),
        ),
    )(xp, w_p, b_p)
    return out[:M, :n_out]


def pallas_head(flat, fc_w, fc_b, q_w, q_b, n_out):
    """q = relu(flat @ fc_w + fc_b) @ q_w + q_b in a single pallas_call."""
    M, K = flat.shape
    Kp, Hp = fc_w.shape
    Hp2, Np = q_w.shape
    assert Hp == Hp2 and Kp % 128 == 0 and Hp % 128 == 0 and Np % 128 == 0

    Mp = _round_up(M, 16)                   # batch-sized: one block
    xp = jnp.pad(flat.astype(jnp.bfloat16), ((0, Mp - M), (0, Kp - K)))

    vmem_bytes = 2 * (Mp * Kp * 2 + Kp * Hp * 2 + Hp * 4
                      + Hp * Np * 2 + Np * 4 + Mp * Np * 4)
    vmem_bytes = min(max(vmem_bytes + (2 << 20), 4 << 20), 32 << 20)

    out = pl.pallas_call(
        _head_kernel,
        out_shape=jax.ShapeDtypeStruct((Mp, Np), jnp.float32),
        grid_spec=pltpu.PrefetchScalarGridSpec(
            num_scalar_prefetch=0,
            grid=(1,),
            in_specs=[
                pl.BlockSpec((Mp, Kp), lambda i: (0, 0)),   # flat activations
                pl.BlockSpec((Kp, Hp), lambda i: (0, 0)),   # fc weight
                pl.BlockSpec((1, Hp), lambda i: (0, 0)),    # fc bias
                pl.BlockSpec((Hp, Np), lambda i: (0, 0)),   # q weight
                pl.BlockSpec((1, Np), lambda i: (0, 0)),    # q bias
            ],
            out_specs=pl.BlockSpec((Mp, Np), lambda i: (0, 0)),
        ),
        compiler_params=pltpu.CompilerParams(
            dimension_semantics=("arbitrary",),
            vmem_limit_bytes=int(vmem_bytes),
        ),
    )(xp, fc_w, fc_b, q_w, q_b)
    return out[:M, :n_out]


# ----------------------------------------------------------------------------
# Conv2d (valid padding, stride) + ReLU via one-op bf16 im2col + Pallas GEMM.
# conv_general_dilated_patches emits feature order (c, kh, kw), matching the
# PyTorch weight flatten w.reshape(O, I*KH*KW); verified vs reference in main.
# ----------------------------------------------------------------------------
_PATCH_DIMS = ("NHWC", "HWIO", "NHWC")


def conv2d_relu(x_nhwc, w_p, b_p, n_out, kh, kw, stride):
    B, H, W, C = x_nhwc.shape
    OH = (H - kh) // stride + 1
    OW = (W - kw) // stride + 1
    patches = lax.conv_general_dilated_patches(
        x_nhwc.astype(jnp.bfloat16), (kh, kw), (stride, stride), "VALID",
        dimension_numbers=_PATCH_DIMS)              # (B, OH, OW, C*kh*kw)
    p2d = patches.reshape(B * OH * OW, C * kh * kw)
    y = pallas_linear(p2d, w_p, b_p, n_out, relu=True, out_dtype=jnp.bfloat16)
    return y.reshape(B, OH, OW, n_out)


# ----------------------------------------------------------------------------
# Deterministic parameter init: xavier_uniform weights, zero biases
# (matches QNet.initialize_weights).  Params kept in PyTorch conventions.
# ----------------------------------------------------------------------------
def _xavier_uniform(key, shape, fan_in, fan_out):
    bound = (6.0 / (fan_in + fan_out)) ** 0.5
    return jax.random.uniform(key, shape, jnp.float32, -bound, bound)


def init_qnet_params(key):
    k1, k2, k3, k4, k5 = jax.random.split(key, 5)
    return {
        "conv1_w": _xavier_uniform(k1, (32, 4, 8, 8), 4 * 8 * 8, 32 * 8 * 8),
        "conv1_b": jnp.zeros((32,), jnp.float32),
        "conv2_w": _xavier_uniform(k2, (64, 32, 4, 4), 32 * 4 * 4, 64 * 4 * 4),
        "conv2_b": jnp.zeros((64,), jnp.float32),
        "conv3_w": _xavier_uniform(k3, (64, 64, 3, 3), 64 * 3 * 3, 64 * 3 * 3),
        "conv3_b": jnp.zeros((64,), jnp.float32),
        "fc_w": _xavier_uniform(k4, (512, 7 * 7 * 64), 7 * 7 * 64, 512),
        "fc_b": jnp.zeros((512,), jnp.float32),
        "q_w": _xavier_uniform(k5, (4, 512), 512, 4),
        "q_b": jnp.zeros((4,), jnp.float32),
    }


def prepare_params(p):
    """One-time layout: transpose to (K, N), permute fc rows (c,h,w)->(h,w,c)
    to match the NHWC flatten, zero-pad K/N to 128 multiples, cast to bf16."""

    def pad_w(w2d):
        K, N = w2d.shape
        Kp, Np = _round_up(K, 128), _round_up(N, 128)
        return (jnp.zeros((Kp, Np), jnp.bfloat16)
                .at[:K, :N].set(w2d.astype(jnp.bfloat16)))

    def pad_b(b):
        Np = _round_up(b.shape[0], 128)
        return (jnp.zeros((1, Np), jnp.float32)
                .at[0, :b.shape[0]].set(b.astype(jnp.float32)))

    out = {}
    for i in (1, 2, 3):
        w = p[f"conv{i}_w"]                                     # (O, I, KH, KW)
        out[f"conv{i}_w"] = pad_w(w.reshape(w.shape[0], -1).T)  # (I*KH*KW, O)
        out[f"conv{i}_b"] = pad_b(p[f"conv{i}_b"])
    # fc: PyTorch (512, 64*7*7) expects (c,h,w)-ordered features; permute rows
    # to (h,w,c) so the NHWC conv3 output flattens directly.
    fc_w = (p["fc_w"].reshape(512, 64, 7, 7)
            .transpose(0, 2, 3, 1).reshape(512, 7 * 7 * 64))
    out["fc_w"] = pad_w(fc_w.T)                                 # (3200, 512)
    out["fc_b"] = pad_b(p["fc_b"])
    out["q_w"] = pad_w(p["q_w"].T)                              # (512, 128)
    out["q_b"] = pad_b(p["q_b"])
    return out


# ----------------------------------------------------------------------------
# Full forward: 3 conv GEMM calls + 1 fused head call, all under one jit so
# the pad / patch / reshape glue fuses around the pallas_calls.
# ----------------------------------------------------------------------------
def _qnet_forward(x_nchw, pp):
    x = jnp.transpose(x_nchw, (0, 2, 3, 1)).astype(jnp.bfloat16)   # (B,84,84,4)
    x = conv2d_relu(x, pp["conv1_w"], pp["conv1_b"], 32, 8, 8, 4)  # (B,20,20,32)
    x = conv2d_relu(x, pp["conv2_w"], pp["conv2_b"], 64, 4, 4, 2)  # (B, 9, 9,64)
    x = conv2d_relu(x, pp["conv3_w"], pp["conv3_b"], 64, 3, 3, 1)  # (B, 7, 7,64)
    B = x.shape[0]
    flat = x.reshape(B, 7 * 7 * 64)        # NHWC flatten; fc_w rows pre-permuted
    return pallas_head(flat, pp["fc_w"], pp["fc_b"], pp["q_w"], pp["q_b"], 4)


qnet_forward = jax.jit(_qnet_forward)


# ----------------------------------------------------------------------------
# Pure-JAX f32 reference (PyTorch NCHW semantics) for a one-time numerics check.
# ----------------------------------------------------------------------------
def _reference_forward(x_nchw, p):
    x = jnp.transpose(x_nchw.astype(jnp.float32), (0, 2, 3, 1))

    def conv(x, w, b, s):
        y = lax.conv_general_dilated(
            x, jnp.transpose(w, (2, 3, 1, 0)), (s, s), "VALID",
            dimension_numbers=("NHWC", "HWIO", "NHWC"),
            precision=lax.Precision.HIGHEST)
        return jax.nn.relu(y + b)

    x = conv(x, p["conv1_w"], p["conv1_b"], 4)
    x = conv(x, p["conv2_w"], p["conv2_b"], 2)
    x = conv(x, p["conv3_w"], p["conv3_b"], 1)
    flat = jnp.transpose(x, (0, 3, 1, 2)).reshape(x.shape[0], -1)  # (c,h,w) flatten
    h = jax.nn.relu(
        jnp.dot(flat, p["fc_w"].T, precision=lax.Precision.HIGHEST) + p["fc_b"])
    return jnp.dot(h, p["q_w"].T, precision=lax.Precision.HIGHEST) + p["q_b"]


if __name__ == "__main__":
    key = jax.random.PRNGKey(0)
    pkey, xkey = jax.random.split(key)

    params = init_qnet_params(pkey)     # PyTorch-convention params
    prepped = prepare_params(params)    # one-time Pallas-ready layout

    # Module hard-codes 84x84 input (fc expects 7*7*64 features); batch = 2.
    x = jax.random.normal(xkey, (2, 4, 84, 84), dtype=jnp.float32)

    q = jax.block_until_ready(qnet_forward(x, prepped))
    assert q.shape == (2, 4), q.shape
    assert q.dtype == jnp.float32, q.dtype

    # Numerics check: bf16 GEMM inputs give ~1e-2 relative error; a layout /
    # patch-ordering bug would produce O(1) error.
    q_ref = jax.block_until_ready(jax.jit(_reference_forward)(x, params))
    rel_err = float(jnp.max(jnp.abs(q - q_ref)) /
                    (jnp.max(jnp.abs(q_ref)) + 1e-6))
    assert rel_err < 0.1, f"numerics mismatch vs reference: rel_err={rel_err}"

    print("KERNEL_OK")
</pallas_src>

<mosaic_0001>
module attributes {stable_mosaic.version = 11 : i64} {
  func.func @_linear_kernel(%arg0: i32, %arg1: memref<400x256xbf16, #tpu.memory_space<vmem>>, %arg2: memref<256x128xbf16, #tpu.memory_space<vmem>>, %arg3: memref<1x128xf32, #tpu.memory_space<vmem>>, %arg4: memref<400x128xbf16, #tpu.memory_space<vmem>>) attributes {dimension_semantics = [#tpu.dimension_semantics<parallel>], iteration_bounds = array<i64: 2>, scalar_prefetch = 0 : i64, scratch_operands = 0 : i64, tpu.core_type = #tpu.core_type<tc>, window_params = [{transform_indices = @transform_0, window_bounds = array<i64: 400, 256>}, {pipeline_mode = #tpu.pipeline_mode<synchronous>, transform_indices = @transform_1, window_bounds = array<i64: 256, 128>}, {pipeline_mode = #tpu.pipeline_mode<synchronous>, transform_indices = @transform_2, window_bounds = array<i64: 1, 128>}, {transform_indices = @transform_3, window_bounds = array<i64: 400, 128>}]} {
    %c0 = arith.constant 0 : index
    %c0_0 = arith.constant 0 : index
    %0 = vector.load %arg1[%c0, %c0_0] : memref<400x256xbf16, #tpu.memory_space<vmem>>, vector<400x256xbf16>
    %c0_1 = arith.constant 0 : index
    %c0_2 = arith.constant 0 : index
    %1 = vector.load %arg2[%c0_1, %c0_2] : memref<256x128xbf16, #tpu.memory_space<vmem>>, vector<256x128xbf16>
    %cst = arith.constant dense<0.000000e+00> : vector<400x128xf32>
    %2 = tpu.matmul %0, %1, %cst {dimension_numbers = #tpu.dot_dimension_numbers<[1], [0], [0], [1], [0, 0, 1, 1], [], []>} : vector<400x256xbf16>, vector<256x128xbf16>, vector<400x128xf32> -> vector<400x128xf32>
    %c0_3 = arith.constant 0 : index
    %c0_4 = arith.constant 0 : index
    %3 = vector.load %arg3[%c0_3, %c0_4] : memref<1x128xf32, #tpu.memory_space<vmem>>, vector<1x128xf32>
    %4 = vector.broadcast %3 : vector<1x128xf32> to vector<400x128xf32>
    %5 = arith.addf %2, %4 : vector<400x128xf32>
    %cst_5 = arith.constant 0.000000e+00 : f32
    %6 = vector.broadcast %cst_5 : f32 to vector<400x128xf32>
    %7 = arith.maximumf %5, %6 : vector<400x128xf32>
    %8 = arith.truncf %7 : vector<400x128xf32> to vector<400x128xbf16>
    %c0_6 = arith.constant 0 : index
    %c0_7 = arith.constant 0 : index
    %9 = vector.load %arg4[%c0_6, %c0_7] : memref<400x128xbf16, #tpu.memory_space<vmem>>, vector<400x128xbf16>
    tpu.vector_store %arg4[%c0_6, %c0_7], %8 {strides = array<i32>} : memref<400x128xbf16, #tpu.memory_space<vmem>>, vector<400x128xbf16>,
    return
  }
  func.func @transform_0(%arg0: i32) -> (i32, i32) {
    %c0_i32 = arith.constant 0 : i32
    %c0_i32_0 = arith.constant 0 : i32
    return %arg0, %c0_i32 : i32, i32
  }
  func.func @transform_1(%arg0: i32) -> (i32, i32) {
    %c0_i32 = arith.constant 0 : i32
    %c0_i32_0 = arith.constant 0 : i32
    %c0_i32_1 = arith.constant 0 : i32
    return %c0_i32, %c0_i32_0 : i32, i32
  }
  func.func @transform_2(%arg0: i32) -> (i32, i32) {
    %c0_i32 = arith.constant 0 : i32
    %c0_i32_0 = arith.constant 0 : i32
    %c0_i32_1 = arith.constant 0 : i32
    return %c0_i32, %c0_i32_0 : i32, i32
  }
  func.func @transform_3(%arg0: i32) -> (i32, i32) {
    %c0_i32 = arith.constant 0 : i32
    %c0_i32_0 = arith.constant 0 : i32
    return %arg0, %c0_i32 : i32, i32
  }
}

module attributes {stable_mosaic.version = 11 : i64} {
  func.func @_linear_kernel(%arg0: i32, %arg1: memref<96x512xbf16, #tpu.memory_space<vmem>>, %arg2: memref<512x128xbf16, #tpu.memory_space<vmem>>, %arg3: memref<1x128xf32, #tpu.memory_space<vmem>>, %arg4: memref<96x128xbf16, #tpu.memory_space<vmem>>) attributes {dimension_semantics = [#tpu.dimension_semantics<parallel>], iteration_bounds = array<i64: 2>, scalar_prefetch = 0 : i64, scratch_operands = 0 : i64, tpu.core_type = #tpu.core_type<tc>, window_params = [{transform_indices = @transform_0, window_bounds = array<i64: 96, 512>}, {pipeline_mode = #tpu.pipeline_mode<synchronous>, transform_indices = @transform_1, window_bounds = array<i64: 512, 128>}, {pipeline_mode = #tpu.pipeline_mode<synchronous>, transform_indices = @transform_2, window_bounds = array<i64: 1, 128>}, {transform_indices = @transform_3, window_bounds = array<i64: 96, 128>}]} {
    %c0 = arith.constant 0 : index
    %c0_0 = arith.constant 0 : index
    %0 = vector.load %arg1[%c0, %c0_0] : memref<96x512xbf16, #tpu.memory_space<vmem>>, vector<96x512xbf16>
    %c0_1 = arith.constant 0 : index
    %c0_2 = arith.constant 0 : index
    %1 = vector.load %arg2[%c0_1, %c0_2] : memref<512x128xbf16, #tpu.memory_space<vmem>>, vector<512x128xbf16>
    %cst = arith.constant dense<0.000000e+00> : vector<96x128xf32>
    %2 = tpu.matmul %0, %1, %cst {dimension_numbers = #tpu.dot_dimension_numbers<[1], [0], [0], [1], [0, 0, 1, 1], [], []>} : vector<96x512xbf16>, vector<512x128xbf16>, vector<96x128xf32> -> vector<96x128xf32>
    %c0_3 = arith.constant 0 : index
    %c0_4 = arith.constant 0 : index
    %3 = vector.load %arg3[%c0_3, %c0_4] : memref<1x128xf32, #tpu.memory_space<vmem>>, vector<1x128xf32>
    %4 = vector.broadcast %3 : vector<1x128xf32> to vector<96x128xf32>
    %5 = arith.addf %2, %4 : vector<96x128xf32>
    %cst_5 = arith.constant 0.000000e+00 : f32
    %6 = vector.broadcast %cst_5 : f32 to vector<96x128xf32>
    %7 = arith.maximumf %5, %6 : vector<96x128xf32>
    %8 = arith.truncf %7 : vector<96x128xf32> to vector<96x128xbf16>
    %c0_6 = arith.constant 0 : index
    %c0_7 = arith.constant 0 : index
    %9 = vector.load %arg4[%c0_6, %c0_7] : memref<96x128xbf16, #tpu.memory_space<vmem>>, vector<96x128xbf16>
    tpu.vector_store %arg4[%c0_6, %c0_7], %8 {strides = array<i32>} : memref<96x128xbf16, #tpu.memory_space<vmem>>, vector<96x128xbf16>,
    return
  }
  func.func @transform_0(%arg0: i32) -> (i32, i32) {
    %c0_i32 = arith.constant 0 : i32
    %c0_i32_0 = arith.constant 0 : i32
    return %arg0, %c0_i32 : i32, i32
  }
  func.func @transform_1(%arg0: i32) -> (i32, i32) {
    %c0_i32 = arith.constant 0 : i32
    %c0_i32_0 = arith.constant 0 : i32
    %c0_i32_1 = arith.constant 0 : i32
    return %c0_i32, %c0_i32_0 : i32, i32
  }
  func.func @transform_2(%arg0: i32) -> (i32, i32) {
    %c0_i32 = arith.constant 0 : i32
    %c0_i32_0 = arith.constant 0 : i32
    %c0_i32_1 = arith.constant 0 : i32
    return %c0_i32, %c0_i32_0 : i32, i32
  }
  func.func @transform_3(%arg0: i32) -> (i32, i32) {
    %c0_i32 = arith.constant 0 : i32
    %c0_i32_0 = arith.constant 0 : i32
    return %arg0, %c0_i32 : i32, i32
  }
}

module attributes {stable_mosaic.version = 11 : i64} {
  func.func @_linear_kernel(%arg0: i32, %arg1: memref<64x640xbf16, #tpu.memory_space<vmem>>, %arg2: memref<640x128xbf16, #tpu.memory_space<vmem>>, %arg3: memref<1x128xf32, #tpu.memory_space<vmem>>, %arg4: memref<64x128xbf16, #tpu.memory_space<vmem>>) attributes {dimension_semantics = [#tpu.dimension_semantics<parallel>], iteration_bounds = array<i64: 2>, scalar_prefetch = 0 : i64, scratch_operands = 0 : i64, tpu.core_type = #tpu.core_type<tc>, window_params = [{transform_indices = @transform_0, window_bounds = array<i64: 64, 640>}, {pipeline_mode = #tpu.pipeline_mode<synchronous>, transform_indices = @transform_1, window_bounds = array<i64: 640, 128>}, {pipeline_mode = #tpu.pipeline_mode<synchronous>, transform_indices = @transform_2, window_bounds = array<i64: 1, 128>}, {transform_indices = @transform_3, window_bounds = array<i64: 64, 128>}]} {
    %c0 = arith.constant 0 : index
    %c0_0 = arith.constant 0 : index
    %0 = vector.load %arg1[%c0, %c0_0] : memref<64x640xbf16, #tpu.memory_space<vmem>>, vector<64x640xbf16>
    %c0_1 = arith.constant 0 : index
    %c0_2 = arith.constant 0 : index
    %1 = vector.load %arg2[%c0_1, %c0_2] : memref<640x128xbf16, #tpu.memory_space<vmem>>, vector<640x128xbf16>
    %cst = arith.constant dense<0.000000e+00> : vector<64x128xf32>
    %2 = tpu.matmul %0, %1, %cst {dimension_numbers = #tpu.dot_dimension_numbers<[1], [0], [0], [1], [0, 0, 1, 1], [], []>} : vector<64x640xbf16>, vector<640x128xbf16>, vector<64x128xf32> -> vector<64x128xf32>
    %c0_3 = arith.constant 0 : index
    %c0_4 = arith.constant 0 : index
    %3 = vector.load %arg3[%c0_3, %c0_4] : memref<1x128xf32, #tpu.memory_space<vmem>>, vector<1x128xf32>
    %4 = vector.broadcast %3 : vector<1x128xf32> to vector<64x128xf32>
    %5 = arith.addf %2, %4 : vector<64x128xf32>
    %cst_5 = arith.constant 0.000000e+00 : f32
    %6 = vector.broadcast %cst_5 : f32 to vector<64x128xf32>
    %7 = arith.maximumf %5, %6 : vector<64x128xf32>
    %8 = arith.truncf %7 : vector<64x128xf32> to vector<64x128xbf16>
    %c0_6 = arith.constant 0 : index
    %c0_7 = arith.constant 0 : index
    %9 = vector.load %arg4[%c0_6, %c0_7] : memref<64x128xbf16, #tpu.memory_space<vmem>>, vector<64x128xbf16>
    tpu.vector_store %arg4[%c0_6, %c0_7], %8 {strides = array<i32>} : memref<64x128xbf16, #tpu.memory_space<vmem>>, vector<64x128xbf16>,
    return
  }
  func.func @transform_0(%arg0: i32) -> (i32, i32) {
    %c0_i32 = arith.constant 0 : i32
    %c0_i32_0 = arith.constant 0 : i32
    return %arg0, %c0_i32 : i32, i32
  }
  func.func @transform_1(%arg0: i32) -> (i32, i32) {
    %c0_i32 = arith.constant 0 : i32
    %c0_i32_0 = arith.constant 0 : i32
    %c0_i32_1 = arith.constant 0 : i32
    return %c0_i32, %c0_i32_0 : i32, i32
  }
  func.func @transform_2(%arg0: i32) -> (i32, i32) {
    %c0_i32 = arith.constant 0 : i32
    %c0_i32_0 = arith.constant 0 : i32
    %c0_i32_1 = arith.constant 0 : i32
    return %c0_i32, %c0_i32_0 : i32, i32
  }
  func.func @transform_3(%arg0: i32) -> (i32, i32) {
    %c0_i32 = arith.constant 0 : i32
    %c0_i32_0 = arith.constant 0 : i32
    return %arg0, %c0_i32 : i32, i32
  }
}

module attributes {stable_mosaic.version = 11 : i64} {
  func.func @_head_kernel(%arg0: i32, %arg1: memref<16x3200xbf16, #tpu.memory_space<vmem>>, %arg2: memref<3200x512xbf16, #tpu.memory_space<vmem>>, %arg3: memref<1x512xf32, #tpu.memory_space<vmem>>, %arg4: memref<512x128xbf16, #tpu.memory_space<vmem>>, %arg5: memref<1x128xf32, #tpu.memory_space<vmem>>, %arg6: memref<16x128xf32, #tpu.memory_space<vmem>>) attributes {dimension_semantics = [#tpu.dimension_semantics<arbitrary>], iteration_bounds = array<i64: 1>, scalar_prefetch = 0 : i64, scratch_operands = 0 : i64, tpu.core_type = #tpu.core_type<tc>, window_params = [{pipeline_mode = #tpu.pipeline_mode<synchronous>, transform_indices = @transform_0, window_bounds = array<i64: 16, 3200>}, {pipeline_mode = #tpu.pipeline_mode<synchronous>, transform_indices = @transform_1, window_bounds = array<i64: 3200, 512>}, {pipeline_mode = #tpu.pipeline_mode<synchronous>, transform_indices = @transform_2, window_bounds = array<i64: 1, 512>}, {pipeline_mode = #tpu.pipeline_mode<synchronous>, transform_indices = @transform_3, window_bounds = array<i64: 512, 128>}, {pipeline_mode = #tpu.pipeline_mode<synchronous>, transform_indices = @transform_4, window_bounds = array<i64: 1, 128>}, {pipeline_mode = #tpu.pipeline_mode<synchronous>, transform_indices = @transform_5, window_bounds = array<i64: 16, 128>}]} {
    %c0 = arith.constant 0 : index
    %c0_0 = arith.constant 0 : index
    %0 = vector.load %arg1[%c0, %c0_0] : memref<16x3200xbf16, #tpu.memory_space<vmem>>, vector<16x3200xbf16>
    %c0_1 = arith.constant 0 : index
    %c0_2 = arith.constant 0 : index
    %1 = vector.load %arg2[%c0_1, %c0_2] : memref<3200x512xbf16, #tpu.memory_space<vmem>>, vector<3200x512xbf16>
    %cst = arith.constant dense<0.000000e+00> : vector<16x512xf32>
    %2 = tpu.matmul %0, %1, %cst {dimension_numbers = #tpu.dot_dimension_numbers<[1], [0], [0], [1], [0, 0, 1, 1], [], []>} : vector<16x3200xbf16>, vector<3200x512xbf16>, vector<16x512xf32> -> vector<16x512xf32>
    %c0_3 = arith.constant 0 : index
    %c0_4 = arith.constant 0 : index
    %3 = vector.load %arg3[%c0_3, %c0_4] : memref<1x512xf32, #tpu.memory_space<vmem>>, vector<1x512xf32>
    %4 = vector.broadcast %3 : vector<1x512xf32> to vector<16x512xf32>
    %5 = arith.addf %2, %4 : vector<16x512xf32>
    %cst_5 = arith.constant 0.000000e+00 : f32
    %6 = vector.broadcast %cst_5 : f32 to vector<16x512xf32>
    %7 = arith.maximumf %5, %6 : vector<16x512xf32>
    %8 = arith.truncf %7 : vector<16x512xf32> to vector<16x512xbf16>
    %c0_6 = arith.constant 0 : index
    %c0_7 = arith.constant 0 : index
    %9 = vector.load %arg4[%c0_6, %c0_7] : memref<512x128xbf16, #tpu.memory_space<vmem>>, vector<512x128xbf16>
    %cst_8 = arith.constant dense<0.000000e+00> : vector<16x128xf32>
    %10 = tpu.matmul %8, %9, %cst_8 {dimension_numbers = #tpu.dot_dimension_numbers<[1], [0], [0], [1], [0, 0, 1, 1], [], []>} : vector<16x512xbf16>, vector<512x128xbf16>, vector<16x128xf32> -> vector<16x128xf32>
    %c0_9 = arith.constant 0 : index
    %c0_10 = arith.constant 0 : index
    %11 = vector.load %arg5[%c0_9, %c0_10] : memref<1x128xf32, #tpu.memory_space<vmem>>, vector<1x128xf32>
    %12 = vector.broadcast %11 : vector<1x128xf32> to vector<16x128xf32>
    %13 = arith.addf %10, %12 : vector<16x128xf32>
    %c0_11 = arith.constant 0 : index
    %c0_12 = arith.constant 0 : index
    %14 = vector.load %arg6[%c0_11, %c0_12] : memref<16x128xf32, #tpu.memory_space<vmem>>, vector<16x128xf32>
    tpu.vector_store %arg6[%c0_11, %c0_12], %13 {strides = array<i32>} : memref<16x128xf32, #tpu.memory_space<vmem>>, vector<16x128xf32>,
    return
  }
  func.func @transform_0(%arg0: i32) -> (i32, i32) {
    %c0_i32 = arith.constant 0 : i32
    %c0_i32_0 = arith.constant 0 : i32
    %c0_i32_1 = arith.constant 0 : i32
    return %c0_i32, %c0_i32_0 : i32, i32
  }
  func.func @transform_1(%arg0: i32) -> (i32, i32) {
    %c0_i32 = arith.constant 0 : i32
    %c0_i32_0 = arith.constant 0 : i32
    %c0_i32_1 = arith.constant 0 : i32
    return %c0_i32, %c0_i32_0 : i32, i32
  }
  func.func @transform_2(%arg0: i32) -> (i32, i32) {
    %c0_i32 = arith.constant 0 : i32
    %c0_i32_0 = arith.constant 0 : i32
    %c0_i32_1 = arith.constant 0 : i32
    return %c0_i32, %c0_i32_0 : i32, i32
  }
  func.func @transform_3(%arg0: i32) -> (i32, i32) {
    %c0_i32 = arith.constant 0 : i32
    %c0_i32_0 = arith.constant 0 : i32
    %c0_i32_1 = arith.constant 0 : i32
    return %c0_i32, %c0_i32_0 : i32, i32
  }
  func.func @transform_4(%arg0: i32) -> (i32, i32) {
    %c0_i32 = arith.constant 0 : i32
    %c0_i32_0 = arith.constant 0 : i32
    %c0_i32_1 = arith.constant 0 : i32
    return %c0_i32, %c0_i32_0 : i32, i32
  }
  func.func @transform_5(%arg0: i32) -> (i32, i32) {
    %c0_i32 = arith.constant 0 : i32
    %c0_i32_0 = arith.constant 0 : i32
    %c0_i32_1 = arith.constant 0 : i32
    return %c0_i32, %c0_i32_0 : i32, i32
  }
}

</mosaic_0001>

<llo_original>
// kernel: _qnet_forward.4
$region0: #{_qnet_forward.4}
  #allocation0 [shape = 'u32[]', space=smem, size = 0x4, offset = 0x4, fixed_abs, tag = 'smem constant byte address 0x4 - core index']
  #allocation1 [shape = 'u32[144,128]{1,0:T(1,128)}', space=vmem, size = 0x12000, scoped, tag = 'internal scratch']
  %s0 = inlined_call_operand.vmem [shape: bf16[800,256], index: 0, kind: input, shape index: {}]
  %s1 = inlined_call_operand.vmem [shape: bf16[256,128], index: 1, kind: input, shape index: {}]
  %s2 = inlined_call_operand.vmem [shape: f32[1,128], index: 2, kind: input, shape index: {}]
  %s3 = inlined_call_operand.vmem [shape: bf16[800,128], index: 3, kind: output, shape index: {}]
  %s4 = sld [smem:[#allocation0]]
  $region45: #{_qnet_forward.4} parent=0
    _
  %s6 = ssub.s32 1, %s4
  %s7 = scalar_select 0, %s6, %s4
  loop: start=0, step=1, limit=4
  $region2: #{_qnet_forward.4} parent=0 // loop_pre_header
    _
  $region3: #{_qnet_forward.4} parent=0 // loop_header
    %s9 = sphi 0, %s13
    %p10 = scmp.ge.s32.totalorder %s9, 4
    %s19 = sphi 0, %s21
    %s22 = sphi 0, %s19
    %s23 = sphi 0, %s22
    %s39 = sphi 0, %s23
    %s43 = sphi 0, %s43
    %s45 = sphi 0, %s43
    %s46 = sphi 0, %s45
    %s60 = sphi 0, %s46
    %s64 = sphi 0, %s64
    %s66 = sphi 0, %s64
    %s67 = sphi 0, %s66
    %s81 = sphi 0, %s67
    %s87 = sphi 0, %s89
    %s90 = sphi 0, %s87
    %s91 = sphi 0, %s90
    %s107 = sphi 0, %s91
  $region4: #{_qnet_forward.4} parent=0 // loop_header_branch
    %12 = sbr.rel (%p10) target = $region8
  $region5: #{_qnet_forward.4} parent=0 // loop_body
    %s14 = ssub.s32 %s9, 1
    %s15 = ssub.s32 %s9, 2
    %s16 = sadd.s32 %s9, 1
    %s17 = ssub.s32 %s9, %s16
    %p18 = scmp.eq.s32.totalorder %s17, 0
    %s20 = sadd.s32 %s19, 1
    %s21 = scalar_select %p18, %s19, %s20
    %p24 = pneg %p18
    %p25 = scmp.eq.s32.totalorder %s9, 1
    %p26 = por %p24, %p25
    %p27 = scmp.ne.s32.totalorder %s19, %s22
    %p28 = scmp.eq.s32.totalorder %s9, 0
    %p29 = por %p27, %p28
    %p30 = scmp.ne.s32.totalorder %s19, %s22
    %p31 = scmp.eq.s32.totalorder %s14, 1
    %p32 = por %p30, %p31
    %p33 = scmp.ne.s32.totalorder %s22, %s23
    %p34 = scmp.eq.s32.totalorder %s14, 0
    %p35 = por %p33, %p34
    %p36 = scmp.ne.s32.totalorder %s22, %s23
    %p37 = scmp.eq.s32.totalorder %s15, 1
    %p38 = por %p36, %p37
    %p40 = scmp.ne.s32.totalorder %s23, %s39
    %p41 = scmp.eq.s32.totalorder %s15, 0
    %p42 = por %p40, %p41
    %s44 = sadd.s32 %s43, 1
    %p47 = scmp.eq.s32.totalorder %s9, 1
    %p48 = scmp.ne.s32.totalorder %s43, %s45
    %p49 = scmp.eq.s32.totalorder %s9, 0
    %p50 = por %p48, %p49
    %p51 = scmp.ne.s32.totalorder %s43, %s45
    %p52 = scmp.eq.s32.totalorder %s14, 1
    %p53 = por %p51, %p52
    %p54 = scmp.ne.s32.totalorder %s45, %s46
    %p55 = scmp.eq.s32.totalorder %s14, 0
    %p56 = por %p54, %p55
    %p57 = scmp.ne.s32.totalorder %s45, %s46
    %p58 = scmp.eq.s32.totalorder %s15, 1
    %p59 = por %p57, %p58
    %p61 = scmp.ne.s32.totalorder %s46, %s60
    %p62 = scmp.eq.s32.totalorder %s15, 0
    %p63 = por %p61, %p62
    %s65 = sadd.s32 %s64, 1
    %p68 = scmp.eq.s32.totalorder %s9, 1
    %p69 = scmp.ne.s32.totalorder %s64, %s66
    %p70 = scmp.eq.s32.totalorder %s9, 0
    %p71 = por %p69, %p70
    %p72 = scmp.ne.s32.totalorder %s64, %s66
    %p73 = scmp.eq.s32.totalorder %s14, 1
    %p74 = por %p72, %p73
    %p75 = scmp.ne.s32.totalorder %s66, %s67
    %p76 = scmp.eq.s32.totalorder %s14, 0
    %p77 = por %p75, %p76
    %p78 = scmp.ne.s32.totalorder %s66, %s67
    %p79 = scmp.eq.s32.totalorder %s15, 1
    %p80 = por %p78, %p79
    %p82 = scmp.ne.s32.totalorder %s67, %s81
    %p83 = scmp.eq.s32.totalorder %s15, 0
    %p84 = por %p82, %p83
    %s85 = ssub.s32 %s9, %s16
    %p86 = scmp.eq.s32.totalorder %s85, 0
    %s88 = sadd.s32 %s87, 1
    %s89 = scalar_select %p86, %s87, %s88
    %p92 = pneg %p86
    %p93 = scmp.eq.s32.totalorder %s9, 1
    %p94 = por %p92, %p93
    %p95 = scmp.ne.s32.totalorder %s87, %s90
    %p96 = scmp.eq.s32.totalorder %s9, 0
    %p97 = por %p95, %p96
    %p98 = scmp.ne.s32.totalorder %s87, %s90
    %p99 = scmp.eq.s32.totalorder %s14, 1
    %p100 = por %p98, %p99
    %p101 = scmp.ne.s32.totalorder %s90, %s91
    %p102 = scmp.eq.s32.totalorder %s14, 0
    %p103 = por %p101, %p102
    %p104 = scmp.ne.s32.totalorder %s90, %s91
    %p105 = scmp.eq.s32.totalorder %s15, 1
    %p106 = por %p104, %p105
    %p108 = scmp.ne.s32.totalorder %s91, %s107
    %p109 = scmp.eq.s32.totalorder %s15, 0
    %p110 = por %p108, %p109
    %p111 = scmp.le.s32.totalorder 1, %s9
    %p112 = scmp.lt.s32.totalorder %s9, 3
    %p113 = pnand %p111, %p112
    %p114 = pneg %p113
    // Predicated region
    $region9: #{_qnet_forward.4} parent=5 // pred_check
      _
    $region10: #{_qnet_forward.4} parent=5 // pred_check_branch
      %116 = sbr.rel (%p113) target = $region12
    $region11: #{_qnet_forward.4} parent=5 // pred_region
      %s117 = ssub.s32 %s9, 1
      // Predicated region
      $region13: #{_qnet_forward.4} parent=11 // pred_check
        %p118 = pneg %p56
      $region14: #{_qnet_forward.4} parent=11 // pred_check_branch
        %120 = sbr.rel (%p118) target = $region16
      $region15: #{_qnet_forward.4} parent=11 // pred_region
        _
      $region16: #{_qnet_forward.4} parent=11 // pred_fallthru
        _
      // Predicated region
      $region17: #{_qnet_forward.4} parent=11 // pred_check
        %p121 = pneg %p77
      $region18: #{_qnet_forward.4} parent=11 // pred_check_branch
        %123 = sbr.rel (%p121) target = $region20
      $region19: #{_qnet_forward.4} parent=11 // pred_region
        _
      $region20: #{_qnet_forward.4} parent=11 // pred_fallthru
        _
    $region12: #{_qnet_forward.4} parent=5 // pred_fallthru
      _
    %p124 = scmp.lt.s32.totalorder %s9, 2
    // Predicated region
    $region21: #{_qnet_forward.4} parent=5 // pred_check
      %p125 = pneg %p124
    $region22: #{_qnet_forward.4} parent=5 // pred_check_branch
      %127 = sbr.rel (%p125) target = $region24
    $region23: #{_qnet_forward.4} parent=5 // pred_region
      // Predicated region
      $region25: #{_qnet_forward.4} parent=23 // pred_check
        %p128 = pneg %p29
      $region26: #{_qnet_forward.4} parent=23 // pred_check_branch
        %130 = sbr.rel (%p128) target = $region28
      $region27: #{_qnet_forward.4} parent=23 // pred_region
        %s131 = smul.u32 50, %s9
        %p132 = scmp.lt.s32.totalorder %s131, 99
        %s133 = scalar_select %p132, %s131, 99
        %s134 = smul.addr %s133, 2
        %s135 = smul.addr %s134, 4
        %s136 = scalar_lea.vmem %s0, %s135
        %s137 = smul.u32 50, %s9
      $region28: #{_qnet_forward.4} parent=23 // pred_fallthru
        _
    $region24: #{_qnet_forward.4} parent=5 // pred_fallthru
      _
    %p138 = scmp.le.s32.totalorder 1, %s9
    %p139 = scmp.lt.s32.totalorder %s9, 3
    %p140 = pnand %p138, %p139
    %p141 = pneg %p140
    // Predicated region
    $region29: #{_qnet_forward.4} parent=5 // pred_check
      _
    $region30: #{_qnet_forward.4} parent=5 // pred_check_branch
      %143 = sbr.rel (%p140) target = $region32
    $region31: #{_qnet_forward.4} parent=5 // pred_region
      %s144 = ssub.s32 %s9, 1
      %s145 = smul.u32 50, %s14
      %p146 = scmp.lt.s32.totalorder %s145, 99
      %s147 = scalar_select %p146, %s145, 99
      %s148 = smul.addr %s147, 2
      %s149 = smul.addr %s148, 4
      %s150 = scalar_lea.vmem %s0, %s149
      %p151 = pneg %p35
      %p152 = pneg %p32
      %p153 = pneg %p56
      %p154 = pneg %p53
      %p155 = pneg %p77
      %p156 = pneg %p74
      %p157 = pneg %p103
      %p158 = pneg %p100
      %s159 = smul.u32 50, %s14
      %p160 = scmp.lt.s32.totalorder %s159, 99
      %s161 = scalar_select %p160, %s159, 99
      %s162 = smul.addr %s161, 4
      %s163 = scalar_lea.vmem %s3, %s162
      %s164 = smul.u32 50, %s14
      %p165 = scmp.lt.s32.totalorder %s164, 99
      %s166 = scalar_select %p165, %s164, 99
      %s167 = smul.addr %s166, 2
      %s168 = smul.addr %s167, 4
      %s169 = scalar_lea.vmem %s0, %s168
      %s170 = smul.u32 50, %s14
      %s171 = smul.u32 50, %s14
      %p172 = scmp.lt.s32.totalorder %s171, 99
      %s173 = scalar_select %p172, %s171, 99
      %s174 = smul.addr %s173, 4
      %s175 = scalar_lea.vmem %s3, %s174
      %s176 = smul.u32 50, %s14
      %v178 = vld [vmem:[%s169] sm:$0xff]
      %v179 = vld [vmem:[%s169 + $0x8] sm:$0xff]
      %v180 = vld [vmem:[%s169 + $0x10] sm:$0xff]
      %v181 = vld [vmem:[%s169 + $0x18] sm:$0xff]
      %v182 = vld [vmem:[%s169 + $0x20] sm:$0xff]
      %v183 = vld [vmem:[%s169 + $0x28] sm:$0xff]
      %v184 = vld [vmem:[%s169 + $0x30] sm:$0xff]
      %v185 = vld [vmem:[%s169 + $0x38] sm:$0xff]
      %v186 = vld [vmem:[%s169 + $0x40] sm:$0xff]
      %v187 = vld [vmem:[%s169 + $0x48] sm:$0xff]
      %v188 = vld [vmem:[%s169 + $0x50] sm:$0xff]
      %v189 = vld [vmem:[%s169 + $0x58] sm:$0xff]
      %v190 = vld [vmem:[%s169 + $0x60] sm:$0xff]
      %v191 = vld [vmem:[%s169 + $0x68] sm:$0xff]
      %v192 = vld [vmem:[%s169 + $0x70] sm:$0xff]
      %v193 = vld [vmem:[%s169 + $0x78] sm:$0xff]
      %v194 = vld [vmem:[%s169 + $0x80] sm:$0xff]
      %v195 = vld [vmem:[%s169 + $0x88] sm:$0xff]
      %v196 = vld [vmem:[%s169 + $0x90] sm:$0xff]
      %v197 = vld [vmem:[%s169 + $0x98] sm:$0xff]
      %v198 = vld [vmem:[%s169 + $0xa0] sm:$0xff]
      %v199 = vld [vmem:[%s169 + $0xa8] sm:$0xff]
      %v200 = vld [vmem:[%s169 + $0xb0] sm:$0xff]
      %v201 = vld [vmem:[%s169 + $0xb8] sm:$0xff]
      %v202 = vld [vmem:[%s169 + $0xc0] sm:$0xff]
      %v203 = vld [vmem:[%s169 + $0xc8] sm:$0xff]
      %v204 = vld [vmem:[%s169 + $0xd0] sm:$0xff]
      %v205 = vld [vmem:[%s169 + $0xd8] sm:$0xff]
      %v206 = vld [vmem:[%s169 + $0xe0] sm:$0xff]
      %v207 = vld [vmem:[%s169 + $0xe8] sm:$0xff]
      %v208 = vld [vmem:[%s169 + $0xf0] sm:$0xff]
      %v209 = vld [vmem:[%s169 + $0xf8] sm:$0xff]
      %v210 = vld [vmem:[%s169 + $0x100] sm:$0xff]
      %v211 = vld [vmem:[%s169 + $0x108] sm:$0xff]
      %v212 = vld [vmem:[%s169 + $0x110] sm:$0xff]
      %v213 = vld [vmem:[%s169 + $0x118] sm:$0xff]
      %v214 = vld [vmem:[%s169 + $0x120] sm:$0xff]
      %v215 = vld [vmem:[%s169 + $0x128] sm:$0xff]
      %v216 = vld [vmem:[%s169 + $0x130] sm:$0xff]
      %v217 = vld [vmem:[%s169 + $0x138] sm:$0xff]
      %v218 = vld [vmem:[%s169 + $0x140] sm:$0xff]
      %v219 = vld [vmem:[%s169 + $0x148] sm:$0xff]
      %v220 = vld [vmem:[%s169 + $0x150] sm:$0xff]
      %v221 = vld [vmem:[%s169 + $0x158] sm:$0xff]
      %v222 = vld [vmem:[%s169 + $0x160] sm:$0xff]
      %v223 = vld [vmem:[%s169 + $0x168] sm:$0xff]
      %v224 = vld [vmem:[%s169 + $0x170] sm:$0xff]
      %v225 = vld [vmem:[%s169 + $0x178] sm:$0xff]
      %v226 = vld [vmem:[%s169 + $0x180] sm:$0xff]
      %v227 = vld [vmem:[%s169 + $0x188] sm:$0xff]
      %v228 = vld [vmem:[%s1] sm:$0xf]
      %v229 = vld [vmem:[%s1 + $0x4] sm:$0xf]
      %v230 = vld [vmem:[%s1 + $0x8] sm:$0xf]
      %v231 = vld [vmem:[%s1 + $0xc] sm:$0xf]
      %v232 = vld [vmem:[%s1 + $0x10] sm:$0xf]
      %v233 = vld [vmem:[%s1 + $0x14] sm:$0xf]
      %v234 = vld [vmem:[%s1 + $0x18] sm:$0xf]
      %v235 = vld [vmem:[%s1 + $0x1c] sm:$0xf]
      %v236 = vld [vmem:[%s1 + $0x20] sm:$0xf]
      %v237 = vld [vmem:[%s1 + $0x24] sm:$0xf]
      %v238 = vld [vmem:[%s1 + $0x28] sm:$0xf]
      %v239 = vld [vmem:[%s1 + $0x2c] sm:$0xf]
      %v240 = vld [vmem:[%s1 + $0x30] sm:$0xf]
      %v241 = vld [vmem:[%s1 + $0x34] sm:$0xf]
      %v242 = vld [vmem:[%s1 + $0x38] sm:$0xf]
      %v243 = vld [vmem:[%s1 + $0x3c] sm:$0xf]
      %v244 = vld [vmem:[%s1 + $0x40] sm:$0xf]
      %v245 = vld [vmem:[%s1 + $0x44] sm:$0xf]
      %v246 = vld [vmem:[%s1 + $0x48] sm:$0xf]
      %v247 = vld [vmem:[%s1 + $0x4c] sm:$0xf]
      %v248 = vld [vmem:[%s1 + $0x50] sm:$0xf]
      %v249 = vld [vmem:[%s1 + $0x54] sm:$0xf]
      %v250 = vld [vmem:[%s1 + $0x58] sm:$0xf]
      %v251 = vld [vmem:[%s1 + $0x5c] sm:$0xf]
      %v252 = vld [vmem:[%s1 + $0x60] sm:$0xf]
      %v253 = vld [vmem:[%s1 + $0x64] sm:$0xf]
      %v254 = vld [vmem:[%s1 + $0x68] sm:$0xf]
      %v255 = vld [vmem:[%s1 + $0x6c] sm:$0xf]
      %v256 = vld [vmem:[%s1 + $0x70] sm:$0xf]
      %v257 = vld [vmem:[%s1 + $0x74] sm:$0xf]
      %v258 = vld [vmem:[%s1 + $0x78] sm:$0xf]
      %v259 = vld [vmem:[%s1 + $0x7c] sm:$0xf]
      %v260 = vld [vmem:[%s2] sm:$0x1]
      %v262 = vlaneseq
      %v263 = vshrl.u32 %v262, 7
      %v264 = vsub.s32 0, %v263
      %v265 = vrot.slane %v260, %v264
      %v317 = vunpack.c.l.b16 %v178
      %v318 = vunpack.c.h.b16 %v178
      %v319 = vunpack.c.l.b16 %v179
      %v320 = vunpack.c.h.b16 %v179
      %v321 = vunpack.c.l.b16 %v180
      %v322 = vunpack.c.h.b16 %v180
      %v323 = vunpack.c.l.b16 %v181
      %v324 = vunpack.c.h.b16 %v181
      %v325 = vunpack.c.l.b16 %v182
      %v326 = vunpack.c.h.b16 %v182
      %v327 = vunpack.c.l.b16 %v183
      %v328 = vunpack.c.h.b16 %v183
      %v329 = vunpack.c.l.b16 %v184
      %v330 = vunpack.c.h.b16 %v184
      %v331 = vunpack.c.l.b16 %v185
      %v332 = vunpack.c.h.b16 %v185
      %v333 = vunpack.c.l.b16 %v186
      %v334 = vunpack.c.h.b16 %v186
      %v335 = vunpack.c.l.b16 %v187
      %v336 = vunpack.c.h.b16 %v187
      %v337 = vunpack.c.l.b16 %v188
      %v338 = vunpack.c.h.b16 %v188
      %v339 = vunpack.c.l.b16 %v189
      %v340 = vunpack.c.h.b16 %v189
      %v341 = vunpack.c.l.b16 %v190
      %v342 = vunpack.c.h.b16 %v190
      %v343 = vunpack.c.l.b16 %v191
      %v344 = vunpack.c.h.b16 %v191
      %v345 = vunpack.c.l.b16 %v192
      %v346 = vunpack.c.h.b16 %v192
      %v347 = vunpack.c.l.b16 %v193
      %v348 = vunpack.c.h.b16 %v193
      %v349 = vunpack.c.l.b16 %v194
      %v350 = vunpack.c.h.b16 %v194
      %v351 = vunpack.c.l.b16 %v195
      %v352 = vunpack.c.h.b16 %v195
      %v353 = vunpack.c.l.b16 %v196
      %v354 = vunpack.c.h.b16 %v196
      %v355 = vunpack.c.l.b16 %v197
      %v356 = vunpack.c.h.b16 %v197
      %v357 = vunpack.c.l.b16 %v198
      %v358 = vunpack.c.h.b16 %v198
      %v359 = vunpack.c.l.b16 %v199
      %v360 = vunpack.c.h.b16 %v199
      %v361 = vunpack.c.l.b16 %v200
      %v362 = vunpack.c.h.b16 %v200
      %v363 = vunpack.c.l.b16 %v201
      %v364 = vunpack.c.h.b16 %v201
      %v365 = vunpack.c.l.b16 %v202
      %v366 = vunpack.c.h.b16 %v202
      %v367 = vunpack.c.l.b16 %v203
      %v368 = vunpack.c.h.b16 %v203
      %v369 = vunpack.c.l.b16 %v204
      %v370 = vunpack.c.h.b16 %v204
      %v371 = vunpack.c.l.b16 %v205
      %v372 = vunpack.c.h.b16 %v205
      %v373 = vunpack.c.l.b16 %v206
      %v374 = vunpack.c.h.b16 %v206
      %v375 = vunpack.c.l.b16 %v207
      %v376 = vunpack.c.h.b16 %v207
      %v377 = vunpack.c.l.b16 %v208
      %v378 = vunpack.c.h.b16 %v208
      %v379 = vunpack.c.l.b16 %v209
      %v380 = vunpack.c.h.b16 %v209
      %v381 = vunpack.c.l.b16 %v210
      %v382 = vunpack.c.h.b16 %v210
      %v383 = vunpack.c.l.b16 %v211
      %v384 = vunpack.c.h.b16 %v211
      %v385 = vunpack.c.l.b16 %v212
      %v386 = vunpack.c.h.b16 %v212
      %v387 = vunpack.c.l.b16 %v213
      %v388 = vunpack.c.h.b16 %v213
      %v389 = vunpack.c.l.b16 %v214
      %v390 = vunpack.c.h.b16 %v214
      %v391 = vunpack.c.l.b16 %v215
      %v392 = vunpack.c.h.b16 %v215
      %v393 = vunpack.c.l.b16 %v216
      %v394 = vunpack.c.h.b16 %v216
      %v395 = vunpack.c.l.b16 %v217
      %v396 = vunpack.c.h.b16 %v217
      %v397 = vunpack.c.l.b16 %v218
      %v398 = vunpack.c.h.b16 %v218
      %v399 = vunpack.c.l.b16 %v219
      %v400 = vunpack.c.h.b16 %v219
      %v401 = vunpack.c.l.b16 %v220
      %v402 = vunpack.c.h.b16 %v220
      %v403 = vunpack.c.l.b16 %v221
      %v404 = vunpack.c.h.b16 %v221
      %v405 = vunpack.c.l.b16 %v222
      %v406 = vunpack.c.h.b16 %v222
      %v407 = vunpack.c.l.b16 %v223
      %v408 = vunpack.c.h.b16 %v223
      %v409 = vunpack.c.l.b16 %v224
      %v410 = vunpack.c.h.b16 %v224
      %v411 = vunpack.c.l.b16 %v225
      %v412 = vunpack.c.h.b16 %v225
      %v413 = vunpack.c.l.b16 %v226
      %v414 = vunpack.c.h.b16 %v226
      %v415 = vunpack.c.l.b16 %v227
      %v416 = vunpack.c.h.b16 %v227
      %v417 = vpack.c.b16 %v319, %v317
      %v418 = vpack.c.b16 %v320, %v318
      %v419 = vpack.c.b16 %v323, %v321
      %v420 = vpack.c.b16 %v324, %v322
      %v421 = vpack.c.b16 %v327, %v325
      %v422 = vpack.c.b16 %v328, %v326
      %v423 = vpack.c.b16 %v331, %v329
      %v424 = vpack.c.b16 %v332, %v330
      %v425 = vpack.c.b16 %v335, %v333
      %v426 = vpack.c.b16 %v336, %v334
      %v427 = vpack.c.b16 %v339, %v337
      %v428 = vpack.c.b16 %v340, %v338
      %v429 = vpack.c.b16 %v343, %v341
      %v430 = vpack.c.b16 %v344, %v342
      %v431 = vpack.c.b16 %v347, %v345
      %v432 = vpack.c.b16 %v348, %v346
      %v433 = vpack.c.b16 %v351, %v349
      %v434 = vpack.c.b16 %v352, %v350
      %v435 = vpack.c.b16 %v355, %v353
      %v436 = vpack.c.b16 %v356, %v354
      %v437 = vpack.c.b16 %v359, %v357
      %v438 = vpack.c.b16 %v360, %v358
      %v439 = vpack.c.b16 %v363, %v361
      %v440 = vpack.c.b16 %v364, %v362
      %v441 = vpack.c.b16 %v367, %v365
      %v442 = vpack.c.b16 %v368, %v366
      %v443 = vpack.c.b16 %v371, %v369
      %v444 = vpack.c.b16 %v372, %v370
      %v445 = vpack.c.b16 %v375, %v373
      %v446 = vpack.c.b16 %v376, %v374
      %v447 = vpack.c.b16 %v379, %v377
      %v448 = vpack.c.b16 %v380, %v378
      %v449 = vpack.c.b16 %v383, %v381
      %v450 = vpack.c.b16 %v384, %v382
      %v451 = vpack.c.b16 %v387, %v385
      %v452 = vpack.c.b16 %v388, %v386
      %v453 = vpack.c.b16 %v391, %v389
      %v454 = vpack.c.b16 %v392, %v390
      %v455 = vpack.c.b16 %v395, %v393
      %v456 = vpack.c.b16 %v396, %v394
      %v457 = vpack.c.b16 %v399, %v397
      %v458 = vpack.c.b16 %v400, %v398
      %v459 = vpack.c.b16 %v403, %v401
      %v460 = vpack.c.b16 %v404, %v402
      %v461 = vpack.c.b16 %v407, %v405
      %v462 = vpack.c.b16 %v408, %v406
      %v463 = vpack.c.b16 %v411, %v409
      %v464 = vpack.c.b16 %v412, %v410
      %v465 = vpack.c.b16 %v415, %v413
      %v466 = vpack.c.b16 %v416, %v414
      %v549 = vunpack.c.l.b16 %v228
      %v550 = vunpack.c.l.b16 %v229
      %v551 = vunpack.c.l.b16 %v230
      %v552 = vunpack.c.l.b16 %v231
      %v553 = vunpack.c.l.b16 %v232
      %v554 = vunpack.c.l.b16 %v233
      %v555 = vunpack.c.l.b16 %v234
      %v556 = vunpack.c.l.b16 %v235
      %v557 = vunpack.c.l.b16 %v236
      %v558 = vunpack.c.l.b16 %v237
      %v559 = vunpack.c.l.b16 %v238
      %v560 = vunpack.c.l.b16 %v239
      %v561 = vunpack.c.l.b16 %v240
      %v562 = vunpack.c.l.b16 %v241
      %v563 = vunpack.c.l.b16 %v242
      %v564 = vunpack.c.l.b16 %v243
      %v565 = vunpack.c.l.b16 %v244
      %v566 = vunpack.c.l.b16 %v245
      %v567 = vunpack.c.l.b16 %v246
      %v568 = vunpack.c.l.b16 %v247
      %v569 = vunpack.c.l.b16 %v248
      %v570 = vunpack.c.l.b16 %v249
      %v571 = vunpack.c.l.b16 %v250
      %v572 = vunpack.c.l.b16 %v251
      %v573 = vunpack.c.l.b16 %v252
      %v574 = vunpack.c.l.b16 %v253
      %v575 = vunpack.c.l.b16 %v254
      %v576 = vunpack.c.l.b16 %v255
      %v577 = vunpack.c.l.b16 %v256
      %v578 = vunpack.c.l.b16 %v257
      %v579 = vunpack.c.l.b16 %v258
      %v580 = vunpack.c.l.b16 %v259
      %v581 = vpack.c.b16 %v550, %v549
      %v582 = vpack.c.b16 %v552, %v551
      %v583 = vpack.c.b16 %v554, %v553
      %v584 = vpack.c.b16 %v556, %v555
      %v585 = vpack.c.b16 %v558, %v557
      %v586 = vpack.c.b16 %v560, %v559
      %v587 = vpack.c.b16 %v562, %v561
      %v588 = vpack.c.b16 %v564, %v563
      %v589 = vpack.c.b16 %v566, %v565
      %v590 = vpack.c.b16 %v568, %v567
      %v591 = vpack.c.b16 %v570, %v569
      %v592 = vpack.c.b16 %v572, %v571
      %v593 = vpack.c.b16 %v574, %v573
      %v594 = vpack.c.b16 %v576, %v575
      %v595 = vpack.c.b16 %v578, %v577
      %v596 = vpack.c.b16 %v580, %v579
      %613 = vmatprep.subr.bf16.mxu0 0
      %614 = vmatpush1.bf16.msra.mxu0 %v588
      %615 = vmatprep.subr.bf16.mxu0 0
      %616 = vmatpush1.bf16.msra.mxu0 %v587
      %617 = vmatprep.subr.bf16.mxu0 0
      %618 = vmatpush1.bf16.msra.mxu0 %v586
      %619 = vmatprep.subr.bf16.mxu0 0
      %620 = vmatpush1.bf16.msra.mxu0 %v585
      %621 = vmatprep.subr.bf16.mxu0 0
      %622 = vmatpush1.bf16.msra.mxu0 %v584
      %623 = vmatprep.subr.bf16.mxu0 0
      %624 = vmatpush1.bf16.msra.mxu0 %v583
      %625 = vmatprep.subr.bf16.mxu0 0
      %626 = vmatpush1.bf16.msra.mxu0 %v582
      %627 = vmatprep.subr.bf16.mxu0 0
      %628 = vmatpush1.bf16.msra.mxu0 %v581
      %629 = vmatprep.subr.bf16.mxu0 0
      %630 = vmatpush2.bf16.msra.mxu0 %v596
      %631 = vmatprep.subr.bf16.mxu0 0
      %632 = vmatpush2.bf16.msra.mxu0 %v595
      %633 = vmatprep.subr.bf16.mxu0 0
      %634 = vmatpush2.bf16.msra.mxu0 %v594
      %635 = vmatprep.subr.bf16.mxu0 0
      %636 = vmatpush2.bf16.msra.mxu0 %v593
      %637 = vmatprep.subr.bf16.mxu0 0
      %638 = vmatpush2.bf16.msra.mxu0 %v592
      %639 = vmatprep.subr.bf16.mxu0 0
      %640 = vmatpush2.bf16.msra.mxu0 %v591
      %641 = vmatprep.subr.bf16.mxu0 0
      %642 = vmatpush2.bf16.msra.mxu0 %v590
      %643 = vmatprep.subr.bf16.mxu0 0
      %644 = vmatpush2.bf16.msra.mxu0 %v589
      %645 = vmatprep.mubr.bf16.mxu0 %v418
      %646 = vmatmul.mubr.bf16.gmra.mxu0 %v417
      %v647 = vpop.f32.mrf.mxu0
      %v648 = vadd.f32 %v265, %v647
      %v649 = vpop.f32.mrf.mxu0
      %v650 = vpop.f32.mrf.mxu0
      %v651 = vadd.f32 %v265, %v650
      %v652 = vpop.f32.mrf.mxu0
      %653 = vmatprep.mubr.bf16.mxu0 %v420
      %654 = vmatmul.mubr.bf16.gmra.mxu0 %v419
      %v655 = vpop.f32.mrf.mxu0
      %v656 = vadd.f32 %v265, %v655
      %v657 = vpop.f32.mrf.mxu0
      %v658 = vpop.f32.mrf.mxu0
      %v659 = vadd.f32 %v265, %v658
      %v660 = vpop.f32.mrf.mxu0
      %661 = vmatprep.mubr.bf16.mxu0 %v422
      %662 = vmatmul.mubr.bf16.gmra.mxu0 %v421
      %v663 = vpop.f32.mrf.mxu0
      %v664 = vadd.f32 %v265, %v663
      %v665 = vpop.f32.mrf.mxu0
      %v666 = vpop.f32.mrf.mxu0
      %v667 = vadd.f32 %v265, %v666
      %v668 = vpop.f32.mrf.mxu0
      %669 = vmatprep.mubr.bf16.mxu0 %v424
      %670 = vmatmul.mubr.bf16.gmra.mxu0 %v423
      %v671 = vpop.f32.mrf.mxu0
      %v672 = vadd.f32 %v265, %v671
      %v673 = vpop.f32.mrf.mxu0
      %v674 = vpop.f32.mrf.mxu0
      %v675 = vadd.f32 %v265, %v674
      %v676 = vpop.f32.mrf.mxu0
      %677 = vmatprep.mubr.bf16.mxu0 %v426
      %678 = vmatmul.mubr.bf16.gmra.mxu0 %v425
      %v679 = vpop.f32.mrf.mxu0
      %v680 = vadd.f32 %v265, %v679
      %v681 = vpop.f32.mrf.mxu0
      %v682 = vpop.f32.mrf.mxu0
      %v683 = vadd.f32 %v265, %v682
      %v684 = vpop.f32.mrf.mxu0
      %685 = vmatprep.mubr.bf16.mxu0 %v428
      %686 = vmatmul.mubr.bf16.gmra.mxu0 %v427
      %v687 = vpop.f32.mrf.mxu0
      %v688 = vadd.f32 %v265, %v687
      %v689 = vpop.f32.mrf.mxu0
      %v690 = vpop.f32.mrf.mxu0
      %v691 = vadd.f32 %v265, %v690
      %v692 = vpop.f32.mrf.mxu0
      %693 = vmatprep.mubr.bf16.mxu0 %v430
      %694 = vmatmul.mubr.bf16.gmra.mxu0 %v429
      %v695 = vpop.f32.mrf.mxu0
      %v696 = vadd.f32 %v265, %v695
      %v697 = vpop.f32.mrf.mxu0
      %v698 = vpop.f32.mrf.mxu0
      %v699 = vadd.f32 %v265, %v698
      %v700 = vpop.f32.mrf.mxu0
      %701 = vmatprep.mubr.bf16.mxu0 %v432
      %702 = vmatmul.mubr.bf16.gmra.mxu0 %v431
      %v703 = vpop.f32.mrf.mxu0
      %v704 = vadd.f32 %v265, %v703
      %v705 = vpop.f32.mrf.mxu0
      %v706 = vpop.f32.mrf.mxu0
      %v707 = vadd.f32 %v265, %v706
      %v708 = vpop.f32.mrf.mxu0
      %709 = vmatprep.mubr.bf16.mxu0 %v434
      %710 = vmatmul.mubr.bf16.gmra.mxu0 %v433
      %v711 = vpop.f32.mrf.mxu0
      %v712 = vadd.f32 %v265, %v711
      %v713 = vpop.f32.mrf.mxu0
      %v714 = vpop.f32.mrf.mxu0
      %v715 = vadd.f32 %v265, %v714
      %v716 = vpop.f32.mrf.mxu0
      %717 = vmatprep.mubr.bf16.mxu0 %v436
      %718 = vmatmul.mubr.bf16.gmra.mxu0 %v435
      %v719 = vpop.f32.mrf.mxu0
      %v720 = vadd.f32 %v265, %v719
      %v721 = vpop.f32.mrf.mxu0
      %v722 = vpop.f32.mrf.mxu0
      %v723 = vadd.f32 %v265, %v722
      %v724 = vpop.f32.mrf.mxu0
      %725 = vmatprep.mubr.bf16.mxu0 %v438
      %726 = vmatmul.mubr.bf16.gmra.mxu0 %v437
      %v727 = vpop.f32.mrf.mxu0
      %v728 = vadd.f32 %v265, %v727
      %v729 = vpop.f32.mrf.mxu0
      %v730 = vpop.f32.mrf.mxu0
      %v731 = vadd.f32 %v265, %v730
      %v732 = vpop.f32.mrf.mxu0
      %733 = vmatprep.mubr.bf16.mxu0 %v440
      %734 = vmatmul.mubr.bf16.gmra.mxu0 %v439
      %v735 = vpop.f32.mrf.mxu0
      %v736 = vadd.f32 %v265, %v735
      %v737 = vpop.f32.mrf.mxu0
      %v738 = vpop.f32.mrf.mxu0
      %v739 = vadd.f32 %v265, %v738
      %v740 = vpop.f32.mrf.mxu0
      %741 = vmatprep.mubr.bf16.mxu0 %v442
      %742 = vmatmul.mubr.bf16.gmra.mxu0 %v441
      %v743 = vpop.f32.mrf.mxu0
      %v744 = vadd.f32 %v265, %v743
      %v745 = vpop.f32.mrf.mxu0
      %v746 = vpop.f32.mrf.mxu0
      %v747 = vadd.f32 %v265, %v746
      %v748 = vpop.f32.mrf.mxu0
      %749 = vmatprep.mubr.bf16.mxu0 %v444
      %750 = vmatmul.mubr.bf16.gmra.mxu0 %v443
      %v751 = vpop.f32.mrf.mxu0
      %v752 = vadd.f32 %v265, %v751
      %v753 = vpop.f32.mrf.mxu0
      %v754 = vpop.f32.mrf.mxu0
      %v755 = vadd.f32 %v265, %v754
      %v756 = vpop.f32.mrf.mxu0
      %757 = vmatprep.mubr.bf16.mxu0 %v446
      %758 = vmatmul.mubr.bf16.gmra.mxu0 %v445
      %v759 = vpop.f32.mrf.mxu0
      %v760 = vadd.f32 %v265, %v759
      %v761 = vpop.f32.mrf.mxu0
      %v762 = vpop.f32.mrf.mxu0
      %v763 = vadd.f32 %v265, %v762
      %v764 = vpop.f32.mrf.mxu0
      %765 = vmatprep.mubr.bf16.mxu0 %v448
      %766 = vmatmul.mubr.bf16.gmra.mxu0 %v447
      %v767 = vpop.f32.mrf.mxu0
      %v768 = vadd.f32 %v265, %v767
      %v769 = vpop.f32.mrf.mxu0
      %v770 = vpop.f32.mrf.mxu0
      %v771 = vadd.f32 %v265, %v770
      %v772 = vpop.f32.mrf.mxu0
      %773 = vmatprep.mubr.bf16.mxu0 %v450
      %774 = vmatmul.mubr.bf16.gmra.mxu0 %v449
      %v775 = vpop.f32.mrf.mxu0
      %v776 = vadd.f32 %v265, %v775
      %v777 = vpop.f32.mrf.mxu0
      %v778 = vpop.f32.mrf.mxu0
      %v779 = vadd.f32 %v265, %v778
      %v780 = vpop.f32.mrf.mxu0
      %781 = vmatprep.mubr.bf16.mxu0 %v452
      %782 = vmatmul.mubr.bf16.gmra.mxu0 %v451
      %v783 = vpop.f32.mrf.mxu0
      %v784 = vadd.f32 %v265, %v783
      %v785 = vpop.f32.mrf.mxu0
      %v786 = vpop.f32.mrf.mxu0
      %v787 = vadd.f32 %v265, %v786
      %v788 = vpop.f32.mrf.mxu0
      %789 = vmatprep.mubr.bf16.mxu0 %v454
      %790 = vmatmul.mubr.bf16.gmra.mxu0 %v453
      %v791 = vpop.f32.mrf.mxu0
      %v792 = vadd.f32 %v265, %v791
      %v793 = vpop.f32.mrf.mxu0
      %v794 = vpop.f32.mrf.mxu0
      %v795 = vadd.f32 %v265, %v794
      %v796 = vpop.f32.mrf.mxu0
      %797 = vmatprep.mubr.bf16.mxu0 %v456
      %798 = vmatmul.mubr.bf16.gmra.mxu0 %v455
      %v799 = vpop.f32.mrf.mxu0
      %v800 = vadd.f32 %v265, %v799
      %v801 = vpop.f32.mrf.mxu0
      %v802 = vpop.f32.mrf.mxu0
      %v803 = vadd.f32 %v265, %v802
      %v804 = vpop.f32.mrf.mxu0
      %805 = vmatprep.mubr.bf16.mxu0 %v458
      %806 = vmatmul.mubr.bf16.gmra.mxu0 %v457
      %v807 = vpop.f32.mrf.mxu0
      %v808 = vadd.f32 %v265, %v807
      %v809 = vpop.f32.mrf.mxu0
      %v810 = vpop.f32.mrf.mxu0
      %v811 = vadd.f32 %v265, %v810
      %v812 = vpop.f32.mrf.mxu0
      %813 = vmatprep.mubr.bf16.mxu0 %v460
      %814 = vmatmul.mubr.bf16.gmra.mxu0 %v459
      %v815 = vpop.f32.mrf.mxu0
      %v816 = vadd.f32 %v265, %v815
      %v817 = vpop.f32.mrf.mxu0
      %v818 = vpop.f32.mrf.mxu0
      %v819 = vadd.f32 %v265, %v818
      %v820 = vpop.f32.mrf.mxu0
      %821 = vmatprep.mubr.bf16.mxu0 %v462
      %822 = vmatmul.mubr.bf16.gmra.mxu0 %v461
      %v823 = vpop.f32.mrf.mxu0
      %v824 = vadd.f32 %v265, %v823
      %v825 = vpop.f32.mrf.mxu0
      %v826 = vpop.f32.mrf.mxu0
      %v827 = vadd.f32 %v265, %v826
      %v828 = vpop.f32.mrf.mxu0
      %829 = vmatprep.mubr.bf16.mxu0 %v464
      %830 = vmatmul.mubr.bf16.gmra.mxu0 %v463
      %v831 = vpop.f32.mrf.mxu0
      %v832 = vadd.f32 %v265, %v831
      %v833 = vpop.f32.mrf.mxu0
      %v834 = vpop.f32.mrf.mxu0
      %v835 = vadd.f32 %v265, %v834
      %v836 = vpop.f32.mrf.mxu0
      %837 = vmatprep.mubr.bf16.mxu0 %v466
      %838 = vmatmul.mubr.bf16.gmra.mxu0 %v465
      %v839 = vpop.f32.mrf.mxu0
      %v840 = vadd.f32 %v265, %v839
      %v841 = vpop.f32.mrf.mxu0
      %v842 = vpop.f32.mrf.mxu0
      %v843 = vadd.f32 %v265, %v842
      %v844 = vpop.f32.mrf.mxu0
      %845 = vdwg.mxu0
      %v846 = vmax.f32 %v648, 0.0
      %v847 = vmax.f32 %v651, 0.0
      %v848 = vmax.f32 %v656, 0.0
      %v849 = vmax.f32 %v659, 0.0
      %v850 = vmax.f32 %v664, 0.0
      %v851 = vmax.f32 %v667, 0.0
      %v852 = vmax.f32 %v672, 0.0
      %v853 = vmax.f32 %v675, 0.0
      %v854 = vmax.f32 %v680, 0.0
      %v855 = vmax.f32 %v683, 0.0
      %v856 = vmax.f32 %v688, 0.0
      %v857 = vmax.f32 %v691, 0.0
      %v858 = vmax.f32 %v696, 0.0
      %v859 = vmax.f32 %v699, 0.0
      %v860 = vmax.f32 %v704, 0.0
      %v861 = vmax.f32 %v707, 0.0
      %v862 = vmax.f32 %v712, 0.0
      %v863 = vmax.f32 %v715, 0.0
      %v864 = vmax.f32 %v720, 0.0
      %v865 = vmax.f32 %v723, 0.0
      %v866 = vmax.f32 %v728, 0.0
      %v867 = vmax.f32 %v731, 0.0
      %v868 = vmax.f32 %v736, 0.0
      %v869 = vmax.f32 %v739, 0.0
      %v870 = vmax.f32 %v744, 0.0
      %v871 = vmax.f32 %v747, 0.0
      %v872 = vmax.f32 %v752, 0.0
      %v873 = vmax.f32 %v755, 0.0
      %v874 = vmax.f32 %v760, 0.0
      %v875 = vmax.f32 %v763, 0.0
      %v876 = vmax.f32 %v768, 0.0
      %v877 = vmax.f32 %v771, 0.0
      %v878 = vmax.f32 %v776, 0.0
      %v879 = vmax.f32 %v779, 0.0
      %v880 = vmax.f32 %v784, 0.0
      %v881 = vmax.f32 %v787, 0.0
      %v882 = vmax.f32 %v792, 0.0
      %v883 = vmax.f32 %v795, 0.0
      %v884 = vmax.f32 %v800, 0.0
      %v885 = vmax.f32 %v803, 0.0
      %v886 = vmax.f32 %v808, 0.0
      %v887 = vmax.f32 %v811, 0.0
      %v888 = vmax.f32 %v816, 0.0
      %v889 = vmax.f32 %v819, 0.0
      %v890 = vmax.f32 %v824, 0.0
      %v891 = vmax.f32 %v827, 0.0
      %v892 = vmax.f32 %v832, 0.0
      %v893 = vmax.f32 %v835, 0.0
      %v894 = vmax.f32 %v840, 0.0
      %v895 = vmax.f32 %v843, 0.0
      %v896 = vpack.c.bf16 %v847, %v846
      %v897 = vpack.c.bf16 %v849, %v848
      %v898 = vpack.c.bf16 %v851, %v850
      %v899 = vpack.c.bf16 %v853, %v852
      %v900 = vpack.c.bf16 %v855, %v854
      %v901 = vpack.c.bf16 %v857, %v856
      %v902 = vpack.c.bf16 %v859, %v858
      %v903 = vpack.c.bf16 %v861, %v860
      %v904 = vpack.c.bf16 %v863, %v862
      %v905 = vpack.c.bf16 %v865, %v864
      %v906 = vpack.c.bf16 %v867, %v866
      %v907 = vpack.c.bf16 %v869, %v868
      %v908 = vpack.c.bf16 %v871, %v870
      %v909 = vpack.c.bf16 %v873, %v872
      %v910 = vpack.c.bf16 %v875, %v874
      %v911 = vpack.c.bf16 %v877, %v876
      %v912 = vpack.c.bf16 %v879, %v878
      %v913 = vpack.c.bf16 %v881, %v880
      %v914 = vpack.c.bf16 %v883, %v882
      %v915 = vpack.c.bf16 %v885, %v884
      %v916 = vpack.c.bf16 %v887, %v886
      %v917 = vpack.c.bf16 %v889, %v888
      %v918 = vpack.c.bf16 %v891, %v890
      %v919 = vpack.c.bf16 %v893, %v892
      %v920 = vpack.c.bf16 %v895, %v894
      %v946 = vunpack.c.l.b16 %v896
      %v947 = vunpack.c.h.b16 %v896
      %v948 = vunpack.c.l.b16 %v897
      %v949 = vunpack.c.h.b16 %v897
      %v950 = vunpack.c.l.b16 %v898
      %v951 = vunpack.c.h.b16 %v898
      %v952 = vunpack.c.l.b16 %v899
      %v953 = vunpack.c.h.b16 %v899
      %v954 = vunpack.c.l.b16 %v900
      %v955 = vunpack.c.h.b16 %v900
      %v956 = vunpack.c.l.b16 %v901
      %v957 = vunpack.c.h.b16 %v901
      %v958 = vunpack.c.l.b16 %v902
      %v959 = vunpack.c.h.b16 %v902
      %v960 = vunpack.c.l.b16 %v903
      %v961 = vunpack.c.h.b16 %v903
      %v962 = vunpack.c.l.b16 %v904
      %v963 = vunpack.c.h.b16 %v904
      %v964 = vunpack.c.l.b16 %v905
      %v965 = vunpack.c.h.b16 %v905
      %v966 = vunpack.c.l.b16 %v906
      %v967 = vunpack.c.h.b16 %v906
      %v968 = vunpack.c.l.b16 %v907
      %v969 = vunpack.c.h.b16 %v907
      %v970 = vunpack.c.l.b16 %v908
      %v971 = vunpack.c.h.b16 %v908
      %v972 = vunpack.c.l.b16 %v909
      %v973 = vunpack.c.h.b16 %v909
      %v974 = vunpack.c.l.b16 %v910
      %v975 = vunpack.c.h.b16 %v910
      %v976 = vunpack.c.l.b16 %v911
      %v977 = vunpack.c.h.b16 %v911
      %v978 = vunpack.c.l.b16 %v912
      %v979 = vunpack.c.h.b16 %v912
      %v980 = vunpack.c.l.b16 %v913
      %v981 = vunpack.c.h.b16 %v913
      %v982 = vunpack.c.l.b16 %v914
      %v983 = vunpack.c.h.b16 %v914
      %v984 = vunpack.c.l.b16 %v915
      %v985 = vunpack.c.h.b16 %v915
      %v986 = vunpack.c.l.b16 %v916
      %v987 = vunpack.c.h.b16 %v916
      %v988 = vunpack.c.l.b16 %v917
      %v989 = vunpack.c.h.b16 %v917
      %v990 = vunpack.c.l.b16 %v918
      %v991 = vunpack.c.h.b16 %v918
      %v992 = vunpack.c.l.b16 %v919
      %v993 = vunpack.c.h.b16 %v919
      %v994 = vunpack.c.l.b16 %v920
      %v995 = vunpack.c.h.b16 %v920
      %v996 = vpack.c.b16 %v946, %v946
      %v997 = vpack.c.b16 %v947, %v947
      %v998 = vpack.c.b16 %v948, %v948
      %v999 = vpack.c.b16 %v949, %v949
      %v1000 = vpack.c.b16 %v950, %v950
      %v1001 = vpack.c.b16 %v951, %v951
      %v1002 = vpack.c.b16 %v952, %v952
      %v1003 = vpack.c.b16 %v953, %v953
      %v1004 = vpack.c.b16 %v954, %v954
      %v1005 = vpack.c.b16 %v955, %v955
      %v1006 = vpack.c.b16 %v956, %v956
      %v1007 = vpack.c.b16 %v957, %v957
      %v1008 = vpack.c.b16 %v958, %v958
      %v1009 = vpack.c.b16 %v959, %v959
      %v1010 = vpack.c.b16 %v960, %v960
      %v1011 = vpack.c.b16 %v961, %v961
      %v1012 = vpack.c.b16 %v962, %v962
      %v1013 = vpack.c.b16 %v963, %v963
      %v1014 = vpack.c.b16 %v964, %v964
      %v1015 = vpack.c.b16 %v965, %v965
      %v1016 = vpack.c.b16 %v966, %v966
      %v1017 = vpack.c.b16 %v967, %v967
      %v1018 = vpack.c.b16 %v968, %v968
      %v1019 = vpack.c.b16 %v969, %v969
      %v1020 = vpack.c.b16 %v970, %v970
      %v1021 = vpack.c.b16 %v971, %v971
      %v1022 = vpack.c.b16 %v972, %v972
      %v1023 = vpack.c.b16 %v973, %v973
      %v1024 = vpack.c.b16 %v974, %v974
      %v1025 = vpack.c.b16 %v975, %v975
      %v1026 = vpack.c.b16 %v976, %v976
      %v1027 = vpack.c.b16 %v977, %v977
      %v1028 = vpack.c.b16 %v978, %v978
      %v1029 = vpack.c.b16 %v979, %v979
      %v1030 = vpack.c.b16 %v980, %v980
      %v1031 = vpack.c.b16 %v981, %v981
      %v1032 = vpack.c.b16 %v982, %v982
      %v1033 = vpack.c.b16 %v983, %v983
      %v1034 = vpack.c.b16 %v984, %v984
      %v1035 = vpack.c.b16 %v985, %v985
      %v1036 = vpack.c.b16 %v986, %v986
      %v1037 = vpack.c.b16 %v987, %v987
      %v1038 = vpack.c.b16 %v988, %v988
      %v1039 = vpack.c.b16 %v989, %v989
      %v1040 = vpack.c.b16 %v990, %v990
      %v1041 = vpack.c.b16 %v991, %v991
      %v1042 = vpack.c.b16 %v992, %v992
      %v1043 = vpack.c.b16 %v993, %v993
      %v1044 = vpack.c.b16 %v994, %v994
      %v1045 = vpack.c.b16 %v995, %v995
      %1096 = vst [vmem:[%s175] sm:$0xf] %v996
      %1097 = vst [vmem:[%s175 + $0x4] sm:$0xf] %v997
      %1098 = vst [vmem:[%s175 + $0x8] sm:$0xf] %v998
      %1099 = vst [vmem:[%s175 + $0xc] sm:$0xf] %v999
      %1100 = vst [vmem:[%s175 + $0x10] sm:$0xf] %v1000
      %1101 = vst [vmem:[%s175 + $0x14] sm:$0xf] %v1001
      %1102 = vst [vmem:[%s175 + $0x18] sm:$0xf] %v1002
      %1103 = vst [vmem:[%s175 + $0x1c] sm:$0xf] %v1003
      %1104 = vst [vmem:[%s175 + $0x20] sm:$0xf] %v1004
      %1105 = vst [vmem:[%s175 + $0x24] sm:$0xf] %v1005
      %1106 = vst [vmem:[%s175 + $0x28] sm:$0xf] %v1006
      %1107 = vst [vmem:[%s175 + $0x2c] sm:$0xf] %v1007
      %1108 = vst [vmem:[%s175 + $0x30] sm:$0xf] %v1008
      %1109 = vst [vmem:[%s175 + $0x34] sm:$0xf] %v1009
      %1110 = vst [vmem:[%s175 + $0x38] sm:$0xf] %v1010
      %1111 = vst [vmem:[%s175 + $0x3c] sm:$0xf] %v1011
      %1112 = vst [vmem:[%s175 + $0x40] sm:$0xf] %v1012
      %1113 = vst [vmem:[%s175 + $0x44] sm:$0xf] %v1013
      %1114 = vst [vmem:[%s175 + $0x48] sm:$0xf] %v1014
      %1115 = vst [vmem:[%s175 + $0x4c] sm:$0xf] %v1015
      %1116 = vst [vmem:[%s175 + $0x50] sm:$0xf] %v1016
      %1117 = vst [vmem:[%s175 + $0x54] sm:$0xf] %v1017
      %1118 = vst [vmem:[%s175 + $0x58] sm:$0xf] %v1018
      %1119 = vst [vmem:[%s175 + $0x5c] sm:$0xf] %v1019
      %1120 = vst [vmem:[%s175 + $0x60] sm:$0xf] %v1020
      %1121 = vst [vmem:[%s175 + $0x64] sm:$0xf] %v1021
      %1122 = vst [vmem:[%s175 + $0x68] sm:$0xf] %v1022
      %1123 = vst [vmem:[%s175 + $0x6c] sm:$0xf] %v1023
      %1124 = vst [vmem:[%s175 + $0x70] sm:$0xf] %v1024
      %1125 = vst [vmem:[%s175 + $0x74] sm:$0xf] %v1025
      %1126 = vst [vmem:[%s175 + $0x78] sm:$0xf] %v1026
      %1127 = vst [vmem:[%s175 + $0x7c] sm:$0xf] %v1027
      %1128 = vst [vmem:[%s175 + $0x80] sm:$0xf] %v1028
      %1129 = vst [vmem:[%s175 + $0x84] sm:$0xf] %v1029
      %1130 = vst [vmem:[%s175 + $0x88] sm:$0xf] %v1030
      %1131 = vst [vmem:[%s175 + $0x8c] sm:$0xf] %v1031
      %1132 = vst [vmem:[%s175 + $0x90] sm:$0xf] %v1032
      %1133 = vst [vmem:[%s175 + $0x94] sm:$0xf] %v1033
      %1134 = vst [vmem:[%s175 + $0x98] sm:$0xf] %v1034
      %1135 = vst [vmem:[%s175 + $0x9c] sm:$0xf] %v1035
      %1136 = vst [vmem:[%s175 + $0xa0] sm:$0xf] %v1036
      %1137 = vst [vmem:[%s175 + $0xa4] sm:$0xf] %v1037
      %1138 = vst [vmem:[%s175 + $0xa8] sm:$0xf] %v1038
      %1139 = vst [vmem:[%s175 + $0xac] sm:$0xf] %v1039
      %1140 = vst [vmem:[%s175 + $0xb0] sm:$0xf] %v1040
      %1141 = vst [vmem:[%s175 + $0xb4] sm:$0xf] %v1041
      %1142 = vst [vmem:[%s175 + $0xb8] sm:$0xf] %v1042
      %1143 = vst [vmem:[%s175 + $0xbc] sm:$0xf] %v1043
      %1144 = vst [vmem:[%s175 + $0xc0] sm:$0xf] %v1044
      %1145 = vst [vmem:[%s175 + $0xc4] sm:$0xf] %v1045
      %s1146 = smul.u32 50, %s14
      %p1147 = scmp.lt.s32.totalorder %s1146, 99
      %s1148 = scalar_select %p1147, %s1146, 99
      %s1149 = smul.addr %s1148, 4
      %s1150 = scalar_lea.vmem %s3, %s1149
      // Predicated region
      $region33: #{_qnet_forward.4} parent=31 // pred_check
        %p1151 = pneg %p100
      $region34: #{_qnet_forward.4} parent=31 // pred_check_branch
        %1153 = sbr.rel (%p1151) target = $region36
      $region35: #{_qnet_forward.4} parent=31 // pred_region
        %s1154 = smul.u32 50, %s14
      $region36: #{_qnet_forward.4} parent=31 // pred_fallthru
        _
    $region32: #{_qnet_forward.4} parent=5 // pred_fallthru
      _
    %p1155 = scmp.le.s32.totalorder 2, %s9
    // Predicated region
    $region37: #{_qnet_forward.4} parent=5 // pred_check
      %p1156 = pneg %p1155
    $region38: #{_qnet_forward.4} parent=5 // pred_check_branch
      %1158 = sbr.rel (%p1156) target = $region40
    $region39: #{_qnet_forward.4} parent=5 // pred_region
      %s1159 = ssub.s32 %s9, 2
      // Predicated region
      $region41: #{_qnet_forward.4} parent=39 // pred_check
        %p1160 = pneg %p106
      $region42: #{_qnet_forward.4} parent=39 // pred_check_branch
        %1162 = sbr.rel (%p1160) target = $region44
      $region43: #{_qnet_forward.4} parent=39 // pred_region
        %s1163 = smul.u32 50, %s15
        %p1164 = scmp.lt.s32.totalorder %s1163, 99
        %s1165 = scalar_select %p1164, %s1163, 99
        %s1166 = smul.addr %s1165, 4
        %s1167 = scalar_lea.vmem %s3, %s1166
      $region44: #{_qnet_forward.4} parent=39 // pred_fallthru
        _
    $region40: #{_qnet_forward.4} parent=5 // pred_fallthru
      _
  $region6: #{_qnet_forward.4} parent=0 // loop_footer
    %s13 = sadd.s32 1, %s9
  $region7: #{_qnet_forward.4} parent=0 // loop_footer_branch
    %8 = sbr.rel target = $region3
  $region8: #{_qnet_forward.4} parent=0 // loop_exit
    _

// kernel: _qnet_forward.5
$region0: #{_qnet_forward.5}
  #allocation0 [shape = 'u32[]', space=smem, size = 0x4, offset = 0x4, fixed_abs, tag = 'smem constant byte address 0x4 - core index']
  #allocation1 [shape = 'u32[144,128]{1,0:T(1,128)}', space=vmem, size = 0x12000, scoped, tag = 'internal scratch']
  %s0 = inlined_call_operand.vmem [shape: bf16[192,512], index: 0, kind: input, shape index: {}]
  %s1 = inlined_call_operand.vmem [shape: bf16[512,128], index: 1, kind: input, shape index: {}]
  %s2 = inlined_call_operand.vmem [shape: f32[1,128], index: 2, kind: input, shape index: {}]
  %s3 = inlined_call_operand.vmem [shape: bf16[192,128], index: 3, kind: output, shape index: {}]
  %s4 = sld [smem:[#allocation0]]
  $region45: #{_qnet_forward.5} parent=0
    _
  %s6 = ssub.s32 1, %s4
  %s7 = scalar_select 0, %s6, %s4
  loop: start=0, step=1, limit=4
  $region2: #{_qnet_forward.5} parent=0 // loop_pre_header
    _
  $region3: #{_qnet_forward.5} parent=0 // loop_header
    %s9 = sphi 0, %s13
    %p10 = scmp.ge.s32.totalorder %s9, 4
    %s19 = sphi 0, %s21
    %s22 = sphi 0, %s19
    %s23 = sphi 0, %s22
    %s39 = sphi 0, %s23
    %s43 = sphi 0, %s43
    %s45 = sphi 0, %s43
    %s46 = sphi 0, %s45
    %s60 = sphi 0, %s46
    %s64 = sphi 0, %s64
    %s66 = sphi 0, %s64
    %s67 = sphi 0, %s66
    %s81 = sphi 0, %s67
    %s87 = sphi 0, %s89
    %s90 = sphi 0, %s87
    %s91 = sphi 0, %s90
    %s107 = sphi 0, %s91
  $region4: #{_qnet_forward.5} parent=0 // loop_header_branch
    %12 = sbr.rel (%p10) target = $region8
  $region5: #{_qnet_forward.5} parent=0 // loop_body
    %s14 = ssub.s32 %s9, 1
    %s15 = ssub.s32 %s9, 2
    %s16 = sadd.s32 %s9, 1
    %s17 = ssub.s32 %s9, %s16
    %p18 = scmp.eq.s32.totalorder %s17, 0
    %s20 = sadd.s32 %s19, 1
    %s21 = scalar_select %p18, %s19, %s20
    %p24 = pneg %p18
    %p25 = scmp.eq.s32.totalorder %s9, 1
    %p26 = por %p24, %p25
    %p27 = scmp.ne.s32.totalorder %s19, %s22
    %p28 = scmp.eq.s32.totalorder %s9, 0
    %p29 = por %p27, %p28
    %p30 = scmp.ne.s32.totalorder %s19, %s22
    %p31 = scmp.eq.s32.totalorder %s14, 1
    %p32 = por %p30, %p31
    %p33 = scmp.ne.s32.totalorder %s22, %s23
    %p34 = scmp.eq.s32.totalorder %s14, 0
    %p35 = por %p33, %p34
    %p36 = scmp.ne.s32.totalorder %s22, %s23
    %p37 = scmp.eq.s32.totalorder %s15, 1
    %p38 = por %p36, %p37
    %p40 = scmp.ne.s32.totalorder %s23, %s39
    %p41 = scmp.eq.s32.totalorder %s15, 0
    %p42 = por %p40, %p41
    %s44 = sadd.s32 %s43, 1
    %p47 = scmp.eq.s32.totalorder %s9, 1
    %p48 = scmp.ne.s32.totalorder %s43, %s45
    %p49 = scmp.eq.s32.totalorder %s9, 0
    %p50 = por %p48, %p49
    %p51 = scmp.ne.s32.totalorder %s43, %s45
    %p52 = scmp.eq.s32.totalorder %s14, 1
    %p53 = por %p51, %p52
    %p54 = scmp.ne.s32.totalorder %s45, %s46
    %p55 = scmp.eq.s32.totalorder %s14, 0
    %p56 = por %p54, %p55
    %p57 = scmp.ne.s32.totalorder %s45, %s46
    %p58 = scmp.eq.s32.totalorder %s15, 1
    %p59 = por %p57, %p58
    %p61 = scmp.ne.s32.totalorder %s46, %s60
    %p62 = scmp.eq.s32.totalorder %s15, 0
    %p63 = por %p61, %p62
    %s65 = sadd.s32 %s64, 1
    %p68 = scmp.eq.s32.totalorder %s9, 1
    %p69 = scmp.ne.s32.totalorder %s64, %s66
    %p70 = scmp.eq.s32.totalorder %s9, 0
    %p71 = por %p69, %p70
    %p72 = scmp.ne.s32.totalorder %s64, %s66
    %p73 = scmp.eq.s32.totalorder %s14, 1
    %p74 = por %p72, %p73
    %p75 = scmp.ne.s32.totalorder %s66, %s67
    %p76 = scmp.eq.s32.totalorder %s14, 0
    %p77 = por %p75, %p76
    %p78 = scmp.ne.s32.totalorder %s66, %s67
    %p79 = scmp.eq.s32.totalorder %s15, 1
    %p80 = por %p78, %p79
    %p82 = scmp.ne.s32.totalorder %s67, %s81
    %p83 = scmp.eq.s32.totalorder %s15, 0
    %p84 = por %p82, %p83
    %s85 = ssub.s32 %s9, %s16
    %p86 = scmp.eq.s32.totalorder %s85, 0
    %s88 = sadd.s32 %s87, 1
    %s89 = scalar_select %p86, %s87, %s88
    %p92 = pneg %p86
    %p93 = scmp.eq.s32.totalorder %s9, 1
    %p94 = por %p92, %p93
    %p95 = scmp.ne.s32.totalorder %s87, %s90
    %p96 = scmp.eq.s32.totalorder %s9, 0
    %p97 = por %p95, %p96
    %p98 = scmp.ne.s32.totalorder %s87, %s90
    %p99 = scmp.eq.s32.totalorder %s14, 1
    %p100 = por %p98, %p99
    %p101 = scmp.ne.s32.totalorder %s90, %s91
    %p102 = scmp.eq.s32.totalorder %s14, 0
    %p103 = por %p101, %p102
    %p104 = scmp.ne.s32.totalorder %s90, %s91
    %p105 = scmp.eq.s32.totalorder %s15, 1
    %p106 = por %p104, %p105
    %p108 = scmp.ne.s32.totalorder %s91, %s107
    %p109 = scmp.eq.s32.totalorder %s15, 0
    %p110 = por %p108, %p109
    %p111 = scmp.le.s32.totalorder 1, %s9
    %p112 = scmp.lt.s32.totalorder %s9, 3
    %p113 = pnand %p111, %p112
    %p114 = pneg %p113
    // Predicated region
    $region9: #{_qnet_forward.5} parent=5 // pred_check
      _
    $region10: #{_qnet_forward.5} parent=5 // pred_check_branch
      %116 = sbr.rel (%p113) target = $region12
    $region11: #{_qnet_forward.5} parent=5 // pred_region
      %s117 = ssub.s32 %s9, 1
      // Predicated region
      $region13: #{_qnet_forward.5} parent=11 // pred_check
        %p118 = pneg %p56
      $region14: #{_qnet_forward.5} parent=11 // pred_check_branch
        %120 = sbr.rel (%p118) target = $region16
      $region15: #{_qnet_forward.5} parent=11 // pred_region
        _
      $region16: #{_qnet_forward.5} parent=11 // pred_fallthru
        _
      // Predicated region
      $region17: #{_qnet_forward.5} parent=11 // pred_check
        %p121 = pneg %p77
      $region18: #{_qnet_forward.5} parent=11 // pred_check_branch
        %123 = sbr.rel (%p121) target = $region20
      $region19: #{_qnet_forward.5} parent=11 // pred_region
        _
      $region20: #{_qnet_forward.5} parent=11 // pred_fallthru
        _
    $region12: #{_qnet_forward.5} parent=5 // pred_fallthru
      _
    %p124 = scmp.lt.s32.totalorder %s9, 2
    // Predicated region
    $region21: #{_qnet_forward.5} parent=5 // pred_check
      %p125 = pneg %p124
    $region22: #{_qnet_forward.5} parent=5 // pred_check_branch
      %127 = sbr.rel (%p125) target = $region24
    $region23: #{_qnet_forward.5} parent=5 // pred_region
      // Predicated region
      $region25: #{_qnet_forward.5} parent=23 // pred_check
        %p128 = pneg %p29
      $region26: #{_qnet_forward.5} parent=23 // pred_check_branch
        %130 = sbr.rel (%p128) target = $region28
      $region27: #{_qnet_forward.5} parent=23 // pred_region
        %s131 = smul.u32 12, %s9
        %p132 = scmp.lt.s32.totalorder %s131, 23
        %s133 = scalar_select %p132, %s131, 23
        %s134 = smul.addr %s133, 4
        %s135 = smul.addr %s134, 4
        %s136 = scalar_lea.vmem %s0, %s135
        %s137 = smul.u32 12, %s9
      $region28: #{_qnet_forward.5} parent=23 // pred_fallthru
        _
    $region24: #{_qnet_forward.5} parent=5 // pred_fallthru
      _
    %p138 = scmp.le.s32.totalorder 1, %s9
    %p139 = scmp.lt.s32.totalorder %s9, 3
    %p140 = pnand %p138, %p139
    %p141 = pneg %p140
    // Predicated region
    $region29: #{_qnet_forward.5} parent=5 // pred_check
      _
    $region30: #{_qnet_forward.5} parent=5 // pred_check_branch
      %143 = sbr.rel (%p140) target = $region32
    $region31: #{_qnet_forward.5} parent=5 // pred_region
      %s144 = ssub.s32 %s9, 1
      %s145 = smul.u32 12, %s14
      %p146 = scmp.lt.s32.totalorder %s145, 23
      %s147 = scalar_select %p146, %s145, 23
      %s148 = smul.addr %s147, 4
      %s149 = smul.addr %s148, 4
      %s150 = scalar_lea.vmem %s0, %s149
      %p151 = pneg %p35
      %p152 = pneg %p32
      %p153 = pneg %p56
      %p154 = pneg %p53
      %p155 = pneg %p77
      %p156 = pneg %p74
      %p157 = pneg %p103
      %p158 = pneg %p100
      %s159 = smul.u32 12, %s14
      %p160 = scmp.lt.s32.totalorder %s159, 23
      %s161 = scalar_select %p160, %s159, 23
      %s162 = smul.addr %s161, 4
      %s163 = scalar_lea.vmem %s3, %s162
      %s164 = smul.u32 12, %s14
      %p165 = scmp.lt.s32.totalorder %s164, 23
      %s166 = scalar_select %p165, %s164, 23
      %s167 = smul.addr %s166, 4
      %s168 = smul.addr %s167, 4
      %s169 = scalar_lea.vmem %s0, %s168
      %s170 = smul.u32 12, %s14
      %s171 = smul.u32 12, %s14
      %p172 = scmp.lt.s32.totalorder %s171, 23
      %s173 = scalar_select %p172, %s171, 23
      %s174 = smul.addr %s173, 4
      %s175 = scalar_lea.vmem %s3, %s174
      %s176 = smul.u32 12, %s14
      %v178 = vld [vmem:[%s169] sm:$0xff]
      %v179 = vld [vmem:[%s169 + $0x8] sm:$0xff]
      %v180 = vld [vmem:[%s169 + $0x10] sm:$0xff]
      %v181 = vld [vmem:[%s169 + $0x18] sm:$0xff]
      %v182 = vld [vmem:[%s169 + $0x20] sm:$0xff]
      %v183 = vld [vmem:[%s169 + $0x28] sm:$0xff]
      %v184 = vld [vmem:[%s169 + $0x30] sm:$0xff]
      %v185 = vld [vmem:[%s169 + $0x38] sm:$0xff]
      %v186 = vld [vmem:[%s169 + $0x40] sm:$0xff]
      %v187 = vld [vmem:[%s169 + $0x48] sm:$0xff]
      %v188 = vld [vmem:[%s169 + $0x50] sm:$0xff]
      %v189 = vld [vmem:[%s169 + $0x58] sm:$0xff]
      %v190 = vld [vmem:[%s169 + $0x60] sm:$0xff]
      %v191 = vld [vmem:[%s169 + $0x68] sm:$0xff]
      %v192 = vld [vmem:[%s169 + $0x70] sm:$0xff]
      %v193 = vld [vmem:[%s169 + $0x78] sm:$0xff]
      %v194 = vld [vmem:[%s169 + $0x80] sm:$0xff]
      %v195 = vld [vmem:[%s169 + $0x88] sm:$0xff]
      %v196 = vld [vmem:[%s169 + $0x90] sm:$0xff]
      %v197 = vld [vmem:[%s169 + $0x98] sm:$0xff]
      %v198 = vld [vmem:[%s169 + $0xa0] sm:$0xff]
      %v199 = vld [vmem:[%s169 + $0xa8] sm:$0xff]
      %v200 = vld [vmem:[%s169 + $0xb0] sm:$0xff]
      %v201 = vld [vmem:[%s169 + $0xb8] sm:$0xff]
      %v202 = vld [vmem:[%s1] sm:$0xf]
      %v203 = vld [vmem:[%s1 + $0x4] sm:$0xf]
      %v204 = vld [vmem:[%s1 + $0x8] sm:$0xf]
      %v205 = vld [vmem:[%s1 + $0xc] sm:$0xf]
      %v206 = vld [vmem:[%s1 + $0x10] sm:$0xf]
      %v207 = vld [vmem:[%s1 + $0x14] sm:$0xf]
      %v208 = vld [vmem:[%s1 + $0x18] sm:$0xf]
      %v209 = vld [vmem:[%s1 + $0x1c] sm:$0xf]
      %v210 = vld [vmem:[%s1 + $0x20] sm:$0xf]
      %v211 = vld [vmem:[%s1 + $0x24] sm:$0xf]
      %v212 = vld [vmem:[%s1 + $0x28] sm:$0xf]
      %v213 = vld [vmem:[%s1 + $0x2c] sm:$0xf]
      %v214 = vld [vmem:[%s1 + $0x30] sm:$0xf]
      %v215 = vld [vmem:[%s1 + $0x34] sm:$0xf]
      %v216 = vld [vmem:[%s1 + $0x38] sm:$0xf]
      %v217 = vld [vmem:[%s1 + $0x3c] sm:$0xf]
      %v218 = vld [vmem:[%s1 + $0x40] sm:$0xf]
      %v219 = vld [vmem:[%s1 + $0x44] sm:$0xf]
      %v220 = vld [vmem:[%s1 + $0x48] sm:$0xf]
      %v221 = vld [vmem:[%s1 + $0x4c] sm:$0xf]
      %v222 = vld [vmem:[%s1 + $0x50] sm:$0xf]
      %v223 = vld [vmem:[%s1 + $0x54] sm:$0xf]
      %v224 = vld [vmem:[%s1 + $0x58] sm:$0xf]
      %v225 = vld [vmem:[%s1 + $0x5c] sm:$0xf]
      %v226 = vld [vmem:[%s1 + $0x60] sm:$0xf]
      %v227 = vld [vmem:[%s1 + $0x64] sm:$0xf]
      %v228 = vld [vmem:[%s1 + $0x68] sm:$0xf]
      %v229 = vld [vmem:[%s1 + $0x6c] sm:$0xf]
      %v230 = vld [vmem:[%s1 + $0x70] sm:$0xf]
      %v231 = vld [vmem:[%s1 + $0x74] sm:$0xf]
      %v232 = vld [vmem:[%s1 + $0x78] sm:$0xf]
      %v233 = vld [vmem:[%s1 + $0x7c] sm:$0xf]
      %v234 = vld [vmem:[%s1 + $0x80] sm:$0xf]
      %v235 = vld [vmem:[%s1 + $0x84] sm:$0xf]
      %v236 = vld [vmem:[%s1 + $0x88] sm:$0xf]
      %v237 = vld [vmem:[%s1 + $0x8c] sm:$0xf]
      %v238 = vld [vmem:[%s1 + $0x90] sm:$0xf]
      %v239 = vld [vmem:[%s1 + $0x94] sm:$0xf]
      %v240 = vld [vmem:[%s1 + $0x98] sm:$0xf]
      %v241 = vld [vmem:[%s1 + $0x9c] sm:$0xf]
      %v242 = vld [vmem:[%s1 + $0xa0] sm:$0xf]
      %v243 = vld [vmem:[%s1 + $0xa4] sm:$0xf]
      %v244 = vld [vmem:[%s1 + $0xa8] sm:$0xf]
      %v245 = vld [vmem:[%s1 + $0xac] sm:$0xf]
      %v246 = vld [vmem:[%s1 + $0xb0] sm:$0xf]
      %v247 = vld [vmem:[%s1 + $0xb4] sm:$0xf]
      %v248 = vld [vmem:[%s1 + $0xb8] sm:$0xf]
      %v249 = vld [vmem:[%s1 + $0xbc] sm:$0xf]
      %v250 = vld [vmem:[%s1 + $0xc0] sm:$0xf]
      %v251 = vld [vmem:[%s1 + $0xc4] sm:$0xf]
      %v252 = vld [vmem:[%s1 + $0xc8] sm:$0xf]
      %v253 = vld [vmem:[%s1 + $0xcc] sm:$0xf]
      %v254 = vld [vmem:[%s1 + $0xd0] sm:$0xf]
      %v255 = vld [vmem:[%s1 + $0xd4] sm:$0xf]
      %v256 = vld [vmem:[%s1 + $0xd8] sm:$0xf]
      %v257 = vld [vmem:[%s1 + $0xdc] sm:$0xf]
      %v258 = vld [vmem:[%s1 + $0xe0] sm:$0xf]
      %v259 = vld [vmem:[%s1 + $0xe4] sm:$0xf]
      %v260 = vld [vmem:[%s1 + $0xe8] sm:$0xf]
      %v261 = vld [vmem:[%s1 + $0xec] sm:$0xf]
      %v262 = vld [vmem:[%s1 + $0xf0] sm:$0xf]
      %v263 = vld [vmem:[%s1 + $0xf4] sm:$0xf]
      %v264 = vld [vmem:[%s1 + $0xf8] sm:$0xf]
      %v265 = vld [vmem:[%s1 + $0xfc] sm:$0xf]
      %v266 = vld [vmem:[%s2] sm:$0x1]
      %v268 = vlaneseq
      %v269 = vshrl.u32 %v268, 7
      %v270 = vsub.s32 0, %v269
      %v271 = vrot.slane %v266, %v270
      %v297 = vunpack.c.l.b16 %v178
      %v298 = vunpack.c.h.b16 %v178
      %v299 = vunpack.c.l.b16 %v179
      %v300 = vunpack.c.h.b16 %v179
      %v301 = vunpack.c.l.b16 %v180
      %v302 = vunpack.c.h.b16 %v180
      %v303 = vunpack.c.l.b16 %v181
      %v304 = vunpack.c.h.b16 %v181
      %v305 = vunpack.c.l.b16 %v182
      %v306 = vunpack.c.h.b16 %v182
      %v307 = vunpack.c.l.b16 %v183
      %v308 = vunpack.c.h.b16 %v183
      %v309 = vunpack.c.l.b16 %v184
      %v310 = vunpack.c.h.b16 %v184
      %v311 = vunpack.c.l.b16 %v185
      %v312 = vunpack.c.h.b16 %v185
      %v313 = vunpack.c.l.b16 %v186
      %v314 = vunpack.c.h.b16 %v186
      %v315 = vunpack.c.l.b16 %v187
      %v316 = vunpack.c.h.b16 %v187
      %v317 = vunpack.c.l.b16 %v188
      %v318 = vunpack.c.h.b16 %v188
      %v319 = vunpack.c.l.b16 %v189
      %v320 = vunpack.c.h.b16 %v189
      %v321 = vunpack.c.l.b16 %v190
      %v322 = vunpack.c.h.b16 %v190
      %v323 = vunpack.c.l.b16 %v191
      %v324 = vunpack.c.h.b16 %v191
      %v325 = vunpack.c.l.b16 %v192
      %v326 = vunpack.c.h.b16 %v192
      %v327 = vunpack.c.l.b16 %v193
      %v328 = vunpack.c.h.b16 %v193
      %v329 = vunpack.c.l.b16 %v194
      %v330 = vunpack.c.h.b16 %v194
      %v331 = vunpack.c.l.b16 %v195
      %v332 = vunpack.c.h.b16 %v195
      %v333 = vunpack.c.l.b16 %v196
      %v334 = vunpack.c.h.b16 %v196
      %v335 = vunpack.c.l.b16 %v197
      %v336 = vunpack.c.h.b16 %v197
      %v337 = vunpack.c.l.b16 %v198
      %v338 = vunpack.c.h.b16 %v198
      %v339 = vunpack.c.l.b16 %v199
      %v340 = vunpack.c.h.b16 %v199
      %v341 = vunpack.c.l.b16 %v200
      %v342 = vunpack.c.h.b16 %v200
      %v343 = vunpack.c.l.b16 %v201
      %v344 = vunpack.c.h.b16 %v201
      %v345 = vpack.c.b16 %v301, %v297
      %v346 = vpack.c.b16 %v302, %v298
      %v347 = vpack.c.b16 %v303, %v299
      %v348 = vpack.c.b16 %v304, %v300
      %v349 = vpack.c.b16 %v309, %v305
      %v350 = vpack.c.b16 %v310, %v306
      %v351 = vpack.c.b16 %v311, %v307
      %v352 = vpack.c.b16 %v312, %v308
      %v353 = vpack.c.b16 %v317, %v313
      %v354 = vpack.c.b16 %v318, %v314
      %v355 = vpack.c.b16 %v319, %v315
      %v356 = vpack.c.b16 %v320, %v316
      %v357 = vpack.c.b16 %v325, %v321
      %v358 = vpack.c.b16 %v326, %v322
      %v359 = vpack.c.b16 %v327, %v323
      %v360 = vpack.c.b16 %v328, %v324
      %v361 = vpack.c.b16 %v333, %v329
      %v362 = vpack.c.b16 %v334, %v330
      %v363 = vpack.c.b16 %v335, %v331
      %v364 = vpack.c.b16 %v336, %v332
      %v365 = vpack.c.b16 %v341, %v337
      %v366 = vpack.c.b16 %v342, %v338
      %v367 = vpack.c.b16 %v343, %v339
      %v368 = vpack.c.b16 %v344, %v340
      %v457 = vunpack.c.l.b16 %v202
      %v458 = vunpack.c.l.b16 %v203
      %v459 = vunpack.c.l.b16 %v204
      %v460 = vunpack.c.l.b16 %v205
      %v461 = vunpack.c.l.b16 %v206
      %v462 = vunpack.c.l.b16 %v207
      %v463 = vunpack.c.l.b16 %v208
      %v464 = vunpack.c.l.b16 %v209
      %v465 = vunpack.c.l.b16 %v210
      %v466 = vunpack.c.l.b16 %v211
      %v467 = vunpack.c.l.b16 %v212
      %v468 = vunpack.c.l.b16 %v213
      %v469 = vunpack.c.l.b16 %v214
      %v470 = vunpack.c.l.b16 %v215
      %v471 = vunpack.c.l.b16 %v216
      %v472 = vunpack.c.l.b16 %v217
      %v473 = vunpack.c.l.b16 %v218
      %v474 = vunpack.c.l.b16 %v219
      %v475 = vunpack.c.l.b16 %v220
      %v476 = vunpack.c.l.b16 %v221
      %v477 = vunpack.c.l.b16 %v222
      %v478 = vunpack.c.l.b16 %v223
      %v479 = vunpack.c.l.b16 %v224
      %v480 = vunpack.c.l.b16 %v225
      %v481 = vunpack.c.l.b16 %v226
      %v482 = vunpack.c.l.b16 %v227
      %v483 = vunpack.c.l.b16 %v228
      %v484 = vunpack.c.l.b16 %v229
      %v485 = vunpack.c.l.b16 %v230
      %v486 = vunpack.c.l.b16 %v231
      %v487 = vunpack.c.l.b16 %v232
      %v488 = vunpack.c.l.b16 %v233
      %v489 = vunpack.c.l.b16 %v234
      %v490 = vunpack.c.l.b16 %v235
      %v491 = vunpack.c.l.b16 %v236
      %v492 = vunpack.c.l.b16 %v237
      %v493 = vunpack.c.l.b16 %v238
      %v494 = vunpack.c.l.b16 %v239
      %v495 = vunpack.c.l.b16 %v240
      %v496 = vunpack.c.l.b16 %v241
      %v497 = vunpack.c.l.b16 %v242
      %v498 = vunpack.c.l.b16 %v243
      %v499 = vunpack.c.l.b16 %v244
      %v500 = vunpack.c.l.b16 %v245
      %v501 = vunpack.c.l.b16 %v246
      %v502 = vunpack.c.l.b16 %v247
      %v503 = vunpack.c.l.b16 %v248
      %v504 = vunpack.c.l.b16 %v249
      %v505 = vunpack.c.l.b16 %v250
      %v506 = vunpack.c.l.b16 %v251
      %v507 = vunpack.c.l.b16 %v252
      %v508 = vunpack.c.l.b16 %v253
      %v509 = vunpack.c.l.b16 %v254
      %v510 = vunpack.c.l.b16 %v255
      %v511 = vunpack.c.l.b16 %v256
      %v512 = vunpack.c.l.b16 %v257
      %v513 = vunpack.c.l.b16 %v258
      %v514 = vunpack.c.l.b16 %v259
      %v515 = vunpack.c.l.b16 %v260
      %v516 = vunpack.c.l.b16 %v261
      %v517 = vunpack.c.l.b16 %v262
      %v518 = vunpack.c.l.b16 %v263
      %v519 = vunpack.c.l.b16 %v264
      %v520 = vunpack.c.l.b16 %v265
      %v521 = vpack.c.b16 %v458, %v457
      %v522 = vpack.c.b16 %v460, %v459
      %v523 = vpack.c.b16 %v462, %v461
      %v524 = vpack.c.b16 %v464, %v463
      %v525 = vpack.c.b16 %v466, %v465
      %v526 = vpack.c.b16 %v468, %v467
      %v527 = vpack.c.b16 %v470, %v469
      %v528 = vpack.c.b16 %v472, %v471
      %v529 = vpack.c.b16 %v474, %v473
      %v530 = vpack.c.b16 %v476, %v475
      %v531 = vpack.c.b16 %v478, %v477
      %v532 = vpack.c.b16 %v480, %v479
      %v533 = vpack.c.b16 %v482, %v481
      %v534 = vpack.c.b16 %v484, %v483
      %v535 = vpack.c.b16 %v486, %v485
      %v536 = vpack.c.b16 %v488, %v487
      %v537 = vpack.c.b16 %v490, %v489
      %v538 = vpack.c.b16 %v492, %v491
      %v539 = vpack.c.b16 %v494, %v493
      %v540 = vpack.c.b16 %v496, %v495
      %v541 = vpack.c.b16 %v498, %v497
      %v542 = vpack.c.b16 %v500, %v499
      %v543 = vpack.c.b16 %v502, %v501
      %v544 = vpack.c.b16 %v504, %v503
      %v545 = vpack.c.b16 %v506, %v505
      %v546 = vpack.c.b16 %v508, %v507
      %v547 = vpack.c.b16 %v510, %v509
      %v548 = vpack.c.b16 %v512, %v511
      %v549 = vpack.c.b16 %v514, %v513
      %v550 = vpack.c.b16 %v516, %v515
      %v551 = vpack.c.b16 %v518, %v517
      %v552 = vpack.c.b16 %v520, %v519
      %585 = vmatprep.subr.bf16.mxu0 0
      %586 = vmatpush1.bf16.msra.mxu0 %v528
      %587 = vmatprep.subr.bf16.mxu0 0
      %588 = vmatpush1.bf16.msra.mxu0 %v527
      %589 = vmatprep.subr.bf16.mxu0 0
      %590 = vmatpush1.bf16.msra.mxu0 %v526
      %591 = vmatprep.subr.bf16.mxu0 0
      %592 = vmatpush1.bf16.msra.mxu0 %v525
      %593 = vmatprep.subr.bf16.mxu0 0
      %594 = vmatpush1.bf16.msra.mxu0 %v524
      %595 = vmatprep.subr.bf16.mxu0 0
      %596 = vmatpush1.bf16.msra.mxu0 %v523
      %597 = vmatprep.subr.bf16.mxu0 0
      %598 = vmatpush1.bf16.msra.mxu0 %v522
      %599 = vmatprep.subr.bf16.mxu0 0
      %600 = vmatpush1.bf16.msra.mxu0 %v521
      %601 = vmatprep.subr.bf16.mxu0 0
      %602 = vmatpush2.bf16.msra.mxu0 %v536
      %603 = vmatprep.subr.bf16.mxu0 0
      %604 = vmatpush2.bf16.msra.mxu0 %v535
      %605 = vmatprep.subr.bf16.mxu0 0
      %606 = vmatpush2.bf16.msra.mxu0 %v534
      %607 = vmatprep.subr.bf16.mxu0 0
      %608 = vmatpush2.bf16.msra.mxu0 %v533
      %609 = vmatprep.subr.bf16.mxu0 0
      %610 = vmatpush2.bf16.msra.mxu0 %v532
      %611 = vmatprep.subr.bf16.mxu0 0
      %612 = vmatpush2.bf16.msra.mxu0 %v531
      %613 = vmatprep.subr.bf16.mxu0 0
      %614 = vmatpush2.bf16.msra.mxu0 %v530
      %615 = vmatprep.subr.bf16.mxu0 0
      %616 = vmatpush2.bf16.msra.mxu0 %v529
      %617 = vmatprep.mubr.bf16.mxu0 %v346
      %618 = vmatmul.mubr.bf16.gmra.mxu0 %v345
      %v619 = vpop.f32.mrf.mxu0
      %v620 = vadd.f32 %v271, %v619
      %v621 = vpop.f32.mrf.mxu0
      %v622 = vpop.f32.mrf.mxu0
      %v623 = vadd.f32 %v271, %v622
      %v624 = vpop.f32.mrf.mxu0
      %625 = vmatprep.mubr.bf16.mxu0 %v350
      %626 = vmatmul.mubr.bf16.gmra.mxu0 %v349
      %v627 = vpop.f32.mrf.mxu0
      %v628 = vadd.f32 %v271, %v627
      %v629 = vpop.f32.mrf.mxu0
      %v630 = vpop.f32.mrf.mxu0
      %v631 = vadd.f32 %v271, %v630
      %v632 = vpop.f32.mrf.mxu0
      %633 = vmatprep.mubr.bf16.mxu0 %v354
      %634 = vmatmul.mubr.bf16.gmra.mxu0 %v353
      %v635 = vpop.f32.mrf.mxu0
      %v636 = vadd.f32 %v271, %v635
      %v637 = vpop.f32.mrf.mxu0
      %v638 = vpop.f32.mrf.mxu0
      %v639 = vadd.f32 %v271, %v638
      %v640 = vpop.f32.mrf.mxu0
      %641 = vmatprep.mubr.bf16.mxu0 %v358
      %642 = vmatmul.mubr.bf16.gmra.mxu0 %v357
      %v643 = vpop.f32.mrf.mxu0
      %v644 = vadd.f32 %v271, %v643
      %v645 = vpop.f32.mrf.mxu0
      %v646 = vpop.f32.mrf.mxu0
      %v647 = vadd.f32 %v271, %v646
      %v648 = vpop.f32.mrf.mxu0
      %649 = vmatprep.mubr.bf16.mxu0 %v362
      %650 = vmatmul.mubr.bf16.gmra.mxu0 %v361
      %v651 = vpop.f32.mrf.mxu0
      %v652 = vadd.f32 %v271, %v651
      %v653 = vpop.f32.mrf.mxu0
      %v654 = vpop.f32.mrf.mxu0
      %v655 = vadd.f32 %v271, %v654
      %v656 = vpop.f32.mrf.mxu0
      %657 = vmatprep.mubr.bf16.mxu0 %v366
      %658 = vmatmul.mubr.bf16.gmra.mxu0 %v365
      %v659 = vpop.f32.mrf.mxu0
      %v660 = vadd.f32 %v271, %v659
      %v661 = vpop.f32.mrf.mxu0
      %v662 = vpop.f32.mrf.mxu0
      %v663 = vadd.f32 %v271, %v662
      %v664 = vpop.f32.mrf.mxu0
      %665 = vdwg.mxu0
      %666 = vmatprep.subr.bf16.mxu0 0
      %667 = vmatpush1.bf16.msra.mxu0 %v544
      %668 = vmatprep.subr.bf16.mxu0 0
      %669 = vmatpush1.bf16.msra.mxu0 %v543
      %670 = vmatprep.subr.bf16.mxu0 0
      %671 = vmatpush1.bf16.msra.mxu0 %v542
      %672 = vmatprep.subr.bf16.mxu0 0
      %673 = vmatpush1.bf16.msra.mxu0 %v541
      %674 = vmatprep.subr.bf16.mxu0 0
      %675 = vmatpush1.bf16.msra.mxu0 %v540
      %676 = vmatprep.subr.bf16.mxu0 0
      %677 = vmatpush1.bf16.msra.mxu0 %v539
      %678 = vmatprep.subr.bf16.mxu0 0
      %679 = vmatpush1.bf16.msra.mxu0 %v538
      %680 = vmatprep.subr.bf16.mxu0 0
      %681 = vmatpush1.bf16.msra.mxu0 %v537
      %682 = vmatprep.subr.bf16.mxu0 0
      %683 = vmatpush2.bf16.msra.mxu0 %v552
      %684 = vmatprep.subr.bf16.mxu0 0
      %685 = vmatpush2.bf16.msra.mxu0 %v551
      %686 = vmatprep.subr.bf16.mxu0 0
      %687 = vmatpush2.bf16.msra.mxu0 %v550
      %688 = vmatprep.subr.bf16.mxu0 0
      %689 = vmatpush2.bf16.msra.mxu0 %v549
      %690 = vmatprep.subr.bf16.mxu0 0
      %691 = vmatpush2.bf16.msra.mxu0 %v548
      %692 = vmatprep.subr.bf16.mxu0 0
      %693 = vmatpush2.bf16.msra.mxu0 %v547
      %694 = vmatprep.subr.bf16.mxu0 0
      %695 = vmatpush2.bf16.msra.mxu0 %v546
      %696 = vmatprep.subr.bf16.mxu0 0
      %697 = vmatpush2.bf16.msra.mxu0 %v545
      %698 = vmatprep.mubr.bf16.mxu0 %v348
      %699 = vmatmul.mubr.bf16.gmra.mxu0 %v347
      %v700 = vpop.f32.mrf.mxu0
      %v701 = vadd.f32 %v620, %v700
      %v702 = vpop.f32.mrf.mxu0
      %v703 = vpop.f32.mrf.mxu0
      %v704 = vadd.f32 %v623, %v703
      %v705 = vpop.f32.mrf.mxu0
      %706 = vmatprep.mubr.bf16.mxu0 %v352
      %707 = vmatmul.mubr.bf16.gmra.mxu0 %v351
      %v708 = vpop.f32.mrf.mxu0
      %v709 = vadd.f32 %v628, %v708
      %v710 = vpop.f32.mrf.mxu0
      %v711 = vpop.f32.mrf.mxu0
      %v712 = vadd.f32 %v631, %v711
      %v713 = vpop.f32.mrf.mxu0
      %714 = vmatprep.mubr.bf16.mxu0 %v356
      %715 = vmatmul.mubr.bf16.gmra.mxu0 %v355
      %v716 = vpop.f32.mrf.mxu0
      %v717 = vadd.f32 %v636, %v716
      %v718 = vpop.f32.mrf.mxu0
      %v719 = vpop.f32.mrf.mxu0
      %v720 = vadd.f32 %v639, %v719
      %v721 = vpop.f32.mrf.mxu0
      %722 = vmatprep.mubr.bf16.mxu0 %v360
      %723 = vmatmul.mubr.bf16.gmra.mxu0 %v359
      %v724 = vpop.f32.mrf.mxu0
      %v725 = vadd.f32 %v644, %v724
      %v726 = vpop.f32.mrf.mxu0
      %v727 = vpop.f32.mrf.mxu0
      %v728 = vadd.f32 %v647, %v727
      %v729 = vpop.f32.mrf.mxu0
      %730 = vmatprep.mubr.bf16.mxu0 %v364
      %731 = vmatmul.mubr.bf16.gmra.mxu0 %v363
      %v732 = vpop.f32.mrf.mxu0
      %v733 = vadd.f32 %v652, %v732
      %v734 = vpop.f32.mrf.mxu0
      %v735 = vpop.f32.mrf.mxu0
      %v736 = vadd.f32 %v655, %v735
      %v737 = vpop.f32.mrf.mxu0
      %738 = vmatprep.mubr.bf16.mxu0 %v368
      %739 = vmatmul.mubr.bf16.gmra.mxu0 %v367
      %v740 = vpop.f32.mrf.mxu0
      %v741 = vadd.f32 %v660, %v740
      %v742 = vpop.f32.mrf.mxu0
      %v743 = vpop.f32.mrf.mxu0
      %v744 = vadd.f32 %v663, %v743
      %v745 = vpop.f32.mrf.mxu0
      %746 = vdwg.mxu0
      %v747 = vmax.f32 %v701, 0.0
      %v748 = vmax.f32 %v704, 0.0
      %v749 = vmax.f32 %v709, 0.0
      %v750 = vmax.f32 %v712, 0.0
      %v751 = vmax.f32 %v717, 0.0
      %v752 = vmax.f32 %v720, 0.0
      %v753 = vmax.f32 %v725, 0.0
      %v754 = vmax.f32 %v728, 0.0
      %v755 = vmax.f32 %v733, 0.0
      %v756 = vmax.f32 %v736, 0.0
      %v757 = vmax.f32 %v741, 0.0
      %v758 = vmax.f32 %v744, 0.0
      %v759 = vpack.c.bf16 %v748, %v747
      %v760 = vpack.c.bf16 %v750, %v749
      %v761 = vpack.c.bf16 %v752, %v751
      %v762 = vpack.c.bf16 %v754, %v753
      %v763 = vpack.c.bf16 %v756, %v755
      %v764 = vpack.c.bf16 %v758, %v757
      %v771 = vunpack.c.l.b16 %v759
      %v772 = vunpack.c.h.b16 %v759
      %v773 = vunpack.c.l.b16 %v760
      %v774 = vunpack.c.h.b16 %v760
      %v775 = vunpack.c.l.b16 %v761
      %v776 = vunpack.c.h.b16 %v761
      %v777 = vunpack.c.l.b16 %v762
      %v778 = vunpack.c.h.b16 %v762
      %v779 = vunpack.c.l.b16 %v763
      %v780 = vunpack.c.h.b16 %v763
      %v781 = vunpack.c.l.b16 %v764
      %v782 = vunpack.c.h.b16 %v764
      %v783 = vpack.c.b16 %v771, %v771
      %v784 = vpack.c.b16 %v772, %v772
      %v785 = vpack.c.b16 %v773, %v773
      %v786 = vpack.c.b16 %v774, %v774
      %v787 = vpack.c.b16 %v775, %v775
      %v788 = vpack.c.b16 %v776, %v776
      %v789 = vpack.c.b16 %v777, %v777
      %v790 = vpack.c.b16 %v778, %v778
      %v791 = vpack.c.b16 %v779, %v779
      %v792 = vpack.c.b16 %v780, %v780
      %v793 = vpack.c.b16 %v781, %v781
      %v794 = vpack.c.b16 %v782, %v782
      %807 = vst [vmem:[%s175] sm:$0xf] %v783
      %808 = vst [vmem:[%s175 + $0x4] sm:$0xf] %v784
      %809 = vst [vmem:[%s175 + $0x8] sm:$0xf] %v785
      %810 = vst [vmem:[%s175 + $0xc] sm:$0xf] %v786
      %811 = vst [vmem:[%s175 + $0x10] sm:$0xf] %v787
      %812 = vst [vmem:[%s175 + $0x14] sm:$0xf] %v788
      %813 = vst [vmem:[%s175 + $0x18] sm:$0xf] %v789
      %814 = vst [vmem:[%s175 + $0x1c] sm:$0xf] %v790
      %815 = vst [vmem:[%s175 + $0x20] sm:$0xf] %v791
      %816 = vst [vmem:[%s175 + $0x24] sm:$0xf] %v792
      %817 = vst [vmem:[%s175 + $0x28] sm:$0xf] %v793
      %818 = vst [vmem:[%s175 + $0x2c] sm:$0xf] %v794
      %s819 = smul.u32 12, %s14
      %p820 = scmp.lt.s32.totalorder %s819, 23
      %s821 = scalar_select %p820, %s819, 23
      %s822 = smul.addr %s821, 4
      %s823 = scalar_lea.vmem %s3, %s822
      // Predicated region
      $region33: #{_qnet_forward.5} parent=31 // pred_check
        %p824 = pneg %p100
      $region34: #{_qnet_forward.5} parent=31 // pred_check_branch
        %826 = sbr.rel (%p824) target = $region36
      $region35: #{_qnet_forward.5} parent=31 // pred_region
        %s827 = smul.u32 12, %s14
      $region36: #{_qnet_forward.5} parent=31 // pred_fallthru
        _
    $region32: #{_qnet_forward.5} parent=5 // pred_fallthru
      _
    %p828 = scmp.le.s32.totalorder 2, %s9
    // Predicated region
    $region37: #{_qnet_forward.5} parent=5 // pred_check
      %p829 = pneg %p828
    $region38: #{_qnet_forward.5} parent=5 // pred_check_branch
      %831 = sbr.rel (%p829) target = $region40
    $region39: #{_qnet_forward.5} parent=5 // pred_region
      %s832 = ssub.s32 %s9, 2
      // Predicated region
      $region41: #{_qnet_forward.5} parent=39 // pred_check
        %p833 = pneg %p106
      $region42: #{_qnet_forward.5} parent=39 // pred_check_branch
        %835 = sbr.rel (%p833) target = $region44
      $region43: #{_qnet_forward.5} parent=39 // pred_region
        %s836 = smul.u32 12, %s15
        %p837 = scmp.lt.s32.totalorder %s836, 23
        %s838 = scalar_select %p837, %s836, 23
        %s839 = smul.addr %s838, 4
        %s840 = scalar_lea.vmem %s3, %s839
      $region44: #{_qnet_forward.5} parent=39 // pred_fallthru
        _
    $region40: #{_qnet_forward.5} parent=5 // pred_fallthru
      _
  $region6: #{_qnet_forward.5} parent=0 // loop_footer
    %s13 = sadd.s32 1, %s9
  $region7: #{_qnet_forward.5} parent=0 // loop_footer_branch
    %8 = sbr.rel target = $region3
  $region8: #{_qnet_forward.5} parent=0 // loop_exit
    _

// kernel: _qnet_forward.6
$region0: #{_qnet_forward.6}
  #allocation0 [shape = 'u32[]', space=smem, size = 0x4, offset = 0x4, fixed_abs, tag = 'smem constant byte address 0x4 - core index']
  #allocation1 [shape = 'u32[144,128]{1,0:T(1,128)}', space=vmem, size = 0x12000, scoped, tag = 'internal scratch']
  %s0 = inlined_call_operand.vmem [shape: bf16[128,640], index: 0, kind: input, shape index: {}]
  %s1 = inlined_call_operand.vmem [shape: bf16[640,128], index: 1, kind: input, shape index: {}]
  %s2 = inlined_call_operand.vmem [shape: f32[1,128], index: 2, kind: input, shape index: {}]
  %s3 = inlined_call_operand.vmem [shape: bf16[128,128], index: 3, kind: output, shape index: {}]
  %s4 = sld [smem:[#allocation0]]
  $region45: #{_qnet_forward.6} parent=0
    _
  %s6 = ssub.s32 1, %s4
  %s7 = scalar_select 0, %s6, %s4
  loop: start=0, step=1, limit=4
  $region2: #{_qnet_forward.6} parent=0 // loop_pre_header
    _
  $region3: #{_qnet_forward.6} parent=0 // loop_header
    %s9 = sphi 0, %s13
    %p10 = scmp.ge.s32.totalorder %s9, 4
    %s19 = sphi 0, %s21
    %s22 = sphi 0, %s19
    %s23 = sphi 0, %s22
    %s39 = sphi 0, %s23
    %s43 = sphi 0, %s43
    %s45 = sphi 0, %s43
    %s46 = sphi 0, %s45
    %s60 = sphi 0, %s46
    %s64 = sphi 0, %s64
    %s66 = sphi 0, %s64
    %s67 = sphi 0, %s66
    %s81 = sphi 0, %s67
    %s87 = sphi 0, %s89
    %s90 = sphi 0, %s87
    %s91 = sphi 0, %s90
    %s107 = sphi 0, %s91
  $region4: #{_qnet_forward.6} parent=0 // loop_header_branch
    %12 = sbr.rel (%p10) target = $region8
  $region5: #{_qnet_forward.6} parent=0 // loop_body
    %s14 = ssub.s32 %s9, 1
    %s15 = ssub.s32 %s9, 2
    %s16 = sadd.s32 %s9, 1
    %s17 = ssub.s32 %s9, %s16
    %p18 = scmp.eq.s32.totalorder %s17, 0
    %s20 = sadd.s32 %s19, 1
    %s21 = scalar_select %p18, %s19, %s20
    %p24 = pneg %p18
    %p25 = scmp.eq.s32.totalorder %s9, 1
    %p26 = por %p24, %p25
    %p27 = scmp.ne.s32.totalorder %s19, %s22
    %p28 = scmp.eq.s32.totalorder %s9, 0
    %p29 = por %p27, %p28
    %p30 = scmp.ne.s32.totalorder %s19, %s22
    %p31 = scmp.eq.s32.totalorder %s14, 1
    %p32 = por %p30, %p31
    %p33 = scmp.ne.s32.totalorder %s22, %s23
    %p34 = scmp.eq.s32.totalorder %s14, 0
    %p35 = por %p33, %p34
    %p36 = scmp.ne.s32.totalorder %s22, %s23
    %p37 = scmp.eq.s32.totalorder %s15, 1
    %p38 = por %p36, %p37
    %p40 = scmp.ne.s32.totalorder %s23, %s39
    %p41 = scmp.eq.s32.totalorder %s15, 0
    %p42 = por %p40, %p41
    %s44 = sadd.s32 %s43, 1
    %p47 = scmp.eq.s32.totalorder %s9, 1
    %p48 = scmp.ne.s32.totalorder %s43, %s45
    %p49 = scmp.eq.s32.totalorder %s9, 0
    %p50 = por %p48, %p49
    %p51 = scmp.ne.s32.totalorder %s43, %s45
    %p52 = scmp.eq.s32.totalorder %s14, 1
    %p53 = por %p51, %p52
    %p54 = scmp.ne.s32.totalorder %s45, %s46
    %p55 = scmp.eq.s32.totalorder %s14, 0
    %p56 = por %p54, %p55
    %p57 = scmp.ne.s32.totalorder %s45, %s46
    %p58 = scmp.eq.s32.totalorder %s15, 1
    %p59 = por %p57, %p58
    %p61 = scmp.ne.s32.totalorder %s46, %s60
    %p62 = scmp.eq.s32.totalorder %s15, 0
    %p63 = por %p61, %p62
    %s65 = sadd.s32 %s64, 1
    %p68 = scmp.eq.s32.totalorder %s9, 1
    %p69 = scmp.ne.s32.totalorder %s64, %s66
    %p70 = scmp.eq.s32.totalorder %s9, 0
    %p71 = por %p69, %p70
    %p72 = scmp.ne.s32.totalorder %s64, %s66
    %p73 = scmp.eq.s32.totalorder %s14, 1
    %p74 = por %p72, %p73
    %p75 = scmp.ne.s32.totalorder %s66, %s67
    %p76 = scmp.eq.s32.totalorder %s14, 0
    %p77 = por %p75, %p76
    %p78 = scmp.ne.s32.totalorder %s66, %s67
    %p79 = scmp.eq.s32.totalorder %s15, 1
    %p80 = por %p78, %p79
    %p82 = scmp.ne.s32.totalorder %s67, %s81
    %p83 = scmp.eq.s32.totalorder %s15, 0
    %p84 = por %p82, %p83
    %s85 = ssub.s32 %s9, %s16
    %p86 = scmp.eq.s32.totalorder %s85, 0
    %s88 = sadd.s32 %s87, 1
    %s89 = scalar_select %p86, %s87, %s88
    %p92 = pneg %p86
    %p93 = scmp.eq.s32.totalorder %s9, 1
    %p94 = por %p92, %p93
    %p95 = scmp.ne.s32.totalorder %s87, %s90
    %p96 = scmp.eq.s32.totalorder %s9, 0
    %p97 = por %p95, %p96
    %p98 = scmp.ne.s32.totalorder %s87, %s90
    %p99 = scmp.eq.s32.totalorder %s14, 1
    %p100 = por %p98, %p99
    %p101 = scmp.ne.s32.totalorder %s90, %s91
    %p102 = scmp.eq.s32.totalorder %s14, 0
    %p103 = por %p101, %p102
    %p104 = scmp.ne.s32.totalorder %s90, %s91
    %p105 = scmp.eq.s32.totalorder %s15, 1
    %p106 = por %p104, %p105
    %p108 = scmp.ne.s32.totalorder %s91, %s107
    %p109 = scmp.eq.s32.totalorder %s15, 0
    %p110 = por %p108, %p109
    %p111 = scmp.le.s32.totalorder 1, %s9
    %p112 = scmp.lt.s32.totalorder %s9, 3
    %p113 = pnand %p111, %p112
    %p114 = pneg %p113
    // Predicated region
    $region9: #{_qnet_forward.6} parent=5 // pred_check
      _
    $region10: #{_qnet_forward.6} parent=5 // pred_check_branch
      %116 = sbr.rel (%p113) target = $region12
    $region11: #{_qnet_forward.6} parent=5 // pred_region
      %s117 = ssub.s32 %s9, 1
      // Predicated region
      $region13: #{_qnet_forward.6} parent=11 // pred_check
        %p118 = pneg %p56
      $region14: #{_qnet_forward.6} parent=11 // pred_check_branch
        %120 = sbr.rel (%p118) target = $region16
      $region15: #{_qnet_forward.6} parent=11 // pred_region
        _
      $region16: #{_qnet_forward.6} parent=11 // pred_fallthru
        _
      // Predicated region
      $region17: #{_qnet_forward.6} parent=11 // pred_check
        %p121 = pneg %p77
      $region18: #{_qnet_forward.6} parent=11 // pred_check_branch
        %123 = sbr.rel (%p121) target = $region20
      $region19: #{_qnet_forward.6} parent=11 // pred_region
        _
      $region20: #{_qnet_forward.6} parent=11 // pred_fallthru
        _
    $region12: #{_qnet_forward.6} parent=5 // pred_fallthru
      _
    %p124 = scmp.lt.s32.totalorder %s9, 2
    // Predicated region
    $region21: #{_qnet_forward.6} parent=5 // pred_check
      %p125 = pneg %p124
    $region22: #{_qnet_forward.6} parent=5 // pred_check_branch
      %127 = sbr.rel (%p125) target = $region24
    $region23: #{_qnet_forward.6} parent=5 // pred_region
      // Predicated region
      $region25: #{_qnet_forward.6} parent=23 // pred_check
        %p128 = pneg %p29
      $region26: #{_qnet_forward.6} parent=23 // pred_check_branch
        %130 = sbr.rel (%p128) target = $region28
      $region27: #{_qnet_forward.6} parent=23 // pred_region
        %s131 = smul.u32 8, %s9
        %p132 = scmp.lt.s32.totalorder %s131, 15
        %s133 = scalar_select %p132, %s131, 15
        %s134 = smul.addr %s133, 5
        %s135 = smul.addr %s134, 4
        %s136 = scalar_lea.vmem %s0, %s135
        %s137 = smul.u32 8, %s9
      $region28: #{_qnet_forward.6} parent=23 // pred_fallthru
        _
    $region24: #{_qnet_forward.6} parent=5 // pred_fallthru
      _
    %p138 = scmp.le.s32.totalorder 1, %s9
    %p139 = scmp.lt.s32.totalorder %s9, 3
    %p140 = pnand %p138, %p139
    %p141 = pneg %p140
    // Predicated region
    $region29: #{_qnet_forward.6} parent=5 // pred_check
      _
    $region30: #{_qnet_forward.6} parent=5 // pred_check_branch
      %143 = sbr.rel (%p140) target = $region32
    $region31: #{_qnet_forward.6} parent=5 // pred_region
      %s144 = ssub.s32 %s9, 1
      %s145 = smul.u32 8, %s14
      %p146 = scmp.lt.s32.totalorder %s145, 15
      %s147 = scalar_select %p146, %s145, 15
      %s148 = smul.addr %s147, 5
      %s149 = smul.addr %s148, 4
      %s150 = scalar_lea.vmem %s0, %s149
      %p151 = pneg %p35
      %p152 = pneg %p32
      %p153 = pneg %p56
      %p154 = pneg %p53
      %p155 = pneg %p77
      %p156 = pneg %p74
      %p157 = pneg %p103
      %p158 = pneg %p100
      %s159 = smul.u32 8, %s14
      %p160 = scmp.lt.s32.totalorder %s159, 15
      %s161 = scalar_select %p160, %s159, 15
      %s162 = smul.addr %s161, 4
      %s163 = scalar_lea.vmem %s3, %s162
      %s164 = smul.u32 8, %s14
      %p165 = scmp.lt.s32.totalorder %s164, 15
      %s166 = scalar_select %p165, %s164, 15
      %s167 = smul.addr %s166, 5
      %s168 = smul.addr %s167, 4
      %s169 = scalar_lea.vmem %s0, %s168
      %s170 = smul.u32 8, %s14
      %s171 = smul.u32 8, %s14
      %p172 = scmp.lt.s32.totalorder %s171, 15
      %s173 = scalar_select %p172, %s171, 15
      %s174 = smul.addr %s173, 4
      %s175 = scalar_lea.vmem %s3, %s174
      %s176 = smul.u32 8, %s14
      %v178 = vld [vmem:[%s169] sm:$0xff]
      %v179 = vld [vmem:[%s169 + $0x8] sm:$0xff]
      %v180 = vld [vmem:[%s169 + $0x10] sm:$0xf]
      %v181 = vld [vmem:[%s169 + $0x14] sm:$0xff]
      %v182 = vld [vmem:[%s169 + $0x1c] sm:$0xff]
      %v183 = vld [vmem:[%s169 + $0x24] sm:$0xf]
      %v184 = vld [vmem:[%s169 + $0x28] sm:$0xff]
      %v185 = vld [vmem:[%s169 + $0x30] sm:$0xff]
      %v186 = vld [vmem:[%s169 + $0x38] sm:$0xf]
      %v187 = vld [vmem:[%s169 + $0x3c] sm:$0xff]
      %v188 = vld [vmem:[%s169 + $0x44] sm:$0xff]
      %v189 = vld [vmem:[%s169 + $0x4c] sm:$0xf]
      %v190 = vld [vmem:[%s169 + $0x50] sm:$0xff]
      %v191 = vld [vmem:[%s169 + $0x58] sm:$0xff]
      %v192 = vld [vmem:[%s169 + $0x60] sm:$0xf]
      %v193 = vld [vmem:[%s169 + $0x64] sm:$0xff]
      %v194 = vld [vmem:[%s169 + $0x6c] sm:$0xff]
      %v195 = vld [vmem:[%s169 + $0x74] sm:$0xf]
      %v196 = vld [vmem:[%s169 + $0x78] sm:$0xff]
      %v197 = vld [vmem:[%s169 + $0x80] sm:$0xff]
      %v198 = vld [vmem:[%s169 + $0x88] sm:$0xf]
      %v199 = vld [vmem:[%s169 + $0x8c] sm:$0xff]
      %v200 = vld [vmem:[%s169 + $0x94] sm:$0xff]
      %v201 = vld [vmem:[%s169 + $0x9c] sm:$0xf]
      %v202 = vld [vmem:[%s1] sm:$0xf]
      %v203 = vld [vmem:[%s1 + $0x4] sm:$0xf]
      %v204 = vld [vmem:[%s1 + $0x8] sm:$0xf]
      %v205 = vld [vmem:[%s1 + $0xc] sm:$0xf]
      %v206 = vld [vmem:[%s1 + $0x10] sm:$0xf]
      %v207 = vld [vmem:[%s1 + $0x14] sm:$0xf]
      %v208 = vld [vmem:[%s1 + $0x18] sm:$0xf]
      %v209 = vld [vmem:[%s1 + $0x1c] sm:$0xf]
      %v210 = vld [vmem:[%s1 + $0x20] sm:$0xf]
      %v211 = vld [vmem:[%s1 + $0x24] sm:$0xf]
      %v212 = vld [vmem:[%s1 + $0x28] sm:$0xf]
      %v213 = vld [vmem:[%s1 + $0x2c] sm:$0xf]
      %v214 = vld [vmem:[%s1 + $0x30] sm:$0xf]
      %v215 = vld [vmem:[%s1 + $0x34] sm:$0xf]
      %v216 = vld [vmem:[%s1 + $0x38] sm:$0xf]
      %v217 = vld [vmem:[%s1 + $0x3c] sm:$0xf]
      %v218 = vld [vmem:[%s1 + $0x40] sm:$0xf]
      %v219 = vld [vmem:[%s1 + $0x44] sm:$0xf]
      %v220 = vld [vmem:[%s1 + $0x48] sm:$0xf]
      %v221 = vld [vmem:[%s1 + $0x4c] sm:$0xf]
      %v222 = vld [vmem:[%s1 + $0x50] sm:$0xf]
      %v223 = vld [vmem:[%s1 + $0x54] sm:$0xf]
      %v224 = vld [vmem:[%s1 + $0x58] sm:$0xf]
      %v225 = vld [vmem:[%s1 + $0x5c] sm:$0xf]
      %v226 = vld [vmem:[%s1 + $0x60] sm:$0xf]
      %v227 = vld [vmem:[%s1 + $0x64] sm:$0xf]
      %v228 = vld [vmem:[%s1 + $0x68] sm:$0xf]
      %v229 = vld [vmem:[%s1 + $0x6c] sm:$0xf]
      %v230 = vld [vmem:[%s1 + $0x70] sm:$0xf]
      %v231 = vld [vmem:[%s1 + $0x74] sm:$0xf]
      %v232 = vld [vmem:[%s1 + $0x78] sm:$0xf]
      %v233 = vld [vmem:[%s1 + $0x7c] sm:$0xf]
      %v234 = vld [vmem:[%s1 + $0x80] sm:$0xf]
      %v235 = vld [vmem:[%s1 + $0x84] sm:$0xf]
      %v236 = vld [vmem:[%s1 + $0x88] sm:$0xf]
      %v237 = vld [vmem:[%s1 + $0x8c] sm:$0xf]
      %v238 = vld [vmem:[%s1 + $0x90] sm:$0xf]
      %v239 = vld [vmem:[%s1 + $0x94] sm:$0xf]
      %v240 = vld [vmem:[%s1 + $0x98] sm:$0xf]
      %v241 = vld [vmem:[%s1 + $0x9c] sm:$0xf]
      %v242 = vld [vmem:[%s1 + $0xa0] sm:$0xf]
      %v243 = vld [vmem:[%s1 + $0xa4] sm:$0xf]
      %v244 = vld [vmem:[%s1 + $0xa8] sm:$0xf]
      %v245 = vld [vmem:[%s1 + $0xac] sm:$0xf]
      %v246 = vld [vmem:[%s1 + $0xb0] sm:$0xf]
      %v247 = vld [vmem:[%s1 + $0xb4] sm:$0xf]
      %v248 = vld [vmem:[%s1 + $0xb8] sm:$0xf]
      %v249 = vld [vmem:[%s1 + $0xbc] sm:$0xf]
      %v250 = vld [vmem:[%s1 + $0xc0] sm:$0xf]
      %v251 = vld [vmem:[%s1 + $0xc4] sm:$0xf]
      %v252 = vld [vmem:[%s1 + $0xc8] sm:$0xf]
      %v253 = vld [vmem:[%s1 + $0xcc] sm:$0xf]
      %v254 = vld [vmem:[%s1 + $0xd0] sm:$0xf]
      %v255 = vld [vmem:[%s1 + $0xd4] sm:$0xf]
      %v256 = vld [vmem:[%s1 + $0xd8] sm:$0xf]
      %v257 = vld [vmem:[%s1 + $0xdc] sm:$0xf]
      %v258 = vld [vmem:[%s1 + $0xe0] sm:$0xf]
      %v259 = vld [vmem:[%s1 + $0xe4] sm:$0xf]
      %v260 = vld [vmem:[%s1 + $0xe8] sm:$0xf]
      %v261 = vld [vmem:[%s1 + $0xec] sm:$0xf]
      %v262 = vld [vmem:[%s1 + $0xf0] sm:$0xf]
      %v263 = vld [vmem:[%s1 + $0xf4] sm:$0xf]
      %v264 = vld [vmem:[%s1 + $0xf8] sm:$0xf]
      %v265 = vld [vmem:[%s1 + $0xfc] sm:$0xf]
      %v266 = vld [vmem:[%s1 + $0x100] sm:$0xf]
      %v267 = vld [vmem:[%s1 + $0x104] sm:$0xf]
      %v268 = vld [vmem:[%s1 + $0x108] sm:$0xf]
      %v269 = vld [vmem:[%s1 + $0x10c] sm:$0xf]
      %v270 = vld [vmem:[%s1 + $0x110] sm:$0xf]
      %v271 = vld [vmem:[%s1 + $0x114] sm:$0xf]
      %v272 = vld [vmem:[%s1 + $0x118] sm:$0xf]
      %v273 = vld [vmem:[%s1 + $0x11c] sm:$0xf]
      %v274 = vld [vmem:[%s1 + $0x120] sm:$0xf]
      %v275 = vld [vmem:[%s1 + $0x124] sm:$0xf]
      %v276 = vld [vmem:[%s1 + $0x128] sm:$0xf]
      %v277 = vld [vmem:[%s1 + $0x12c] sm:$0xf]
      %v278 = vld [vmem:[%s1 + $0x130] sm:$0xf]
      %v279 = vld [vmem:[%s1 + $0x134] sm:$0xf]
      %v280 = vld [vmem:[%s1 + $0x138] sm:$0xf]
      %v281 = vld [vmem:[%s1 + $0x13c] sm:$0xf]
      %v282 = vld [vmem:[%s2] sm:$0x1]
      %v284 = vlaneseq
      %v285 = vshrl.u32 %v284, 7
      %v286 = vsub.s32 0, %v285
      %v287 = vrot.slane %v282, %v286
      %v313 = vunpack.c.l.b16 %v178
      %v314 = vunpack.c.h.b16 %v178
      %v315 = vunpack.c.l.b16 %v179
      %v316 = vunpack.c.h.b16 %v179
      %v317 = vunpack.c.l.b16 %v180
      %v318 = vunpack.c.l.b16 %v181
      %v319 = vunpack.c.h.b16 %v181
      %v320 = vunpack.c.l.b16 %v182
      %v321 = vunpack.c.h.b16 %v182
      %v322 = vunpack.c.l.b16 %v183
      %v323 = vunpack.c.l.b16 %v184
      %v324 = vunpack.c.h.b16 %v184
      %v325 = vunpack.c.l.b16 %v185
      %v326 = vunpack.c.h.b16 %v185
      %v327 = vunpack.c.l.b16 %v186
      %v328 = vunpack.c.l.b16 %v187
      %v329 = vunpack.c.h.b16 %v187
      %v330 = vunpack.c.l.b16 %v188
      %v331 = vunpack.c.h.b16 %v188
      %v332 = vunpack.c.l.b16 %v189
      %v333 = vunpack.c.l.b16 %v190
      %v334 = vunpack.c.h.b16 %v190
      %v335 = vunpack.c.l.b16 %v191
      %v336 = vunpack.c.h.b16 %v191
      %v337 = vunpack.c.l.b16 %v192
      %v338 = vunpack.c.l.b16 %v193
      %v339 = vunpack.c.h.b16 %v193
      %v340 = vunpack.c.l.b16 %v194
      %v341 = vunpack.c.h.b16 %v194
      %v342 = vunpack.c.l.b16 %v195
      %v343 = vunpack.c.l.b16 %v196
      %v344 = vunpack.c.h.b16 %v196
      %v345 = vunpack.c.l.b16 %v197
      %v346 = vunpack.c.h.b16 %v197
      %v347 = vunpack.c.l.b16 %v198
      %v348 = vunpack.c.l.b16 %v199
      %v349 = vunpack.c.h.b16 %v199
      %v350 = vunpack.c.l.b16 %v200
      %v351 = vunpack.c.h.b16 %v200
      %v352 = vunpack.c.l.b16 %v201
      %v353 = vpack.c.b16 %v318, %v313
      %v354 = vpack.c.b16 %v319, %v314
      %v355 = vpack.c.b16 %v320, %v315
      %v356 = vpack.c.b16 %v321, %v316
      %v357 = vpack.c.b16 %v322, %v317
      %v358 = vpack.c.b16 %v328, %v323
      %v359 = vpack.c.b16 %v329, %v324
      %v360 = vpack.c.b16 %v330, %v325
      %v361 = vpack.c.b16 %v331, %v326
      %v362 = vpack.c.b16 %v332, %v327
      %v363 = vpack.c.b16 %v338, %v333
      %v364 = vpack.c.b16 %v339, %v334
      %v365 = vpack.c.b16 %v340, %v335
      %v366 = vpack.c.b16 %v341, %v336
      %v367 = vpack.c.b16 %v342, %v337
      %v368 = vpack.c.b16 %v348, %v343
      %v369 = vpack.c.b16 %v349, %v344
      %v370 = vpack.c.b16 %v350, %v345
      %v371 = vpack.c.b16 %v351, %v346
      %v372 = vpack.c.b16 %v352, %v347
      %v473 = vunpack.c.l.b16 %v202
      %v474 = vunpack.c.l.b16 %v203
      %v475 = vunpack.c.l.b16 %v204
      %v476 = vunpack.c.l.b16 %v205
      %v477 = vunpack.c.l.b16 %v206
      %v478 = vunpack.c.l.b16 %v207
      %v479 = vunpack.c.l.b16 %v208
      %v480 = vunpack.c.l.b16 %v209
      %v481 = vunpack.c.l.b16 %v210
      %v482 = vunpack.c.l.b16 %v211
      %v483 = vunpack.c.l.b16 %v212
      %v484 = vunpack.c.l.b16 %v213
      %v485 = vunpack.c.l.b16 %v214
      %v486 = vunpack.c.l.b16 %v215
      %v487 = vunpack.c.l.b16 %v216
      %v488 = vunpack.c.l.b16 %v217
      %v489 = vunpack.c.l.b16 %v218
      %v490 = vunpack.c.l.b16 %v219
      %v491 = vunpack.c.l.b16 %v220
      %v492 = vunpack.c.l.b16 %v221
      %v493 = vunpack.c.l.b16 %v222
      %v494 = vunpack.c.l.b16 %v223
      %v495 = vunpack.c.l.b16 %v224
      %v496 = vunpack.c.l.b16 %v225
      %v497 = vunpack.c.l.b16 %v226
      %v498 = vunpack.c.l.b16 %v227
      %v499 = vunpack.c.l.b16 %v228
      %v500 = vunpack.c.l.b16 %v229
      %v501 = vunpack.c.l.b16 %v230
      %v502 = vunpack.c.l.b16 %v231
      %v503 = vunpack.c.l.b16 %v232
      %v504 = vunpack.c.l.b16 %v233
      %v505 = vunpack.c.l.b16 %v234
      %v506 = vunpack.c.l.b16 %v235
      %v507 = vunpack.c.l.b16 %v236
      %v508 = vunpack.c.l.b16 %v237
      %v509 = vunpack.c.l.b16 %v238
      %v510 = vunpack.c.l.b16 %v239
      %v511 = vunpack.c.l.b16 %v240
      %v512 = vunpack.c.l.b16 %v241
      %v513 = vunpack.c.l.b16 %v242
      %v514 = vunpack.c.l.b16 %v243
      %v515 = vunpack.c.l.b16 %v244
      %v516 = vunpack.c.l.b16 %v245
      %v517 = vunpack.c.l.b16 %v246
      %v518 = vunpack.c.l.b16 %v247
      %v519 = vunpack.c.l.b16 %v248
      %v520 = vunpack.c.l.b16 %v249
      %v521 = vunpack.c.l.b16 %v250
      %v522 = vunpack.c.l.b16 %v251
      %v523 = vunpack.c.l.b16 %v252
      %v524 = vunpack.c.l.b16 %v253
      %v525 = vunpack.c.l.b16 %v254
      %v526 = vunpack.c.l.b16 %v255
      %v527 = vunpack.c.l.b16 %v256
      %v528 = vunpack.c.l.b16 %v257
      %v529 = vunpack.c.l.b16 %v258
      %v530 = vunpack.c.l.b16 %v259
      %v531 = vunpack.c.l.b16 %v260
      %v532 = vunpack.c.l.b16 %v261
      %v533 = vunpack.c.l.b16 %v262
      %v534 = vunpack.c.l.b16 %v263
      %v535 = vunpack.c.l.b16 %v264
      %v536 = vunpack.c.l.b16 %v265
      %v537 = vunpack.c.l.b16 %v266
      %v538 = vunpack.c.l.b16 %v267
      %v539 = vunpack.c.l.b16 %v268
      %v540 = vunpack.c.l.b16 %v269
      %v541 = vunpack.c.l.b16 %v270
      %v542 = vunpack.c.l.b16 %v271
      %v543 = vunpack.c.l.b16 %v272
      %v544 = vunpack.c.l.b16 %v273
      %v545 = vunpack.c.l.b16 %v274
      %v546 = vunpack.c.l.b16 %v275
      %v547 = vunpack.c.l.b16 %v276
      %v548 = vunpack.c.l.b16 %v277
      %v549 = vunpack.c.l.b16 %v278
      %v550 = vunpack.c.l.b16 %v279
      %v551 = vunpack.c.l.b16 %v280
      %v552 = vunpack.c.l.b16 %v281
      %v553 = vpack.c.b16 %v474, %v473
      %v554 = vpack.c.b16 %v476, %v475
      %v555 = vpack.c.b16 %v478, %v477
      %v556 = vpack.c.b16 %v480, %v479
      %v557 = vpack.c.b16 %v482, %v481
      %v558 = vpack.c.b16 %v484, %v483
      %v559 = vpack.c.b16 %v486, %v485
      %v560 = vpack.c.b16 %v488, %v487
      %v561 = vpack.c.b16 %v490, %v489
      %v562 = vpack.c.b16 %v492, %v491
      %v563 = vpack.c.b16 %v494, %v493
      %v564 = vpack.c.b16 %v496, %v495
      %v565 = vpack.c.b16 %v498, %v497
      %v566 = vpack.c.b16 %v500, %v499
      %v567 = vpack.c.b16 %v502, %v501
      %v568 = vpack.c.b16 %v504, %v503
      %v569 = vpack.c.b16 %v506, %v505
      %v570 = vpack.c.b16 %v508, %v507
      %v571 = vpack.c.b16 %v510, %v509
      %v572 = vpack.c.b16 %v512, %v511
      %v573 = vpack.c.b16 %v514, %v513
      %v574 = vpack.c.b16 %v516, %v515
      %v575 = vpack.c.b16 %v518, %v517
      %v576 = vpack.c.b16 %v520, %v519
      %v577 = vpack.c.b16 %v522, %v521
      %v578 = vpack.c.b16 %v524, %v523
      %v579 = vpack.c.b16 %v526, %v525
      %v580 = vpack.c.b16 %v528, %v527
      %v581 = vpack.c.b16 %v530, %v529
      %v582 = vpack.c.b16 %v532, %v531
      %v583 = vpack.c.b16 %v534, %v533
      %v584 = vpack.c.b16 %v536, %v535
      %v585 = vpack.c.b16 %v538, %v537
      %v586 = vpack.c.b16 %v540, %v539
      %v587 = vpack.c.b16 %v542, %v541
      %v588 = vpack.c.b16 %v544, %v543
      %v589 = vpack.c.b16 %v546, %v545
      %v590 = vpack.c.b16 %v548, %v547
      %v591 = vpack.c.b16 %v550, %v549
      %v592 = vpack.c.b16 %v552, %v551
      %633 = vmatprep.subr.bf16.mxu0 0
      %634 = vmatpush1.bf16.msra.mxu0 %v560
      %635 = vmatprep.subr.bf16.mxu0 0
      %636 = vmatpush1.bf16.msra.mxu0 %v559
      %637 = vmatprep.subr.bf16.mxu0 0
      %638 = vmatpush1.bf16.msra.mxu0 %v558
      %639 = vmatprep.subr.bf16.mxu0 0
      %640 = vmatpush1.bf16.msra.mxu0 %v557
      %641 = vmatprep.subr.bf16.mxu0 0
      %642 = vmatpush1.bf16.msra.mxu0 %v556
      %643 = vmatprep.subr.bf16.mxu0 0
      %644 = vmatpush1.bf16.msra.mxu0 %v555
      %645 = vmatprep.subr.bf16.mxu0 0
      %646 = vmatpush1.bf16.msra.mxu0 %v554
      %647 = vmatprep.subr.bf16.mxu0 0
      %648 = vmatpush1.bf16.msra.mxu0 %v553
      %649 = vmatprep.subr.bf16.mxu0 0
      %650 = vmatpush2.bf16.msra.mxu0 %v568
      %651 = vmatprep.subr.bf16.mxu0 0
      %652 = vmatpush2.bf16.msra.mxu0 %v567
      %653 = vmatprep.subr.bf16.mxu0 0
      %654 = vmatpush2.bf16.msra.mxu0 %v566
      %655 = vmatprep.subr.bf16.mxu0 0
      %656 = vmatpush2.bf16.msra.mxu0 %v565
      %657 = vmatprep.subr.bf16.mxu0 0
      %658 = vmatpush2.bf16.msra.mxu0 %v564
      %659 = vmatprep.subr.bf16.mxu0 0
      %660 = vmatpush2.bf16.msra.mxu0 %v563
      %661 = vmatprep.subr.bf16.mxu0 0
      %662 = vmatpush2.bf16.msra.mxu0 %v562
      %663 = vmatprep.subr.bf16.mxu0 0
      %664 = vmatpush2.bf16.msra.mxu0 %v561
      %665 = vmatprep.mubr.bf16.mxu0 %v354
      %666 = vmatmul.mubr.bf16.gmra.mxu0 %v353
      %v667 = vpop.f32.mrf.mxu0
      %v668 = vadd.f32 %v287, %v667
      %v669 = vpop.f32.mrf.mxu0
      %v670 = vpop.f32.mrf.mxu0
      %v671 = vadd.f32 %v287, %v670
      %v672 = vpop.f32.mrf.mxu0
      %673 = vmatprep.mubr.bf16.mxu0 %v359
      %674 = vmatmul.mubr.bf16.gmra.mxu0 %v358
      %v675 = vpop.f32.mrf.mxu0
      %v676 = vadd.f32 %v287, %v675
      %v677 = vpop.f32.mrf.mxu0
      %v678 = vpop.f32.mrf.mxu0
      %v679 = vadd.f32 %v287, %v678
      %v680 = vpop.f32.mrf.mxu0
      %681 = vmatprep.mubr.bf16.mxu0 %v364
      %682 = vmatmul.mubr.bf16.gmra.mxu0 %v363
      %v683 = vpop.f32.mrf.mxu0
      %v684 = vadd.f32 %v287, %v683
      %v685 = vpop.f32.mrf.mxu0
      %v686 = vpop.f32.mrf.mxu0
      %v687 = vadd.f32 %v287, %v686
      %v688 = vpop.f32.mrf.mxu0
      %689 = vmatprep.mubr.bf16.mxu0 %v369
      %690 = vmatmul.mubr.bf16.gmra.mxu0 %v368
      %v691 = vpop.f32.mrf.mxu0
      %v692 = vadd.f32 %v287, %v691
      %v693 = vpop.f32.mrf.mxu0
      %v694 = vpop.f32.mrf.mxu0
      %v695 = vadd.f32 %v287, %v694
      %v696 = vpop.f32.mrf.mxu0
      %697 = vdwg.mxu0
      %698 = vmatprep.subr.bf16.mxu0 0
      %699 = vmatpush1.bf16.msra.mxu0 %v576
      %700 = vmatprep.subr.bf16.mxu0 0
      %701 = vmatpush1.bf16.msra.mxu0 %v575
      %702 = vmatprep.subr.bf16.mxu0 0
      %703 = vmatpush1.bf16.msra.mxu0 %v574
      %704 = vmatprep.subr.bf16.mxu0 0
      %705 = vmatpush1.bf16.msra.mxu0 %v573
      %706 = vmatprep.subr.bf16.mxu0 0
      %707 = vmatpush1.bf16.msra.mxu0 %v572
      %708 = vmatprep.subr.bf16.mxu0 0
      %709 = vmatpush1.bf16.msra.mxu0 %v571
      %710 = vmatprep.subr.bf16.mxu0 0
      %711 = vmatpush1.bf16.msra.mxu0 %v570
      %712 = vmatprep.subr.bf16.mxu0 0
      %713 = vmatpush1.bf16.msra.mxu0 %v569
      %714 = vmatprep.subr.bf16.mxu0 0
      %715 = vmatpush2.bf16.msra.mxu0 %v584
      %716 = vmatprep.subr.bf16.mxu0 0
      %717 = vmatpush2.bf16.msra.mxu0 %v583
      %718 = vmatprep.subr.bf16.mxu0 0
      %719 = vmatpush2.bf16.msra.mxu0 %v582
      %720 = vmatprep.subr.bf16.mxu0 0
      %721 = vmatpush2.bf16.msra.mxu0 %v581
      %722 = vmatprep.subr.bf16.mxu0 0
      %723 = vmatpush2.bf16.msra.mxu0 %v580
      %724 = vmatprep.subr.bf16.mxu0 0
      %725 = vmatpush2.bf16.msra.mxu0 %v579
      %726 = vmatprep.subr.bf16.mxu0 0
      %727 = vmatpush2.bf16.msra.mxu0 %v578
      %728 = vmatprep.subr.bf16.mxu0 0
      %729 = vmatpush2.bf16.msra.mxu0 %v577
      %730 = vmatprep.mubr.bf16.mxu0 %v356
      %731 = vmatmul.mubr.bf16.gmra.mxu0 %v355
      %v732 = vpop.f32.mrf.mxu0
      %v733 = vadd.f32 %v668, %v732
      %v734 = vpop.f32.mrf.mxu0
      %v735 = vpop.f32.mrf.mxu0
      %v736 = vadd.f32 %v671, %v735
      %v737 = vpop.f32.mrf.mxu0
      %738 = vmatprep.mubr.bf16.mxu0 %v361
      %739 = vmatmul.mubr.bf16.gmra.mxu0 %v360
      %v740 = vpop.f32.mrf.mxu0
      %v741 = vadd.f32 %v676, %v740
      %v742 = vpop.f32.mrf.mxu0
      %v743 = vpop.f32.mrf.mxu0
      %v744 = vadd.f32 %v679, %v743
      %v745 = vpop.f32.mrf.mxu0
      %746 = vmatprep.mubr.bf16.mxu0 %v366
      %747 = vmatmul.mubr.bf16.gmra.mxu0 %v365
      %v748 = vpop.f32.mrf.mxu0
      %v749 = vadd.f32 %v684, %v748
      %v750 = vpop.f32.mrf.mxu0
      %v751 = vpop.f32.mrf.mxu0
      %v752 = vadd.f32 %v687, %v751
      %v753 = vpop.f32.mrf.mxu0
      %754 = vmatprep.mubr.bf16.mxu0 %v371
      %755 = vmatmul.mubr.bf16.gmra.mxu0 %v370
      %v756 = vpop.f32.mrf.mxu0
      %v757 = vadd.f32 %v692, %v756
      %v758 = vpop.f32.mrf.mxu0
      %v759 = vpop.f32.mrf.mxu0
      %v760 = vadd.f32 %v695, %v759
      %v761 = vpop.f32.mrf.mxu0
      %762 = vdwg.mxu0
      %763 = vmatprep.subr.bf16.mxu0 0
      %764 = vmatpush1.bf16.msra.mxu0 %v592
      %765 = vmatprep.subr.bf16.mxu0 0
      %766 = vmatpush1.bf16.msra.mxu0 %v591
      %767 = vmatprep.subr.bf16.mxu0 0
      %768 = vmatpush1.bf16.msra.mxu0 %v590
      %769 = vmatprep.subr.bf16.mxu0 0
      %770 = vmatpush1.bf16.msra.mxu0 %v589
      %771 = vmatprep.subr.bf16.mxu0 0
      %772 = vmatpush1.bf16.msra.mxu0 %v588
      %773 = vmatprep.subr.bf16.mxu0 0
      %774 = vmatpush1.bf16.msra.mxu0 %v587
      %775 = vmatprep.subr.bf16.mxu0 0
      %776 = vmatpush1.bf16.msra.mxu0 %v586
      %777 = vmatprep.subr.bf16.mxu0 0
      %778 = vmatpush1.bf16.msra.mxu0 %v585
      %779 = vmatprep.subr.bf16.mxu0 0
      %780 = vmatpush2.bf16.msra.mxu0 0
      %781 = vmatprep.subr.bf16.mxu0 0
      %782 = vmatpush2.bf16.msra.mxu0 0
      %783 = vmatprep.subr.bf16.mxu0 0
      %784 = vmatpush2.bf16.msra.mxu0 0
      %785 = vmatprep.subr.bf16.mxu0 0
      %786 = vmatpush2.bf16.msra.mxu0 0
      %787 = vmatprep.subr.bf16.mxu0 0
      %788 = vmatpush2.bf16.msra.mxu0 0
      %789 = vmatprep.subr.bf16.mxu0 0
      %790 = vmatpush2.bf16.msra.mxu0 0
      %791 = vmatprep.subr.bf16.mxu0 0
      %792 = vmatpush2.bf16.msra.mxu0 0
      %793 = vmatprep.subr.bf16.mxu0 0
      %794 = vmatpush2.bf16.msra.mxu0 0
      %795 = vmatprep.mubr.bf16.mxu0 0
      %796 = vmatmul.mubr.bf16.gmra.mxu0 %v357
      %v797 = vpop.f32.mrf.mxu0
      %v798 = vadd.f32 %v733, %v797
      %v799 = vpop.f32.mrf.mxu0
      %v800 = vpop.f32.mrf.mxu0
      %v801 = vadd.f32 %v736, %v800
      %v802 = vpop.f32.mrf.mxu0
      %803 = vmatprep.mubr.bf16.mxu0 0
      %804 = vmatmul.mubr.bf16.gmra.mxu0 %v362
      %v805 = vpop.f32.mrf.mxu0
      %v806 = vadd.f32 %v741, %v805
      %v807 = vpop.f32.mrf.mxu0
      %v808 = vpop.f32.mrf.mxu0
      %v809 = vadd.f32 %v744, %v808
      %v810 = vpop.f32.mrf.mxu0
      %811 = vmatprep.mubr.bf16.mxu0 0
      %812 = vmatmul.mubr.bf16.gmra.mxu0 %v367
      %v813 = vpop.f32.mrf.mxu0
      %v814 = vadd.f32 %v749, %v813
      %v815 = vpop.f32.mrf.mxu0
      %v816 = vpop.f32.mrf.mxu0
      %v817 = vadd.f32 %v752, %v816
      %v818 = vpop.f32.mrf.mxu0
      %819 = vmatprep.mubr.bf16.mxu0 0
      %820 = vmatmul.mubr.bf16.gmra.mxu0 %v372
      %v821 = vpop.f32.mrf.mxu0
      %v822 = vadd.f32 %v757, %v821
      %v823 = vpop.f32.mrf.mxu0
      %v824 = vpop.f32.mrf.mxu0
      %v825 = vadd.f32 %v760, %v824
      %v826 = vpop.f32.mrf.mxu0
      %827 = vdwg.mxu0
      %v828 = vmax.f32 %v798, 0.0
      %v829 = vmax.f32 %v801, 0.0
      %v830 = vmax.f32 %v806, 0.0
      %v831 = vmax.f32 %v809, 0.0
      %v832 = vmax.f32 %v814, 0.0
      %v833 = vmax.f32 %v817, 0.0
      %v834 = vmax.f32 %v822, 0.0
      %v835 = vmax.f32 %v825, 0.0
      %v836 = vpack.c.bf16 %v829, %v828
      %v837 = vpack.c.bf16 %v831, %v830
      %v838 = vpack.c.bf16 %v833, %v832
      %v839 = vpack.c.bf16 %v835, %v834
      %v844 = vunpack.c.l.b16 %v836
      %v845 = vunpack.c.h.b16 %v836
      %v846 = vunpack.c.l.b16 %v837
      %v847 = vunpack.c.h.b16 %v837
      %v848 = vunpack.c.l.b16 %v838
      %v849 = vunpack.c.h.b16 %v838
      %v850 = vunpack.c.l.b16 %v839
      %v851 = vunpack.c.h.b16 %v839
      %v852 = vpack.c.b16 %v844, %v844
      %v853 = vpack.c.b16 %v845, %v845
      %v854 = vpack.c.b16 %v846, %v846
      %v855 = vpack.c.b16 %v847, %v847
      %v856 = vpack.c.b16 %v848, %v848
      %v857 = vpack.c.b16 %v849, %v849
      %v858 = vpack.c.b16 %v850, %v850
      %v859 = vpack.c.b16 %v851, %v851
      %868 = vst [vmem:[%s175] sm:$0xf] %v852
      %869 = vst [vmem:[%s175 + $0x4] sm:$0xf] %v853
      %870 = vst [vmem:[%s175 + $0x8] sm:$0xf] %v854
      %871 = vst [vmem:[%s175 + $0xc] sm:$0xf] %v855
      %872 = vst [vmem:[%s175 + $0x10] sm:$0xf] %v856
      %873 = vst [vmem:[%s175 + $0x14] sm:$0xf] %v857
      %874 = vst [vmem:[%s175 + $0x18] sm:$0xf] %v858
      %875 = vst [vmem:[%s175 + $0x1c] sm:$0xf] %v859
      %s876 = smul.u32 8, %s14
      %p877 = scmp.lt.s32.totalorder %s876, 15
      %s878 = scalar_select %p877, %s876, 15
      %s879 = smul.addr %s878, 4
      %s880 = scalar_lea.vmem %s3, %s879
      // Predicated region
      $region33: #{_qnet_forward.6} parent=31 // pred_check
        %p881 = pneg %p100
      $region34: #{_qnet_forward.6} parent=31 // pred_check_branch
        %883 = sbr.rel (%p881) target = $region36
      $region35: #{_qnet_forward.6} parent=31 // pred_region
        %s884 = smul.u32 8, %s14
      $region36: #{_qnet_forward.6} parent=31 // pred_fallthru
        _
    $region32: #{_qnet_forward.6} parent=5 // pred_fallthru
      _
    %p885 = scmp.le.s32.totalorder 2, %s9
    // Predicated region
    $region37: #{_qnet_forward.6} parent=5 // pred_check
      %p886 = pneg %p885
    $region38: #{_qnet_forward.6} parent=5 // pred_check_branch
      %888 = sbr.rel (%p886) target = $region40
    $region39: #{_qnet_forward.6} parent=5 // pred_region
      %s889 = ssub.s32 %s9, 2
      // Predicated region
      $region41: #{_qnet_forward.6} parent=39 // pred_check
        %p890 = pneg %p106
      $region42: #{_qnet_forward.6} parent=39 // pred_check_branch
        %892 = sbr.rel (%p890) target = $region44
      $region43: #{_qnet_forward.6} parent=39 // pred_region
        %s893 = smul.u32 8, %s15
        %p894 = scmp.lt.s32.totalorder %s893, 15
        %s895 = scalar_select %p894, %s893, 15
        %s896 = smul.addr %s895, 4
        %s897 = scalar_lea.vmem %s3, %s896
      $region44: #{_qnet_forward.6} parent=39 // pred_fallthru
        _
    $region40: #{_qnet_forward.6} parent=5 // pred_fallthru
      _
  $region6: #{_qnet_forward.6} parent=0 // loop_footer
    %s13 = sadd.s32 1, %s9
  $region7: #{_qnet_forward.6} parent=0 // loop_footer_branch
    %8 = sbr.rel target = $region3
  $region8: #{_qnet_forward.6} parent=0 // loop_exit
    _

// kernel: _qnet_forward.7
$region0: #{_qnet_forward.7}
  #allocation0 [shape = 'u32[]', space=smem, size = 0x4, offset = 0x4, fixed_abs, tag = 'smem constant byte address 0x4 - core index']
  #allocation1 [shape = 'u32[144,128]{1,0:T(1,128)}', space=vmem, size = 0x12000, scoped, tag = 'internal scratch']
  %s0 = inlined_call_operand.vmem [shape: bf16[16,3200], index: 0, kind: input, shape index: {}]
  %s1 = inlined_call_operand.vmem [shape: bf16[3200,512], index: 1, kind: input, shape index: {}]
  %s2 = inlined_call_operand.vmem [shape: f32[1,512], index: 2, kind: input, shape index: {}]
  %s3 = inlined_call_operand.vmem [shape: bf16[512,128], index: 3, kind: input, shape index: {}]
  %s4 = inlined_call_operand.vmem [shape: f32[1,128], index: 4, kind: input, shape index: {}]
  %s5 = inlined_call_operand.vmem [shape: f32[16,128], index: 5, kind: output, shape index: {}]
  %s6 = sld [smem:[#allocation0]]
  $region30: #{_qnet_forward.7} parent=0
    _
  %s8 = ssub.s32 1, %s6
  %s9 = scalar_select 0, %s8, %s6
  // Predicated region
  $region2: #{_qnet_forward.7} parent=0 // pred_check
    _
  $region3: #{_qnet_forward.7} parent=0 // pred_check_branch
    %11 = sbr.rel (0) target = $region5
  $region4: #{_qnet_forward.7} parent=0 // pred_region
    _
  $region5: #{_qnet_forward.7} parent=0 // pred_fallthru
    _
  // Predicated region
  $region6: #{_qnet_forward.7} parent=0 // pred_check
    _
  $region7: #{_qnet_forward.7} parent=0 // pred_check_branch
    %13 = sbr.rel (0) target = $region9
  $region8: #{_qnet_forward.7} parent=0 // pred_region
    _
  $region9: #{_qnet_forward.7} parent=0 // pred_fallthru
    _
  // Predicated region
  $region10: #{_qnet_forward.7} parent=0 // pred_check
    _
  $region11: #{_qnet_forward.7} parent=0 // pred_check_branch
    %15 = sbr.rel (0) target = $region13
  $region12: #{_qnet_forward.7} parent=0 // pred_region
    _
  $region13: #{_qnet_forward.7} parent=0 // pred_fallthru
    _
  // Predicated region
  $region14: #{_qnet_forward.7} parent=0 // pred_check
    _
  $region15: #{_qnet_forward.7} parent=0 // pred_check_branch
    %17 = sbr.rel (0) target = $region17
  $region16: #{_qnet_forward.7} parent=0 // pred_region
    _
  $region17: #{_qnet_forward.7} parent=0 // pred_fallthru
    _
  // Predicated region
  $region18: #{_qnet_forward.7} parent=0 // pred_check
    _
  $region19: #{_qnet_forward.7} parent=0 // pred_check_branch
    %19 = sbr.rel (0) target = $region21
  $region20: #{_qnet_forward.7} parent=0 // pred_region
    _
  $region21: #{_qnet_forward.7} parent=0 // pred_fallthru
    _
  %v21 = vld [vmem:[%s0] sm:$0xff]
  %v22 = vld [vmem:[%s0 + $0x8] sm:$0xff]
  %v23 = vld [vmem:[%s0 + $0x10] sm:$0xff]
  %v24 = vld [vmem:[%s0 + $0x18] sm:$0xff]
  %v25 = vld [vmem:[%s0 + $0x20] sm:$0xff]
  %v26 = vld [vmem:[%s0 + $0x28] sm:$0xff]
  %v27 = vld [vmem:[%s0 + $0x30] sm:$0xff]
  %v28 = vld [vmem:[%s0 + $0x38] sm:$0xff]
  %v29 = vld [vmem:[%s0 + $0x40] sm:$0xff]
  %v30 = vld [vmem:[%s0 + $0x48] sm:$0xff]
  %v31 = vld [vmem:[%s0 + $0x50] sm:$0xff]
  %v32 = vld [vmem:[%s0 + $0x58] sm:$0xff]
  %v33 = vld [vmem:[%s0 + $0x60] sm:$0xf]
  %v34 = vld [vmem:[%s0 + $0x64] sm:$0xff]
  %v35 = vld [vmem:[%s0 + $0x6c] sm:$0xff]
  %v36 = vld [vmem:[%s0 + $0x74] sm:$0xff]
  %v37 = vld [vmem:[%s0 + $0x7c] sm:$0xff]
  %v38 = vld [vmem:[%s0 + $0x84] sm:$0xff]
  %v39 = vld [vmem:[%s0 + $0x8c] sm:$0xff]
  %v40 = vld [vmem:[%s0 + $0x94] sm:$0xff]
  %v41 = vld [vmem:[%s0 + $0x9c] sm:$0xff]
  %v42 = vld [vmem:[%s0 + $0xa4] sm:$0xff]
  %v43 = vld [vmem:[%s0 + $0xac] sm:$0xff]
  %v44 = vld [vmem:[%s0 + $0xb4] sm:$0xff]
  %v45 = vld [vmem:[%s0 + $0xbc] sm:$0xff]
  %v46 = vld [vmem:[%s0 + $0xc4] sm:$0xf]
  %v47 = vld [vmem:[%s1] sm:$0xff]
  %v48 = vld [vmem:[%s1 + $0x8] sm:$0xff]
  %v49 = vld [vmem:[%s1 + $0x10] sm:$0xff]
  %v50 = vld [vmem:[%s1 + $0x18] sm:$0xff]
  %v51 = vld [vmem:[%s1 + $0x20] sm:$0xff]
  %v52 = vld [vmem:[%s1 + $0x28] sm:$0xff]
  %v53 = vld [vmem:[%s1 + $0x30] sm:$0xff]
  %v54 = vld [vmem:[%s1 + $0x38] sm:$0xff]
  %v55 = vld [vmem:[%s1 + $0x40] sm:$0xff]
  %v56 = vld [vmem:[%s1 + $0x48] sm:$0xff]
  %v57 = vld [vmem:[%s1 + $0x50] sm:$0xff]
  %v58 = vld [vmem:[%s1 + $0x58] sm:$0xff]
  %v59 = vld [vmem:[%s1 + $0x60] sm:$0xff]
  %v60 = vld [vmem:[%s1 + $0x68] sm:$0xff]
  %v61 = vld [vmem:[%s1 + $0x70] sm:$0xff]
  %v62 = vld [vmem:[%s1 + $0x78] sm:$0xff]
  %v63 = vld [vmem:[%s1 + $0x80] sm:$0xff]
  %v64 = vld [vmem:[%s1 + $0x88] sm:$0xff]
  %v65 = vld [vmem:[%s1 + $0x90] sm:$0xff]
  %v66 = vld [vmem:[%s1 + $0x98] sm:$0xff]
  %v67 = vld [vmem:[%s1 + $0xa0] sm:$0xff]
  %v68 = vld [vmem:[%s1 + $0xa8] sm:$0xff]
  %v69 = vld [vmem:[%s1 + $0xb0] sm:$0xff]
  %v70 = vld [vmem:[%s1 + $0xb8] sm:$0xff]
  %v71 = vld [vmem:[%s1 + $0xc0] sm:$0xff]
  %v72 = vld [vmem:[%s1 + $0xc8] sm:$0xff]
  %v73 = vld [vmem:[%s1 + $0xd0] sm:$0xff]
  %v74 = vld [vmem:[%s1 + $0xd8] sm:$0xff]
  %v75 = vld [vmem:[%s1 + $0xe0] sm:$0xff]
  %v76 = vld [vmem:[%s1 + $0xe8] sm:$0xff]
  %v77 = vld [vmem:[%s1 + $0xf0] sm:$0xff]
  %v78 = vld [vmem:[%s1 + $0xf8] sm:$0xff]
  %v79 = vld [vmem:[%s1 + $0x100] sm:$0xff]
  %v80 = vld [vmem:[%s1 + $0x108] sm:$0xff]
  %v81 = vld [vmem:[%s1 + $0x110] sm:$0xff]
  %v82 = vld [vmem:[%s1 + $0x118] sm:$0xff]
  %v83 = vld [vmem:[%s1 + $0x120] sm:$0xff]
  %v84 = vld [vmem:[%s1 + $0x128] sm:$0xff]
  %v85 = vld [vmem:[%s1 + $0x130] sm:$0xff]
  %v86 = vld [vmem:[%s1 + $0x138] sm:$0xff]
  %v87 = vld [vmem:[%s1 + $0x140] sm:$0xff]
  %v88 = vld [vmem:[%s1 + $0x148] sm:$0xff]
  %v89 = vld [vmem:[%s1 + $0x150] sm:$0xff]
  %v90 = vld [vmem:[%s1 + $0x158] sm:$0xff]
  %v91 = vld [vmem:[%s1 + $0x160] sm:$0xff]
  %v92 = vld [vmem:[%s1 + $0x168] sm:$0xff]
  %v93 = vld [vmem:[%s1 + $0x170] sm:$0xff]
  %v94 = vld [vmem:[%s1 + $0x178] sm:$0xff]
  %v95 = vld [vmem:[%s1 + $0x180] sm:$0xff]
  %v96 = vld [vmem:[%s1 + $0x188] sm:$0xff]
  %v97 = vld [vmem:[%s1 + $0x190] sm:$0xff]
  %v98 = vld [vmem:[%s1 + $0x198] sm:$0xff]
  %v99 = vld [vmem:[%s1 + $0x1a0] sm:$0xff]
  %v100 = vld [vmem:[%s1 + $0x1a8] sm:$0xff]
  %v101 = vld [vmem:[%s1 + $0x1b0] sm:$0xff]
  %v102 = vld [vmem:[%s1 + $0x1b8] sm:$0xff]
  %v103 = vld [vmem:[%s1 + $0x1c0] sm:$0xff]
  %v104 = vld [vmem:[%s1 + $0x1c8] sm:$0xff]
  %v105 = vld [vmem:[%s1 + $0x1d0] sm:$0xff]
  %v106 = vld [vmem:[%s1 + $0x1d8] sm:$0xff]
  %v107 = vld [vmem:[%s1 + $0x1e0] sm:$0xff]
  %v108 = vld [vmem:[%s1 + $0x1e8] sm:$0xff]
  %v109 = vld [vmem:[%s1 + $0x1f0] sm:$0xff]
  %v110 = vld [vmem:[%s1 + $0x1f8] sm:$0xff]
  %v111 = vld [vmem:[%s1 + $0x200] sm:$0xff]
  %v112 = vld [vmem:[%s1 + $0x208] sm:$0xff]
  %v113 = vld [vmem:[%s1 + $0x210] sm:$0xff]
  %v114 = vld [vmem:[%s1 + $0x218] sm:$0xff]
  %v115 = vld [vmem:[%s1 + $0x220] sm:$0xff]
  %v116 = vld [vmem:[%s1 + $0x228] sm:$0xff]
  %v117 = vld [vmem:[%s1 + $0x230] sm:$0xff]
  %v118 = vld [vmem:[%s1 + $0x238] sm:$0xff]
  %v119 = vld [vmem:[%s1 + $0x240] sm:$0xff]
  %v120 = vld [vmem:[%s1 + $0x248] sm:$0xff]
  %v121 = vld [vmem:[%s1 + $0x250] sm:$0xff]
  %v122 = vld [vmem:[%s1 + $0x258] sm:$0xff]
  %v123 = vld [vmem:[%s1 + $0x260] sm:$0xff]
  %v124 = vld [vmem:[%s1 + $0x268] sm:$0xff]
  %v125 = vld [vmem:[%s1 + $0x270] sm:$0xff]
  %v126 = vld [vmem:[%s1 + $0x278] sm:$0xff]
  %v127 = vld [vmem:[%s1 + $0x280] sm:$0xff]
  %v128 = vld [vmem:[%s1 + $0x288] sm:$0xff]
  %v129 = vld [vmem:[%s1 + $0x290] sm:$0xff]
  %v130 = vld [vmem:[%s1 + $0x298] sm:$0xff]
  %v131 = vld [vmem:[%s1 + $0x2a0] sm:$0xff]
  %v132 = vld [vmem:[%s1 + $0x2a8] sm:$0xff]
  %v133 = vld [vmem:[%s1 + $0x2b0] sm:$0xff]
  %v134 = vld [vmem:[%s1 + $0x2b8] sm:$0xff]
  %v135 = vld [vmem:[%s1 + $0x2c0] sm:$0xff]
  %v136 = vld [vmem:[%s1 + $0x2c8] sm:$0xff]
  %v137 = vld [vmem:[%s1 + $0x2d0] sm:$0xff]
  %v138 = vld [vmem:[%s1 + $0x2d8] sm:$0xff]
  %v139 = vld [vmem:[%s1 + $0x2e0] sm:$0xff]
  %v140 = vld [vmem:[%s1 + $0x2e8] sm:$0xff]
  %v141 = vld [vmem:[%s1 + $0x2f0] sm:$0xff]
  %v142 = vld [vmem:[%s1 + $0x2f8] sm:$0xff]
  %v143 = vld [vmem:[%s1 + $0x300] sm:$0xff]
  %v144 = vld [vmem:[%s1 + $0x308] sm:$0xff]
  %v145 = vld [vmem:[%s1 + $0x310] sm:$0xff]
  %v146 = vld [vmem:[%s1 + $0x318] sm:$0xff]
  %v147 = vld [vmem:[%s1 + $0x320] sm:$0xff]
  %v148 = vld [vmem:[%s1 + $0x328] sm:$0xff]
  %v149 = vld [vmem:[%s1 + $0x330] sm:$0xff]
  %v150 = vld [vmem:[%s1 + $0x338] sm:$0xff]
  %v151 = vld [vmem:[%s1 + $0x340] sm:$0xff]
  %v152 = vld [vmem:[%s1 + $0x348] sm:$0xff]
  %v153 = vld [vmem:[%s1 + $0x350] sm:$0xff]
  %v154 = vld [vmem:[%s1 + $0x358] sm:$0xff]
  %v155 = vld [vmem:[%s1 + $0x360] sm:$0xff]
  %v156 = vld [vmem:[%s1 + $0x368] sm:$0xff]
  %v157 = vld [vmem:[%s1 + $0x370] sm:$0xff]
  %v158 = vld [vmem:[%s1 + $0x378] sm:$0xff]
  %v159 = vld [vmem:[%s1 + $0x380] sm:$0xff]
  %v160 = vld [vmem:[%s1 + $0x388] sm:$0xff]
  %v161 = vld [vmem:[%s1 + $0x390] sm:$0xff]
  %v162 = vld [vmem:[%s1 + $0x398] sm:$0xff]
  %v163 = vld [vmem:[%s1 + $0x3a0] sm:$0xff]
  %v164 = vld [vmem:[%s1 + $0x3a8] sm:$0xff]
  %v165 = vld [vmem:[%s1 + $0x3b0] sm:$0xff]
  %v166 = vld [vmem:[%s1 + $0x3b8] sm:$0xff]
  %v167 = vld [vmem:[%s1 + $0x3c0] sm:$0xff]
  %v168 = vld [vmem:[%s1 + $0x3c8] sm:$0xff]
  %v169 = vld [vmem:[%s1 + $0x3d0] sm:$0xff]
  %v170 = vld [vmem:[%s1 + $0x3d8] sm:$0xff]
  %v171 = vld [vmem:[%s1 + $0x3e0] sm:$0xff]
  %v172 = vld [vmem:[%s1 + $0x3e8] sm:$0xff]
  %v173 = vld [vmem:[%s1 + $0x3f0] sm:$0xff]
  %v174 = vld [vmem:[%s1 + $0x3f8] sm:$0xff]
  %v175 = vld [vmem:[%s1 + $0x400] sm:$0xff]
  %v176 = vld [vmem:[%s1 + $0x408] sm:$0xff]
  %v177 = vld [vmem:[%s1 + $0x410] sm:$0xff]
  %v178 = vld [vmem:[%s1 + $0x418] sm:$0xff]
  %v179 = vld [vmem:[%s1 + $0x420] sm:$0xff]
  %v180 = vld [vmem:[%s1 + $0x428] sm:$0xff]
  %v181 = vld [vmem:[%s1 + $0x430] sm:$0xff]
  %v182 = vld [vmem:[%s1 + $0x438] sm:$0xff]
  %v183 = vld [vmem:[%s1 + $0x440] sm:$0xff]
  %v184 = vld [vmem:[%s1 + $0x448] sm:$0xff]
  %v185 = vld [vmem:[%s1 + $0x450] sm:$0xff]
  %v186 = vld [vmem:[%s1 + $0x458] sm:$0xff]
  %v187 = vld [vmem:[%s1 + $0x460] sm:$0xff]
  %v188 = vld [vmem:[%s1 + $0x468] sm:$0xff]
  %v189 = vld [vmem:[%s1 + $0x470] sm:$0xff]
  %v190 = vld [vmem:[%s1 + $0x478] sm:$0xff]
  %v191 = vld [vmem:[%s1 + $0x480] sm:$0xff]
  %v192 = vld [vmem:[%s1 + $0x488] sm:$0xff]
  %v193 = vld [vmem:[%s1 + $0x490] sm:$0xff]
  %v194 = vld [vmem:[%s1 + $0x498] sm:$0xff]
  %v195 = vld [vmem:[%s1 + $0x4a0] sm:$0xff]
  %v196 = vld [vmem:[%s1 + $0x4a8] sm:$0xff]
  %v197 = vld [vmem:[%s1 + $0x4b0] sm:$0xff]
  %v198 = vld [vmem:[%s1 + $0x4b8] sm:$0xff]
  %v199 = vld [vmem:[%s1 + $0x4c0] sm:$0xff]
  %v200 = vld [vmem:[%s1 + $0x4c8] sm:$0xff]
  %v201 = vld [vmem:[%s1 + $0x4d0] sm:$0xff]
  %v202 = vld [vmem:[%s1 + $0x4d8] sm:$0xff]
  %v203 = vld [vmem:[%s1 + $0x4e0] sm:$0xff]
  %v204 = vld [vmem:[%s1 + $0x4e8] sm:$0xff]
  %v205 = vld [vmem:[%s1 + $0x4f0] sm:$0xff]
  %v206 = vld [vmem:[%s1 + $0x4f8] sm:$0xff]
  %v207 = vld [vmem:[%s1 + $0x500] sm:$0xff]
  %v208 = vld [vmem:[%s1 + $0x508] sm:$0xff]
  %v209 = vld [vmem:[%s1 + $0x510] sm:$0xff]
  %v210 = vld [vmem:[%s1 + $0x518] sm:$0xff]
  %v211 = vld [vmem:[%s1 + $0x520] sm:$0xff]
  %v212 = vld [vmem:[%s1 + $0x528] sm:$0xff]
  %v213 = vld [vmem:[%s1 + $0x530] sm:$0xff]
  %v214 = vld [vmem:[%s1 + $0x538] sm:$0xff]
  %v215 = vld [vmem:[%s1 + $0x540] sm:$0xff]
  %v216 = vld [vmem:[%s1 + $0x548] sm:$0xff]
  %v217 = vld [vmem:[%s1 + $0x550] sm:$0xff]
  %v218 = vld [vmem:[%s1 + $0x558] sm:$0xff]
  %v219 = vld [vmem:[%s1 + $0x560] sm:$0xff]
  %v220 = vld [vmem:[%s1 + $0x568] sm:$0xff]
  %v221 = vld [vmem:[%s1 + $0x570] sm:$0xff]
  %v222 = vld [vmem:[%s1 + $0x578] sm:$0xff]
  %v223 = vld [vmem:[%s1 + $0x580] sm:$0xff]
  %v224 = vld [vmem:[%s1 + $0x588] sm:$0xff]
  %v225 = vld [vmem:[%s1 + $0x590] sm:$0xff]
  %v226 = vld [vmem:[%s1 + $0x598] sm:$0xff]
  %v227 = vld [vmem:[%s1 + $0x5a0] sm:$0xff]
  %v228 = vld [vmem:[%s1 + $0x5a8] sm:$0xff]
  %v229 = vld [vmem:[%s1 + $0x5b0] sm:$0xff]
  %v230 = vld [vmem:[%s1 + $0x5b8] sm:$0xff]
  %v231 = vld [vmem:[%s1 + $0x5c0] sm:$0xff]
  %v232 = vld [vmem:[%s1 + $0x5c8] sm:$0xff]
  %v233 = vld [vmem:[%s1 + $0x5d0] sm:$0xff]
  %v234 = vld [vmem:[%s1 + $0x5d8] sm:$0xff]
  %v235 = vld [vmem:[%s1 + $0x5e0] sm:$0xff]
  %v236 = vld [vmem:[%s1 + $0x5e8] sm:$0xff]
  %v237 = vld [vmem:[%s1 + $0x5f0] sm:$0xff]
  %v238 = vld [vmem:[%s1 + $0x5f8] sm:$0xff]
  %v239 = vld [vmem:[%s1 + $0x600] sm:$0xff]
  %v240 = vld [vmem:[%s1 + $0x608] sm:$0xff]
  %v241 = vld [vmem:[%s1 + $0x610] sm:$0xff]
  %v242 = vld [vmem:[%s1 + $0x618] sm:$0xff]
  %v243 = vld [vmem:[%s1 + $0x620] sm:$0xff]
  %v244 = vld [vmem:[%s1 + $0x628] sm:$0xff]
  %v245 = vld [vmem:[%s1 + $0x630] sm:$0xff]
  %v246 = vld [vmem:[%s1 + $0x638] sm:$0xff]
  %v247 = vld [vmem:[%s1 + $0x640] sm:$0xff]
  %v248 = vld [vmem:[%s1 + $0x648] sm:$0xff]
  %v249 = vld [vmem:[%s1 + $0x650] sm:$0xff]
  %v250 = vld [vmem:[%s1 + $0x658] sm:$0xff]
  %v251 = vld [vmem:[%s1 + $0x660] sm:$0xff]
  %v252 = vld [vmem:[%s1 + $0x668] sm:$0xff]
  %v253 = vld [vmem:[%s1 + $0x670] sm:$0xff]
  %v254 = vld [vmem:[%s1 + $0x678] sm:$0xff]
  %v255 = vld [vmem:[%s1 + $0x680] sm:$0xff]
  %v256 = vld [vmem:[%s1 + $0x688] sm:$0xff]
  %v257 = vld [vmem:[%s1 + $0x690] sm:$0xff]
  %v258 = vld [vmem:[%s1 + $0x698] sm:$0xff]
  %v259 = vld [vmem:[%s1 + $0x6a0] sm:$0xff]
  %v260 = vld [vmem:[%s1 + $0x6a8] sm:$0xff]
  %v261 = vld [vmem:[%s1 + $0x6b0] sm:$0xff]
  %v262 = vld [vmem:[%s1 + $0x6b8] sm:$0xff]
  %v263 = vld [vmem:[%s1 + $0x6c0] sm:$0xff]
  %v264 = vld [vmem:[%s1 + $0x6c8] sm:$0xff]
  %v265 = vld [vmem:[%s1 + $0x6d0] sm:$0xff]
  %v266 = vld [vmem:[%s1 + $0x6d8] sm:$0xff]
  %v267 = vld [vmem:[%s1 + $0x6e0] sm:$0xff]
  %v268 = vld [vmem:[%s1 + $0x6e8] sm:$0xff]
  %v269 = vld [vmem:[%s1 + $0x6f0] sm:$0xff]
  %v270 = vld [vmem:[%s1 + $0x6f8] sm:$0xff]
  %v271 = vld [vmem:[%s1 + $0x700] sm:$0xff]
  %v272 = vld [vmem:[%s1 + $0x708] sm:$0xff]
  %v273 = vld [vmem:[%s1 + $0x710] sm:$0xff]
  %v274 = vld [vmem:[%s1 + $0x718] sm:$0xff]
  %v275 = vld [vmem:[%s1 + $0x720] sm:$0xff]
  %v276 = vld [vmem:[%s1 + $0x728] sm:$0xff]
  %v277 = vld [vmem:[%s1 + $0x730] sm:$0xff]
  %v278 = vld [vmem:[%s1 + $0x738] sm:$0xff]
  %v279 = vld [vmem:[%s1 + $0x740] sm:$0xff]
  %v280 = vld [vmem:[%s1 + $0x748] sm:$0xff]
  %v281 = vld [vmem:[%s1 + $0x750] sm:$0xff]
  %v282 = vld [vmem:[%s1 + $0x758] sm:$0xff]
  %v283 = vld [vmem:[%s1 + $0x760] sm:$0xff]
  %v284 = vld [vmem:[%s1 + $0x768] sm:$0xff]
  %v285 = vld [vmem:[%s1 + $0x770] sm:$0xff]
  %v286 = vld [vmem:[%s1 + $0x778] sm:$0xff]
  %v287 = vld [vmem:[%s1 + $0x780] sm:$0xff]
  %v288 = vld [vmem:[%s1 + $0x788] sm:$0xff]
  %v289 = vld [vmem:[%s1 + $0x790] sm:$0xff]
  %v290 = vld [vmem:[%s1 + $0x798] sm:$0xff]
  %v291 = vld [vmem:[%s1 + $0x7a0] sm:$0xff]
  %v292 = vld [vmem:[%s1 + $0x7a8] sm:$0xff]
  %v293 = vld [vmem:[%s1 + $0x7b0] sm:$0xff]
  %v294 = vld [vmem:[%s1 + $0x7b8] sm:$0xff]
  %v295 = vld [vmem:[%s1 + $0x7c0] sm:$0xff]
  %v296 = vld [vmem:[%s1 + $0x7c8] sm:$0xff]
  %v297 = vld [vmem:[%s1 + $0x7d0] sm:$0xff]
  %v298 = vld [vmem:[%s1 + $0x7d8] sm:$0xff]
  %v299 = vld [vmem:[%s1 + $0x7e0] sm:$0xff]
  %v300 = vld [vmem:[%s1 + $0x7e8] sm:$0xff]
  %v301 = vld [vmem:[%s1 + $0x7f0] sm:$0xff]
  %v302 = vld [vmem:[%s1 + $0x7f8] sm:$0xff]
  %v303 = vld [vmem:[%s1 + $0x800] sm:$0xff]
  %v304 = vld [vmem:[%s1 + $0x808] sm:$0xff]
  %v305 = vld [vmem:[%s1 + $0x810] sm:$0xff]
  %v306 = vld [vmem:[%s1 + $0x818] sm:$0xff]
  %v307 = vld [vmem:[%s1 + $0x820] sm:$0xff]
  %v308 = vld [vmem:[%s1 + $0x828] sm:$0xff]
  %v309 = vld [vmem:[%s1 + $0x830] sm:$0xff]
  %v310 = vld [vmem:[%s1 + $0x838] sm:$0xff]
  %v311 = vld [vmem:[%s1 + $0x840] sm:$0xff]
  %v312 = vld [vmem:[%s1 + $0x848] sm:$0xff]
  %v313 = vld [vmem:[%s1 + $0x850] sm:$0xff]
  %v314 = vld [vmem:[%s1 + $0x858] sm:$0xff]
  %v315 = vld [vmem:[%s1 + $0x860] sm:$0xff]
  %v316 = vld [vmem:[%s1 + $0x868] sm:$0xff]
  %v317 = vld [vmem:[%s1 + $0x870] sm:$0xff]
  %v318 = vld [vmem:[%s1 + $0x878] sm:$0xff]
  %v319 = vld [vmem:[%s1 + $0x880] sm:$0xff]
  %v320 = vld [vmem:[%s1 + $0x888] sm:$0xff]
  %v321 = vld [vmem:[%s1 + $0x890] sm:$0xff]
  %v322 = vld [vmem:[%s1 + $0x898] sm:$0xff]
  %v323 = vld [vmem:[%s1 + $0x8a0] sm:$0xff]
  %v324 = vld [vmem:[%s1 + $0x8a8] sm:$0xff]
  %v325 = vld [vmem:[%s1 + $0x8b0] sm:$0xff]
  %v326 = vld [vmem:[%s1 + $0x8b8] sm:$0xff]
  %v327 = vld [vmem:[%s1 + $0x8c0] sm:$0xff]
  %v328 = vld [vmem:[%s1 + $0x8c8] sm:$0xff]
  %v329 = vld [vmem:[%s1 + $0x8d0] sm:$0xff]
  %v330 = vld [vmem:[%s1 + $0x8d8] sm:$0xff]
  %v331 = vld [vmem:[%s1 + $0x8e0] sm:$0xff]
  %v332 = vld [vmem:[%s1 + $0x8e8] sm:$0xff]
  %v333 = vld [vmem:[%s1 + $0x8f0] sm:$0xff]
  %v334 = vld [vmem:[%s1 + $0x8f8] sm:$0xff]
  %v335 = vld [vmem:[%s1 + $0x900] sm:$0xff]
  %v336 = vld [vmem:[%s1 + $0x908] sm:$0xff]
  %v337 = vld [vmem:[%s1 + $0x910] sm:$0xff]
  %v338 = vld [vmem:[%s1 + $0x918] sm:$0xff]
  %v339 = vld [vmem:[%s1 + $0x920] sm:$0xff]
  %v340 = vld [vmem:[%s1 + $0x928] sm:$0xff]
  %v341 = vld [vmem:[%s1 + $0x930] sm:$0xff]
  %v342 = vld [vmem:[%s1 + $0x938] sm:$0xff]
  %v343 = vld [vmem:[%s1 + $0x940] sm:$0xff]
  %v344 = vld [vmem:[%s1 + $0x948] sm:$0xff]
  %v345 = vld [vmem:[%s1 + $0x950] sm:$0xff]
  %v346 = vld [vmem:[%s1 + $0x958] sm:$0xff]
  %v347 = vld [vmem:[%s1 + $0x960] sm:$0xff]
  %v348 = vld [vmem:[%s1 + $0x968] sm:$0xff]
  %v349 = vld [vmem:[%s1 + $0x970] sm:$0xff]
  %v350 = vld [vmem:[%s1 + $0x978] sm:$0xff]
  %v351 = vld [vmem:[%s1 + $0x980] sm:$0xff]
  %v352 = vld [vmem:[%s1 + $0x988] sm:$0xff]
  %v353 = vld [vmem:[%s1 + $0x990] sm:$0xff]
  %v354 = vld [vmem:[%s1 + $0x998] sm:$0xff]
  %v355 = vld [vmem:[%s1 + $0x9a0] sm:$0xff]
  %v356 = vld [vmem:[%s1 + $0x9a8] sm:$0xff]
  %v357 = vld [vmem:[%s1 + $0x9b0] sm:$0xff]
  %v358 = vld [vmem:[%s1 + $0x9b8] sm:$0xff]
  %v359 = vld [vmem:[%s1 + $0x9c0] sm:$0xff]
  %v360 = vld [vmem:[%s1 + $0x9c8] sm:$0xff]
  %v361 = vld [vmem:[%s1 + $0x9d0] sm:$0xff]
  %v362 = vld [vmem:[%s1 + $0x9d8] sm:$0xff]
  %v363 = vld [vmem:[%s1 + $0x9e0] sm:$0xff]
  %v364 = vld [vmem:[%s1 + $0x9e8] sm:$0xff]
  %v365 = vld [vmem:[%s1 + $0x9f0] sm:$0xff]
  %v366 = vld [vmem:[%s1 + $0x9f8] sm:$0xff]
  %v367 = vld [vmem:[%s1 + $0xa00] sm:$0xff]
  %v368 = vld [vmem:[%s1 + $0xa08] sm:$0xff]
  %v369 = vld [vmem:[%s1 + $0xa10] sm:$0xff]
  %v370 = vld [vmem:[%s1 + $0xa18] sm:$0xff]
  %v371 = vld [vmem:[%s1 + $0xa20] sm:$0xff]
  %v372 = vld [vmem:[%s1 + $0xa28] sm:$0xff]
  %v373 = vld [vmem:[%s1 + $0xa30] sm:$0xff]
  %v374 = vld [vmem:[%s1 + $0xa38] sm:$0xff]
  %v375 = vld [vmem:[%s1 + $0xa40] sm:$0xff]
  %v376 = vld [vmem:[%s1 + $0xa48] sm:$0xff]
  %v377 = vld [vmem:[%s1 + $0xa50] sm:$0xff]
  %v378 = vld [vmem:[%s1 + $0xa58] sm:$0xff]
  %v379 = vld [vmem:[%s1 + $0xa60] sm:$0xff]
  %v380 = vld [vmem:[%s1 + $0xa68] sm:$0xff]
  %v381 = vld [vmem:[%s1 + $0xa70] sm:$0xff]
  %v382 = vld [vmem:[%s1 + $0xa78] sm:$0xff]
  %v383 = vld [vmem:[%s1 + $0xa80] sm:$0xff]
  %v384 = vld [vmem:[%s1 + $0xa88] sm:$0xff]
  %v385 = vld [vmem:[%s1 + $0xa90] sm:$0xff]
  %v386 = vld [vmem:[%s1 + $0xa98] sm:$0xff]
  %v387 = vld [vmem:[%s1 + $0xaa0] sm:$0xff]
  %v388 = vld [vmem:[%s1 + $0xaa8] sm:$0xff]
  %v389 = vld [vmem:[%s1 + $0xab0] sm:$0xff]
  %v390 = vld [vmem:[%s1 + $0xab8] sm:$0xff]
  %v391 = vld [vmem:[%s1 + $0xac0] sm:$0xff]
  %v392 = vld [vmem:[%s1 + $0xac8] sm:$0xff]
  %v393 = vld [vmem:[%s1 + $0xad0] sm:$0xff]
  %v394 = vld [vmem:[%s1 + $0xad8] sm:$0xff]
  %v395 = vld [vmem:[%s1 + $0xae0] sm:$0xff]
  %v396 = vld [vmem:[%s1 + $0xae8] sm:$0xff]
  %v397 = vld [vmem:[%s1 + $0xaf0] sm:$0xff]
  %v398 = vld [vmem:[%s1 + $0xaf8] sm:$0xff]
  %v399 = vld [vmem:[%s1 + $0xb00] sm:$0xff]
  %v400 = vld [vmem:[%s1 + $0xb08] sm:$0xff]
  %v401 = vld [vmem:[%s1 + $0xb10] sm:$0xff]
  %v402 = vld [vmem:[%s1 + $0xb18] sm:$0xff]
  %v403 = vld [vmem:[%s1 + $0xb20] sm:$0xff]
  %v404 = vld [vmem:[%s1 + $0xb28] sm:$0xff]
  %v405 = vld [vmem:[%s1 + $0xb30] sm:$0xff]
  %v406 = vld [vmem:[%s1 + $0xb38] sm:$0xff]
  %v407 = vld [vmem:[%s1 + $0xb40] sm:$0xff]
  %v408 = vld [vmem:[%s1 + $0xb48] sm:$0xff]
  %v409 = vld [vmem:[%s1 + $0xb50] sm:$0xff]
  %v410 = vld [vmem:[%s1 + $0xb58] sm:$0xff]
  %v411 = vld [vmem:[%s1 + $0xb60] sm:$0xff]
  %v412 = vld [vmem:[%s1 + $0xb68] sm:$0xff]
  %v413 = vld [vmem:[%s1 + $0xb70] sm:$0xff]
  %v414 = vld [vmem:[%s1 + $0xb78] sm:$0xff]
  %v415 = vld [vmem:[%s1 + $0xb80] sm:$0xff]
  %v416 = vld [vmem:[%s1 + $0xb88] sm:$0xff]
  %v417 = vld [vmem:[%s1 + $0xb90] sm:$0xff]
  %v418 = vld [vmem:[%s1 + $0xb98] sm:$0xff]
  %v419 = vld [vmem:[%s1 + $0xba0] sm:$0xff]
  %v420 = vld [vmem:[%s1 + $0xba8] sm:$0xff]
  %v421 = vld [vmem:[%s1 + $0xbb0] sm:$0xff]
  %v422 = vld [vmem:[%s1 + $0xbb8] sm:$0xff]
  %v423 = vld [vmem:[%s1 + $0xbc0] sm:$0xff]
  %v424 = vld [vmem:[%s1 + $0xbc8] sm:$0xff]
  %v425 = vld [vmem:[%s1 + $0xbd0] sm:$0xff]
  %v426 = vld [vmem:[%s1 + $0xbd8] sm:$0xff]
  %v427 = vld [vmem:[%s1 + $0xbe0] sm:$0xff]
  %v428 = vld [vmem:[%s1 + $0xbe8] sm:$0xff]
  %v429 = vld [vmem:[%s1 + $0xbf0] sm:$0xff]
  %v430 = vld [vmem:[%s1 + $0xbf8] sm:$0xff]
  %v431 = vld [vmem:[%s1 + $0xc00] sm:$0xff]
  %v432 = vld [vmem:[%s1 + $0xc08] sm:$0xff]
  %v433 = vld [vmem:[%s1 + $0xc10] sm:$0xff]
  %v434 = vld [vmem:[%s1 + $0xc18] sm:$0xff]
  %v435 = vld [vmem:[%s1 + $0xc20] sm:$0xff]
  %v436 = vld [vmem:[%s1 + $0xc28] sm:$0xff]
  %v437 = vld [vmem:[%s1 + $0xc30] sm:$0xff]
  %v438 = vld [vmem:[%s1 + $0xc38] sm:$0xff]
  %v439 = vld [vmem:[%s1 + $0xc40] sm:$0xff]
  %v440 = vld [vmem:[%s1 + $0xc48] sm:$0xff]
  %v441 = vld [vmem:[%s1 + $0xc50] sm:$0xff]
  %v442 = vld [vmem:[%s1 + $0xc58] sm:$0xff]
  %v443 = vld [vmem:[%s1 + $0xc60] sm:$0xff]
  %v444 = vld [vmem:[%s1 + $0xc68] sm:$0xff]
  %v445 = vld [vmem:[%s1 + $0xc70] sm:$0xff]
  %v446 = vld [vmem:[%s1 + $0xc78] sm:$0xff]
  %v447 = vld [vmem:[%s1 + $0xc80] sm:$0xff]
  %v448 = vld [vmem:[%s1 + $0xc88] sm:$0xff]
  %v449 = vld [vmem:[%s1 + $0xc90] sm:$0xff]
  %v450 = vld [vmem:[%s1 + $0xc98] sm:$0xff]
  %v451 = vld [vmem:[%s1 + $0xca0] sm:$0xff]
  %v452 = vld [vmem:[%s1 + $0xca8] sm:$0xff]
  %v453 = vld [vmem:[%s1 + $0xcb0] sm:$0xff]
  %v454 = vld [vmem:[%s1 + $0xcb8] sm:$0xff]
  %v455 = vld [vmem:[%s1 + $0xcc0] sm:$0xff]
  %v456 = vld [vmem:[%s1 + $0xcc8] sm:$0xff]
  %v457 = vld [vmem:[%s1 + $0xcd0] sm:$0xff]
  %v458 = vld [vmem:[%s1 + $0xcd8] sm:$0xff]
  %v459 = vld [vmem:[%s1 + $0xce0] sm:$0xff]
  %v460 = vld [vmem:[%s1 + $0xce8] sm:$0xff]
  %v461 = vld [vmem:[%s1 + $0xcf0] sm:$0xff]
  %v462 = vld [vmem:[%s1 + $0xcf8] sm:$0xff]
  %v463 = vld [vmem:[%s1 + $0xd00] sm:$0xff]
  %v464 = vld [vmem:[%s1 + $0xd08] sm:$0xff]
  %v465 = vld [vmem:[%s1 + $0xd10] sm:$0xff]
  %v466 = vld [vmem:[%s1 + $0xd18] sm:$0xff]
  %v467 = vld [vmem:[%s1 + $0xd20] sm:$0xff]
  %v468 = vld [vmem:[%s1 + $0xd28] sm:$0xff]
  %v469 = vld [vmem:[%s1 + $0xd30] sm:$0xff]
  %v470 = vld [vmem:[%s1 + $0xd38] sm:$0xff]
  %v471 = vld [vmem:[%s1 + $0xd40] sm:$0xff]
  %v472 = vld [vmem:[%s1 + $0xd48] sm:$0xff]
  %v473 = vld [vmem:[%s1 + $0xd50] sm:$0xff]
  %v474 = vld [vmem:[%s1 + $0xd58] sm:$0xff]
  %v475 = vld [vmem:[%s1 + $0xd60] sm:$0xff]
  %v476 = vld [vmem:[%s1 + $0xd68] sm:$0xff]
  %v477 = vld [vmem:[%s1 + $0xd70] sm:$0xff]
  %v478 = vld [vmem:[%s1 + $0xd78] sm:$0xff]
  %v479 = vld [vmem:[%s1 + $0xd80] sm:$0xff]
  %v480 = vld [vmem:[%s1 + $0xd88] sm:$0xff]
  %v481 = vld [vmem:[%s1 + $0xd90] sm:$0xff]
  %v482 = vld [vmem:[%s1 + $0xd98] sm:$0xff]
  %v483 = vld [vmem:[%s1 + $0xda0] sm:$0xff]
  %v484 = vld [vmem:[%s1 + $0xda8] sm:$0xff]
  %v485 = vld [vmem:[%s1 + $0xdb0] sm:$0xff]
  %v486 = vld [vmem:[%s1 + $0xdb8] sm:$0xff]
  %v487 = vld [vmem:[%s1 + $0xdc0] sm:$0xff]
  %v488 = vld [vmem:[%s1 + $0xdc8] sm:$0xff]
  %v489 = vld [vmem:[%s1 + $0xdd0] sm:$0xff]
  %v490 = vld [vmem:[%s1 + $0xdd8] sm:$0xff]
  %v491 = vld [vmem:[%s1 + $0xde0] sm:$0xff]
  %v492 = vld [vmem:[%s1 + $0xde8] sm:$0xff]
  %v493 = vld [vmem:[%s1 + $0xdf0] sm:$0xff]
  %v494 = vld [vmem:[%s1 + $0xdf8] sm:$0xff]
  %v495 = vld [vmem:[%s1 + $0xe00] sm:$0xff]
  %v496 = vld [vmem:[%s1 + $0xe08] sm:$0xff]
  %v497 = vld [vmem:[%s1 + $0xe10] sm:$0xff]
  %v498 = vld [vmem:[%s1 + $0xe18] sm:$0xff]
  %v499 = vld [vmem:[%s1 + $0xe20] sm:$0xff]
  %v500 = vld [vmem:[%s1 + $0xe28] sm:$0xff]
  %v501 = vld [vmem:[%s1 + $0xe30] sm:$0xff]
  %v502 = vld [vmem:[%s1 + $0xe38] sm:$0xff]
  %v503 = vld [vmem:[%s1 + $0xe40] sm:$0xff]
  %v504 = vld [vmem:[%s1 + $0xe48] sm:$0xff]
  %v505 = vld [vmem:[%s1 + $0xe50] sm:$0xff]
  %v506 = vld [vmem:[%s1 + $0xe58] sm:$0xff]
  %v507 = vld [vmem:[%s1 + $0xe60] sm:$0xff]
  %v508 = vld [vmem:[%s1 + $0xe68] sm:$0xff]
  %v509 = vld [vmem:[%s1 + $0xe70] sm:$0xff]
  %v510 = vld [vmem:[%s1 + $0xe78] sm:$0xff]
  %v511 = vld [vmem:[%s1 + $0xe80] sm:$0xff]
  %v512 = vld [vmem:[%s1 + $0xe88] sm:$0xff]
  %v513 = vld [vmem:[%s1 + $0xe90] sm:$0xff]
  %v514 = vld [vmem:[%s1 + $0xe98] sm:$0xff]
  %v515 = vld [vmem:[%s1 + $0xea0] sm:$0xff]
  %v516 = vld [vmem:[%s1 + $0xea8] sm:$0xff]
  %v517 = vld [vmem:[%s1 + $0xeb0] sm:$0xff]
  %v518 = vld [vmem:[%s1 + $0xeb8] sm:$0xff]
  %v519 = vld [vmem:[%s1 + $0xec0] sm:$0xff]
  %v520 = vld [vmem:[%s1 + $0xec8] sm:$0xff]
  %v521 = vld [vmem:[%s1 + $0xed0] sm:$0xff]
  %v522 = vld [vmem:[%s1 + $0xed8] sm:$0xff]
  %v523 = vld [vmem:[%s1 + $0xee0] sm:$0xff]
  %v524 = vld [vmem:[%s1 + $0xee8] sm:$0xff]
  %v525 = vld [vmem:[%s1 + $0xef0] sm:$0xff]
  %v526 = vld [vmem:[%s1 + $0xef8] sm:$0xff]
  %v527 = vld [vmem:[%s1 + $0xf00] sm:$0xff]
  %v528 = vld [vmem:[%s1 + $0xf08] sm:$0xff]
  %v529 = vld [vmem:[%s1 + $0xf10] sm:$0xff]
  %v530 = vld [vmem:[%s1 + $0xf18] sm:$0xff]
  %v531 = vld [vmem:[%s1 + $0xf20] sm:$0xff]
  %v532 = vld [vmem:[%s1 + $0xf28] sm:$0xff]
  %v533 = vld [vmem:[%s1 + $0xf30] sm:$0xff]
  %v534 = vld [vmem:[%s1 + $0xf38] sm:$0xff]
  %v535 = vld [vmem:[%s1 + $0xf40] sm:$0xff]
  %v536 = vld [vmem:[%s1 + $0xf48] sm:$0xff]
  %v537 = vld [vmem:[%s1 + $0xf50] sm:$0xff]
  %v538 = vld [vmem:[%s1 + $0xf58] sm:$0xff]
  %v539 = vld [vmem:[%s1 + $0xf60] sm:$0xff]
  %v540 = vld [vmem:[%s1 + $0xf68] sm:$0xff]
  %v541 = vld [vmem:[%s1 + $0xf70] sm:$0xff]
  %v542 = vld [vmem:[%s1 + $0xf78] sm:$0xff]
  %v543 = vld [vmem:[%s1 + $0xf80] sm:$0xff]
  %v544 = vld [vmem:[%s1 + $0xf88] sm:$0xff]
  %v545 = vld [vmem:[%s1 + $0xf90] sm:$0xff]
  %v546 = vld [vmem:[%s1 + $0xf98] sm:$0xff]
  %v547 = vld [vmem:[%s1 + $0xfa0] sm:$0xff]
  %v548 = vld [vmem:[%s1 + $0xfa8] sm:$0xff]
  %v549 = vld [vmem:[%s1 + $0xfb0] sm:$0xff]
  %v550 = vld [vmem:[%s1 + $0xfb8] sm:$0xff]
  %v551 = vld [vmem:[%s1 + $0xfc0] sm:$0xff]
  %v552 = vld [vmem:[%s1 + $0xfc8] sm:$0xff]
  %v553 = vld [vmem:[%s1 + $0xfd0] sm:$0xff]
  %v554 = vld [vmem:[%s1 + $0xfd8] sm:$0xff]
  %v555 = vld [vmem:[%s1 + $0xfe0] sm:$0xff]
  %v556 = vld [vmem:[%s1 + $0xfe8] sm:$0xff]
  %v557 = vld [vmem:[%s1 + $0xff0] sm:$0xff]
  %v558 = vld [vmem:[%s1 + $0xff8] sm:$0xff]
  %v559 = vld [vmem:[%s1 + $0x1000] sm:$0xff]
  %v560 = vld [vmem:[%s1 + $0x1008] sm:$0xff]
  %v561 = vld [vmem:[%s1 + $0x1010] sm:$0xff]
  %v562 = vld [vmem:[%s1 + $0x1018] sm:$0xff]
  %v563 = vld [vmem:[%s1 + $0x1020] sm:$0xff]
  %v564 = vld [vmem:[%s1 + $0x1028] sm:$0xff]
  %v565 = vld [vmem:[%s1 + $0x1030] sm:$0xff]
  %v566 = vld [vmem:[%s1 + $0x1038] sm:$0xff]
  %v567 = vld [vmem:[%s1 + $0x1040] sm:$0xff]
  %v568 = vld [vmem:[%s1 + $0x1048] sm:$0xff]
  %v569 = vld [vmem:[%s1 + $0x1050] sm:$0xff]
  %v570 = vld [vmem:[%s1 + $0x1058] sm:$0xff]
  %v571 = vld [vmem:[%s1 + $0x1060] sm:$0xff]
  %v572 = vld [vmem:[%s1 + $0x1068] sm:$0xff]
  %v573 = vld [vmem:[%s1 + $0x1070] sm:$0xff]
  %v574 = vld [vmem:[%s1 + $0x1078] sm:$0xff]
  %v575 = vld [vmem:[%s1 + $0x1080] sm:$0xff]
  %v576 = vld [vmem:[%s1 + $0x1088] sm:$0xff]
  %v577 = vld [vmem:[%s1 + $0x1090] sm:$0xff]
  %v578 = vld [vmem:[%s1 + $0x1098] sm:$0xff]
  %v579 = vld [vmem:[%s1 + $0x10a0] sm:$0xff]
  %v580 = vld [vmem:[%s1 + $0x10a8] sm:$0xff]
  %v581 = vld [vmem:[%s1 + $0x10b0] sm:$0xff]
  %v582 = vld [vmem:[%s1 + $0x10b8] sm:$0xff]
  %v583 = vld [vmem:[%s1 + $0x10c0] sm:$0xff]
  %v584 = vld [vmem:[%s1 + $0x10c8] sm:$0xff]
  %v585 = vld [vmem:[%s1 + $0x10d0] sm:$0xff]
  %v586 = vld [vmem:[%s1 + $0x10d8] sm:$0xff]
  %v587 = vld [vmem:[%s1 + $0x10e0] sm:$0xff]
  %v588 = vld [vmem:[%s1 + $0x10e8] sm:$0xff]
  %v589 = vld [vmem:[%s1 + $0x10f0] sm:$0xff]
  %v590 = vld [vmem:[%s1 + $0x10f8] sm:$0xff]
  %v591 = vld [vmem:[%s1 + $0x1100] sm:$0xff]
  %v592 = vld [vmem:[%s1 + $0x1108] sm:$0xff]
  %v593 = vld [vmem:[%s1 + $0x1110] sm:$0xff]
  %v594 = vld [vmem:[%s1 + $0x1118] sm:$0xff]
  %v595 = vld [vmem:[%s1 + $0x1120] sm:$0xff]
  %v596 = vld [vmem:[%s1 + $0x1128] sm:$0xff]
  %v597 = vld [vmem:[%s1 + $0x1130] sm:$0xff]
  %v598 = vld [vmem:[%s1 + $0x1138] sm:$0xff]
  %v599 = vld [vmem:[%s1 + $0x1140] sm:$0xff]
  %v600 = vld [vmem:[%s1 + $0x1148] sm:$0xff]
  %v601 = vld [vmem:[%s1 + $0x1150] sm:$0xff]
  %v602 = vld [vmem:[%s1 + $0x1158] sm:$0xff]
  %v603 = vld [vmem:[%s1 + $0x1160] sm:$0xff]
  %v604 = vld [vmem:[%s1 + $0x1168] sm:$0xff]
  %v605 = vld [vmem:[%s1 + $0x1170] sm:$0xff]
  %v606 = vld [vmem:[%s1 + $0x1178] sm:$0xff]
  %v607 = vld [vmem:[%s1 + $0x1180] sm:$0xff]
  %v608 = vld [vmem:[%s1 + $0x1188] sm:$0xff]
  %v609 = vld [vmem:[%s1 + $0x1190] sm:$0xff]
  %v610 = vld [vmem:[%s1 + $0x1198] sm:$0xff]
  %v611 = vld [vmem:[%s1 + $0x11a0] sm:$0xff]
  %v612 = vld [vmem:[%s1 + $0x11a8] sm:$0xff]
  %v613 = vld [vmem:[%s1 + $0x11b0] sm:$0xff]
  %v614 = vld [vmem:[%s1 + $0x11b8] sm:$0xff]
  %v615 = vld [vmem:[%s1 + $0x11c0] sm:$0xff]
  %v616 = vld [vmem:[%s1 + $0x11c8] sm:$0xff]
  %v617 = vld [vmem:[%s1 + $0x11d0] sm:$0xff]
  %v618 = vld [vmem:[%s1 + $0x11d8] sm:$0xff]
  %v619 = vld [vmem:[%s1 + $0x11e0] sm:$0xff]
  %v620 = vld [vmem:[%s1 + $0x11e8] sm:$0xff]
  %v621 = vld [vmem:[%s1 + $0x11f0] sm:$0xff]
  %v622 = vld [vmem:[%s1 + $0x11f8] sm:$0xff]
  %v623 = vld [vmem:[%s1 + $0x1200] sm:$0xff]
  %v624 = vld [vmem:[%s1 + $0x1208] sm:$0xff]
  %v625 = vld [vmem:[%s1 + $0x1210] sm:$0xff]
  %v626 = vld [vmem:[%s1 + $0x1218] sm:$0xff]
  %v627 = vld [vmem:[%s1 + $0x1220] sm:$0xff]
  %v628 = vld [vmem:[%s1 + $0x1228] sm:$0xff]
  %v629 = vld [vmem:[%s1 + $0x1230] sm:$0xff]
  %v630 = vld [vmem:[%s1 + $0x1238] sm:$0xff]
  %v631 = vld [vmem:[%s1 + $0x1240] sm:$0xff]
  %v632 = vld [vmem:[%s1 + $0x1248] sm:$0xff]
  %v633 = vld [vmem:[%s1 + $0x1250] sm:$0xff]
  %v634 = vld [vmem:[%s1 + $0x1258] sm:$0xff]
  %v635 = vld [vmem:[%s1 + $0x1260] sm:$0xff]
  %v636 = vld [vmem:[%s1 + $0x1268] sm:$0xff]
  %v637 = vld [vmem:[%s1 + $0x1270] sm:$0xff]
  %v638 = vld [vmem:[%s1 + $0x1278] sm:$0xff]
  %v639 = vld [vmem:[%s1 + $0x1280] sm:$0xff]
  %v640 = vld [vmem:[%s1 + $0x1288] sm:$0xff]
  %v641 = vld [vmem:[%s1 + $0x1290] sm:$0xff]
  %v642 = vld [vmem:[%s1 + $0x1298] sm:$0xff]
  %v643 = vld [vmem:[%s1 + $0x12a0] sm:$0xff]
  %v644 = vld [vmem:[%s1 + $0x12a8] sm:$0xff]
  %v645 = vld [vmem:[%s1 + $0x12b0] sm:$0xff]
  %v646 = vld [vmem:[%s1 + $0x12b8] sm:$0xff]
  %v647 = vld [vmem:[%s1 + $0x12c0] sm:$0xff]
  %v648 = vld [vmem:[%s1 + $0x12c8] sm:$0xff]
  %v649 = vld [vmem:[%s1 + $0x12d0] sm:$0xff]
  %v650 = vld [vmem:[%s1 + $0x12d8] sm:$0xff]
  %v651 = vld [vmem:[%s1 + $0x12e0] sm:$0xff]
  %v652 = vld [vmem:[%s1 + $0x12e8] sm:$0xff]
  %v653 = vld [vmem:[%s1 + $0x12f0] sm:$0xff]
  %v654 = vld [vmem:[%s1 + $0x12f8] sm:$0xff]
  %v655 = vld [vmem:[%s1 + $0x1300] sm:$0xff]
  %v656 = vld [vmem:[%s1 + $0x1308] sm:$0xff]
  %v657 = vld [vmem:[%s1 + $0x1310] sm:$0xff]
  %v658 = vld [vmem:[%s1 + $0x1318] sm:$0xff]
  %v659 = vld [vmem:[%s1 + $0x1320] sm:$0xff]
  %v660 = vld [vmem:[%s1 + $0x1328] sm:$0xff]
  %v661 = vld [vmem:[%s1 + $0x1330] sm:$0xff]
  %v662 = vld [vmem:[%s1 + $0x1338] sm:$0xff]
  %v663 = vld [vmem:[%s1 + $0x1340] sm:$0xff]
  %v664 = vld [vmem:[%s1 + $0x1348] sm:$0xff]
  %v665 = vld [vmem:[%s1 + $0x1350] sm:$0xff]
  %v666 = vld [vmem:[%s1 + $0x1358] sm:$0xff]
  %v667 = vld [vmem:[%s1 + $0x1360] sm:$0xff]
  %v668 = vld [vmem:[%s1 + $0x1368] sm:$0xff]
  %v669 = vld [vmem:[%s1 + $0x1370] sm:$0xff]
  %v670 = vld [vmem:[%s1 + $0x1378] sm:$0xff]
  %v671 = vld [vmem:[%s1 + $0x1380] sm:$0xff]
  %v672 = vld [vmem:[%s1 + $0x1388] sm:$0xff]
  %v673 = vld [vmem:[%s1 + $0x1390] sm:$0xff]
  %v674 = vld [vmem:[%s1 + $0x1398] sm:$0xff]
  %v675 = vld [vmem:[%s1 + $0x13a0] sm:$0xff]
  %v676 = vld [vmem:[%s1 + $0x13a8] sm:$0xff]
  %v677 = vld [vmem:[%s1 + $0x13b0] sm:$0xff]
  %v678 = vld [vmem:[%s1 + $0x13b8] sm:$0xff]
  %v679 = vld [vmem:[%s1 + $0x13c0] sm:$0xff]
  %v680 = vld [vmem:[%s1 + $0x13c8] sm:$0xff]
  %v681 = vld [vmem:[%s1 + $0x13d0] sm:$0xff]
  %v682 = vld [vmem:[%s1 + $0x13d8] sm:$0xff]
  %v683 = vld [vmem:[%s1 + $0x13e0] sm:$0xff]
  %v684 = vld [vmem:[%s1 + $0x13e8] sm:$0xff]
  %v685 = vld [vmem:[%s1 + $0x13f0] sm:$0xff]
  %v686 = vld [vmem:[%s1 + $0x13f8] sm:$0xff]
  %v687 = vld [vmem:[%s1 + $0x1400] sm:$0xff]
  %v688 = vld [vmem:[%s1 + $0x1408] sm:$0xff]
  %v689 = vld [vmem:[%s1 + $0x1410] sm:$0xff]
  %v690 = vld [vmem:[%s1 + $0x1418] sm:$0xff]
  %v691 = vld [vmem:[%s1 + $0x1420] sm:$0xff]
  %v692 = vld [vmem:[%s1 + $0x1428] sm:$0xff]
  %v693 = vld [vmem:[%s1 + $0x1430] sm:$0xff]
  %v694 = vld [vmem:[%s1 + $0x1438] sm:$0xff]
  %v695 = vld [vmem:[%s1 + $0x1440] sm:$0xff]
  %v696 = vld [vmem:[%s1 + $0x1448] sm:$0xff]
  %v697 = vld [vmem:[%s1 + $0x1450] sm:$0xff]
  %v698 = vld [vmem:[%s1 + $0x1458] sm:$0xff]
  %v699 = vld [vmem:[%s1 + $0x1460] sm:$0xff]
  %v700 = vld [vmem:[%s1 + $0x1468] sm:$0xff]
  %v701 = vld [vmem:[%s1 + $0x1470] sm:$0xff]
  %v702 = vld [vmem:[%s1 + $0x1478] sm:$0xff]
  %v703 = vld [vmem:[%s1 + $0x1480] sm:$0xff]
  %v704 = vld [vmem:[%s1 + $0x1488] sm:$0xff]
  %v705 = vld [vmem:[%s1 + $0x1490] sm:$0xff]
  %v706 = vld [vmem:[%s1 + $0x1498] sm:$0xff]
  %v707 = vld [vmem:[%s1 + $0x14a0] sm:$0xff]
  %v708 = vld [vmem:[%s1 + $0x14a8] sm:$0xff]
  %v709 = vld [vmem:[%s1 + $0x14b0] sm:$0xff]
  %v710 = vld [vmem:[%s1 + $0x14b8] sm:$0xff]
  %v711 = vld [vmem:[%s1 + $0x14c0] sm:$0xff]
  %v712 = vld [vmem:[%s1 + $0x14c8] sm:$0xff]
  %v713 = vld [vmem:[%s1 + $0x14d0] sm:$0xff]
  %v714 = vld [vmem:[%s1 + $0x14d8] sm:$0xff]
  %v715 = vld [vmem:[%s1 + $0x14e0] sm:$0xff]
  %v716 = vld [vmem:[%s1 + $0x14e8] sm:$0xff]
  %v717 = vld [vmem:[%s1 + $0x14f0] sm:$0xff]
  %v718 = vld [vmem:[%s1 + $0x14f8] sm:$0xff]
  %v719 = vld [vmem:[%s1 + $0x1500] sm:$0xff]
  %v720 = vld [vmem:[%s1 + $0x1508] sm:$0xff]
  %v721 = vld [vmem:[%s1 + $0x1510] sm:$0xff]
  %v722 = vld [vmem:[%s1 + $0x1518] sm:$0xff]
  %v723 = vld [vmem:[%s1 + $0x1520] sm:$0xff]
  %v724 = vld [vmem:[%s1 + $0x1528] sm:$0xff]
  %v725 = vld [vmem:[%s1 + $0x1530] sm:$0xff]
  %v726 = vld [vmem:[%s1 + $0x1538] sm:$0xff]
  %v727 = vld [vmem:[%s1 + $0x1540] sm:$0xff]
  %v728 = vld [vmem:[%s1 + $0x1548] sm:$0xff]
  %v729 = vld [vmem:[%s1 + $0x1550] sm:$0xff]
  %v730 = vld [vmem:[%s1 + $0x1558] sm:$0xff]
  %v731 = vld [vmem:[%s1 + $0x1560] sm:$0xff]
  %v732 = vld [vmem:[%s1 + $0x1568] sm:$0xff]
  %v733 = vld [vmem:[%s1 + $0x1570] sm:$0xff]
  %v734 = vld [vmem:[%s1 + $0x1578] sm:$0xff]
  %v735 = vld [vmem:[%s1 + $0x1580] sm:$0xff]
  %v736 = vld [vmem:[%s1 + $0x1588] sm:$0xff]
  %v737 = vld [vmem:[%s1 + $0x1590] sm:$0xff]
  %v738 = vld [vmem:[%s1 + $0x1598] sm:$0xff]
  %v739 = vld [vmem:[%s1 + $0x15a0] sm:$0xff]
  %v740 = vld [vmem:[%s1 + $0x15a8] sm:$0xff]
  %v741 = vld [vmem:[%s1 + $0x15b0] sm:$0xff]
  %v742 = vld [vmem:[%s1 + $0x15b8] sm:$0xff]
  %v743 = vld [vmem:[%s1 + $0x15c0] sm:$0xff]
  %v744 = vld [vmem:[%s1 + $0x15c8] sm:$0xff]
  %v745 = vld [vmem:[%s1 + $0x15d0] sm:$0xff]
  %v746 = vld [vmem:[%s1 + $0x15d8] sm:$0xff]
  %v747 = vld [vmem:[%s1 + $0x15e0] sm:$0xff]
  %v748 = vld [vmem:[%s1 + $0x15e8] sm:$0xff]
  %v749 = vld [vmem:[%s1 + $0x15f0] sm:$0xff]
  %v750 = vld [vmem:[%s1 + $0x15f8] sm:$0xff]
  %v751 = vld [vmem:[%s1 + $0x1600] sm:$0xff]
  %v752 = vld [vmem:[%s1 + $0x1608] sm:$0xff]
  %v753 = vld [vmem:[%s1 + $0x1610] sm:$0xff]
  %v754 = vld [vmem:[%s1 + $0x1618] sm:$0xff]
  %v755 = vld [vmem:[%s1 + $0x1620] sm:$0xff]
  %v756 = vld [vmem:[%s1 + $0x1628] sm:$0xff]
  %v757 = vld [vmem:[%s1 + $0x1630] sm:$0xff]
  %v758 = vld [vmem:[%s1 + $0x1638] sm:$0xff]
  %v759 = vld [vmem:[%s1 + $0x1640] sm:$0xff]
  %v760 = vld [vmem:[%s1 + $0x1648] sm:$0xff]
  %v761 = vld [vmem:[%s1 + $0x1650] sm:$0xff]
  %v762 = vld [vmem:[%s1 + $0x1658] sm:$0xff]
  %v763 = vld [vmem:[%s1 + $0x1660] sm:$0xff]
  %v764 = vld [vmem:[%s1 + $0x1668] sm:$0xff]
  %v765 = vld [vmem:[%s1 + $0x1670] sm:$0xff]
  %v766 = vld [vmem:[%s1 + $0x1678] sm:$0xff]
  %v767 = vld [vmem:[%s1 + $0x1680] sm:$0xff]
  %v768 = vld [vmem:[%s1 + $0x1688] sm:$0xff]
  %v769 = vld [vmem:[%s1 + $0x1690] sm:$0xff]
  %v770 = vld [vmem:[%s1 + $0x1698] sm:$0xff]
  %v771 = vld [vmem:[%s1 + $0x16a0] sm:$0xff]
  %v772 = vld [vmem:[%s1 + $0x16a8] sm:$0xff]
  %v773 = vld [vmem:[%s1 + $0x16b0] sm:$0xff]
  %v774 = vld [vmem:[%s1 + $0x16b8] sm:$0xff]
  %v775 = vld [vmem:[%s1 + $0x16c0] sm:$0xff]
  %v776 = vld [vmem:[%s1 + $0x16c8] sm:$0xff]
  %v777 = vld [vmem:[%s1 + $0x16d0] sm:$0xff]
  %v778 = vld [vmem:[%s1 + $0x16d8] sm:$0xff]
  %v779 = vld [vmem:[%s1 + $0x16e0] sm:$0xff]
  %v780 = vld [vmem:[%s1 + $0x16e8] sm:$0xff]
  %v781 = vld [vmem:[%s1 + $0x16f0] sm:$0xff]
  %v782 = vld [vmem:[%s1 + $0x16f8] sm:$0xff]
  %v783 = vld [vmem:[%s1 + $0x1700] sm:$0xff]
  %v784 = vld [vmem:[%s1 + $0x1708] sm:$0xff]
  %v785 = vld [vmem:[%s1 + $0x1710] sm:$0xff]
  %v786 = vld [vmem:[%s1 + $0x1718] sm:$0xff]
  %v787 = vld [vmem:[%s1 + $0x1720] sm:$0xff]
  %v788 = vld [vmem:[%s1 + $0x1728] sm:$0xff]
  %v789 = vld [vmem:[%s1 + $0x1730] sm:$0xff]
  %v790 = vld [vmem:[%s1 + $0x1738] sm:$0xff]
  %v791 = vld [vmem:[%s1 + $0x1740] sm:$0xff]
  %v792 = vld [vmem:[%s1 + $0x1748] sm:$0xff]
  %v793 = vld [vmem:[%s1 + $0x1750] sm:$0xff]
  %v794 = vld [vmem:[%s1 + $0x1758] sm:$0xff]
  %v795 = vld [vmem:[%s1 + $0x1760] sm:$0xff]
  %v796 = vld [vmem:[%s1 + $0x1768] sm:$0xff]
  %v797 = vld [vmem:[%s1 + $0x1770] sm:$0xff]
  %v798 = vld [vmem:[%s1 + $0x1778] sm:$0xff]
  %v799 = vld [vmem:[%s1 + $0x1780] sm:$0xff]
  %v800 = vld [vmem:[%s1 + $0x1788] sm:$0xff]
  %v801 = vld [vmem:[%s1 + $0x1790] sm:$0xff]
  %v802 = vld [vmem:[%s1 + $0x1798] sm:$0xff]
  %v803 = vld [vmem:[%s1 + $0x17a0] sm:$0xff]
  %v804 = vld [vmem:[%s1 + $0x17a8] sm:$0xff]
  %v805 = vld [vmem:[%s1 + $0x17b0] sm:$0xff]
  %v806 = vld [vmem:[%s1 + $0x17b8] sm:$0xff]
  %v807 = vld [vmem:[%s1 + $0x17c0] sm:$0xff]
  %v808 = vld [vmem:[%s1 + $0x17c8] sm:$0xff]
  %v809 = vld [vmem:[%s1 + $0x17d0] sm:$0xff]
  %v810 = vld [vmem:[%s1 + $0x17d8] sm:$0xff]
  %v811 = vld [vmem:[%s1 + $0x17e0] sm:$0xff]
  %v812 = vld [vmem:[%s1 + $0x17e8] sm:$0xff]
  %v813 = vld [vmem:[%s1 + $0x17f0] sm:$0xff]
  %v814 = vld [vmem:[%s1 + $0x17f8] sm:$0xff]
  %v815 = vld [vmem:[%s1 + $0x1800] sm:$0xff]
  %v816 = vld [vmem:[%s1 + $0x1808] sm:$0xff]
  %v817 = vld [vmem:[%s1 + $0x1810] sm:$0xff]
  %v818 = vld [vmem:[%s1 + $0x1818] sm:$0xff]
  %v819 = vld [vmem:[%s1 + $0x1820] sm:$0xff]
  %v820 = vld [vmem:[%s1 + $0x1828] sm:$0xff]
  %v821 = vld [vmem:[%s1 + $0x1830] sm:$0xff]
  %v822 = vld [vmem:[%s1 + $0x1838] sm:$0xff]
  %v823 = vld [vmem:[%s1 + $0x1840] sm:$0xff]
  %v824 = vld [vmem:[%s1 + $0x1848] sm:$0xff]
  %v825 = vld [vmem:[%s1 + $0x1850] sm:$0xff]
  %v826 = vld [vmem:[%s1 + $0x1858] sm:$0xff]
  %v827 = vld [vmem:[%s1 + $0x1860] sm:$0xff]
  %v828 = vld [vmem:[%s1 + $0x1868] sm:$0xff]
  %v829 = vld [vmem:[%s1 + $0x1870] sm:$0xff]
  %v830 = vld [vmem:[%s1 + $0x1878] sm:$0xff]
  %v831 = vld [vmem:[%s1 + $0x1880] sm:$0xff]
  %v832 = vld [vmem:[%s1 + $0x1888] sm:$0xff]
  %v833 = vld [vmem:[%s1 + $0x1890] sm:$0xff]
  %v834 = vld [vmem:[%s1 + $0x1898] sm:$0xff]
  %v835 = vld [vmem:[%s1 + $0x18a0] sm:$0xff]
  %v836 = vld [vmem:[%s1 + $0x18a8] sm:$0xff]
  %v837 = vld [vmem:[%s1 + $0x18b0] sm:$0xff]
  %v838 = vld [vmem:[%s1 + $0x18b8] sm:$0xff]
  %v839 = vld [vmem:[%s1 + $0x18c0] sm:$0xff]
  %v840 = vld [vmem:[%s1 + $0x18c8] sm:$0xff]
  %v841 = vld [vmem:[%s1 + $0x18d0] sm:$0xff]
  %v842 = vld [vmem:[%s1 + $0x18d8] sm:$0xff]
  %v843 = vld [vmem:[%s1 + $0x18e0] sm:$0xff]
  %v844 = vld [vmem:[%s1 + $0x18e8] sm:$0xff]
  %v845 = vld [vmem:[%s1 + $0x18f0] sm:$0xff]
  %v846 = vld [vmem:[%s1 + $0x18f8] sm:$0xff]
  %v847 = vld [vmem:[%s2] sm:$0xf]
  %v849 = vlaneseq
  %v850 = vshrl.u32 %v849, 7
  %v851 = vsub.s32 0, %v850
  %v852 = vrot.slane %v847, %v851
  %v853 = vlaneseq
  %v854 = vshrl.u32 %v853, 7
  %v855 = vsub.s32 1, %v854
  %v856 = vrot.slane %v847, %v855
  %v857 = vlaneseq
  %v858 = vshrl.u32 %v857, 7
  %v859 = vsub.s32 2, %v858
  %v860 = vrot.slane %v847, %v859
  %v861 = vlaneseq
  %v862 = vshrl.u32 %v861, 7
  %v863 = vsub.s32 3, %v862
  %v864 = vrot.slane %v847, %v863
  %v895 = vunpack.c.l.b16 %v21
  %v896 = vunpack.c.h.b16 %v21
  %v897 = vunpack.c.l.b16 %v22
  %v898 = vunpack.c.h.b16 %v22
  %v899 = vunpack.c.l.b16 %v23
  %v900 = vunpack.c.h.b16 %v23
  %v901 = vunpack.c.l.b16 %v24
  %v902 = vunpack.c.h.b16 %v24
  %v903 = vunpack.c.l.b16 %v25
  %v904 = vunpack.c.h.b16 %v25
  %v905 = vunpack.c.l.b16 %v26
  %v906 = vunpack.c.h.b16 %v26
  %v907 = vunpack.c.l.b16 %v27
  %v908 = vunpack.c.h.b16 %v27
  %v909 = vunpack.c.l.b16 %v28
  %v910 = vunpack.c.h.b16 %v28
  %v911 = vunpack.c.l.b16 %v29
  %v912 = vunpack.c.h.b16 %v29
  %v913 = vunpack.c.l.b16 %v30
  %v914 = vunpack.c.h.b16 %v30
  %v915 = vunpack.c.l.b16 %v31
  %v916 = vunpack.c.h.b16 %v31
  %v917 = vunpack.c.l.b16 %v32
  %v918 = vunpack.c.h.b16 %v32
  %v919 = vunpack.c.l.b16 %v33
  %v920 = vunpack.c.l.b16 %v34
  %v921 = vunpack.c.h.b16 %v34
  %v922 = vunpack.c.l.b16 %v35
  %v923 = vunpack.c.h.b16 %v35
  %v924 = vunpack.c.l.b16 %v36
  %v925 = vunpack.c.h.b16 %v36
  %v926 = vunpack.c.l.b16 %v37
  %v927 = vunpack.c.h.b16 %v37
  %v928 = vunpack.c.l.b16 %v38
  %v929 = vunpack.c.h.b16 %v38
  %v930 = vunpack.c.l.b16 %v39
  %v931 = vunpack.c.h.b16 %v39
  %v932 = vunpack.c.l.b16 %v40
  %v933 = vunpack.c.h.b16 %v40
  %v934 = vunpack.c.l.b16 %v41
  %v935 = vunpack.c.h.b16 %v41
  %v936 = vunpack.c.l.b16 %v42
  %v937 = vunpack.c.h.b16 %v42
  %v938 = vunpack.c.l.b16 %v43
  %v939 = vunpack.c.h.b16 %v43
  %v940 = vunpack.c.l.b16 %v44
  %v941 = vunpack.c.h.b16 %v44
  %v942 = vunpack.c.l.b16 %v45
  %v943 = vunpack.c.h.b16 %v45
  %v944 = vunpack.c.l.b16 %v46
  %v945 = vpack.c.b16 %v920, %v895
  %v946 = vpack.c.b16 %v921, %v896
  %v947 = vpack.c.b16 %v922, %v897
  %v948 = vpack.c.b16 %v923, %v898
  %v949 = vpack.c.b16 %v924, %v899
  %v950 = vpack.c.b16 %v925, %v900
  %v951 = vpack.c.b16 %v926, %v901
  %v952 = vpack.c.b16 %v927, %v902
  %v953 = vpack.c.b16 %v928, %v903
  %v954 = vpack.c.b16 %v929, %v904
  %v955 = vpack.c.b16 %v930, %v905
  %v956 = vpack.c.b16 %v931, %v906
  %v957 = vpack.c.b16 %v932, %v907
  %v958 = vpack.c.b16 %v933, %v908
  %v959 = vpack.c.b16 %v934, %v909
  %v960 = vpack.c.b16 %v935, %v910
  %v961 = vpack.c.b16 %v936, %v911
  %v962 = vpack.c.b16 %v937, %v912
  %v963 = vpack.c.b16 %v938, %v913
  %v964 = vpack.c.b16 %v939, %v914
  %v965 = vpack.c.b16 %v940, %v915
  %v966 = vpack.c.b16 %v941, %v916
  %v967 = vpack.c.b16 %v942, %v917
  %v968 = vpack.c.b16 %v943, %v918
  %v969 = vpack.c.b16 %v944, %v919
  %v1795 = vunpack.c.l.b16 %v47
  %v1796 = vunpack.c.h.b16 %v47
  %v1797 = vunpack.c.l.b16 %v48
  %v1798 = vunpack.c.h.b16 %v48
  %v1799 = vunpack.c.l.b16 %v49
  %v1800 = vunpack.c.h.b16 %v49
  %v1801 = vunpack.c.l.b16 %v50
  %v1802 = vunpack.c.h.b16 %v50
  %v1803 = vunpack.c.l.b16 %v51
  %v1804 = vunpack.c.h.b16 %v51
  %v1805 = vunpack.c.l.b16 %v52
  %v1806 = vunpack.c.h.b16 %v52
  %v1807 = vunpack.c.l.b16 %v53
  %v1808 = vunpack.c.h.b16 %v53
  %v1809 = vunpack.c.l.b16 %v54
  %v1810 = vunpack.c.h.b16 %v54
  %v1811 = vunpack.c.l.b16 %v55
  %v1812 = vunpack.c.h.b16 %v55
  %v1813 = vunpack.c.l.b16 %v56
  %v1814 = vunpack.c.h.b16 %v56
  %v1815 = vunpack.c.l.b16 %v57
  %v1816 = vunpack.c.h.b16 %v57
  %v1817 = vunpack.c.l.b16 %v58
  %v1818 = vunpack.c.h.b16 %v58
  %v1819 = vunpack.c.l.b16 %v59
  %v1820 = vunpack.c.h.b16 %v59
  %v1821 = vunpack.c.l.b16 %v60
  %v1822 = vunpack.c.h.b16 %v60
  %v1823 = vunpack.c.l.b16 %v61
  %v1824 = vunpack.c.h.b16 %v61
  %v1825 = vunpack.c.l.b16 %v62
  %v1826 = vunpack.c.h.b16 %v62
  %v1827 = vunpack.c.l.b16 %v63
  %v1828 = vunpack.c.h.b16 %v63
  %v1829 = vunpack.c.l.b16 %v64
  %v1830 = vunpack.c.h.b16 %v64
  %v1831 = vunpack.c.l.b16 %v65
  %v1832 = vunpack.c.h.b16 %v65
  %v1833 = vunpack.c.l.b16 %v66
  %v1834 = vunpack.c.h.b16 %v66
  %v1835 = vunpack.c.l.b16 %v67
  %v1836 = vunpack.c.h.b16 %v67
  %v1837 = vunpack.c.l.b16 %v68
  %v1838 = vunpack.c.h.b16 %v68
  %v1839 = vunpack.c.l.b16 %v69
  %v1840 = vunpack.c.h.b16 %v69
  %v1841 = vunpack.c.l.b16 %v70
  %v1842 = vunpack.c.h.b16 %v70
  %v1843 = vunpack.c.l.b16 %v71
  %v1844 = vunpack.c.h.b16 %v71
  %v1845 = vunpack.c.l.b16 %v72
  %v1846 = vunpack.c.h.b16 %v72
  %v1847 = vunpack.c.l.b16 %v73
  %v1848 = vunpack.c.h.b16 %v73
  %v1849 = vunpack.c.l.b16 %v74
  %v1850 = vunpack.c.h.b16 %v74
  %v1851 = vunpack.c.l.b16 %v75
  %v1852 = vunpack.c.h.b16 %v75
  %v1853 = vunpack.c.l.b16 %v76
  %v1854 = vunpack.c.h.b16 %v76
  %v1855 = vunpack.c.l.b16 %v77
  %v1856 = vunpack.c.h.b16 %v77
  %v1857 = vunpack.c.l.b16 %v78
  %v1858 = vunpack.c.h.b16 %v78
  %v1859 = vunpack.c.l.b16 %v79
  %v1860 = vunpack.c.h.b16 %v79
  %v1861 = vunpack.c.l.b16 %v80
  %v1862 = vunpack.c.h.b16 %v80
  %v1863 = vunpack.c.l.b16 %v81
  %v1864 = vunpack.c.h.b16 %v81
  %v1865 = vunpack.c.l.b16 %v82
  %v1866 = vunpack.c.h.b16 %v82
  %v1867 = vunpack.c.l.b16 %v83
  %v1868 = vunpack.c.h.b16 %v83
  %v1869 = vunpack.c.l.b16 %v84
  %v1870 = vunpack.c.h.b16 %v84
  %v1871 = vunpack.c.l.b16 %v85
  %v1872 = vunpack.c.h.b16 %v85
  %v1873 = vunpack.c.l.b16 %v86
  %v1874 = vunpack.c.h.b16 %v86
  %v1875 = vunpack.c.l.b16 %v87
  %v1876 = vunpack.c.h.b16 %v87
  %v1877 = vunpack.c.l.b16 %v88
  %v1878 = vunpack.c.h.b16 %v88
  %v1879 = vunpack.c.l.b16 %v89
  %v1880 = vunpack.c.h.b16 %v89
  %v1881 = vunpack.c.l.b16 %v90
  %v1882 = vunpack.c.h.b16 %v90
  %v1883 = vunpack.c.l.b16 %v91
  %v1884 = vunpack.c.h.b16 %v91
  %v1885 = vunpack.c.l.b16 %v92
  %v1886 = vunpack.c.h.b16 %v92
  %v1887 = vunpack.c.l.b16 %v93
  %v1888 = vunpack.c.h.b16 %v93
  %v1889 = vunpack.c.l.b16 %v94
  %v1890 = vunpack.c.h.b16 %v94
  %v1891 = vunpack.c.l.b16 %v95
  %v1892 = vunpack.c.h.b16 %v95
  %v1893 = vunpack.c.l.b16 %v96
  %v1894 = vunpack.c.h.b16 %v96
  %v1895 = vunpack.c.l.b16 %v97
  %v1896 = vunpack.c.h.b16 %v97
  %v1897 = vunpack.c.l.b16 %v98
  %v1898 = vunpack.c.h.b16 %v98
  %v1899 = vunpack.c.l.b16 %v99
  %v1900 = vunpack.c.h.b16 %v99
  %v1901 = vunpack.c.l.b16 %v100
  %v1902 = vunpack.c.h.b16 %v100
  %v1903 = vunpack.c.l.b16 %v101
  %v1904 = vunpack.c.h.b16 %v101
  %v1905 = vunpack.c.l.b16 %v102
  %v1906 = vunpack.c.h.b16 %v102
  %v1907 = vunpack.c.l.b16 %v103
  %v1908 = vunpack.c.h.b16 %v103
  %v1909 = vunpack.c.l.b16 %v104
  %v1910 = vunpack.c.h.b16 %v104
  %v1911 = vunpack.c.l.b16 %v105
  %v1912 = vunpack.c.h.b16 %v105
  %v1913 = vunpack.c.l.b16 %v106
  %v1914 = vunpack.c.h.b16 %v106
  %v1915 = vunpack.c.l.b16 %v107
  %v1916 = vunpack.c.h.b16 %v107
  %v1917 = vunpack.c.l.b16 %v108
  %v1918 = vunpack.c.h.b16 %v108
  %v1919 = vunpack.c.l.b16 %v109
  %v1920 = vunpack.c.h.b16 %v109
  %v1921 = vunpack.c.l.b16 %v110
  %v1922 = vunpack.c.h.b16 %v110
  %v1923 = vunpack.c.l.b16 %v111
  %v1924 = vunpack.c.h.b16 %v111
  %v1925 = vunpack.c.l.b16 %v112
  %v1926 = vunpack.c.h.b16 %v112
  %v1927 = vunpack.c.l.b16 %v113
  %v1928 = vunpack.c.h.b16 %v113
  %v1929 = vunpack.c.l.b16 %v114
  %v1930 = vunpack.c.h.b16 %v114
  %v1931 = vunpack.c.l.b16 %v115
  %v1932 = vunpack.c.h.b16 %v115
  %v1933 = vunpack.c.l.b16 %v116
  %v1934 = vunpack.c.h.b16 %v116
  %v1935 = vunpack.c.l.b16 %v117
  %v1936 = vunpack.c.h.b16 %v117
  %v1937 = vunpack.c.l.b16 %v118
  %v1938 = vunpack.c.h.b16 %v118
  %v1939 = vunpack.c.l.b16 %v119
  %v1940 = vunpack.c.h.b16 %v119
  %v1941 = vunpack.c.l.b16 %v120
  %v1942 = vunpack.c.h.b16 %v120
  %v1943 = vunpack.c.l.b16 %v121
  %v1944 = vunpack.c.h.b16 %v121
  %v1945 = vunpack.c.l.b16 %v122
  %v1946 = vunpack.c.h.b16 %v122
  %v1947 = vunpack.c.l.b16 %v123
  %v1948 = vunpack.c.h.b16 %v123
  %v1949 = vunpack.c.l.b16 %v124
  %v1950 = vunpack.c.h.b16 %v124
  %v1951 = vunpack.c.l.b16 %v125
  %v1952 = vunpack.c.h.b16 %v125
  %v1953 = vunpack.c.l.b16 %v126
  %v1954 = vunpack.c.h.b16 %v126
  %v1955 = vunpack.c.l.b16 %v127
  %v1956 = vunpack.c.h.b16 %v127
  %v1957 = vunpack.c.l.b16 %v128
  %v1958 = vunpack.c.h.b16 %v128
  %v1959 = vunpack.c.l.b16 %v129
  %v1960 = vunpack.c.h.b16 %v129
  %v1961 = vunpack.c.l.b16 %v130
  %v1962 = vunpack.c.h.b16 %v130
  %v1963 = vunpack.c.l.b16 %v131
  %v1964 = vunpack.c.h.b16 %v131
  %v1965 = vunpack.c.l.b16 %v132
  %v1966 = vunpack.c.h.b16 %v132
  %v1967 = vunpack.c.l.b16 %v133
  %v1968 = vunpack.c.h.b16 %v133
  %v1969 = vunpack.c.l.b16 %v134
  %v1970 = vunpack.c.h.b16 %v134
  %v1971 = vunpack.c.l.b16 %v135
  %v1972 = vunpack.c.h.b16 %v135
  %v1973 = vunpack.c.l.b16 %v136
  %v1974 = vunpack.c.h.b16 %v136
  %v1975 = vunpack.c.l.b16 %v137
  %v1976 = vunpack.c.h.b16 %v137
  %v1977 = vunpack.c.l.b16 %v138
  %v1978 = vunpack.c.h.b16 %v138
  %v1979 = vunpack.c.l.b16 %v139
  %v1980 = vunpack.c.h.b16 %v139
  %v1981 = vunpack.c.l.b16 %v140
  %v1982 = vunpack.c.h.b16 %v140
  %v1983 = vunpack.c.l.b16 %v141
  %v1984 = vunpack.c.h.b16 %v141
  %v1985 = vunpack.c.l.b16 %v142
  %v1986 = vunpack.c.h.b16 %v142
  %v1987 = vunpack.c.l.b16 %v143
  %v1988 = vunpack.c.h.b16 %v143
  %v1989 = vunpack.c.l.b16 %v144
  %v1990 = vunpack.c.h.b16 %v144
  %v1991 = vunpack.c.l.b16 %v145
  %v1992 = vunpack.c.h.b16 %v145
  %v1993 = vunpack.c.l.b16 %v146
  %v1994 = vunpack.c.h.b16 %v146
  %v1995 = vunpack.c.l.b16 %v147
  %v1996 = vunpack.c.h.b16 %v147
  %v1997 = vunpack.c.l.b16 %v148
  %v1998 = vunpack.c.h.b16 %v148
  %v1999 = vunpack.c.l.b16 %v149
  %v2000 = vunpack.c.h.b16 %v149
  %v2001 = vunpack.c.l.b16 %v150
  %v2002 = vunpack.c.h.b16 %v150
  %v2003 = vunpack.c.l.b16 %v151
  %v2004 = vunpack.c.h.b16 %v151
  %v2005 = vunpack.c.l.b16 %v152
  %v2006 = vunpack.c.h.b16 %v152
  %v2007 = vunpack.c.l.b16 %v153
  %v2008 = vunpack.c.h.b16 %v153
  %v2009 = vunpack.c.l.b16 %v154
  %v2010 = vunpack.c.h.b16 %v154
  %v2011 = vunpack.c.l.b16 %v155
  %v2012 = vunpack.c.h.b16 %v155
  %v2013 = vunpack.c.l.b16 %v156
  %v2014 = vunpack.c.h.b16 %v156
  %v2015 = vunpack.c.l.b16 %v157
  %v2016 = vunpack.c.h.b16 %v157
  %v2017 = vunpack.c.l.b16 %v158
  %v2018 = vunpack.c.h.b16 %v158
  %v2019 = vunpack.c.l.b16 %v159
  %v2020 = vunpack.c.h.b16 %v159
  %v2021 = vunpack.c.l.b16 %v160
  %v2022 = vunpack.c.h.b16 %v160
  %v2023 = vunpack.c.l.b16 %v161
  %v2024 = vunpack.c.h.b16 %v161
  %v2025 = vunpack.c.l.b16 %v162
  %v2026 = vunpack.c.h.b16 %v162
  %v2027 = vunpack.c.l.b16 %v163
  %v2028 = vunpack.c.h.b16 %v163
  %v2029 = vunpack.c.l.b16 %v164
  %v2030 = vunpack.c.h.b16 %v164
  %v2031 = vunpack.c.l.b16 %v165
  %v2032 = vunpack.c.h.b16 %v165
  %v2033 = vunpack.c.l.b16 %v166
  %v2034 = vunpack.c.h.b16 %v166
  %v2035 = vunpack.c.l.b16 %v167
  %v2036 = vunpack.c.h.b16 %v167
  %v2037 = vunpack.c.l.b16 %v168
  %v2038 = vunpack.c.h.b16 %v168
  %v2039 = vunpack.c.l.b16 %v169
  %v2040 = vunpack.c.h.b16 %v169
  %v2041 = vunpack.c.l.b16 %v170
  %v2042 = vunpack.c.h.b16 %v170
  %v2043 = vunpack.c.l.b16 %v171
  %v2044 = vunpack.c.h.b16 %v171
  %v2045 = vunpack.c.l.b16 %v172
  %v2046 = vunpack.c.h.b16 %v172
  %v2047 = vunpack.c.l.b16 %v173
  %v2048 = vunpack.c.h.b16 %v173
  %v2049 = vunpack.c.l.b16 %v174
  %v2050 = vunpack.c.h.b16 %v174
  %v2051 = vunpack.c.l.b16 %v175
  %v2052 = vunpack.c.h.b16 %v175
  %v2053 = vunpack.c.l.b16 %v176
  %v2054 = vunpack.c.h.b16 %v176
  %v2055 = vunpack.c.l.b16 %v177
  %v2056 = vunpack.c.h.b16 %v177
  %v2057 = vunpack.c.l.b16 %v178
  %v2058 = vunpack.c.h.b16 %v178
  %v2059 = vunpack.c.l.b16 %v179
  %v2060 = vunpack.c.h.b16 %v179
  %v2061 = vunpack.c.l.b16 %v180
  %v2062 = vunpack.c.h.b16 %v180
  %v2063 = vunpack.c.l.b16 %v181
  %v2064 = vunpack.c.h.b16 %v181
  %v2065 = vunpack.c.l.b16 %v182
  %v2066 = vunpack.c.h.b16 %v182
  %v2067 = vunpack.c.l.b16 %v183
  %v2068 = vunpack.c.h.b16 %v183
  %v2069 = vunpack.c.l.b16 %v184
  %v2070 = vunpack.c.h.b16 %v184
  %v2071 = vunpack.c.l.b16 %v185
  %v2072 = vunpack.c.h.b16 %v185
  %v2073 = vunpack.c.l.b16 %v186
  %v2074 = vunpack.c.h.b16 %v186
  %v2075 = vunpack.c.l.b16 %v187
  %v2076 = vunpack.c.h.b16 %v187
  %v2077 = vunpack.c.l.b16 %v188
  %v2078 = vunpack.c.h.b16 %v188
  %v2079 = vunpack.c.l.b16 %v189
  %v2080 = vunpack.c.h.b16 %v189
  %v2081 = vunpack.c.l.b16 %v190
  %v2082 = vunpack.c.h.b16 %v190
  %v2083 = vunpack.c.l.b16 %v191
  %v2084 = vunpack.c.h.b16 %v191
  %v2085 = vunpack.c.l.b16 %v192
  %v2086 = vunpack.c.h.b16 %v192
  %v2087 = vunpack.c.l.b16 %v193
  %v2088 = vunpack.c.h.b16 %v193
  %v2089 = vunpack.c.l.b16 %v194
  %v2090 = vunpack.c.h.b16 %v194
  %v2091 = vunpack.c.l.b16 %v195
  %v2092 = vunpack.c.h.b16 %v195
  %v2093 = vunpack.c.l.b16 %v196
  %v2094 = vunpack.c.h.b16 %v196
  %v2095 = vunpack.c.l.b16 %v197
  %v2096 = vunpack.c.h.b16 %v197
  %v2097 = vunpack.c.l.b16 %v198
  %v2098 = vunpack.c.h.b16 %v198
  %v2099 = vunpack.c.l.b16 %v199
  %v2100 = vunpack.c.h.b16 %v199
  %v2101 = vunpack.c.l.b16 %v200
  %v2102 = vunpack.c.h.b16 %v200
  %v2103 = vunpack.c.l.b16 %v201
  %v2104 = vunpack.c.h.b16 %v201
  %v2105 = vunpack.c.l.b16 %v202
  %v2106 = vunpack.c.h.b16 %v202
  %v2107 = vunpack.c.l.b16 %v203
  %v2108 = vunpack.c.h.b16 %v203
  %v2109 = vunpack.c.l.b16 %v204
  %v2110 = vunpack.c.h.b16 %v204
  %v2111 = vunpack.c.l.b16 %v205
  %v2112 = vunpack.c.h.b16 %v205
  %v2113 = vunpack.c.l.b16 %v206
  %v2114 = vunpack.c.h.b16 %v206
  %v2115 = vunpack.c.l.b16 %v207
  %v2116 = vunpack.c.h.b16 %v207
  %v2117 = vunpack.c.l.b16 %v208
  %v2118 = vunpack.c.h.b16 %v208
  %v2119 = vunpack.c.l.b16 %v209
  %v2120 = vunpack.c.h.b16 %v209
  %v2121 = vunpack.c.l.b16 %v210
  %v2122 = vunpack.c.h.b16 %v210
  %v2123 = vunpack.c.l.b16 %v211
  %v2124 = vunpack.c.h.b16 %v211
  %v2125 = vunpack.c.l.b16 %v212
  %v2126 = vunpack.c.h.b16 %v212
  %v2127 = vunpack.c.l.b16 %v213
  %v2128 = vunpack.c.h.b16 %v213
  %v2129 = vunpack.c.l.b16 %v214
  %v2130 = vunpack.c.h.b16 %v214
  %v2131 = vunpack.c.l.b16 %v215
  %v2132 = vunpack.c.h.b16 %v215
  %v2133 = vunpack.c.l.b16 %v216
  %v2134 = vunpack.c.h.b16 %v216
  %v2135 = vunpack.c.l.b16 %v217
  %v2136 = vunpack.c.h.b16 %v217
  %v2137 = vunpack.c.l.b16 %v218
  %v2138 = vunpack.c.h.b16 %v218
  %v2139 = vunpack.c.l.b16 %v219
  %v2140 = vunpack.c.h.b16 %v219
  %v2141 = vunpack.c.l.b16 %v220
  %v2142 = vunpack.c.h.b16 %v220
  %v2143 = vunpack.c.l.b16 %v221
  %v2144 = vunpack.c.h.b16 %v221
  %v2145 = vunpack.c.l.b16 %v222
  %v2146 = vunpack.c.h.b16 %v222
  %v2147 = vunpack.c.l.b16 %v223
  %v2148 = vunpack.c.h.b16 %v223
  %v2149 = vunpack.c.l.b16 %v224
  %v2150 = vunpack.c.h.b16 %v224
  %v2151 = vunpack.c.l.b16 %v225
  %v2152 = vunpack.c.h.b16 %v225
  %v2153 = vunpack.c.l.b16 %v226
  %v2154 = vunpack.c.h.b16 %v226
  %v2155 = vunpack.c.l.b16 %v227
  %v2156 = vunpack.c.h.b16 %v227
  %v2157 = vunpack.c.l.b16 %v228
  %v2158 = vunpack.c.h.b16 %v228
  %v2159 = vunpack.c.l.b16 %v229
  %v2160 = vunpack.c.h.b16 %v229
  %v2161 = vunpack.c.l.b16 %v230
  %v2162 = vunpack.c.h.b16 %v230
  %v2163 = vunpack.c.l.b16 %v231
  %v2164 = vunpack.c.h.b16 %v231
  %v2165 = vunpack.c.l.b16 %v232
  %v2166 = vunpack.c.h.b16 %v232
  %v2167 = vunpack.c.l.b16 %v233
  %v2168 = vunpack.c.h.b16 %v233
  %v2169 = vunpack.c.l.b16 %v234
  %v2170 = vunpack.c.h.b16 %v234
  %v2171 = vunpack.c.l.b16 %v235
  %v2172 = vunpack.c.h.b16 %v235
  %v2173 = vunpack.c.l.b16 %v236
  %v2174 = vunpack.c.h.b16 %v236
  %v2175 = vunpack.c.l.b16 %v237
  %v2176 = vunpack.c.h.b16 %v237
  %v2177 = vunpack.c.l.b16 %v238
  %v2178 = vunpack.c.h.b16 %v238
  %v2179 = vunpack.c.l.b16 %v239
  %v2180 = vunpack.c.h.b16 %v239
  %v2181 = vunpack.c.l.b16 %v240
  %v2182 = vunpack.c.h.b16 %v240
  %v2183 = vunpack.c.l.b16 %v241
  %v2184 = vunpack.c.h.b16 %v241
  %v2185 = vunpack.c.l.b16 %v242
  %v2186 = vunpack.c.h.b16 %v242
  %v2187 = vunpack.c.l.b16 %v243
  %v2188 = vunpack.c.h.b16 %v243
  %v2189 = vunpack.c.l.b16 %v244
  %v2190 = vunpack.c.h.b16 %v244
  %v2191 = vunpack.c.l.b16 %v245
  %v2192 = vunpack.c.h.b16 %v245
  %v2193 = vunpack.c.l.b16 %v246
  %v2194 = vunpack.c.h.b16 %v246
  %v2195 = vunpack.c.l.b16 %v247
  %v2196 = vunpack.c.h.b16 %v247
  %v2197 = vunpack.c.l.b16 %v248
  %v2198 = vunpack.c.h.b16 %v248
  %v2199 = vunpack.c.l.b16 %v249
  %v2200 = vunpack.c.h.b16 %v249
  %v2201 = vunpack.c.l.b16 %v250
  %v2202 = vunpack.c.h.b16 %v250
  %v2203 = vunpack.c.l.b16 %v251
  %v2204 = vunpack.c.h.b16 %v251
  %v2205 = vunpack.c.l.b16 %v252
  %v2206 = vunpack.c.h.b16 %v252
  %v2207 = vunpack.c.l.b16 %v253
  %v2208 = vunpack.c.h.b16 %v253
  %v2209 = vunpack.c.l.b16 %v254
  %v2210 = vunpack.c.h.b16 %v254
  %v2211 = vunpack.c.l.b16 %v255
  %v2212 = vunpack.c.h.b16 %v255
  %v2213 = vunpack.c.l.b16 %v256
  %v2214 = vunpack.c.h.b16 %v256
  %v2215 = vunpack.c.l.b16 %v257
  %v2216 = vunpack.c.h.b16 %v257
  %v2217 = vunpack.c.l.b16 %v258
  %v2218 = vunpack.c.h.b16 %v258
  %v2219 = vunpack.c.l.b16 %v259
  %v2220 = vunpack.c.h.b16 %v259
  %v2221 = vunpack.c.l.b16 %v260
  %v2222 = vunpack.c.h.b16 %v260
  %v2223 = vunpack.c.l.b16 %v261
  %v2224 = vunpack.c.h.b16 %v261
  %v2225 = vunpack.c.l.b16 %v262
  %v2226 = vunpack.c.h.b16 %v262
  %v2227 = vunpack.c.l.b16 %v263
  %v2228 = vunpack.c.h.b16 %v263
  %v2229 = vunpack.c.l.b16 %v264
  %v2230 = vunpack.c.h.b16 %v264
  %v2231 = vunpack.c.l.b16 %v265
  %v2232 = vunpack.c.h.b16 %v265
  %v2233 = vunpack.c.l.b16 %v266
  %v2234 = vunpack.c.h.b16 %v266
  %v2235 = vunpack.c.l.b16 %v267
  %v2236 = vunpack.c.h.b16 %v267
  %v2237 = vunpack.c.l.b16 %v268
  %v2238 = vunpack.c.h.b16 %v268
  %v2239 = vunpack.c.l.b16 %v269
  %v2240 = vunpack.c.h.b16 %v269
  %v2241 = vunpack.c.l.b16 %v270
  %v2242 = vunpack.c.h.b16 %v270
  %v2243 = vunpack.c.l.b16 %v271
  %v2244 = vunpack.c.h.b16 %v271
  %v2245 = vunpack.c.l.b16 %v272
  %v2246 = vunpack.c.h.b16 %v272
  %v2247 = vunpack.c.l.b16 %v273
  %v2248 = vunpack.c.h.b16 %v273
  %v2249 = vunpack.c.l.b16 %v274
  %v2250 = vunpack.c.h.b16 %v274
  %v2251 = vunpack.c.l.b16 %v275
  %v2252 = vunpack.c.h.b16 %v275
  %v2253 = vunpack.c.l.b16 %v276
  %v2254 = vunpack.c.h.b16 %v276
  %v2255 = vunpack.c.l.b16 %v277
  %v2256 = vunpack.c.h.b16 %v277
  %v2257 = vunpack.c.l.b16 %v278
  %v2258 = vunpack.c.h.b16 %v278
  %v2259 = vunpack.c.l.b16 %v279
  %v2260 = vunpack.c.h.b16 %v279
  %v2261 = vunpack.c.l.b16 %v280
  %v2262 = vunpack.c.h.b16 %v280
  %v2263 = vunpack.c.l.b16 %v281
  %v2264 = vunpack.c.h.b16 %v281
  %v2265 = vunpack.c.l.b16 %v282
  %v2266 = vunpack.c.h.b16 %v282
  %v2267 = vunpack.c.l.b16 %v283
  %v2268 = vunpack.c.h.b16 %v283
  %v2269 = vunpack.c.l.b16 %v284
  %v2270 = vunpack.c.h.b16 %v284
  %v2271 = vunpack.c.l.b16 %v285
  %v2272 = vunpack.c.h.b16 %v285
  %v2273 = vunpack.c.l.b16 %v286
  %v2274 = vunpack.c.h.b16 %v286
  %v2275 = vunpack.c.l.b16 %v287
  %v2276 = vunpack.c.h.b16 %v287
  %v2277 = vunpack.c.l.b16 %v288
  %v2278 = vunpack.c.h.b16 %v288
  %v2279 = vunpack.c.l.b16 %v289
  %v2280 = vunpack.c.h.b16 %v289
  %v2281 = vunpack.c.l.b16 %v290
  %v2282 = vunpack.c.h.b16 %v290
  %v2283 = vunpack.c.l.b16 %v291
  %v2284 = vunpack.c.h.b16 %v291
  %v2285 = vunpack.c.l.b16 %v292
  %v2286 = vunpack.c.h.b16 %v292
  %v2287 = vunpack.c.l.b16 %v293
  %v2288 = vunpack.c.h.b16 %v293
  %v2289 = vunpack.c.l.b16 %v294
  %v2290 = vunpack.c.h.b16 %v294
  %v2291 = vunpack.c.l.b16 %v295
  %v2292 = vunpack.c.h.b16 %v295
  %v2293 = vunpack.c.l.b16 %v296
  %v2294 = vunpack.c.h.b16 %v296
  %v2295 = vunpack.c.l.b16 %v297
  %v2296 = vunpack.c.h.b16 %v297
  %v2297 = vunpack.c.l.b16 %v298
  %v2298 = vunpack.c.h.b16 %v298
  %v2299 = vunpack.c.l.b16 %v299
  %v2300 = vunpack.c.h.b16 %v299
  %v2301 = vunpack.c.l.b16 %v300
  %v2302 = vunpack.c.h.b16 %v300
  %v2303 = vunpack.c.l.b16 %v301
  %v2304 = vunpack.c.h.b16 %v301
  %v2305 = vunpack.c.l.b16 %v302
  %v2306 = vunpack.c.h.b16 %v302
  %v2307 = vunpack.c.l.b16 %v303
  %v2308 = vunpack.c.h.b16 %v303
  %v2309 = vunpack.c.l.b16 %v304
  %v2310 = vunpack.c.h.b16 %v304
  %v2311 = vunpack.c.l.b16 %v305
  %v2312 = vunpack.c.h.b16 %v305
  %v2313 = vunpack.c.l.b16 %v306
  %v2314 = vunpack.c.h.b16 %v306
  %v2315 = vunpack.c.l.b16 %v307
  %v2316 = vunpack.c.h.b16 %v307
  %v2317 = vunpack.c.l.b16 %v308
  %v2318 = vunpack.c.h.b16 %v308
  %v2319 = vunpack.c.l.b16 %v309
  %v2320 = vunpack.c.h.b16 %v309
  %v2321 = vunpack.c.l.b16 %v310
  %v2322 = vunpack.c.h.b16 %v310
  %v2323 = vunpack.c.l.b16 %v311
  %v2324 = vunpack.c.h.b16 %v311
  %v2325 = vunpack.c.l.b16 %v312
  %v2326 = vunpack.c.h.b16 %v312
  %v2327 = vunpack.c.l.b16 %v313
  %v2328 = vunpack.c.h.b16 %v313
  %v2329 = vunpack.c.l.b16 %v314
  %v2330 = vunpack.c.h.b16 %v314
  %v2331 = vunpack.c.l.b16 %v315
  %v2332 = vunpack.c.h.b16 %v315
  %v2333 = vunpack.c.l.b16 %v316
  %v2334 = vunpack.c.h.b16 %v316
  %v2335 = vunpack.c.l.b16 %v317
  %v2336 = vunpack.c.h.b16 %v317
  %v2337 = vunpack.c.l.b16 %v318
  %v2338 = vunpack.c.h.b16 %v318
  %v2339 = vunpack.c.l.b16 %v319
  %v2340 = vunpack.c.h.b16 %v319
  %v2341 = vunpack.c.l.b16 %v320
  %v2342 = vunpack.c.h.b16 %v320
  %v2343 = vunpack.c.l.b16 %v321
  %v2344 = vunpack.c.h.b16 %v321
  %v2345 = vunpack.c.l.b16 %v322
  %v2346 = vunpack.c.h.b16 %v322
  %v2347 = vunpack.c.l.b16 %v323
  %v2348 = vunpack.c.h.b16 %v323
  %v2349 = vunpack.c.l.b16 %v324
  %v2350 = vunpack.c.h.b16 %v324
  %v2351 = vunpack.c.l.b16 %v325
  %v2352 = vunpack.c.h.b16 %v325
  %v2353 = vunpack.c.l.b16 %v326
  %v2354 = vunpack.c.h.b16 %v326
  %v2355 = vunpack.c.l.b16 %v327
  %v2356 = vunpack.c.h.b16 %v327
  %v2357 = vunpack.c.l.b16 %v328
  %v2358 = vunpack.c.h.b16 %v328
  %v2359 = vunpack.c.l.b16 %v329
  %v2360 = vunpack.c.h.b16 %v329
  %v2361 = vunpack.c.l.b16 %v330
  %v2362 = vunpack.c.h.b16 %v330
  %v2363 = vunpack.c.l.b16 %v331
  %v2364 = vunpack.c.h.b16 %v331
  %v2365 = vunpack.c.l.b16 %v332
  %v2366 = vunpack.c.h.b16 %v332
  %v2367 = vunpack.c.l.b16 %v333
  %v2368 = vunpack.c.h.b16 %v333
  %v2369 = vunpack.c.l.b16 %v334
  %v2370 = vunpack.c.h.b16 %v334
  %v2371 = vunpack.c.l.b16 %v335
  %v2372 = vunpack.c.h.b16 %v335
  %v2373 = vunpack.c.l.b16 %v336
  %v2374 = vunpack.c.h.b16 %v336
  %v2375 = vunpack.c.l.b16 %v337
  %v2376 = vunpack.c.h.b16 %v337
  %v2377 = vunpack.c.l.b16 %v338
  %v2378 = vunpack.c.h.b16 %v338
  %v2379 = vunpack.c.l.b16 %v339
  %v2380 = vunpack.c.h.b16 %v339
  %v2381 = vunpack.c.l.b16 %v340
  %v2382 = vunpack.c.h.b16 %v340
  %v2383 = vunpack.c.l.b16 %v341
  %v2384 = vunpack.c.h.b16 %v341
  %v2385 = vunpack.c.l.b16 %v342
  %v2386 = vunpack.c.h.b16 %v342
  %v2387 = vunpack.c.l.b16 %v343
  %v2388 = vunpack.c.h.b16 %v343
  %v2389 = vunpack.c.l.b16 %v344
  %v2390 = vunpack.c.h.b16 %v344
  %v2391 = vunpack.c.l.b16 %v345
  %v2392 = vunpack.c.h.b16 %v345
  %v2393 = vunpack.c.l.b16 %v346
  %v2394 = vunpack.c.h.b16 %v346
  %v2395 = vunpack.c.l.b16 %v347
  %v2396 = vunpack.c.h.b16 %v347
  %v2397 = vunpack.c.l.b16 %v348
  %v2398 = vunpack.c.h.b16 %v348
  %v2399 = vunpack.c.l.b16 %v349
  %v2400 = vunpack.c.h.b16 %v349
  %v2401 = vunpack.c.l.b16 %v350
  %v2402 = vunpack.c.h.b16 %v350
  %v2403 = vunpack.c.l.b16 %v351
  %v2404 = vunpack.c.h.b16 %v351
  %v2405 = vunpack.c.l.b16 %v352
  %v2406 = vunpack.c.h.b16 %v352
  %v2407 = vunpack.c.l.b16 %v353
  %v2408 = vunpack.c.h.b16 %v353
  %v2409 = vunpack.c.l.b16 %v354
  %v2410 = vunpack.c.h.b16 %v354
  %v2411 = vunpack.c.l.b16 %v355
  %v2412 = vunpack.c.h.b16 %v355
  %v2413 = vunpack.c.l.b16 %v356
  %v2414 = vunpack.c.h.b16 %v356
  %v2415 = vunpack.c.l.b16 %v357
  %v2416 = vunpack.c.h.b16 %v357
  %v2417 = vunpack.c.l.b16 %v358
  %v2418 = vunpack.c.h.b16 %v358
  %v2419 = vunpack.c.l.b16 %v359
  %v2420 = vunpack.c.h.b16 %v359
  %v2421 = vunpack.c.l.b16 %v360
  %v2422 = vunpack.c.h.b16 %v360
  %v2423 = vunpack.c.l.b16 %v361
  %v2424 = vunpack.c.h.b16 %v361
  %v2425 = vunpack.c.l.b16 %v362
  %v2426 = vunpack.c.h.b16 %v362
  %v2427 = vunpack.c.l.b16 %v363
  %v2428 = vunpack.c.h.b16 %v363
  %v2429 = vunpack.c.l.b16 %v364
  %v2430 = vunpack.c.h.b16 %v364
  %v2431 = vunpack.c.l.b16 %v365
  %v2432 = vunpack.c.h.b16 %v365
  %v2433 = vunpack.c.l.b16 %v366
  %v2434 = vunpack.c.h.b16 %v366
  %v2435 = vunpack.c.l.b16 %v367
  %v2436 = vunpack.c.h.b16 %v367
  %v2437 = vunpack.c.l.b16 %v368
  %v2438 = vunpack.c.h.b16 %v368
  %v2439 = vunpack.c.l.b16 %v369
  %v2440 = vunpack.c.h.b16 %v369
  %v2441 = vunpack.c.l.b16 %v370
  %v2442 = vunpack.c.h.b16 %v370
  %v2443 = vunpack.c.l.b16 %v371
  %v2444 = vunpack.c.h.b16 %v371
  %v2445 = vunpack.c.l.b16 %v372
  %v2446 = vunpack.c.h.b16 %v372
  %v2447 = vunpack.c.l.b16 %v373
  %v2448 = vunpack.c.h.b16 %v373
  %v2449 = vunpack.c.l.b16 %v374
  %v2450 = vunpack.c.h.b16 %v374
  %v2451 = vunpack.c.l.b16 %v375
  %v2452 = vunpack.c.h.b16 %v375
  %v2453 = vunpack.c.l.b16 %v376
  %v2454 = vunpack.c.h.b16 %v376
  %v2455 = vunpack.c.l.b16 %v377
  %v2456 = vunpack.c.h.b16 %v377
  %v2457 = vunpack.c.l.b16 %v378
  %v2458 = vunpack.c.h.b16 %v378
  %v2459 = vunpack.c.l.b16 %v379
  %v2460 = vunpack.c.h.b16 %v379
  %v2461 = vunpack.c.l.b16 %v380
  %v2462 = vunpack.c.h.b16 %v380
  %v2463 = vunpack.c.l.b16 %v381
  %v2464 = vunpack.c.h.b16 %v381
  %v2465 = vunpack.c.l.b16 %v382
  %v2466 = vunpack.c.h.b16 %v382
  %v2467 = vunpack.c.l.b16 %v383
  %v2468 = vunpack.c.h.b16 %v383
  %v2469 = vunpack.c.l.b16 %v384
  %v2470 = vunpack.c.h.b16 %v384
  %v2471 = vunpack.c.l.b16 %v385
  %v2472 = vunpack.c.h.b16 %v385
  %v2473 = vunpack.c.l.b16 %v386
  %v2474 = vunpack.c.h.b16 %v386
  %v2475 = vunpack.c.l.b16 %v387
  %v2476 = vunpack.c.h.b16 %v387
  %v2477 = vunpack.c.l.b16 %v388
  %v2478 = vunpack.c.h.b16 %v388
  %v2479 = vunpack.c.l.b16 %v389
  %v2480 = vunpack.c.h.b16 %v389
  %v2481 = vunpack.c.l.b16 %v390
  %v2482 = vunpack.c.h.b16 %v390
  %v2483 = vunpack.c.l.b16 %v391
  %v2484 = vunpack.c.h.b16 %v391
  %v2485 = vunpack.c.l.b16 %v392
  %v2486 = vunpack.c.h.b16 %v392
  %v2487 = vunpack.c.l.b16 %v393
  %v2488 = vunpack.c.h.b16 %v393
  %v2489 = vunpack.c.l.b16 %v394
  %v2490 = vunpack.c.h.b16 %v394
  %v2491 = vunpack.c.l.b16 %v395
  %v2492 = vunpack.c.h.b16 %v395
  %v2493 = vunpack.c.l.b16 %v396
  %v2494 = vunpack.c.h.b16 %v396
  %v2495 = vunpack.c.l.b16 %v397
  %v2496 = vunpack.c.h.b16 %v397
  %v2497 = vunpack.c.l.b16 %v398
  %v2498 = vunpack.c.h.b16 %v398
  %v2499 = vunpack.c.l.b16 %v399
  %v2500 = vunpack.c.h.b16 %v399
  %v2501 = vunpack.c.l.b16 %v400
  %v2502 = vunpack.c.h.b16 %v400
  %v2503 = vunpack.c.l.b16 %v401
  %v2504 = vunpack.c.h.b16 %v401
  %v2505 = vunpack.c.l.b16 %v402
  %v2506 = vunpack.c.h.b16 %v402
  %v2507 = vunpack.c.l.b16 %v403
  %v2508 = vunpack.c.h.b16 %v403
  %v2509 = vunpack.c.l.b16 %v404
  %v2510 = vunpack.c.h.b16 %v404
  %v2511 = vunpack.c.l.b16 %v405
  %v2512 = vunpack.c.h.b16 %v405
  %v2513 = vunpack.c.l.b16 %v406
  %v2514 = vunpack.c.h.b16 %v406
  %v2515 = vunpack.c.l.b16 %v407
  %v2516 = vunpack.c.h.b16 %v407
  %v2517 = vunpack.c.l.b16 %v408
  %v2518 = vunpack.c.h.b16 %v408
  %v2519 = vunpack.c.l.b16 %v409
  %v2520 = vunpack.c.h.b16 %v409
  %v2521 = vunpack.c.l.b16 %v410
  %v2522 = vunpack.c.h.b16 %v410
  %v2523 = vunpack.c.l.b16 %v411
  %v2524 = vunpack.c.h.b16 %v411
  %v2525 = vunpack.c.l.b16 %v412
  %v2526 = vunpack.c.h.b16 %v412
  %v2527 = vunpack.c.l.b16 %v413
  %v2528 = vunpack.c.h.b16 %v413
  %v2529 = vunpack.c.l.b16 %v414
  %v2530 = vunpack.c.h.b16 %v414
  %v2531 = vunpack.c.l.b16 %v415
  %v2532 = vunpack.c.h.b16 %v415
  %v2533 = vunpack.c.l.b16 %v416
  %v2534 = vunpack.c.h.b16 %v416
  %v2535 = vunpack.c.l.b16 %v417
  %v2536 = vunpack.c.h.b16 %v417
  %v2537 = vunpack.c.l.b16 %v418
  %v2538 = vunpack.c.h.b16 %v418
  %v2539 = vunpack.c.l.b16 %v419
  %v2540 = vunpack.c.h.b16 %v419
  %v2541 = vunpack.c.l.b16 %v420
  %v2542 = vunpack.c.h.b16 %v420
  %v2543 = vunpack.c.l.b16 %v421
  %v2544 = vunpack.c.h.b16 %v421
  %v2545 = vunpack.c.l.b16 %v422
  %v2546 = vunpack.c.h.b16 %v422
  %v2547 = vunpack.c.l.b16 %v423
  %v2548 = vunpack.c.h.b16 %v423
  %v2549 = vunpack.c.l.b16 %v424
  %v2550 = vunpack.c.h.b16 %v424
  %v2551 = vunpack.c.l.b16 %v425
  %v2552 = vunpack.c.h.b16 %v425
  %v2553 = vunpack.c.l.b16 %v426
  %v2554 = vunpack.c.h.b16 %v426
  %v2555 = vunpack.c.l.b16 %v427
  %v2556 = vunpack.c.h.b16 %v427
  %v2557 = vunpack.c.l.b16 %v428
  %v2558 = vunpack.c.h.b16 %v428
  %v2559 = vunpack.c.l.b16 %v429
  %v2560 = vunpack.c.h.b16 %v429
  %v2561 = vunpack.c.l.b16 %v430
  %v2562 = vunpack.c.h.b16 %v430
  %v2563 = vunpack.c.l.b16 %v431
  %v2564 = vunpack.c.h.b16 %v431
  %v2565 = vunpack.c.l.b16 %v432
  %v2566 = vunpack.c.h.b16 %v432
  %v2567 = vunpack.c.l.b16 %v433
  %v2568 = vunpack.c.h.b16 %v433
  %v2569 = vunpack.c.l.b16 %v434
  %v2570 = vunpack.c.h.b16 %v434
  %v2571 = vunpack.c.l.b16 %v435
  %v2572 = vunpack.c.h.b16 %v435
  %v2573 = vunpack.c.l.b16 %v436
  %v2574 = vunpack.c.h.b16 %v436
  %v2575 = vunpack.c.l.b16 %v437
  %v2576 = vunpack.c.h.b16 %v437
  %v2577 = vunpack.c.l.b16 %v438
  %v2578 = vunpack.c.h.b16 %v438
  %v2579 = vunpack.c.l.b16 %v439
  %v2580 = vunpack.c.h.b16 %v439
  %v2581 = vunpack.c.l.b16 %v440
  %v2582 = vunpack.c.h.b16 %v440
  %v2583 = vunpack.c.l.b16 %v441
  %v2584 = vunpack.c.h.b16 %v441
  %v2585 = vunpack.c.l.b16 %v442
  %v2586 = vunpack.c.h.b16 %v442
  %v2587 = vunpack.c.l.b16 %v443
  %v2588 = vunpack.c.h.b16 %v443
  %v2589 = vunpack.c.l.b16 %v444
  %v2590 = vunpack.c.h.b16 %v444
  %v2591 = vunpack.c.l.b16 %v445
  %v2592 = vunpack.c.h.b16 %v445
  %v2593 = vunpack.c.l.b16 %v446
  %v2594 = vunpack.c.h.b16 %v446
  %v2595 = vunpack.c.l.b16 %v447
  %v2596 = vunpack.c.h.b16 %v447
  %v2597 = vunpack.c.l.b16 %v448
  %v2598 = vunpack.c.h.b16 %v448
  %v2599 = vunpack.c.l.b16 %v449
  %v2600 = vunpack.c.h.b16 %v449
  %v2601 = vunpack.c.l.b16 %v450
  %v2602 = vunpack.c.h.b16 %v450
  %v2603 = vunpack.c.l.b16 %v451
  %v2604 = vunpack.c.h.b16 %v451
  %v2605 = vunpack.c.l.b16 %v452
  %v2606 = vunpack.c.h.b16 %v452
  %v2607 = vunpack.c.l.b16 %v453
  %v2608 = vunpack.c.h.b16 %v453
  %v2609 = vunpack.c.l.b16 %v454
  %v2610 = vunpack.c.h.b16 %v454
  %v2611 = vunpack.c.l.b16 %v455
  %v2612 = vunpack.c.h.b16 %v455
  %v2613 = vunpack.c.l.b16 %v456
  %v2614 = vunpack.c.h.b16 %v456
  %v2615 = vunpack.c.l.b16 %v457
  %v2616 = vunpack.c.h.b16 %v457
  %v2617 = vunpack.c.l.b16 %v458
  %v2618 = vunpack.c.h.b16 %v458
  %v2619 = vunpack.c.l.b16 %v459
  %v2620 = vunpack.c.h.b16 %v459
  %v2621 = vunpack.c.l.b16 %v460
  %v2622 = vunpack.c.h.b16 %v460
  %v2623 = vunpack.c.l.b16 %v461
  %v2624 = vunpack.c.h.b16 %v461
  %v2625 = vunpack.c.l.b16 %v462
  %v2626 = vunpack.c.h.b16 %v462
  %v2627 = vunpack.c.l.b16 %v463
  %v2628 = vunpack.c.h.b16 %v463
  %v2629 = vunpack.c.l.b16 %v464
  %v2630 = vunpack.c.h.b16 %v464
  %v2631 = vunpack.c.l.b16 %v465
  %v2632 = vunpack.c.h.b16 %v465
  %v2633 = vunpack.c.l.b16 %v466
  %v2634 = vunpack.c.h.b16 %v466
  %v2635 = vunpack.c.l.b16 %v467
  %v2636 = vunpack.c.h.b16 %v467
  %v2637 = vunpack.c.l.b16 %v468
  %v2638 = vunpack.c.h.b16 %v468
  %v2639 = vunpack.c.l.b16 %v469
  %v2640 = vunpack.c.h.b16 %v469
  %v2641 = vunpack.c.l.b16 %v470
  %v2642 = vunpack.c.h.b16 %v470
  %v2643 = vunpack.c.l.b16 %v471
  %v2644 = vunpack.c.h.b16 %v471
  %v2645 = vunpack.c.l.b16 %v472
  %v2646 = vunpack.c.h.b16 %v472
  %v2647 = vunpack.c.l.b16 %v473
  %v2648 = vunpack.c.h.b16 %v473
  %v2649 = vunpack.c.l.b16 %v474
  %v2650 = vunpack.c.h.b16 %v474
  %v2651 = vunpack.c.l.b16 %v475
  %v2652 = vunpack.c.h.b16 %v475
  %v2653 = vunpack.c.l.b16 %v476
  %v2654 = vunpack.c.h.b16 %v476
  %v2655 = vunpack.c.l.b16 %v477
  %v2656 = vunpack.c.h.b16 %v477
  %v2657 = vunpack.c.l.b16 %v478
  %v2658 = vunpack.c.h.b16 %v478
  %v2659 = vunpack.c.l.b16 %v479
  %v2660 = vunpack.c.h.b16 %v479
  %v2661 = vunpack.c.l.b16 %v480
  %v2662 = vunpack.c.h.b16 %v480
  %v2663 = vunpack.c.l.b16 %v481
  %v2664 = vunpack.c.h.b16 %v481
  %v2665 = vunpack.c.l.b16 %v482
  %v2666 = vunpack.c.h.b16 %v482
  %v2667 = vunpack.c.l.b16 %v483
  %v2668 = vunpack.c.h.b16 %v483
  %v2669 = vunpack.c.l.b16 %v484
  %v2670 = vunpack.c.h.b16 %v484
  %v2671 = vunpack.c.l.b16 %v485
  %v2672 = vunpack.c.h.b16 %v485
  %v2673 = vunpack.c.l.b16 %v486
  %v2674 = vunpack.c.h.b16 %v486
  %v2675 = vunpack.c.l.b16 %v487
  %v2676 = vunpack.c.h.b16 %v487
  %v2677 = vunpack.c.l.b16 %v488
  %v2678 = vunpack.c.h.b16 %v488
  %v2679 = vunpack.c.l.b16 %v489
  %v2680 = vunpack.c.h.b16 %v489
  %v2681 = vunpack.c.l.b16 %v490
  %v2682 = vunpack.c.h.b16 %v490
  %v2683 = vunpack.c.l.b16 %v491
  %v2684 = vunpack.c.h.b16 %v491
  %v2685 = vunpack.c.l.b16 %v492
  %v2686 = vunpack.c.h.b16 %v492
  %v2687 = vunpack.c.l.b16 %v493
  %v2688 = vunpack.c.h.b16 %v493
  %v2689 = vunpack.c.l.b16 %v494
  %v2690 = vunpack.c.h.b16 %v494
  %v2691 = vunpack.c.l.b16 %v495
  %v2692 = vunpack.c.h.b16 %v495
  %v2693 = vunpack.c.l.b16 %v496
  %v2694 = vunpack.c.h.b16 %v496
  %v2695 = vunpack.c.l.b16 %v497
  %v2696 = vunpack.c.h.b16 %v497
  %v2697 = vunpack.c.l.b16 %v498
  %v2698 = vunpack.c.h.b16 %v498
  %v2699 = vunpack.c.l.b16 %v499
  %v2700 = vunpack.c.h.b16 %v499
  %v2701 = vunpack.c.l.b16 %v500
  %v2702 = vunpack.c.h.b16 %v500
  %v2703 = vunpack.c.l.b16 %v501
  %v2704 = vunpack.c.h.b16 %v501
  %v2705 = vunpack.c.l.b16 %v502
  %v2706 = vunpack.c.h.b16 %v502
  %v2707 = vunpack.c.l.b16 %v503
  %v2708 = vunpack.c.h.b16 %v503
  %v2709 = vunpack.c.l.b16 %v504
  %v2710 = vunpack.c.h.b16 %v504
  %v2711 = vunpack.c.l.b16 %v505
  %v2712 = vunpack.c.h.b16 %v505
  %v2713 = vunpack.c.l.b16 %v506
  %v2714 = vunpack.c.h.b16 %v506
  %v2715 = vunpack.c.l.b16 %v507
  %v2716 = vunpack.c.h.b16 %v507
  %v2717 = vunpack.c.l.b16 %v508
  %v2718 = vunpack.c.h.b16 %v508
  %v2719 = vunpack.c.l.b16 %v509
  %v2720 = vunpack.c.h.b16 %v509
  %v2721 = vunpack.c.l.b16 %v510
  %v2722 = vunpack.c.h.b16 %v510
  %v2723 = vunpack.c.l.b16 %v511
  %v2724 = vunpack.c.h.b16 %v511
  %v2725 = vunpack.c.l.b16 %v512
  %v2726 = vunpack.c.h.b16 %v512
  %v2727 = vunpack.c.l.b16 %v513
  %v2728 = vunpack.c.h.b16 %v513
  %v2729 = vunpack.c.l.b16 %v514
  %v2730 = vunpack.c.h.b16 %v514
  %v2731 = vunpack.c.l.b16 %v515
  %v2732 = vunpack.c.h.b16 %v515
  %v2733 = vunpack.c.l.b16 %v516
  %v2734 = vunpack.c.h.b16 %v516
  %v2735 = vunpack.c.l.b16 %v517
  %v2736 = vunpack.c.h.b16 %v517
  %v2737 = vunpack.c.l.b16 %v518
  %v2738 = vunpack.c.h.b16 %v518
  %v2739 = vunpack.c.l.b16 %v519
  %v2740 = vunpack.c.h.b16 %v519
  %v2741 = vunpack.c.l.b16 %v520
  %v2742 = vunpack.c.h.b16 %v520
  %v2743 = vunpack.c.l.b16 %v521
  %v2744 = vunpack.c.h.b16 %v521
  %v2745 = vunpack.c.l.b16 %v522
  %v2746 = vunpack.c.h.b16 %v522
  %v2747 = vunpack.c.l.b16 %v523
  %v2748 = vunpack.c.h.b16 %v523
  %v2749 = vunpack.c.l.b16 %v524
  %v2750 = vunpack.c.h.b16 %v524
  %v2751 = vunpack.c.l.b16 %v525
  %v2752 = vunpack.c.h.b16 %v525
  %v2753 = vunpack.c.l.b16 %v526
  %v2754 = vunpack.c.h.b16 %v526
  %v2755 = vunpack.c.l.b16 %v527
  %v2756 = vunpack.c.h.b16 %v527
  %v2757 = vunpack.c.l.b16 %v528
  %v2758 = vunpack.c.h.b16 %v528
  %v2759 = vunpack.c.l.b16 %v529
  %v2760 = vunpack.c.h.b16 %v529
  %v2761 = vunpack.c.l.b16 %v530
  %v2762 = vunpack.c.h.b16 %v530
  %v2763 = vunpack.c.l.b16 %v531
  %v2764 = vunpack.c.h.b16 %v531
  %v2765 = vunpack.c.l.b16 %v532
  %v2766 = vunpack.c.h.b16 %v532
  %v2767 = vunpack.c.l.b16 %v533
  %v2768 = vunpack.c.h.b16 %v533
  %v2769 = vunpack.c.l.b16 %v534
  %v2770 = vunpack.c.h.b16 %v534
  %v2771 = vunpack.c.l.b16 %v535
  %v2772 = vunpack.c.h.b16 %v535
  %v2773 = vunpack.c.l.b16 %v536
  %v2774 = vunpack.c.h.b16 %v536
  %v2775 = vunpack.c.l.b16 %v537
  %v2776 = vunpack.c.h.b16 %v537
  %v2777 = vunpack.c.l.b16 %v538
  %v2778 = vunpack.c.h.b16 %v538
  %v2779 = vunpack.c.l.b16 %v539
  %v2780 = vunpack.c.h.b16 %v539
  %v2781 = vunpack.c.l.b16 %v540
  %v2782 = vunpack.c.h.b16 %v540
  %v2783 = vunpack.c.l.b16 %v541
  %v2784 = vunpack.c.h.b16 %v541
  %v2785 = vunpack.c.l.b16 %v542
  %v2786 = vunpack.c.h.b16 %v542
  %v2787 = vunpack.c.l.b16 %v543
  %v2788 = vunpack.c.h.b16 %v543
  %v2789 = vunpack.c.l.b16 %v544
  %v2790 = vunpack.c.h.b16 %v544
  %v2791 = vunpack.c.l.b16 %v545
  %v2792 = vunpack.c.h.b16 %v545
  %v2793 = vunpack.c.l.b16 %v546
  %v2794 = vunpack.c.h.b16 %v546
  %v2795 = vunpack.c.l.b16 %v547
  %v2796 = vunpack.c.h.b16 %v547
  %v2797 = vunpack.c.l.b16 %v548
  %v2798 = vunpack.c.h.b16 %v548
  %v2799 = vunpack.c.l.b16 %v549
  %v2800 = vunpack.c.h.b16 %v549
  %v2801 = vunpack.c.l.b16 %v550
  %v2802 = vunpack.c.h.b16 %v550
  %v2803 = vunpack.c.l.b16 %v551
  %v2804 = vunpack.c.h.b16 %v551
  %v2805 = vunpack.c.l.b16 %v552
  %v2806 = vunpack.c.h.b16 %v552
  %v2807 = vunpack.c.l.b16 %v553
  %v2808 = vunpack.c.h.b16 %v553
  %v2809 = vunpack.c.l.b16 %v554
  %v2810 = vunpack.c.h.b16 %v554
  %v2811 = vunpack.c.l.b16 %v555
  %v2812 = vunpack.c.h.b16 %v555
  %v2813 = vunpack.c.l.b16 %v556
  %v2814 = vunpack.c.h.b16 %v556
  %v2815 = vunpack.c.l.b16 %v557
  %v2816 = vunpack.c.h.b16 %v557
  %v2817 = vunpack.c.l.b16 %v558
  %v2818 = vunpack.c.h.b16 %v558
  %v2819 = vunpack.c.l.b16 %v559
  %v2820 = vunpack.c.h.b16 %v559
  %v2821 = vunpack.c.l.b16 %v560
  %v2822 = vunpack.c.h.b16 %v560
  %v2823 = vunpack.c.l.b16 %v561
  %v2824 = vunpack.c.h.b16 %v561
  %v2825 = vunpack.c.l.b16 %v562
  %v2826 = vunpack.c.h.b16 %v562
  %v2827 = vunpack.c.l.b16 %v563
  %v2828 = vunpack.c.h.b16 %v563
  %v2829 = vunpack.c.l.b16 %v564
  %v2830 = vunpack.c.h.b16 %v564
  %v2831 = vunpack.c.l.b16 %v565
  %v2832 = vunpack.c.h.b16 %v565
  %v2833 = vunpack.c.l.b16 %v566
  %v2834 = vunpack.c.h.b16 %v566
  %v2835 = vunpack.c.l.b16 %v567
  %v2836 = vunpack.c.h.b16 %v567
  %v2837 = vunpack.c.l.b16 %v568
  %v2838 = vunpack.c.h.b16 %v568
  %v2839 = vunpack.c.l.b16 %v569
  %v2840 = vunpack.c.h.b16 %v569
  %v2841 = vunpack.c.l.b16 %v570
  %v2842 = vunpack.c.h.b16 %v570
  %v2843 = vunpack.c.l.b16 %v571
  %v2844 = vunpack.c.h.b16 %v571
  %v2845 = vunpack.c.l.b16 %v572
  %v2846 = vunpack.c.h.b16 %v572
  %v2847 = vunpack.c.l.b16 %v573
  %v2848 = vunpack.c.h.b16 %v573
  %v2849 = vunpack.c.l.b16 %v574
  %v2850 = vunpack.c.h.b16 %v574
  %v2851 = vunpack.c.l.b16 %v575
  %v2852 = vunpack.c.h.b16 %v575
  %v2853 = vunpack.c.l.b16 %v576
  %v2854 = vunpack.c.h.b16 %v576
  %v2855 = vunpack.c.l.b16 %v577
  %v2856 = vunpack.c.h.b16 %v577
  %v2857 = vunpack.c.l.b16 %v578
  %v2858 = vunpack.c.h.b16 %v578
  %v2859 = vunpack.c.l.b16 %v579
  %v2860 = vunpack.c.h.b16 %v579
  %v2861 = vunpack.c.l.b16 %v580
  %v2862 = vunpack.c.h.b16 %v580
  %v2863 = vunpack.c.l.b16 %v581
  %v2864 = vunpack.c.h.b16 %v581
  %v2865 = vunpack.c.l.b16 %v582
  %v2866 = vunpack.c.h.b16 %v582
  %v2867 = vunpack.c.l.b16 %v583
  %v2868 = vunpack.c.h.b16 %v583
  %v2869 = vunpack.c.l.b16 %v584
  %v2870 = vunpack.c.h.b16 %v584
  %v2871 = vunpack.c.l.b16 %v585
  %v2872 = vunpack.c.h.b16 %v585
  %v2873 = vunpack.c.l.b16 %v586
  %v2874 = vunpack.c.h.b16 %v586
  %v2875 = vunpack.c.l.b16 %v587
  %v2876 = vunpack.c.h.b16 %v587
  %v2877 = vunpack.c.l.b16 %v588
  %v2878 = vunpack.c.h.b16 %v588
  %v2879 = vunpack.c.l.b16 %v589
  %v2880 = vunpack.c.h.b16 %v589
  %v2881 = vunpack.c.l.b16 %v590
  %v2882 = vunpack.c.h.b16 %v590
  %v2883 = vunpack.c.l.b16 %v591
  %v2884 = vunpack.c.h.b16 %v591
  %v2885 = vunpack.c.l.b16 %v592
  %v2886 = vunpack.c.h.b16 %v592
  %v2887 = vunpack.c.l.b16 %v593
  %v2888 = vunpack.c.h.b16 %v593
  %v2889 = vunpack.c.l.b16 %v594
  %v2890 = vunpack.c.h.b16 %v594
  %v2891 = vunpack.c.l.b16 %v595
  %v2892 = vunpack.c.h.b16 %v595
  %v2893 = vunpack.c.l.b16 %v596
  %v2894 = vunpack.c.h.b16 %v596
  %v2895 = vunpack.c.l.b16 %v597
  %v2896 = vunpack.c.h.b16 %v597
  %v2897 = vunpack.c.l.b16 %v598
  %v2898 = vunpack.c.h.b16 %v598
  %v2899 = vunpack.c.l.b16 %v599
  %v2900 = vunpack.c.h.b16 %v599
  %v2901 = vunpack.c.l.b16 %v600
  %v2902 = vunpack.c.h.b16 %v600
  %v2903 = vunpack.c.l.b16 %v601
  %v2904 = vunpack.c.h.b16 %v601
  %v2905 = vunpack.c.l.b16 %v602
  %v2906 = vunpack.c.h.b16 %v602
  %v2907 = vunpack.c.l.b16 %v603
  %v2908 = vunpack.c.h.b16 %v603
  %v2909 = vunpack.c.l.b16 %v604
  %v2910 = vunpack.c.h.b16 %v604
  %v2911 = vunpack.c.l.b16 %v605
  %v2912 = vunpack.c.h.b16 %v605
  %v2913 = vunpack.c.l.b16 %v606
  %v2914 = vunpack.c.h.b16 %v606
  %v2915 = vunpack.c.l.b16 %v607
  %v2916 = vunpack.c.h.b16 %v607
  %v2917 = vunpack.c.l.b16 %v608
  %v2918 = vunpack.c.h.b16 %v608
  %v2919 = vunpack.c.l.b16 %v609
  %v2920 = vunpack.c.h.b16 %v609
  %v2921 = vunpack.c.l.b16 %v610
  %v2922 = vunpack.c.h.b16 %v610
  %v2923 = vunpack.c.l.b16 %v611
  %v2924 = vunpack.c.h.b16 %v611
  %v2925 = vunpack.c.l.b16 %v612
  %v2926 = vunpack.c.h.b16 %v612
  %v2927 = vunpack.c.l.b16 %v613
  %v2928 = vunpack.c.h.b16 %v613
  %v2929 = vunpack.c.l.b16 %v614
  %v2930 = vunpack.c.h.b16 %v614
  %v2931 = vunpack.c.l.b16 %v615
  %v2932 = vunpack.c.h.b16 %v615
  %v2933 = vunpack.c.l.b16 %v616
  %v2934 = vunpack.c.h.b16 %v616
  %v2935 = vunpack.c.l.b16 %v617
  %v2936 = vunpack.c.h.b16 %v617
  %v2937 = vunpack.c.l.b16 %v618
  %v2938 = vunpack.c.h.b16 %v618
  %v2939 = vunpack.c.l.b16 %v619
  %v2940 = vunpack.c.h.b16 %v619
  %v2941 = vunpack.c.l.b16 %v620
  %v2942 = vunpack.c.h.b16 %v620
  %v2943 = vunpack.c.l.b16 %v621
  %v2944 = vunpack.c.h.b16 %v621
  %v2945 = vunpack.c.l.b16 %v622
  %v2946 = vunpack.c.h.b16 %v622
  %v2947 = vunpack.c.l.b16 %v623
  %v2948 = vunpack.c.h.b16 %v623
  %v2949 = vunpack.c.l.b16 %v624
  %v2950 = vunpack.c.h.b16 %v624
  %v2951 = vunpack.c.l.b16 %v625
  %v2952 = vunpack.c.h.b16 %v625
  %v2953 = vunpack.c.l.b16 %v626
  %v2954 = vunpack.c.h.b16 %v626
  %v2955 = vunpack.c.l.b16 %v627
  %v2956 = vunpack.c.h.b16 %v627
  %v2957 = vunpack.c.l.b16 %v628
  %v2958 = vunpack.c.h.b16 %v628
  %v2959 = vunpack.c.l.b16 %v629
  %v2960 = vunpack.c.h.b16 %v629
  %v2961 = vunpack.c.l.b16 %v630
  %v2962 = vunpack.c.h.b16 %v630
  %v2963 = vunpack.c.l.b16 %v631
  %v2964 = vunpack.c.h.b16 %v631
  %v2965 = vunpack.c.l.b16 %v632
  %v2966 = vunpack.c.h.b16 %v632
  %v2967 = vunpack.c.l.b16 %v633
  %v2968 = vunpack.c.h.b16 %v633
  %v2969 = vunpack.c.l.b16 %v634
  %v2970 = vunpack.c.h.b16 %v634
  %v2971 = vunpack.c.l.b16 %v635
  %v2972 = vunpack.c.h.b16 %v635
  %v2973 = vunpack.c.l.b16 %v636
  %v2974 = vunpack.c.h.b16 %v636
  %v2975 = vunpack.c.l.b16 %v637
  %v2976 = vunpack.c.h.b16 %v637
  %v2977 = vunpack.c.l.b16 %v638
  %v2978 = vunpack.c.h.b16 %v638
  %v2979 = vunpack.c.l.b16 %v639
  %v2980 = vunpack.c.h.b16 %v639
  %v2981 = vunpack.c.l.b16 %v640
  %v2982 = vunpack.c.h.b16 %v640
  %v2983 = vunpack.c.l.b16 %v641
  %v2984 = vunpack.c.h.b16 %v641
  %v2985 = vunpack.c.l.b16 %v642
  %v2986 = vunpack.c.h.b16 %v642
  %v2987 = vunpack.c.l.b16 %v643
  %v2988 = vunpack.c.h.b16 %v643
  %v2989 = vunpack.c.l.b16 %v644
  %v2990 = vunpack.c.h.b16 %v644
  %v2991 = vunpack.c.l.b16 %v645
  %v2992 = vunpack.c.h.b16 %v645
  %v2993 = vunpack.c.l.b16 %v646
  %v2994 = vunpack.c.h.b16 %v646
  %v2995 = vunpack.c.l.b16 %v647
  %v2996 = vunpack.c.h.b16 %v647
  %v2997 = vunpack.c.l.b16 %v648
  %v2998 = vunpack.c.h.b16 %v648
  %v2999 = vunpack.c.l.b16 %v649
  %v3000 = vunpack.c.h.b16 %v649
  %v3001 = vunpack.c.l.b16 %v650
  %v3002 = vunpack.c.h.b16 %v650
  %v3003 = vunpack.c.l.b16 %v651
  %v3004 = vunpack.c.h.b16 %v651
  %v3005 = vunpack.c.l.b16 %v652
  %v3006 = vunpack.c.h.b16 %v652
  %v3007 = vunpack.c.l.b16 %v653
  %v3008 = vunpack.c.h.b16 %v653
  %v3009 = vunpack.c.l.b16 %v654
  %v3010 = vunpack.c.h.b16 %v654
  %v3011 = vunpack.c.l.b16 %v655
  %v3012 = vunpack.c.h.b16 %v655
  %v3013 = vunpack.c.l.b16 %v656
  %v3014 = vunpack.c.h.b16 %v656
  %v3015 = vunpack.c.l.b16 %v657
  %v3016 = vunpack.c.h.b16 %v657
  %v3017 = vunpack.c.l.b16 %v658
  %v3018 = vunpack.c.h.b16 %v658
  %v3019 = vunpack.c.l.b16 %v659
  %v3020 = vunpack.c.h.b16 %v659
  %v3021 = vunpack.c.l.b16 %v660
  %v3022 = vunpack.c.h.b16 %v660
  %v3023 = vunpack.c.l.b16 %v661
  %v3024 = vunpack.c.h.b16 %v661
  %v3025 = vunpack.c.l.b16 %v662
  %v3026 = vunpack.c.h.b16 %v662
  %v3027 = vunpack.c.l.b16 %v663
  %v3028 = vunpack.c.h.b16 %v663
  %v3029 = vunpack.c.l.b16 %v664
  %v3030 = vunpack.c.h.b16 %v664
  %v3031 = vunpack.c.l.b16 %v665
  %v3032 = vunpack.c.h.b16 %v665
  %v3033 = vunpack.c.l.b16 %v666
  %v3034 = vunpack.c.h.b16 %v666
  %v3035 = vunpack.c.l.b16 %v667
  %v3036 = vunpack.c.h.b16 %v667
  %v3037 = vunpack.c.l.b16 %v668
  %v3038 = vunpack.c.h.b16 %v668
  %v3039 = vunpack.c.l.b16 %v669
  %v3040 = vunpack.c.h.b16 %v669
  %v3041 = vunpack.c.l.b16 %v670
  %v3042 = vunpack.c.h.b16 %v670
  %v3043 = vunpack.c.l.b16 %v671
  %v3044 = vunpack.c.h.b16 %v671
  %v3045 = vunpack.c.l.b16 %v672
  %v3046 = vunpack.c.h.b16 %v672
  %v3047 = vunpack.c.l.b16 %v673
  %v3048 = vunpack.c.h.b16 %v673
  %v3049 = vunpack.c.l.b16 %v674
  %v3050 = vunpack.c.h.b16 %v674
  %v3051 = vunpack.c.l.b16 %v675
  %v3052 = vunpack.c.h.b16 %v675
  %v3053 = vunpack.c.l.b16 %v676
  %v3054 = vunpack.c.h.b16 %v676
  %v3055 = vunpack.c.l.b16 %v677
  %v3056 = vunpack.c.h.b16 %v677
  %v3057 = vunpack.c.l.b16 %v678
  %v3058 = vunpack.c.h.b16 %v678
  %v3059 = vunpack.c.l.b16 %v679
  %v3060 = vunpack.c.h.b16 %v679
  %v3061 = vunpack.c.l.b16 %v680
  %v3062 = vunpack.c.h.b16 %v680
  %v3063 = vunpack.c.l.b16 %v681
  %v3064 = vunpack.c.h.b16 %v681
  %v3065 = vunpack.c.l.b16 %v682
  %v3066 = vunpack.c.h.b16 %v682
  %v3067 = vunpack.c.l.b16 %v683
  %v3068 = vunpack.c.h.b16 %v683
  %v3069 = vunpack.c.l.b16 %v684
  %v3070 = vunpack.c.h.b16 %v684
  %v3071 = vunpack.c.l.b16 %v685
  %v3072 = vunpack.c.h.b16 %v685
  %v3073 = vunpack.c.l.b16 %v686
  %v3074 = vunpack.c.h.b16 %v686
  %v3075 = vunpack.c.l.b16 %v687
  %v3076 = vunpack.c.h.b16 %v687
  %v3077 = vunpack.c.l.b16 %v688
  %v3078 = vunpack.c.h.b16 %v688
  %v3079 = vunpack.c.l.b16 %v689
  %v3080 = vunpack.c.h.b16 %v689
  %v3081 = vunpack.c.l.b16 %v690
  %v3082 = vunpack.c.h.b16 %v690
  %v3083 = vunpack.c.l.b16 %v691
  %v3084 = vunpack.c.h.b16 %v691
  %v3085 = vunpack.c.l.b16 %v692
  %v3086 = vunpack.c.h.b16 %v692
  %v3087 = vunpack.c.l.b16 %v693
  %v3088 = vunpack.c.h.b16 %v693
  %v3089 = vunpack.c.l.b16 %v694
  %v3090 = vunpack.c.h.b16 %v694
  %v3091 = vunpack.c.l.b16 %v695
  %v3092 = vunpack.c.h.b16 %v695
  %v3093 = vunpack.c.l.b16 %v696
  %v3094 = vunpack.c.h.b16 %v696
  %v3095 = vunpack.c.l.b16 %v697
  %v3096 = vunpack.c.h.b16 %v697
  %v3097 = vunpack.c.l.b16 %v698
  %v3098 = vunpack.c.h.b16 %v698
  %v3099 = vunpack.c.l.b16 %v699
  %v3100 = vunpack.c.h.b16 %v699
  %v3101 = vunpack.c.l.b16 %v700
  %v3102 = vunpack.c.h.b16 %v700
  %v3103 = vunpack.c.l.b16 %v701
  %v3104 = vunpack.c.h.b16 %v701
  %v3105 = vunpack.c.l.b16 %v702
  %v3106 = vunpack.c.h.b16 %v702
  %v3107 = vunpack.c.l.b16 %v703
  %v3108 = vunpack.c.h.b16 %v703
  %v3109 = vunpack.c.l.b16 %v704
  %v3110 = vunpack.c.h.b16 %v704
  %v3111 = vunpack.c.l.b16 %v705
  %v3112 = vunpack.c.h.b16 %v705
  %v3113 = vunpack.c.l.b16 %v706
  %v3114 = vunpack.c.h.b16 %v706
  %v3115 = vunpack.c.l.b16 %v707
  %v3116 = vunpack.c.h.b16 %v707
  %v3117 = vunpack.c.l.b16 %v708
  %v3118 = vunpack.c.h.b16 %v708
  %v3119 = vunpack.c.l.b16 %v709
  %v3120 = vunpack.c.h.b16 %v709
  %v3121 = vunpack.c.l.b16 %v710
  %v3122 = vunpack.c.h.b16 %v710
  %v3123 = vunpack.c.l.b16 %v711
  %v3124 = vunpack.c.h.b16 %v711
  %v3125 = vunpack.c.l.b16 %v712
  %v3126 = vunpack.c.h.b16 %v712
  %v3127 = vunpack.c.l.b16 %v713
  %v3128 = vunpack.c.h.b16 %v713
  %v3129 = vunpack.c.l.b16 %v714
  %v3130 = vunpack.c.h.b16 %v714
  %v3131 = vunpack.c.l.b16 %v715
  %v3132 = vunpack.c.h.b16 %v715
  %v3133 = vunpack.c.l.b16 %v716
  %v3134 = vunpack.c.h.b16 %v716
  %v3135 = vunpack.c.l.b16 %v717
  %v3136 = vunpack.c.h.b16 %v717
  %v3137 = vunpack.c.l.b16 %v718
  %v3138 = vunpack.c.h.b16 %v718
  %v3139 = vunpack.c.l.b16 %v719
  %v3140 = vunpack.c.h.b16 %v719
  %v3141 = vunpack.c.l.b16 %v720
  %v3142 = vunpack.c.h.b16 %v720
  %v3143 = vunpack.c.l.b16 %v721
  %v3144 = vunpack.c.h.b16 %v721
  %v3145 = vunpack.c.l.b16 %v722
  %v3146 = vunpack.c.h.b16 %v722
  %v3147 = vunpack.c.l.b16 %v723
  %v3148 = vunpack.c.h.b16 %v723
  %v3149 = vunpack.c.l.b16 %v724
  %v3150 = vunpack.c.h.b16 %v724
  %v3151 = vunpack.c.l.b16 %v725
  %v3152 = vunpack.c.h.b16 %v725
  %v3153 = vunpack.c.l.b16 %v726
  %v3154 = vunpack.c.h.b16 %v726
  %v3155 = vunpack.c.l.b16 %v727
  %v3156 = vunpack.c.h.b16 %v727
  %v3157 = vunpack.c.l.b16 %v728
  %v3158 = vunpack.c.h.b16 %v728
  %v3159 = vunpack.c.l.b16 %v729
  %v3160 = vunpack.c.h.b16 %v729
  %v3161 = vunpack.c.l.b16 %v730
  %v3162 = vunpack.c.h.b16 %v730
  %v3163 = vunpack.c.l.b16 %v731
  %v3164 = vunpack.c.h.b16 %v731
  %v3165 = vunpack.c.l.b16 %v732
  %v3166 = vunpack.c.h.b16 %v732
  %v3167 = vunpack.c.l.b16 %v733
  %v3168 = vunpack.c.h.b16 %v733
  %v3169 = vunpack.c.l.b16 %v734
  %v3170 = vunpack.c.h.b16 %v734
  %v3171 = vunpack.c.l.b16 %v735
  %v3172 = vunpack.c.h.b16 %v735
  %v3173 = vunpack.c.l.b16 %v736
  %v3174 = vunpack.c.h.b16 %v736
  %v3175 = vunpack.c.l.b16 %v737
  %v3176 = vunpack.c.h.b16 %v737
  %v3177 = vunpack.c.l.b16 %v738
  %v3178 = vunpack.c.h.b16 %v738
  %v3179 = vunpack.c.l.b16 %v739
  %v3180 = vunpack.c.h.b16 %v739
  %v3181 = vunpack.c.l.b16 %v740
  %v3182 = vunpack.c.h.b16 %v740
  %v3183 = vunpack.c.l.b16 %v741
  %v3184 = vunpack.c.h.b16 %v741
  %v3185 = vunpack.c.l.b16 %v742
  %v3186 = vunpack.c.h.b16 %v742
  %v3187 = vunpack.c.l.b16 %v743
  %v3188 = vunpack.c.h.b16 %v743
  %v3189 = vunpack.c.l.b16 %v744
  %v3190 = vunpack.c.h.b16 %v744
  %v3191 = vunpack.c.l.b16 %v745
  %v3192 = vunpack.c.h.b16 %v745
  %v3193 = vunpack.c.l.b16 %v746
  %v3194 = vunpack.c.h.b16 %v746
  %v3195 = vunpack.c.l.b16 %v747
  %v3196 = vunpack.c.h.b16 %v747
  %v3197 = vunpack.c.l.b16 %v748
  %v3198 = vunpack.c.h.b16 %v748
  %v3199 = vunpack.c.l.b16 %v749
  %v3200 = vunpack.c.h.b16 %v749
  %v3201 = vunpack.c.l.b16 %v750
  %v3202 = vunpack.c.h.b16 %v750
  %v3203 = vunpack.c.l.b16 %v751
  %v3204 = vunpack.c.h.b16 %v751
  %v3205 = vunpack.c.l.b16 %v752
  %v3206 = vunpack.c.h.b16 %v752
  %v3207 = vunpack.c.l.b16 %v753
  %v3208 = vunpack.c.h.b16 %v753
  %v3209 = vunpack.c.l.b16 %v754
  %v3210 = vunpack.c.h.b16 %v754
  %v3211 = vunpack.c.l.b16 %v755
  %v3212 = vunpack.c.h.b16 %v755
  %v3213 = vunpack.c.l.b16 %v756
  %v3214 = vunpack.c.h.b16 %v756
  %v3215 = vunpack.c.l.b16 %v757
  %v3216 = vunpack.c.h.b16 %v757
  %v3217 = vunpack.c.l.b16 %v758
  %v3218 = vunpack.c.h.b16 %v758
  %v3219 = vunpack.c.l.b16 %v759
  %v3220 = vunpack.c.h.b16 %v759
  %v3221 = vunpack.c.l.b16 %v760
  %v3222 = vunpack.c.h.b16 %v760
  %v3223 = vunpack.c.l.b16 %v761
  %v3224 = vunpack.c.h.b16 %v761
  %v3225 = vunpack.c.l.b16 %v762
  %v3226 = vunpack.c.h.b16 %v762
  %v3227 = vunpack.c.l.b16 %v763
  %v3228 = vunpack.c.h.b16 %v763
  %v3229 = vunpack.c.l.b16 %v764
  %v3230 = vunpack.c.h.b16 %v764
  %v3231 = vunpack.c.l.b16 %v765
  %v3232 = vunpack.c.h.b16 %v765
  %v3233 = vunpack.c.l.b16 %v766
  %v3234 = vunpack.c.h.b16 %v766
  %v3235 = vunpack.c.l.b16 %v767
  %v3236 = vunpack.c.h.b16 %v767
  %v3237 = vunpack.c.l.b16 %v768
  %v3238 = vunpack.c.h.b16 %v768
  %v3239 = vunpack.c.l.b16 %v769
  %v3240 = vunpack.c.h.b16 %v769
  %v3241 = vunpack.c.l.b16 %v770
  %v3242 = vunpack.c.h.b16 %v770
  %v3243 = vunpack.c.l.b16 %v771
  %v3244 = vunpack.c.h.b16 %v771
  %v3245 = vunpack.c.l.b16 %v772
  %v3246 = vunpack.c.h.b16 %v772
  %v3247 = vunpack.c.l.b16 %v773
  %v3248 = vunpack.c.h.b16 %v773
  %v3249 = vunpack.c.l.b16 %v774
  %v3250 = vunpack.c.h.b16 %v774
  %v3251 = vunpack.c.l.b16 %v775
  %v3252 = vunpack.c.h.b16 %v775
  %v3253 = vunpack.c.l.b16 %v776
  %v3254 = vunpack.c.h.b16 %v776
  %v3255 = vunpack.c.l.b16 %v777
  %v3256 = vunpack.c.h.b16 %v777
  %v3257 = vunpack.c.l.b16 %v778
  %v3258 = vunpack.c.h.b16 %v778
  %v3259 = vunpack.c.l.b16 %v779
  %v3260 = vunpack.c.h.b16 %v779
  %v3261 = vunpack.c.l.b16 %v780
  %v3262 = vunpack.c.h.b16 %v780
  %v3263 = vunpack.c.l.b16 %v781
  %v3264 = vunpack.c.h.b16 %v781
  %v3265 = vunpack.c.l.b16 %v782
  %v3266 = vunpack.c.h.b16 %v782
  %v3267 = vunpack.c.l.b16 %v783
  %v3268 = vunpack.c.h.b16 %v783
  %v3269 = vunpack.c.l.b16 %v784
  %v3270 = vunpack.c.h.b16 %v784
  %v3271 = vunpack.c.l.b16 %v785
  %v3272 = vunpack.c.h.b16 %v785
  %v3273 = vunpack.c.l.b16 %v786
  %v3274 = vunpack.c.h.b16 %v786
  %v3275 = vunpack.c.l.b16 %v787
  %v3276 = vunpack.c.h.b16 %v787
  %v3277 = vunpack.c.l.b16 %v788
  %v3278 = vunpack.c.h.b16 %v788
  %v3279 = vunpack.c.l.b16 %v789
  %v3280 = vunpack.c.h.b16 %v789
  %v3281 = vunpack.c.l.b16 %v790
  %v3282 = vunpack.c.h.b16 %v790
  %v3283 = vunpack.c.l.b16 %v791
  %v3284 = vunpack.c.h.b16 %v791
  %v3285 = vunpack.c.l.b16 %v792
  %v3286 = vunpack.c.h.b16 %v792
  %v3287 = vunpack.c.l.b16 %v793
  %v3288 = vunpack.c.h.b16 %v793
  %v3289 = vunpack.c.l.b16 %v794
  %v3290 = vunpack.c.h.b16 %v794
  %v3291 = vunpack.c.l.b16 %v795
  %v3292 = vunpack.c.h.b16 %v795
  %v3293 = vunpack.c.l.b16 %v796
  %v3294 = vunpack.c.h.b16 %v796
  %v3295 = vunpack.c.l.b16 %v797
  %v3296 = vunpack.c.h.b16 %v797
  %v3297 = vunpack.c.l.b16 %v798
  %v3298 = vunpack.c.h.b16 %v798
  %v3299 = vunpack.c.l.b16 %v799
  %v3300 = vunpack.c.h.b16 %v799
  %v3301 = vunpack.c.l.b16 %v800
  %v3302 = vunpack.c.h.b16 %v800
  %v3303 = vunpack.c.l.b16 %v801
  %v3304 = vunpack.c.h.b16 %v801
  %v3305 = vunpack.c.l.b16 %v802
  %v3306 = vunpack.c.h.b16 %v802
  %v3307 = vunpack.c.l.b16 %v803
  %v3308 = vunpack.c.h.b16 %v803
  %v3309 = vunpack.c.l.b16 %v804
  %v3310 = vunpack.c.h.b16 %v804
  %v3311 = vunpack.c.l.b16 %v805
  %v3312 = vunpack.c.h.b16 %v805
  %v3313 = vunpack.c.l.b16 %v806
  %v3314 = vunpack.c.h.b16 %v806
  %v3315 = vunpack.c.l.b16 %v807
  %v3316 = vunpack.c.h.b16 %v807
  %v3317 = vunpack.c.l.b16 %v808
  %v3318 = vunpack.c.h.b16 %v808
  %v3319 = vunpack.c.l.b16 %v809
  %v3320 = vunpack.c.h.b16 %v809
  %v3321 = vunpack.c.l.b16 %v810
  %v3322 = vunpack.c.h.b16 %v810
  %v3323 = vunpack.c.l.b16 %v811
  %v3324 = vunpack.c.h.b16 %v811
  %v3325 = vunpack.c.l.b16 %v812
  %v3326 = vunpack.c.h.b16 %v812
  %v3327 = vunpack.c.l.b16 %v813
  %v3328 = vunpack.c.h.b16 %v813
  %v3329 = vunpack.c.l.b16 %v814
  %v3330 = vunpack.c.h.b16 %v814
  %v3331 = vunpack.c.l.b16 %v815
  %v3332 = vunpack.c.h.b16 %v815
  %v3333 = vunpack.c.l.b16 %v816
  %v3334 = vunpack.c.h.b16 %v816
  %v3335 = vunpack.c.l.b16 %v817
  %v3336 = vunpack.c.h.b16 %v817
  %v3337 = vunpack.c.l.b16 %v818
  %v3338 = vunpack.c.h.b16 %v818
  %v3339 = vunpack.c.l.b16 %v819
  %v3340 = vunpack.c.h.b16 %v819
  %v3341 = vunpack.c.l.b16 %v820
  %v3342 = vunpack.c.h.b16 %v820
  %v3343 = vunpack.c.l.b16 %v821
  %v3344 = vunpack.c.h.b16 %v821
  %v3345 = vunpack.c.l.b16 %v822
  %v3346 = vunpack.c.h.b16 %v822
  %v3347 = vunpack.c.l.b16 %v823
  %v3348 = vunpack.c.h.b16 %v823
  %v3349 = vunpack.c.l.b16 %v824
  %v3350 = vunpack.c.h.b16 %v824
  %v3351 = vunpack.c.l.b16 %v825
  %v3352 = vunpack.c.h.b16 %v825
  %v3353 = vunpack.c.l.b16 %v826
  %v3354 = vunpack.c.h.b16 %v826
  %v3355 = vunpack.c.l.b16 %v827
  %v3356 = vunpack.c.h.b16 %v827
  %v3357 = vunpack.c.l.b16 %v828
  %v3358 = vunpack.c.h.b16 %v828
  %v3359 = vunpack.c.l.b16 %v829
  %v3360 = vunpack.c.h.b16 %v829
  %v3361 = vunpack.c.l.b16 %v830
  %v3362 = vunpack.c.h.b16 %v830
  %v3363 = vunpack.c.l.b16 %v831
  %v3364 = vunpack.c.h.b16 %v831
  %v3365 = vunpack.c.l.b16 %v832
  %v3366 = vunpack.c.h.b16 %v832
  %v3367 = vunpack.c.l.b16 %v833
  %v3368 = vunpack.c.h.b16 %v833
  %v3369 = vunpack.c.l.b16 %v834
  %v3370 = vunpack.c.h.b16 %v834
  %v3371 = vunpack.c.l.b16 %v835
  %v3372 = vunpack.c.h.b16 %v835
  %v3373 = vunpack.c.l.b16 %v836
  %v3374 = vunpack.c.h.b16 %v836
  %v3375 = vunpack.c.l.b16 %v837
  %v3376 = vunpack.c.h.b16 %v837
  %v3377 = vunpack.c.l.b16 %v838
  %v3378 = vunpack.c.h.b16 %v838
  %v3379 = vunpack.c.l.b16 %v839
  %v3380 = vunpack.c.h.b16 %v839
  %v3381 = vunpack.c.l.b16 %v840
  %v3382 = vunpack.c.h.b16 %v840
  %v3383 = vunpack.c.l.b16 %v841
  %v3384 = vunpack.c.h.b16 %v841
  %v3385 = vunpack.c.l.b16 %v842
  %v3386 = vunpack.c.h.b16 %v842
  %v3387 = vunpack.c.l.b16 %v843
  %v3388 = vunpack.c.h.b16 %v843
  %v3389 = vunpack.c.l.b16 %v844
  %v3390 = vunpack.c.h.b16 %v844
  %v3391 = vunpack.c.l.b16 %v845
  %v3392 = vunpack.c.h.b16 %v845
  %v3393 = vunpack.c.l.b16 %v846
  %v3394 = vunpack.c.h.b16 %v846
  %v3395 = vpack.c.b16 %v1799, %v1795
  %v3396 = vpack.c.b16 %v1800, %v1796
  %v3397 = vpack.c.b16 %v1801, %v1797
  %v3398 = vpack.c.b16 %v1802, %v1798
  %v3399 = vpack.c.b16 %v1807, %v1803
  %v3400 = vpack.c.b16 %v1808, %v1804
  %v3401 = vpack.c.b16 %v1809, %v1805
  %v3402 = vpack.c.b16 %v1810, %v1806
  %v3403 = vpack.c.b16 %v1815, %v1811
  %v3404 = vpack.c.b16 %v1816, %v1812
  %v3405 = vpack.c.b16 %v1817, %v1813
  %v3406 = vpack.c.b16 %v1818, %v1814
  %v3407 = vpack.c.b16 %v1823, %v1819
  %v3408 = vpack.c.b16 %v1824, %v1820
  %v3409 = vpack.c.b16 %v1825, %v1821
  %v3410 = vpack.c.b16 %v1826, %v1822
  %v3411 = vpack.c.b16 %v1831, %v1827
  %v3412 = vpack.c.b16 %v1832, %v1828
  %v3413 = vpack.c.b16 %v1833, %v1829
  %v3414 = vpack.c.b16 %v1834, %v1830
  %v3415 = vpack.c.b16 %v1839, %v1835
  %v3416 = vpack.c.b16 %v1840, %v1836
  %v3417 = vpack.c.b16 %v1841, %v1837
  %v3418 = vpack.c.b16 %v1842, %v1838
  %v3419 = vpack.c.b16 %v1847, %v1843
  %v3420 = vpack.c.b16 %v1848, %v1844
  %v3421 = vpack.c.b16 %v1849, %v1845
  %v3422 = vpack.c.b16 %v1850, %v1846
  %v3423 = vpack.c.b16 %v1855, %v1851
  %v3424 = vpack.c.b16 %v1856, %v1852
  %v3425 = vpack.c.b16 %v1857, %v1853
  %v3426 = vpack.c.b16 %v1858, %v1854
  %v3427 = vpack.c.b16 %v1863, %v1859
  %v3428 = vpack.c.b16 %v1864, %v1860
  %v3429 = vpack.c.b16 %v1865, %v1861
  %v3430 = vpack.c.b16 %v1866, %v1862
  %v3431 = vpack.c.b16 %v1871, %v1867
  %v3432 = vpack.c.b16 %v1872, %v1868
  %v3433 = vpack.c.b16 %v1873, %v1869
  %v3434 = vpack.c.b16 %v1874, %v1870
  %v3435 = vpack.c.b16 %v1879, %v1875
  %v3436 = vpack.c.b16 %v1880, %v1876
  %v3437 = vpack.c.b16 %v1881, %v1877
  %v3438 = vpack.c.b16 %v1882, %v1878
  %v3439 = vpack.c.b16 %v1887, %v1883
  %v3440 = vpack.c.b16 %v1888, %v1884
  %v3441 = vpack.c.b16 %v1889, %v1885
  %v3442 = vpack.c.b16 %v1890, %v1886
  %v3443 = vpack.c.b16 %v1895, %v1891
  %v3444 = vpack.c.b16 %v1896, %v1892
  %v3445 = vpack.c.b16 %v1897, %v1893
  %v3446 = vpack.c.b16 %v1898, %v1894
  %v3447 = vpack.c.b16 %v1903, %v1899
  %v3448 = vpack.c.b16 %v1904, %v1900
  %v3449 = vpack.c.b16 %v1905, %v1901
  %v3450 = vpack.c.b16 %v1906, %v1902
  %v3451 = vpack.c.b16 %v1911, %v1907
  %v3452 = vpack.c.b16 %v1912, %v1908
  %v3453 = vpack.c.b16 %v1913, %v1909
  %v3454 = vpack.c.b16 %v1914, %v1910
  %v3455 = vpack.c.b16 %v1919, %v1915
  %v3456 = vpack.c.b16 %v1920, %v1916
  %v3457 = vpack.c.b16 %v1921, %v1917
  %v3458 = vpack.c.b16 %v1922, %v1918
  %v3459 = vpack.c.b16 %v1927, %v1923
  %v3460 = vpack.c.b16 %v1928, %v1924
  %v3461 = vpack.c.b16 %v1929, %v1925
  %v3462 = vpack.c.b16 %v1930, %v1926
  %v3463 = vpack.c.b16 %v1935, %v1931
  %v3464 = vpack.c.b16 %v1936, %v1932
  %v3465 = vpack.c.b16 %v1937, %v1933
  %v3466 = vpack.c.b16 %v1938, %v1934
  %v3467 = vpack.c.b16 %v1943, %v1939
  %v3468 = vpack.c.b16 %v1944, %v1940
  %v3469 = vpack.c.b16 %v1945, %v1941
  %v3470 = vpack.c.b16 %v1946, %v1942
  %v3471 = vpack.c.b16 %v1951, %v1947
  %v3472 = vpack.c.b16 %v1952, %v1948
  %v3473 = vpack.c.b16 %v1953, %v1949
  %v3474 = vpack.c.b16 %v1954, %v1950
  %v3475 = vpack.c.b16 %v1959, %v1955
  %v3476 = vpack.c.b16 %v1960, %v1956
  %v3477 = vpack.c.b16 %v1961, %v1957
  %v3478 = vpack.c.b16 %v1962, %v1958
  %v3479 = vpack.c.b16 %v1967, %v1963
  %v3480 = vpack.c.b16 %v1968, %v1964
  %v3481 = vpack.c.b16 %v1969, %v1965
  %v3482 = vpack.c.b16 %v1970, %v1966
  %v3483 = vpack.c.b16 %v1975, %v1971
  %v3484 = vpack.c.b16 %v1976, %v1972
  %v3485 = vpack.c.b16 %v1977, %v1973
  %v3486 = vpack.c.b16 %v1978, %v1974
  %v3487 = vpack.c.b16 %v1983, %v1979
  %v3488 = vpack.c.b16 %v1984, %v1980
  %v3489 = vpack.c.b16 %v1985, %v1981
  %v3490 = vpack.c.b16 %v1986, %v1982
  %v3491 = vpack.c.b16 %v1991, %v1987
  %v3492 = vpack.c.b16 %v1992, %v1988
  %v3493 = vpack.c.b16 %v1993, %v1989
  %v3494 = vpack.c.b16 %v1994, %v1990
  %v3495 = vpack.c.b16 %v1999, %v1995
  %v3496 = vpack.c.b16 %v2000, %v1996
  %v3497 = vpack.c.b16 %v2001, %v1997
  %v3498 = vpack.c.b16 %v2002, %v1998
  %v3499 = vpack.c.b16 %v2007, %v2003
  %v3500 = vpack.c.b16 %v2008, %v2004
  %v3501 = vpack.c.b16 %v2009, %v2005
  %v3502 = vpack.c.b16 %v2010, %v2006
  %v3503 = vpack.c.b16 %v2015, %v2011
  %v3504 = vpack.c.b16 %v2016, %v2012
  %v3505 = vpack.c.b16 %v2017, %v2013
  %v3506 = vpack.c.b16 %v2018, %v2014
  %v3507 = vpack.c.b16 %v2023, %v2019
  %v3508 = vpack.c.b16 %v2024, %v2020
  %v3509 = vpack.c.b16 %v2025, %v2021
  %v3510 = vpack.c.b16 %v2026, %v2022
  %v3511 = vpack.c.b16 %v2031, %v2027
  %v3512 = vpack.c.b16 %v2032, %v2028
  %v3513 = vpack.c.b16 %v2033, %v2029
  %v3514 = vpack.c.b16 %v2034, %v2030
  %v3515 = vpack.c.b16 %v2039, %v2035
  %v3516 = vpack.c.b16 %v2040, %v2036
  %v3517 = vpack.c.b16 %v2041, %v2037
  %v3518 = vpack.c.b16 %v2042, %v2038
  %v3519 = vpack.c.b16 %v2047, %v2043
  %v3520 = vpack.c.b16 %v2048, %v2044
  %v3521 = vpack.c.b16 %v2049, %v2045
  %v3522 = vpack.c.b16 %v2050, %v2046
  %v3523 = vpack.c.b16 %v2055, %v2051
  %v3524 = vpack.c.b16 %v2056, %v2052
  %v3525 = vpack.c.b16 %v2057, %v2053
  %v3526 = vpack.c.b16 %v2058, %v2054
  %v3527 = vpack.c.b16 %v2063, %v2059
  %v3528 = vpack.c.b16 %v2064, %v2060
  %v3529 = vpack.c.b16 %v2065, %v2061
  %v3530 = vpack.c.b16 %v2066, %v2062
  %v3531 = vpack.c.b16 %v2071, %v2067
  %v3532 = vpack.c.b16 %v2072, %v2068
  %v3533 = vpack.c.b16 %v2073, %v2069
  %v3534 = vpack.c.b16 %v2074, %v2070
  %v3535 = vpack.c.b16 %v2079, %v2075
  %v3536 = vpack.c.b16 %v2080, %v2076
  %v3537 = vpack.c.b16 %v2081, %v2077
  %v3538 = vpack.c.b16 %v2082, %v2078
  %v3539 = vpack.c.b16 %v2087, %v2083
  %v3540 = vpack.c.b16 %v2088, %v2084
  %v3541 = vpack.c.b16 %v2089, %v2085
  %v3542 = vpack.c.b16 %v2090, %v2086
  %v3543 = vpack.c.b16 %v2095, %v2091
  %v3544 = vpack.c.b16 %v2096, %v2092
  %v3545 = vpack.c.b16 %v2097, %v2093
  %v3546 = vpack.c.b16 %v2098, %v2094
  %v3547 = vpack.c.b16 %v2103, %v2099
  %v3548 = vpack.c.b16 %v2104, %v2100
  %v3549 = vpack.c.b16 %v2105, %v2101
  %v3550 = vpack.c.b16 %v2106, %v2102
  %v3551 = vpack.c.b16 %v2111, %v2107
  %v3552 = vpack.c.b16 %v2112, %v2108
  %v3553 = vpack.c.b16 %v2113, %v2109
  %v3554 = vpack.c.b16 %v2114, %v2110
  %v3555 = vpack.c.b16 %v2119, %v2115
  %v3556 = vpack.c.b16 %v2120, %v2116
  %v3557 = vpack.c.b16 %v2121, %v2117
  %v3558 = vpack.c.b16 %v2122, %v2118
  %v3559 = vpack.c.b16 %v2127, %v2123
  %v3560 = vpack.c.b16 %v2128, %v2124
  %v3561 = vpack.c.b16 %v2129, %v2125
  %v3562 = vpack.c.b16 %v2130, %v2126
  %v3563 = vpack.c.b16 %v2135, %v2131
  %v3564 = vpack.c.b16 %v2136, %v2132
  %v3565 = vpack.c.b16 %v2137, %v2133
  %v3566 = vpack.c.b16 %v2138, %v2134
  %v3567 = vpack.c.b16 %v2143, %v2139
  %v3568 = vpack.c.b16 %v2144, %v2140
  %v3569 = vpack.c.b16 %v2145, %v2141
  %v3570 = vpack.c.b16 %v2146, %v2142
  %v3571 = vpack.c.b16 %v2151, %v2147
  %v3572 = vpack.c.b16 %v2152, %v2148
  %v3573 = vpack.c.b16 %v2153, %v2149
  %v3574 = vpack.c.b16 %v2154, %v2150
  %v3575 = vpack.c.b16 %v2159, %v2155
  %v3576 = vpack.c.b16 %v2160, %v2156
  %v3577 = vpack.c.b16 %v2161, %v2157
  %v3578 = vpack.c.b16 %v2162, %v2158
  %v3579 = vpack.c.b16 %v2167, %v2163
  %v3580 = vpack.c.b16 %v2168, %v2164
  %v3581 = vpack.c.b16 %v2169, %v2165
  %v3582 = vpack.c.b16 %v2170, %v2166
  %v3583 = vpack.c.b16 %v2175, %v2171
  %v3584 = vpack.c.b16 %v2176, %v2172
  %v3585 = vpack.c.b16 %v2177, %v2173
  %v3586 = vpack.c.b16 %v2178, %v2174
  %v3587 = vpack.c.b16 %v2183, %v2179
  %v3588 = vpack.c.b16 %v2184, %v2180
  %v3589 = vpack.c.b16 %v2185, %v2181
  %v3590 = vpack.c.b16 %v2186, %v2182
  %v3591 = vpack.c.b16 %v2191, %v2187
  %v3592 = vpack.c.b16 %v2192, %v2188
  %v3593 = vpack.c.b16 %v2193, %v2189
  %v3594 = vpack.c.b16 %v2194, %v2190
  %v3595 = vpack.c.b16 %v2199, %v2195
  %v3596 = vpack.c.b16 %v2200, %v2196
  %v3597 = vpack.c.b16 %v2201, %v2197
  %v3598 = vpack.c.b16 %v2202, %v2198
  %v3599 = vpack.c.b16 %v2207, %v2203
  %v3600 = vpack.c.b16 %v2208, %v2204
  %v3601 = vpack.c.b16 %v2209, %v2205
  %v3602 = vpack.c.b16 %v2210, %v2206
  %v3603 = vpack.c.b16 %v2215, %v2211
  %v3604 = vpack.c.b16 %v2216, %v2212
  %v3605 = vpack.c.b16 %v2217, %v2213
  %v3606 = vpack.c.b16 %v2218, %v2214
  %v3607 = vpack.c.b16 %v2223, %v2219
  %v3608 = vpack.c.b16 %v2224, %v2220
  %v3609 = vpack.c.b16 %v2225, %v2221
  %v3610 = vpack.c.b16 %v2226, %v2222
  %v3611 = vpack.c.b16 %v2231, %v2227
  %v3612 = vpack.c.b16 %v2232, %v2228
  %v3613 = vpack.c.b16 %v2233, %v2229
  %v3614 = vpack.c.b16 %v2234, %v2230
  %v3615 = vpack.c.b16 %v2239, %v2235
  %v3616 = vpack.c.b16 %v2240, %v2236
  %v3617 = vpack.c.b16 %v2241, %v2237
  %v3618 = vpack.c.b16 %v2242, %v2238
  %v3619 = vpack.c.b16 %v2247, %v2243
  %v3620 = vpack.c.b16 %v2248, %v2244
  %v3621 = vpack.c.b16 %v2249, %v2245
  %v3622 = vpack.c.b16 %v2250, %v2246
  %v3623 = vpack.c.b16 %v2255, %v2251
  %v3624 = vpack.c.b16 %v2256, %v2252
  %v3625 = vpack.c.b16 %v2257, %v2253
  %v3626 = vpack.c.b16 %v2258, %v2254
  %v3627 = vpack.c.b16 %v2263, %v2259
  %v3628 = vpack.c.b16 %v2264, %v2260
  %v3629 = vpack.c.b16 %v2265, %v2261
  %v3630 = vpack.c.b16 %v2266, %v2262
  %v3631 = vpack.c.b16 %v2271, %v2267
  %v3632 = vpack.c.b16 %v2272, %v2268
  %v3633 = vpack.c.b16 %v2273, %v2269
  %v3634 = vpack.c.b16 %v2274, %v2270
  %v3635 = vpack.c.b16 %v2279, %v2275
  %v3636 = vpack.c.b16 %v2280, %v2276
  %v3637 = vpack.c.b16 %v2281, %v2277
  %v3638 = vpack.c.b16 %v2282, %v2278
  %v3639 = vpack.c.b16 %v2287, %v2283
  %v3640 = vpack.c.b16 %v2288, %v2284
  %v3641 = vpack.c.b16 %v2289, %v2285
  %v3642 = vpack.c.b16 %v2290, %v2286
  %v3643 = vpack.c.b16 %v2295, %v2291
  %v3644 = vpack.c.b16 %v2296, %v2292
  %v3645 = vpack.c.b16 %v2297, %v2293
  %v3646 = vpack.c.b16 %v2298, %v2294
  %v3647 = vpack.c.b16 %v2303, %v2299
  %v3648 = vpack.c.b16 %v2304, %v2300
  %v3649 = vpack.c.b16 %v2305, %v2301
  %v3650 = vpack.c.b16 %v2306, %v2302
  %v3651 = vpack.c.b16 %v2311, %v2307
  %v3652 = vpack.c.b16 %v2312, %v2308
  %v3653 = vpack.c.b16 %v2313, %v2309
  %v3654 = vpack.c.b16 %v2314, %v2310
  %v3655 = vpack.c.b16 %v2319, %v2315
  %v3656 = vpack.c.b16 %v2320, %v2316
  %v3657 = vpack.c.b16 %v2321, %v2317
  %v3658 = vpack.c.b16 %v2322, %v2318
  %v3659 = vpack.c.b16 %v2327, %v2323
  %v3660 = vpack.c.b16 %v2328, %v2324
  %v3661 = vpack.c.b16 %v2329, %v2325
  %v3662 = vpack.c.b16 %v2330, %v2326
  %v3663 = vpack.c.b16 %v2335, %v2331
  %v3664 = vpack.c.b16 %v2336, %v2332
  %v3665 = vpack.c.b16 %v2337, %v2333
  %v3666 = vpack.c.b16 %v2338, %v2334
  %v3667 = vpack.c.b16 %v2343, %v2339
  %v3668 = vpack.c.b16 %v2344, %v2340
  %v3669 = vpack.c.b16 %v2345, %v2341
  %v3670 = vpack.c.b16 %v2346, %v2342
  %v3671 = vpack.c.b16 %v2351, %v2347
  %v3672 = vpack.c.b16 %v2352, %v2348
  %v3673 = vpack.c.b16 %v2353, %v2349
  %v3674 = vpack.c.b16 %v2354, %v2350
  %v3675 = vpack.c.b16 %v2359, %v2355
  %v3676 = vpack.c.b16 %v2360, %v2356
  %v3677 = vpack.c.b16 %v2361, %v2357
  %v3678 = vpack.c.b16 %v2362, %v2358
  %v3679 = vpack.c.b16 %v2367, %v2363
  %v3680 = vpack.c.b16 %v2368, %v2364
  %v3681 = vpack.c.b16 %v2369, %v2365
  %v3682 = vpack.c.b16 %v2370, %v2366
  %v3683 = vpack.c.b16 %v2375, %v2371
  %v3684 = vpack.c.b16 %v2376, %v2372
  %v3685 = vpack.c.b16 %v2377, %v2373
  %v3686 = vpack.c.b16 %v2378, %v2374
  %v3687 = vpack.c.b16 %v2383, %v2379
  %v3688 = vpack.c.b16 %v2384, %v2380
  %v3689 = vpack.c.b16 %v2385, %v2381
  %v3690 = vpack.c.b16 %v2386, %v2382
  %v3691 = vpack.c.b16 %v2391, %v2387
  %v3692 = vpack.c.b16 %v2392, %v2388
  %v3693 = vpack.c.b16 %v2393, %v2389
  %v3694 = vpack.c.b16 %v2394, %v2390
  %v3695 = vpack.c.b16 %v2399, %v2395
  %v3696 = vpack.c.b16 %v2400, %v2396
  %v3697 = vpack.c.b16 %v2401, %v2397
  %v3698 = vpack.c.b16 %v2402, %v2398
  %v3699 = vpack.c.b16 %v2407, %v2403
  %v3700 = vpack.c.b16 %v2408, %v2404
  %v3701 = vpack.c.b16 %v2409, %v2405
  %v3702 = vpack.c.b16 %v2410, %v2406
  %v3703 = vpack.c.b16 %v2415, %v2411
  %v3704 = vpack.c.b16 %v2416, %v2412
  %v3705 = vpack.c.b16 %v2417, %v2413
  %v3706 = vpack.c.b16 %v2418, %v2414
  %v3707 = vpack.c.b16 %v2423, %v2419
  %v3708 = vpack.c.b16 %v2424, %v2420
  %v3709 = vpack.c.b16 %v2425, %v2421
  %v3710 = vpack.c.b16 %v2426, %v2422
  %v3711 = vpack.c.b16 %v2431, %v2427
  %v3712 = vpack.c.b16 %v2432, %v2428
  %v3713 = vpack.c.b16 %v2433, %v2429
  %v3714 = vpack.c.b16 %v2434, %v2430
  %v3715 = vpack.c.b16 %v2439, %v2435
  %v3716 = vpack.c.b16 %v2440, %v2436
  %v3717 = vpack.c.b16 %v2441, %v2437
  %v3718 = vpack.c.b16 %v2442, %v2438
  %v3719 = vpack.c.b16 %v2447, %v2443
  %v3720 = vpack.c.b16 %v2448, %v2444
  %v3721 = vpack.c.b16 %v2449, %v2445
  %v3722 = vpack.c.b16 %v2450, %v2446
  %v3723 = vpack.c.b16 %v2455, %v2451
  %v3724 = vpack.c.b16 %v2456, %v2452
  %v3725 = vpack.c.b16 %v2457, %v2453
  %v3726 = vpack.c.b16 %v2458, %v2454
  %v3727 = vpack.c.b16 %v2463, %v2459
  %v3728 = vpack.c.b16 %v2464, %v2460
  %v3729 = vpack.c.b16 %v2465, %v2461
  %v3730 = vpack.c.b16 %v2466, %v2462
  %v3731 = vpack.c.b16 %v2471, %v2467
  %v3732 = vpack.c.b16 %v2472, %v2468
  %v3733 = vpack.c.b16 %v2473, %v2469
  %v3734 = vpack.c.b16 %v2474, %v2470
  %v3735 = vpack.c.b16 %v2479, %v2475
  %v3736 = vpack.c.b16 %v2480, %v2476
  %v3737 = vpack.c.b16 %v2481, %v2477
  %v3738 = vpack.c.b16 %v2482, %v2478
  %v3739 = vpack.c.b16 %v2487, %v2483
  %v3740 = vpack.c.b16 %v2488, %v2484
  %v3741 = vpack.c.b16 %v2489, %v2485
  %v3742 = vpack.c.b16 %v2490, %v2486
  %v3743 = vpack.c.b16 %v2495, %v2491
  %v3744 = vpack.c.b16 %v2496, %v2492
  %v3745 = vpack.c.b16 %v2497, %v2493
  %v3746 = vpack.c.b16 %v2498, %v2494
  %v3747 = vpack.c.b16 %v2503, %v2499
  %v3748 = vpack.c.b16 %v2504, %v2500
  %v3749 = vpack.c.b16 %v2505, %v2501
  %v3750 = vpack.c.b16 %v2506, %v2502
  %v3751 = vpack.c.b16 %v2511, %v2507
  %v3752 = vpack.c.b16 %v2512, %v2508
  %v3753 = vpack.c.b16 %v2513, %v2509
  %v3754 = vpack.c.b16 %v2514, %v2510
  %v3755 = vpack.c.b16 %v2519, %v2515
  %v3756 = vpack.c.b16 %v2520, %v2516
  %v3757 = vpack.c.b16 %v2521, %v2517
  %v3758 = vpack.c.b16 %v2522, %v2518
  %v3759 = vpack.c.b16 %v2527, %v2523
  %v3760 = vpack.c.b16 %v2528, %v2524
  %v3761 = vpack.c.b16 %v2529, %v2525
  %v3762 = vpack.c.b16 %v2530, %v2526
  %v3763 = vpack.c.b16 %v2535, %v2531
  %v3764 = vpack.c.b16 %v2536, %v2532
  %v3765 = vpack.c.b16 %v2537, %v2533
  %v3766 = vpack.c.b16 %v2538, %v2534
  %v3767 = vpack.c.b16 %v2543, %v2539
  %v3768 = vpack.c.b16 %v2544, %v2540
  %v3769 = vpack.c.b16 %v2545, %v2541
  %v3770 = vpack.c.b16 %v2546, %v2542
  %v3771 = vpack.c.b16 %v2551, %v2547
  %v3772 = vpack.c.b16 %v2552, %v2548
  %v3773 = vpack.c.b16 %v2553, %v2549
  %v3774 = vpack.c.b16 %v2554, %v2550
  %v3775 = vpack.c.b16 %v2559, %v2555
  %v3776 = vpack.c.b16 %v2560, %v2556
  %v3777 = vpack.c.b16 %v2561, %v2557
  %v3778 = vpack.c.b16 %v2562, %v2558
  %v3779 = vpack.c.b16 %v2567, %v2563
  %v3780 = vpack.c.b16 %v2568, %v2564
  %v3781 = vpack.c.b16 %v2569, %v2565
  %v3782 = vpack.c.b16 %v2570, %v2566
  %v3783 = vpack.c.b16 %v2575, %v2571
  %v3784 = vpack.c.b16 %v2576, %v2572
  %v3785 = vpack.c.b16 %v2577, %v2573
  %v3786 = vpack.c.b16 %v2578, %v2574
  %v3787 = vpack.c.b16 %v2583, %v2579
  %v3788 = vpack.c.b16 %v2584, %v2580
  %v3789 = vpack.c.b16 %v2585, %v2581
  %v3790 = vpack.c.b16 %v2586, %v2582
  %v3791 = vpack.c.b16 %v2591, %v2587
  %v3792 = vpack.c.b16 %v2592, %v2588
  %v3793 = vpack.c.b16 %v2593, %v2589
  %v3794 = vpack.c.b16 %v2594, %v2590
  %v3795 = vpack.c.b16 %v2599, %v2595
  %v3796 = vpack.c.b16 %v2600, %v2596
  %v3797 = vpack.c.b16 %v2601, %v2597
  %v3798 = vpack.c.b16 %v2602, %v2598
  %v3799 = vpack.c.b16 %v2607, %v2603
  %v3800 = vpack.c.b16 %v2608, %v2604
  %v3801 = vpack.c.b16 %v2609, %v2605
  %v3802 = vpack.c.b16 %v2610, %v2606
  %v3803 = vpack.c.b16 %v2615, %v2611
  %v3804 = vpack.c.b16 %v2616, %v2612
  %v3805 = vpack.c.b16 %v2617, %v2613
  %v3806 = vpack.c.b16 %v2618, %v2614
  %v3807 = vpack.c.b16 %v2623, %v2619
  %v3808 = vpack.c.b16 %v2624, %v2620
  %v3809 = vpack.c.b16 %v2625, %v2621
  %v3810 = vpack.c.b16 %v2626, %v2622
  %v3811 = vpack.c.b16 %v2631, %v2627
  %v3812 = vpack.c.b16 %v2632, %v2628
  %v3813 = vpack.c.b16 %v2633, %v2629
  %v3814 = vpack.c.b16 %v2634, %v2630
  %v3815 = vpack.c.b16 %v2639, %v2635
  %v3816 = vpack.c.b16 %v2640, %v2636
  %v3817 = vpack.c.b16 %v2641, %v2637
  %v3818 = vpack.c.b16 %v2642, %v2638
  %v3819 = vpack.c.b16 %v2647, %v2643
  %v3820 = vpack.c.b16 %v2648, %v2644
  %v3821 = vpack.c.b16 %v2649, %v2645
  %v3822 = vpack.c.b16 %v2650, %v2646
  %v3823 = vpack.c.b16 %v2655, %v2651
  %v3824 = vpack.c.b16 %v2656, %v2652
  %v3825 = vpack.c.b16 %v2657, %v2653
  %v3826 = vpack.c.b16 %v2658, %v2654
  %v3827 = vpack.c.b16 %v2663, %v2659
  %v3828 = vpack.c.b16 %v2664, %v2660
  %v3829 = vpack.c.b16 %v2665, %v2661
  %v3830 = vpack.c.b16 %v2666, %v2662
  %v3831 = vpack.c.b16 %v2671, %v2667
  %v3832 = vpack.c.b16 %v2672, %v2668
  %v3833 = vpack.c.b16 %v2673, %v2669
  %v3834 = vpack.c.b16 %v2674, %v2670
  %v3835 = vpack.c.b16 %v2679, %v2675
  %v3836 = vpack.c.b16 %v2680, %v2676
  %v3837 = vpack.c.b16 %v2681, %v2677
  %v3838 = vpack.c.b16 %v2682, %v2678
  %v3839 = vpack.c.b16 %v2687, %v2683
  %v3840 = vpack.c.b16 %v2688, %v2684
  %v3841 = vpack.c.b16 %v2689, %v2685
  %v3842 = vpack.c.b16 %v2690, %v2686
  %v3843 = vpack.c.b16 %v2695, %v2691
  %v3844 = vpack.c.b16 %v2696, %v2692
  %v3845 = vpack.c.b16 %v2697, %v2693
  %v3846 = vpack.c.b16 %v2698, %v2694
  %v3847 = vpack.c.b16 %v2703, %v2699
  %v3848 = vpack.c.b16 %v2704, %v2700
  %v3849 = vpack.c.b16 %v2705, %v2701
  %v3850 = vpack.c.b16 %v2706, %v2702
  %v3851 = vpack.c.b16 %v2711, %v2707
  %v3852 = vpack.c.b16 %v2712, %v2708
  %v3853 = vpack.c.b16 %v2713, %v2709
  %v3854 = vpack.c.b16 %v2714, %v2710
  %v3855 = vpack.c.b16 %v2719, %v2715
  %v3856 = vpack.c.b16 %v2720, %v2716
  %v3857 = vpack.c.b16 %v2721, %v2717
  %v3858 = vpack.c.b16 %v2722, %v2718
  %v3859 = vpack.c.b16 %v2727, %v2723
  %v3860 = vpack.c.b16 %v2728, %v2724
  %v3861 = vpack.c.b16 %v2729, %v2725
  %v3862 = vpack.c.b16 %v2730, %v2726
  %v3863 = vpack.c.b16 %v2735, %v2731
  %v3864 = vpack.c.b16 %v2736, %v2732
  %v3865 = vpack.c.b16 %v2737, %v2733
  %v3866 = vpack.c.b16 %v2738, %v2734
  %v3867 = vpack.c.b16 %v2743, %v2739
  %v3868 = vpack.c.b16 %v2744, %v2740
  %v3869 = vpack.c.b16 %v2745, %v2741
  %v3870 = vpack.c.b16 %v2746, %v2742
  %v3871 = vpack.c.b16 %v2751, %v2747
  %v3872 = vpack.c.b16 %v2752, %v2748
  %v3873 = vpack.c.b16 %v2753, %v2749
  %v3874 = vpack.c.b16 %v2754, %v2750
  %v3875 = vpack.c.b16 %v2759, %v2755
  %v3876 = vpack.c.b16 %v2760, %v2756
  %v3877 = vpack.c.b16 %v2761, %v2757
  %v3878 = vpack.c.b16 %v2762, %v2758
  %v3879 = vpack.c.b16 %v2767, %v2763
  %v3880 = vpack.c.b16 %v2768, %v2764
  %v3881 = vpack.c.b16 %v2769, %v2765
  %v3882 = vpack.c.b16 %v2770, %v2766
  %v3883 = vpack.c.b16 %v2775, %v2771
  %v3884 = vpack.c.b16 %v2776, %v2772
  %v3885 = vpack.c.b16 %v2777, %v2773
  %v3886 = vpack.c.b16 %v2778, %v2774
  %v3887 = vpack.c.b16 %v2783, %v2779
  %v3888 = vpack.c.b16 %v2784, %v2780
  %v3889 = vpack.c.b16 %v2785, %v2781
  %v3890 = vpack.c.b16 %v2786, %v2782
  %v3891 = vpack.c.b16 %v2791, %v2787
  %v3892 = vpack.c.b16 %v2792, %v2788
  %v3893 = vpack.c.b16 %v2793, %v2789
  %v3894 = vpack.c.b16 %v2794, %v2790
  %v3895 = vpack.c.b16 %v2799, %v2795
  %v3896 = vpack.c.b16 %v2800, %v2796
  %v3897 = vpack.c.b16 %v2801, %v2797
  %v3898 = vpack.c.b16 %v2802, %v2798
  %v3899 = vpack.c.b16 %v2807, %v2803
  %v3900 = vpack.c.b16 %v2808, %v2804
  %v3901 = vpack.c.b16 %v2809, %v2805
  %v3902 = vpack.c.b16 %v2810, %v2806
  %v3903 = vpack.c.b16 %v2815, %v2811
  %v3904 = vpack.c.b16 %v2816, %v2812
  %v3905 = vpack.c.b16 %v2817, %v2813
  %v3906 = vpack.c.b16 %v2818, %v2814
  %v3907 = vpack.c.b16 %v2823, %v2819
  %v3908 = vpack.c.b16 %v2824, %v2820
  %v3909 = vpack.c.b16 %v2825, %v2821
  %v3910 = vpack.c.b16 %v2826, %v2822
  %v3911 = vpack.c.b16 %v2831, %v2827
  %v3912 = vpack.c.b16 %v2832, %v2828
  %v3913 = vpack.c.b16 %v2833, %v2829
  %v3914 = vpack.c.b16 %v2834, %v2830
  %v3915 = vpack.c.b16 %v2839, %v2835
  %v3916 = vpack.c.b16 %v2840, %v2836
  %v3917 = vpack.c.b16 %v2841, %v2837
  %v3918 = vpack.c.b16 %v2842, %v2838
  %v3919 = vpack.c.b16 %v2847, %v2843
  %v3920 = vpack.c.b16 %v2848, %v2844
  %v3921 = vpack.c.b16 %v2849, %v2845
  %v3922 = vpack.c.b16 %v2850, %v2846
  %v3923 = vpack.c.b16 %v2855, %v2851
  %v3924 = vpack.c.b16 %v2856, %v2852
  %v3925 = vpack.c.b16 %v2857, %v2853
  %v3926 = vpack.c.b16 %v2858, %v2854
  %v3927 = vpack.c.b16 %v2863, %v2859
  %v3928 = vpack.c.b16 %v2864, %v2860
  %v3929 = vpack.c.b16 %v2865, %v2861
  %v3930 = vpack.c.b16 %v2866, %v2862
  %v3931 = vpack.c.b16 %v2871, %v2867
  %v3932 = vpack.c.b16 %v2872, %v2868
  %v3933 = vpack.c.b16 %v2873, %v2869
  %v3934 = vpack.c.b16 %v2874, %v2870
  %v3935 = vpack.c.b16 %v2879, %v2875
  %v3936 = vpack.c.b16 %v2880, %v2876
  %v3937 = vpack.c.b16 %v2881, %v2877
  %v3938 = vpack.c.b16 %v2882, %v2878
  %v3939 = vpack.c.b16 %v2887, %v2883
  %v3940 = vpack.c.b16 %v2888, %v2884
  %v3941 = vpack.c.b16 %v2889, %v2885
  %v3942 = vpack.c.b16 %v2890, %v2886
  %v3943 = vpack.c.b16 %v2895, %v2891
  %v3944 = vpack.c.b16 %v2896, %v2892
  %v3945 = vpack.c.b16 %v2897, %v2893
  %v3946 = vpack.c.b16 %v2898, %v2894
  %v3947 = vpack.c.b16 %v2903, %v2899
  %v3948 = vpack.c.b16 %v2904, %v2900
  %v3949 = vpack.c.b16 %v2905, %v2901
  %v3950 = vpack.c.b16 %v2906, %v2902
  %v3951 = vpack.c.b16 %v2911, %v2907
  %v3952 = vpack.c.b16 %v2912, %v2908
  %v3953 = vpack.c.b16 %v2913, %v2909
  %v3954 = vpack.c.b16 %v2914, %v2910
  %v3955 = vpack.c.b16 %v2919, %v2915
  %v3956 = vpack.c.b16 %v2920, %v2916
  %v3957 = vpack.c.b16 %v2921, %v2917
  %v3958 = vpack.c.b16 %v2922, %v2918
  %v3959 = vpack.c.b16 %v2927, %v2923
  %v3960 = vpack.c.b16 %v2928, %v2924
  %v3961 = vpack.c.b16 %v2929, %v2925
  %v3962 = vpack.c.b16 %v2930, %v2926
  %v3963 = vpack.c.b16 %v2935, %v2931
  %v3964 = vpack.c.b16 %v2936, %v2932
  %v3965 = vpack.c.b16 %v2937, %v2933
  %v3966 = vpack.c.b16 %v2938, %v2934
  %v3967 = vpack.c.b16 %v2943, %v2939
  %v3968 = vpack.c.b16 %v2944, %v2940
  %v3969 = vpack.c.b16 %v2945, %v2941
  %v3970 = vpack.c.b16 %v2946, %v2942
  %v3971 = vpack.c.b16 %v2951, %v2947
  %v3972 = vpack.c.b16 %v2952, %v2948
  %v3973 = vpack.c.b16 %v2953, %v2949
  %v3974 = vpack.c.b16 %v2954, %v2950
  %v3975 = vpack.c.b16 %v2959, %v2955
  %v3976 = vpack.c.b16 %v2960, %v2956
  %v3977 = vpack.c.b16 %v2961, %v2957
  %v3978 = vpack.c.b16 %v2962, %v2958
  %v3979 = vpack.c.b16 %v2967, %v2963
  %v3980 = vpack.c.b16 %v2968, %v2964
  %v3981 = vpack.c.b16 %v2969, %v2965
  %v3982 = vpack.c.b16 %v2970, %v2966
  %v3983 = vpack.c.b16 %v2975, %v2971
  %v3984 = vpack.c.b16 %v2976, %v2972
  %v3985 = vpack.c.b16 %v2977, %v2973
  %v3986 = vpack.c.b16 %v2978, %v2974
  %v3987 = vpack.c.b16 %v2983, %v2979
  %v3988 = vpack.c.b16 %v2984, %v2980
  %v3989 = vpack.c.b16 %v2985, %v2981
  %v3990 = vpack.c.b16 %v2986, %v2982
  %v3991 = vpack.c.b16 %v2991, %v2987
  %v3992 = vpack.c.b16 %v2992, %v2988
  %v3993 = vpack.c.b16 %v2993, %v2989
  %v3994 = vpack.c.b16 %v2994, %v2990
  %v3995 = vpack.c.b16 %v2999, %v2995
  %v3996 = vpack.c.b16 %v3000, %v2996
  %v3997 = vpack.c.b16 %v3001, %v2997
  %v3998 = vpack.c.b16 %v3002, %v2998
  %v3999 = vpack.c.b16 %v3007, %v3003
  %v4000 = vpack.c.b16 %v3008, %v3004
  %v4001 = vpack.c.b16 %v3009, %v3005
  %v4002 = vpack.c.b16 %v3010, %v3006
  %v4003 = vpack.c.b16 %v3015, %v3011
  %v4004 = vpack.c.b16 %v3016, %v3012
  %v4005 = vpack.c.b16 %v3017, %v3013
  %v4006 = vpack.c.b16 %v3018, %v3014
  %v4007 = vpack.c.b16 %v3023, %v3019
  %v4008 = vpack.c.b16 %v3024, %v3020
  %v4009 = vpack.c.b16 %v3025, %v3021
  %v4010 = vpack.c.b16 %v3026, %v3022
  %v4011 = vpack.c.b16 %v3031, %v3027
  %v4012 = vpack.c.b16 %v3032, %v3028
  %v4013 = vpack.c.b16 %v3033, %v3029
  %v4014 = vpack.c.b16 %v3034, %v3030
  %v4015 = vpack.c.b16 %v3039, %v3035
  %v4016 = vpack.c.b16 %v3040, %v3036
  %v4017 = vpack.c.b16 %v3041, %v3037
  %v4018 = vpack.c.b16 %v3042, %v3038
  %v4019 = vpack.c.b16 %v3047, %v3043
  %v4020 = vpack.c.b16 %v3048, %v3044
  %v4021 = vpack.c.b16 %v3049, %v3045
  %v4022 = vpack.c.b16 %v3050, %v3046
  %v4023 = vpack.c.b16 %v3055, %v3051
  %v4024 = vpack.c.b16 %v3056, %v3052
  %v4025 = vpack.c.b16 %v3057, %v3053
  %v4026 = vpack.c.b16 %v3058, %v3054
  %v4027 = vpack.c.b16 %v3063, %v3059
  %v4028 = vpack.c.b16 %v3064, %v3060
  %v4029 = vpack.c.b16 %v3065, %v3061
  %v4030 = vpack.c.b16 %v3066, %v3062
  %v4031 = vpack.c.b16 %v3071, %v3067
  %v4032 = vpack.c.b16 %v3072, %v3068
  %v4033 = vpack.c.b16 %v3073, %v3069
  %v4034 = vpack.c.b16 %v3074, %v3070
  %v4035 = vpack.c.b16 %v3079, %v3075
  %v4036 = vpack.c.b16 %v3080, %v3076
  %v4037 = vpack.c.b16 %v3081, %v3077
  %v4038 = vpack.c.b16 %v3082, %v3078
  %v4039 = vpack.c.b16 %v3087, %v3083
  %v4040 = vpack.c.b16 %v3088, %v3084
  %v4041 = vpack.c.b16 %v3089, %v3085
  %v4042 = vpack.c.b16 %v3090, %v3086
  %v4043 = vpack.c.b16 %v3095, %v3091
  %v4044 = vpack.c.b16 %v3096, %v3092
  %v4045 = vpack.c.b16 %v3097, %v3093
  %v4046 = vpack.c.b16 %v3098, %v3094
  %v4047 = vpack.c.b16 %v3103, %v3099
  %v4048 = vpack.c.b16 %v3104, %v3100
  %v4049 = vpack.c.b16 %v3105, %v3101
  %v4050 = vpack.c.b16 %v3106, %v3102
  %v4051 = vpack.c.b16 %v3111, %v3107
  %v4052 = vpack.c.b16 %v3112, %v3108
  %v4053 = vpack.c.b16 %v3113, %v3109
  %v4054 = vpack.c.b16 %v3114, %v3110
  %v4055 = vpack.c.b16 %v3119, %v3115
  %v4056 = vpack.c.b16 %v3120, %v3116
  %v4057 = vpack.c.b16 %v3121, %v3117
  %v4058 = vpack.c.b16 %v3122, %v3118
  %v4059 = vpack.c.b16 %v3127, %v3123
  %v4060 = vpack.c.b16 %v3128, %v3124
  %v4061 = vpack.c.b16 %v3129, %v3125
  %v4062 = vpack.c.b16 %v3130, %v3126
  %v4063 = vpack.c.b16 %v3135, %v3131
  %v4064 = vpack.c.b16 %v3136, %v3132
  %v4065 = vpack.c.b16 %v3137, %v3133
  %v4066 = vpack.c.b16 %v3138, %v3134
  %v4067 = vpack.c.b16 %v3143, %v3139
  %v4068 = vpack.c.b16 %v3144, %v3140
  %v4069 = vpack.c.b16 %v3145, %v3141
  %v4070 = vpack.c.b16 %v3146, %v3142
  %v4071 = vpack.c.b16 %v3151, %v3147
  %v4072 = vpack.c.b16 %v3152, %v3148
  %v4073 = vpack.c.b16 %v3153, %v3149
  %v4074 = vpack.c.b16 %v3154, %v3150
  %v4075 = vpack.c.b16 %v3159, %v3155
  %v4076 = vpack.c.b16 %v3160, %v3156
  %v4077 = vpack.c.b16 %v3161, %v3157
  %v4078 = vpack.c.b16 %v3162, %v3158
  %v4079 = vpack.c.b16 %v3167, %v3163
  %v4080 = vpack.c.b16 %v3168, %v3164
  %v4081 = vpack.c.b16 %v3169, %v3165
  %v4082 = vpack.c.b16 %v3170, %v3166
  %v4083 = vpack.c.b16 %v3175, %v3171
  %v4084 = vpack.c.b16 %v3176, %v3172
  %v4085 = vpack.c.b16 %v3177, %v3173
  %v4086 = vpack.c.b16 %v3178, %v3174
  %v4087 = vpack.c.b16 %v3183, %v3179
  %v4088 = vpack.c.b16 %v3184, %v3180
  %v4089 = vpack.c.b16 %v3185, %v3181
  %v4090 = vpack.c.b16 %v3186, %v3182
  %v4091 = vpack.c.b16 %v3191, %v3187
  %v4092 = vpack.c.b16 %v3192, %v3188
  %v4093 = vpack.c.b16 %v3193, %v3189
  %v4094 = vpack.c.b16 %v3194, %v3190
  %v4095 = vpack.c.b16 %v3199, %v3195
  %v4096 = vpack.c.b16 %v3200, %v3196
  %v4097 = vpack.c.b16 %v3201, %v3197
  %v4098 = vpack.c.b16 %v3202, %v3198
  %v4099 = vpack.c.b16 %v3207, %v3203
  %v4100 = vpack.c.b16 %v3208, %v3204
  %v4101 = vpack.c.b16 %v3209, %v3205
  %v4102 = vpack.c.b16 %v3210, %v3206
  %v4103 = vpack.c.b16 %v3215, %v3211
  %v4104 = vpack.c.b16 %v3216, %v3212
  %v4105 = vpack.c.b16 %v3217, %v3213
  %v4106 = vpack.c.b16 %v3218, %v3214
  %v4107 = vpack.c.b16 %v3223, %v3219
  %v4108 = vpack.c.b16 %v3224, %v3220
  %v4109 = vpack.c.b16 %v3225, %v3221
  %v4110 = vpack.c.b16 %v3226, %v3222
  %v4111 = vpack.c.b16 %v3231, %v3227
  %v4112 = vpack.c.b16 %v3232, %v3228
  %v4113 = vpack.c.b16 %v3233, %v3229
  %v4114 = vpack.c.b16 %v3234, %v3230
  %v4115 = vpack.c.b16 %v3239, %v3235
  %v4116 = vpack.c.b16 %v3240, %v3236
  %v4117 = vpack.c.b16 %v3241, %v3237
  %v4118 = vpack.c.b16 %v3242, %v3238
  %v4119 = vpack.c.b16 %v3247, %v3243
  %v4120 = vpack.c.b16 %v3248, %v3244
  %v4121 = vpack.c.b16 %v3249, %v3245
  %v4122 = vpack.c.b16 %v3250, %v3246
  %v4123 = vpack.c.b16 %v3255, %v3251
  %v4124 = vpack.c.b16 %v3256, %v3252
  %v4125 = vpack.c.b16 %v3257, %v3253
  %v4126 = vpack.c.b16 %v3258, %v3254
  %v4127 = vpack.c.b16 %v3263, %v3259
  %v4128 = vpack.c.b16 %v3264, %v3260
  %v4129 = vpack.c.b16 %v3265, %v3261
  %v4130 = vpack.c.b16 %v3266, %v3262
  %v4131 = vpack.c.b16 %v3271, %v3267
  %v4132 = vpack.c.b16 %v3272, %v3268
  %v4133 = vpack.c.b16 %v3273, %v3269
  %v4134 = vpack.c.b16 %v3274, %v3270
  %v4135 = vpack.c.b16 %v3279, %v3275
  %v4136 = vpack.c.b16 %v3280, %v3276
  %v4137 = vpack.c.b16 %v3281, %v3277
  %v4138 = vpack.c.b16 %v3282, %v3278
  %v4139 = vpack.c.b16 %v3287, %v3283
  %v4140 = vpack.c.b16 %v3288, %v3284
  %v4141 = vpack.c.b16 %v3289, %v3285
  %v4142 = vpack.c.b16 %v3290, %v3286
  %v4143 = vpack.c.b16 %v3295, %v3291
  %v4144 = vpack.c.b16 %v3296, %v3292
  %v4145 = vpack.c.b16 %v3297, %v3293
  %v4146 = vpack.c.b16 %v3298, %v3294
  %v4147 = vpack.c.b16 %v3303, %v3299
  %v4148 = vpack.c.b16 %v3304, %v3300
  %v4149 = vpack.c.b16 %v3305, %v3301
  %v4150 = vpack.c.b16 %v3306, %v3302
  %v4151 = vpack.c.b16 %v3311, %v3307
  %v4152 = vpack.c.b16 %v3312, %v3308
  %v4153 = vpack.c.b16 %v3313, %v3309
  %v4154 = vpack.c.b16 %v3314, %v3310
  %v4155 = vpack.c.b16 %v3319, %v3315
  %v4156 = vpack.c.b16 %v3320, %v3316
  %v4157 = vpack.c.b16 %v3321, %v3317
  %v4158 = vpack.c.b16 %v3322, %v3318
  %v4159 = vpack.c.b16 %v3327, %v3323
  %v4160 = vpack.c.b16 %v3328, %v3324
  %v4161 = vpack.c.b16 %v3329, %v3325
  %v4162 = vpack.c.b16 %v3330, %v3326
  %v4163 = vpack.c.b16 %v3335, %v3331
  %v4164 = vpack.c.b16 %v3336, %v3332
  %v4165 = vpack.c.b16 %v3337, %v3333
  %v4166 = vpack.c.b16 %v3338, %v3334
  %v4167 = vpack.c.b16 %v3343, %v3339
  %v4168 = vpack.c.b16 %v3344, %v3340
  %v4169 = vpack.c.b16 %v3345, %v3341
  %v4170 = vpack.c.b16 %v3346, %v3342
  %v4171 = vpack.c.b16 %v3351, %v3347
  %v4172 = vpack.c.b16 %v3352, %v3348
  %v4173 = vpack.c.b16 %v3353, %v3349
  %v4174 = vpack.c.b16 %v3354, %v3350
  %v4175 = vpack.c.b16 %v3359, %v3355
  %v4176 = vpack.c.b16 %v3360, %v3356
  %v4177 = vpack.c.b16 %v3361, %v3357
  %v4178 = vpack.c.b16 %v3362, %v3358
  %v4179 = vpack.c.b16 %v3367, %v3363
  %v4180 = vpack.c.b16 %v3368, %v3364
  %v4181 = vpack.c.b16 %v3369, %v3365
  %v4182 = vpack.c.b16 %v3370, %v3366
  %v4183 = vpack.c.b16 %v3375, %v3371
  %v4184 = vpack.c.b16 %v3376, %v3372
  %v4185 = vpack.c.b16 %v3377, %v3373
  %v4186 = vpack.c.b16 %v3378, %v3374
  %v4187 = vpack.c.b16 %v3383, %v3379
  %v4188 = vpack.c.b16 %v3384, %v3380
  %v4189 = vpack.c.b16 %v3385, %v3381
  %v4190 = vpack.c.b16 %v3386, %v3382
  %v4191 = vpack.c.b16 %v3391, %v3387
  %v4192 = vpack.c.b16 %v3392, %v3388
  %v4193 = vpack.c.b16 %v3393, %v3389
  %v4194 = vpack.c.b16 %v3394, %v3390
  %4995 = vmatprep.subr.bf16.mxu0 %v3424
  %4996 = vmatpush1.bf16.msra.mxu0 %v3423
  %4997 = vmatprep.subr.bf16.mxu0 %v3420
  %4998 = vmatpush1.bf16.msra.mxu0 %v3419
  %4999 = vmatprep.subr.bf16.mxu0 %v3416
  %5000 = vmatpush1.bf16.msra.mxu0 %v3415
  %5001 = vmatprep.subr.bf16.mxu0 %v3412
  %5002 = vmatpush1.bf16.msra.mxu0 %v3411
  %5003 = vmatprep.subr.bf16.mxu0 %v3408
  %5004 = vmatpush1.bf16.msra.mxu0 %v3407
  %5005 = vmatprep.subr.bf16.mxu0 %v3404
  %5006 = vmatpush1.bf16.msra.mxu0 %v3403
  %5007 = vmatprep.subr.bf16.mxu0 %v3400
  %5008 = vmatpush1.bf16.msra.mxu0 %v3399
  %5009 = vmatprep.subr.bf16.mxu0 %v3396
  %5010 = vmatpush1.bf16.msra.mxu0 %v3395
  %5011 = vmatprep.subr.bf16.mxu0 %v3456
  %5012 = vmatpush2.bf16.msra.mxu0 %v3455
  %5013 = vmatprep.subr.bf16.mxu0 %v3452
  %5014 = vmatpush2.bf16.msra.mxu0 %v3451
  %5015 = vmatprep.subr.bf16.mxu0 %v3448
  %5016 = vmatpush2.bf16.msra.mxu0 %v3447
  %5017 = vmatprep.subr.bf16.mxu0 %v3444
  %5018 = vmatpush2.bf16.msra.mxu0 %v3443
  %5019 = vmatprep.subr.bf16.mxu0 %v3440
  %5020 = vmatpush2.bf16.msra.mxu0 %v3439
  %5021 = vmatprep.subr.bf16.mxu0 %v3436
  %5022 = vmatpush2.bf16.msra.mxu0 %v3435
  %5023 = vmatprep.subr.bf16.mxu0 %v3432
  %5024 = vmatpush2.bf16.msra.mxu0 %v3431
  %5025 = vmatprep.subr.bf16.mxu0 %v3428
  %5026 = vmatpush2.bf16.msra.mxu0 %v3427
  %5027 = vmatprep.mubr.bf16.mxu0 %v946
  %5028 = vmatmul.mubr.bf16.gmra.mxu0 %v945
  %v5029 = vpop.f32.mrf.mxu0
  %v5030 = vadd.f32 %v852, %v5029
  %v5031 = vpop.f32.mrf.mxu0
  %v5032 = vadd.f32 %v856, %v5031
  %v5033 = vpop.f32.mrf.mxu0
  %v5034 = vadd.f32 %v852, %v5033
  %v5035 = vpop.f32.mrf.mxu0
  %v5036 = vadd.f32 %v856, %v5035
  %5037 = vdwg.mxu0
  %5038 = vmatprep.subr.bf16.mxu0 %v3488
  %5039 = vmatpush1.bf16.msra.mxu0 %v3487
  %5040 = vmatprep.subr.bf16.mxu0 %v3484
  %5041 = vmatpush1.bf16.msra.mxu0 %v3483
  %5042 = vmatprep.subr.bf16.mxu0 %v3480
  %5043 = vmatpush1.bf16.msra.mxu0 %v3479
  %5044 = vmatprep.subr.bf16.mxu0 %v3476
  %5045 = vmatpush1.bf16.msra.mxu0 %v3475
  %5046 = vmatprep.subr.bf16.mxu0 %v3472
  %5047 = vmatpush1.bf16.msra.mxu0 %v3471
  %5048 = vmatprep.subr.bf16.mxu0 %v3468
  %5049 = vmatpush1.bf16.msra.mxu0 %v3467
  %5050 = vmatprep.subr.bf16.mxu0 %v3464
  %5051 = vmatpush1.bf16.msra.mxu0 %v3463
  %5052 = vmatprep.subr.bf16.mxu0 %v3460
  %5053 = vmatpush1.bf16.msra.mxu0 %v3459
  %5054 = vmatprep.subr.bf16.mxu0 %v3520
  %5055 = vmatpush2.bf16.msra.mxu0 %v3519
  %5056 = vmatprep.subr.bf16.mxu0 %v3516
  %5057 = vmatpush2.bf16.msra.mxu0 %v3515
  %5058 = vmatprep.subr.bf16.mxu0 %v3512
  %5059 = vmatpush2.bf16.msra.mxu0 %v3511
  %5060 = vmatprep.subr.bf16.mxu0 %v3508
  %5061 = vmatpush2.bf16.msra.mxu0 %v3507
  %5062 = vmatprep.subr.bf16.mxu0 %v3504
  %5063 = vmatpush2.bf16.msra.mxu0 %v3503
  %5064 = vmatprep.subr.bf16.mxu0 %v3500
  %5065 = vmatpush2.bf16.msra.mxu0 %v3499
  %5066 = vmatprep.subr.bf16.mxu0 %v3496
  %5067 = vmatpush2.bf16.msra.mxu0 %v3495
  %5068 = vmatprep.subr.bf16.mxu0 %v3492
  %5069 = vmatpush2.bf16.msra.mxu0 %v3491
  %5070 = vmatprep.mubr.bf16.mxu0 %v948
  %5071 = vmatmul.mubr.bf16.gmra.mxu0 %v947
  %v5072 = vpop.f32.mrf.mxu0
  %v5073 = vadd.f32 %v5030, %v5072
  %v5074 = vpop.f32.mrf.mxu0
  %v5075 = vadd.f32 %v5032, %v5074
  %v5076 = vpop.f32.mrf.mxu0
  %v5077 = vadd.f32 %v5034, %v5076
  %v5078 = vpop.f32.mrf.mxu0
  %v5079 = vadd.f32 %v5036, %v5078
  %5080 = vdwg.mxu0
  %5081 = vmatprep.subr.bf16.mxu0 %v3552
  %5082 = vmatpush1.bf16.msra.mxu0 %v3551
  %5083 = vmatprep.subr.bf16.mxu0 %v3548
  %5084 = vmatpush1.bf16.msra.mxu0 %v3547
  %5085 = vmatprep.subr.bf16.mxu0 %v3544
  %5086 = vmatpush1.bf16.msra.mxu0 %v3543
  %5087 = vmatprep.subr.bf16.mxu0 %v3540
  %5088 = vmatpush1.bf16.msra.mxu0 %v3539
  %5089 = vmatprep.subr.bf16.mxu0 %v3536
  %5090 = vmatpush1.bf16.msra.mxu0 %v3535
  %5091 = vmatprep.subr.bf16.mxu0 %v3532
  %5092 = vmatpush1.bf16.msra.mxu0 %v3531
  %5093 = vmatprep.subr.bf16.mxu0 %v3528
  %5094 = vmatpush1.bf16.msra.mxu0 %v3527
  %5095 = vmatprep.subr.bf16.mxu0 %v3524
  %5096 = vmatpush1.bf16.msra.mxu0 %v3523
  %5097 = vmatprep.subr.bf16.mxu0 %v3584
  %5098 = vmatpush2.bf16.msra.mxu0 %v3583
  %5099 = vmatprep.subr.bf16.mxu0 %v3580
  %5100 = vmatpush2.bf16.msra.mxu0 %v3579
  %5101 = vmatprep.subr.bf16.mxu0 %v3576
  %5102 = vmatpush2.bf16.msra.mxu0 %v3575
  %5103 = vmatprep.subr.bf16.mxu0 %v3572
  %5104 = vmatpush2.bf16.msra.mxu0 %v3571
  %5105 = vmatprep.subr.bf16.mxu0 %v3568
  %5106 = vmatpush2.bf16.msra.mxu0 %v3567
  %5107 = vmatprep.subr.bf16.mxu0 %v3564
  %5108 = vmatpush2.bf16.msra.mxu0 %v3563
  %5109 = vmatprep.subr.bf16.mxu0 %v3560
  %5110 = vmatpush2.bf16.msra.mxu0 %v3559
  %5111 = vmatprep.subr.bf16.mxu0 %v3556
  %5112 = vmatpush2.bf16.msra.mxu0 %v3555
  %5113 = vmatprep.mubr.bf16.mxu0 %v950
  %5114 = vmatmul.mubr.bf16.gmra.mxu0 %v949
  %v5115 = vpop.f32.mrf.mxu0
  %v5116 = vadd.f32 %v5073, %v5115
  %v5117 = vpop.f32.mrf.mxu0
  %v5118 = vadd.f32 %v5075, %v5117
  %v5119 = vpop.f32.mrf.mxu0
  %v5120 = vadd.f32 %v5077, %v5119
  %v5121 = vpop.f32.mrf.mxu0
  %v5122 = vadd.f32 %v5079, %v5121
  %5123 = vdwg.mxu0
  %5124 = vmatprep.subr.bf16.mxu0 %v3616
  %5125 = vmatpush1.bf16.msra.mxu0 %v3615
  %5126 = vmatprep.subr.bf16.mxu0 %v3612
  %5127 = vmatpush1.bf16.msra.mxu0 %v3611
  %5128 = vmatprep.subr.bf16.mxu0 %v3608
  %5129 = vmatpush1.bf16.msra.mxu0 %v3607
  %5130 = vmatprep.subr.bf16.mxu0 %v3604
  %5131 = vmatpush1.bf16.msra.mxu0 %v3603
  %5132 = vmatprep.subr.bf16.mxu0 %v3600
  %5133 = vmatpush1.bf16.msra.mxu0 %v3599
  %5134 = vmatprep.subr.bf16.mxu0 %v3596
  %5135 = vmatpush1.bf16.msra.mxu0 %v3595
  %5136 = vmatprep.subr.bf16.mxu0 %v3592
  %5137 = vmatpush1.bf16.msra.mxu0 %v3591
  %5138 = vmatprep.subr.bf16.mxu0 %v3588
  %5139 = vmatpush1.bf16.msra.mxu0 %v3587
  %5140 = vmatprep.subr.bf16.mxu0 %v3648
  %5141 = vmatpush2.bf16.msra.mxu0 %v3647
  %5142 = vmatprep.subr.bf16.mxu0 %v3644
  %5143 = vmatpush2.bf16.msra.mxu0 %v3643
  %5144 = vmatprep.subr.bf16.mxu0 %v3640
  %5145 = vmatpush2.bf16.msra.mxu0 %v3639
  %5146 = vmatprep.subr.bf16.mxu0 %v3636
  %5147 = vmatpush2.bf16.msra.mxu0 %v3635
  %5148 = vmatprep.subr.bf16.mxu0 %v3632
  %5149 = vmatpush2.bf16.msra.mxu0 %v3631
  %5150 = vmatprep.subr.bf16.mxu0 %v3628
  %5151 = vmatpush2.bf16.msra.mxu0 %v3627
  %5152 = vmatprep.subr.bf16.mxu0 %v3624
  %5153 = vmatpush2.bf16.msra.mxu0 %v3623
  %5154 = vmatprep.subr.bf16.mxu0 %v3620
  %5155 = vmatpush2.bf16.msra.mxu0 %v3619
  %5156 = vmatprep.mubr.bf16.mxu0 %v952
  %5157 = vmatmul.mubr.bf16.gmra.mxu0 %v951
  %v5158 = vpop.f32.mrf.mxu0
  %v5159 = vadd.f32 %v5116, %v5158
  %v5160 = vpop.f32.mrf.mxu0
  %v5161 = vadd.f32 %v5118, %v5160
  %v5162 = vpop.f32.mrf.mxu0
  %v5163 = vadd.f32 %v5120, %v5162
  %v5164 = vpop.f32.mrf.mxu0
  %v5165 = vadd.f32 %v5122, %v5164
  %5166 = vdwg.mxu0
  %5167 = vmatprep.subr.bf16.mxu0 %v3680
  %5168 = vmatpush1.bf16.msra.mxu0 %v3679
  %5169 = vmatprep.subr.bf16.mxu0 %v3676
  %5170 = vmatpush1.bf16.msra.mxu0 %v3675
  %5171 = vmatprep.subr.bf16.mxu0 %v3672
  %5172 = vmatpush1.bf16.msra.mxu0 %v3671
  %5173 = vmatprep.subr.bf16.mxu0 %v3668
  %5174 = vmatpush1.bf16.msra.mxu0 %v3667
  %5175 = vmatprep.subr.bf16.mxu0 %v3664
  %5176 = vmatpush1.bf16.msra.mxu0 %v3663
  %5177 = vmatprep.subr.bf16.mxu0 %v3660
  %5178 = vmatpush1.bf16.msra.mxu0 %v3659
  %5179 = vmatprep.subr.bf16.mxu0 %v3656
  %5180 = vmatpush1.bf16.msra.mxu0 %v3655
  %5181 = vmatprep.subr.bf16.mxu0 %v3652
  %5182 = vmatpush1.bf16.msra.mxu0 %v3651
  %5183 = vmatprep.subr.bf16.mxu0 %v3712
  %5184 = vmatpush2.bf16.msra.mxu0 %v3711
  %5185 = vmatprep.subr.bf16.mxu0 %v3708
  %5186 = vmatpush2.bf16.msra.mxu0 %v3707
  %5187 = vmatprep.subr.bf16.mxu0 %v3704
  %5188 = vmatpush2.bf16.msra.mxu0 %v3703
  %5189 = vmatprep.subr.bf16.mxu0 %v3700
  %5190 = vmatpush2.bf16.msra.mxu0 %v3699
  %5191 = vmatprep.subr.bf16.mxu0 %v3696
  %5192 = vmatpush2.bf16.msra.mxu0 %v3695
  %5193 = vmatprep.subr.bf16.mxu0 %v3692
  %5194 = vmatpush2.bf16.msra.mxu0 %v3691
  %5195 = vmatprep.subr.bf16.mxu0 %v3688
  %5196 = vmatpush2.bf16.msra.mxu0 %v3687
  %5197 = vmatprep.subr.bf16.mxu0 %v3684
  %5198 = vmatpush2.bf16.msra.mxu0 %v3683
  %5199 = vmatprep.mubr.bf16.mxu0 %v954
  %5200 = vmatmul.mubr.bf16.gmra.mxu0 %v953
  %v5201 = vpop.f32.mrf.mxu0
  %v5202 = vadd.f32 %v5159, %v5201
  %v5203 = vpop.f32.mrf.mxu0
  %v5204 = vadd.f32 %v5161, %v5203
  %v5205 = vpop.f32.mrf.mxu0
  %v5206 = vadd.f32 %v5163, %v5205
  %v5207 = vpop.f32.mrf.mxu0
  %v5208 = vadd.f32 %v5165, %v5207
  %5209 = vdwg.mxu0
  %5210 = vmatprep.subr.bf16.mxu0 %v3744
  %5211 = vmatpush1.bf16.msra.mxu0 %v3743
  %5212 = vmatprep.subr.bf16.mxu0 %v3740
  %5213 = vmatpush1.bf16.msra.mxu0 %v3739
  %5214 = vmatprep.subr.bf16.mxu0 %v3736
  %5215 = vmatpush1.bf16.msra.mxu0 %v3735
  %5216 = vmatprep.subr.bf16.mxu0 %v3732
  %5217 = vmatpush1.bf16.msra.mxu0 %v3731
  %5218 = vmatprep.subr.bf16.mxu0 %v3728
  %5219 = vmatpush1.bf16.msra.mxu0 %v3727
  %5220 = vmatprep.subr.bf16.mxu0 %v3724
  %5221 = vmatpush1.bf16.msra.mxu0 %v3723
  %5222 = vmatprep.subr.bf16.mxu0 %v3720
  %5223 = vmatpush1.bf16.msra.mxu0 %v3719
  %5224 = vmatprep.subr.bf16.mxu0 %v3716
  %5225 = vmatpush1.bf16.msra.mxu0 %v3715
  %5226 = vmatprep.subr.bf16.mxu0 %v3776
  %5227 = vmatpush2.bf16.msra.mxu0 %v3775
  %5228 = vmatprep.subr.bf16.mxu0 %v3772
  %5229 = vmatpush2.bf16.msra.mxu0 %v3771
  %5230 = vmatprep.subr.bf16.mxu0 %v3768
  %5231 = vmatpush2.bf16.msra.mxu0 %v3767
  %5232 = vmatprep.subr.bf16.mxu0 %v3764
  %5233 = vmatpush2.bf16.msra.mxu0 %v3763
  %5234 = vmatprep.subr.bf16.mxu0 %v3760
  %5235 = vmatpush2.bf16.msra.mxu0 %v3759
  %5236 = vmatprep.subr.bf16.mxu0 %v3756
  %5237 = vmatpush2.bf16.msra.mxu0 %v3755
  %5238 = vmatprep.subr.bf16.mxu0 %v3752
  %5239 = vmatpush2.bf16.msra.mxu0 %v3751
  %5240 = vmatprep.subr.bf16.mxu0 %v3748
  %5241 = vmatpush2.bf16.msra.mxu0 %v3747
  %5242 = vmatprep.mubr.bf16.mxu0 %v956
  %5243 = vmatmul.mubr.bf16.gmra.mxu0 %v955
  %v5244 = vpop.f32.mrf.mxu0
  %v5245 = vadd.f32 %v5202, %v5244
  %v5246 = vpop.f32.mrf.mxu0
  %v5247 = vadd.f32 %v5204, %v5246
  %v5248 = vpop.f32.mrf.mxu0
  %v5249 = vadd.f32 %v5206, %v5248
  %v5250 = vpop.f32.mrf.mxu0
  %v5251 = vadd.f32 %v5208, %v5250
  %5252 = vdwg.mxu0
  %5253 = vmatprep.subr.bf16.mxu0 %v3808
  %5254 = vmatpush1.bf16.msra.mxu0 %v3807
  %5255 = vmatprep.subr.bf16.mxu0 %v3804
  %5256 = vmatpush1.bf16.msra.mxu0 %v3803
  %5257 = vmatprep.subr.bf16.mxu0 %v3800
  %5258 = vmatpush1.bf16.msra.mxu0 %v3799
  %5259 = vmatprep.subr.bf16.mxu0 %v3796
  %5260 = vmatpush1.bf16.msra.mxu0 %v3795
  %5261 = vmatprep.subr.bf16.mxu0 %v3792
  %5262 = vmatpush1.bf16.msra.mxu0 %v3791
  %5263 = vmatprep.subr.bf16.mxu0 %v3788
  %5264 = vmatpush1.bf16.msra.mxu0 %v3787
  %5265 = vmatprep.subr.bf16.mxu0 %v3784
  %5266 = vmatpush1.bf16.msra.mxu0 %v3783
  %5267 = vmatprep.subr.bf16.mxu0 %v3780
  %5268 = vmatpush1.bf16.msra.mxu0 %v3779
  %5269 = vmatprep.subr.bf16.mxu0 %v3840
  %5270 = vmatpush2.bf16.msra.mxu0 %v3839
  %5271 = vmatprep.subr.bf16.mxu0 %v3836
  %5272 = vmatpush2.bf16.msra.mxu0 %v3835
  %5273 = vmatprep.subr.bf16.mxu0 %v3832
  %5274 = vmatpush2.bf16.msra.mxu0 %v3831
  %5275 = vmatprep.subr.bf16.mxu0 %v3828
  %5276 = vmatpush2.bf16.msra.mxu0 %v3827
  %5277 = vmatprep.subr.bf16.mxu0 %v3824
  %5278 = vmatpush2.bf16.msra.mxu0 %v3823
  %5279 = vmatprep.subr.bf16.mxu0 %v3820
  %5280 = vmatpush2.bf16.msra.mxu0 %v3819
  %5281 = vmatprep.subr.bf16.mxu0 %v3816
  %5282 = vmatpush2.bf16.msra.mxu0 %v3815
  %5283 = vmatprep.subr.bf16.mxu0 %v3812
  %5284 = vmatpush2.bf16.msra.mxu0 %v3811
  %5285 = vmatprep.mubr.bf16.mxu0 %v958
  %5286 = vmatmul.mubr.bf16.gmra.mxu0 %v957
  %v5287 = vpop.f32.mrf.mxu0
  %v5288 = vadd.f32 %v5245, %v5287
  %v5289 = vpop.f32.mrf.mxu0
  %v5290 = vadd.f32 %v5247, %v5289
  %v5291 = vpop.f32.mrf.mxu0
  %v5292 = vadd.f32 %v5249, %v5291
  %v5293 = vpop.f32.mrf.mxu0
  %v5294 = vadd.f32 %v5251, %v5293
  %5295 = vdwg.mxu0
  %5296 = vmatprep.subr.bf16.mxu0 %v3872
  %5297 = vmatpush1.bf16.msra.mxu0 %v3871
  %5298 = vmatprep.subr.bf16.mxu0 %v3868
  %5299 = vmatpush1.bf16.msra.mxu0 %v3867
  %5300 = vmatprep.subr.bf16.mxu0 %v3864
  %5301 = vmatpush1.bf16.msra.mxu0 %v3863
  %5302 = vmatprep.subr.bf16.mxu0 %v3860
  %5303 = vmatpush1.bf16.msra.mxu0 %v3859
  %5304 = vmatprep.subr.bf16.mxu0 %v3856
  %5305 = vmatpush1.bf16.msra.mxu0 %v3855
  %5306 = vmatprep.subr.bf16.mxu0 %v3852
  %5307 = vmatpush1.bf16.msra.mxu0 %v3851
  %5308 = vmatprep.subr.bf16.mxu0 %v3848
  %5309 = vmatpush1.bf16.msra.mxu0 %v3847
  %5310 = vmatprep.subr.bf16.mxu0 %v3844
  %5311 = vmatpush1.bf16.msra.mxu0 %v3843
  %5312 = vmatprep.subr.bf16.mxu0 %v3904
  %5313 = vmatpush2.bf16.msra.mxu0 %v3903
  %5314 = vmatprep.subr.bf16.mxu0 %v3900
  %5315 = vmatpush2.bf16.msra.mxu0 %v3899
  %5316 = vmatprep.subr.bf16.mxu0 %v3896
  %5317 = vmatpush2.bf16.msra.mxu0 %v3895
  %5318 = vmatprep.subr.bf16.mxu0 %v3892
  %5319 = vmatpush2.bf16.msra.mxu0 %v3891
  %5320 = vmatprep.subr.bf16.mxu0 %v3888
  %5321 = vmatpush2.bf16.msra.mxu0 %v3887
  %5322 = vmatprep.subr.bf16.mxu0 %v3884
  %5323 = vmatpush2.bf16.msra.mxu0 %v3883
  %5324 = vmatprep.subr.bf16.mxu0 %v3880
  %5325 = vmatpush2.bf16.msra.mxu0 %v3879
  %5326 = vmatprep.subr.bf16.mxu0 %v3876
  %5327 = vmatpush2.bf16.msra.mxu0 %v3875
  %5328 = vmatprep.mubr.bf16.mxu0 %v960
  %5329 = vmatmul.mubr.bf16.gmra.mxu0 %v959
  %v5330 = vpop.f32.mrf.mxu0
  %v5331 = vadd.f32 %v5288, %v5330
  %v5332 = vpop.f32.mrf.mxu0
  %v5333 = vadd.f32 %v5290, %v5332
  %v5334 = vpop.f32.mrf.mxu0
  %v5335 = vadd.f32 %v5292, %v5334
  %v5336 = vpop.f32.mrf.mxu0
  %v5337 = vadd.f32 %v5294, %v5336
  %5338 = vdwg.mxu0
  %5339 = vmatprep.subr.bf16.mxu0 %v3936
  %5340 = vmatpush1.bf16.msra.mxu0 %v3935
  %5341 = vmatprep.subr.bf16.mxu0 %v3932
  %5342 = vmatpush1.bf16.msra.mxu0 %v3931
  %5343 = vmatprep.subr.bf16.mxu0 %v3928
  %5344 = vmatpush1.bf16.msra.mxu0 %v3927
  %5345 = vmatprep.subr.bf16.mxu0 %v3924
  %5346 = vmatpush1.bf16.msra.mxu0 %v3923
  %5347 = vmatprep.subr.bf16.mxu0 %v3920
  %5348 = vmatpush1.bf16.msra.mxu0 %v3919
  %5349 = vmatprep.subr.bf16.mxu0 %v3916
  %5350 = vmatpush1.bf16.msra.mxu0 %v3915
  %5351 = vmatprep.subr.bf16.mxu0 %v3912
  %5352 = vmatpush1.bf16.msra.mxu0 %v3911
  %5353 = vmatprep.subr.bf16.mxu0 %v3908
  %5354 = vmatpush1.bf16.msra.mxu0 %v3907
  %5355 = vmatprep.subr.bf16.mxu0 %v3968
  %5356 = vmatpush2.bf16.msra.mxu0 %v3967
  %5357 = vmatprep.subr.bf16.mxu0 %v3964
  %5358 = vmatpush2.bf16.msra.mxu0 %v3963
  %5359 = vmatprep.subr.bf16.mxu0 %v3960
  %5360 = vmatpush2.bf16.msra.mxu0 %v3959
  %5361 = vmatprep.subr.bf16.mxu0 %v3956
  %5362 = vmatpush2.bf16.msra.mxu0 %v3955
  %5363 = vmatprep.subr.bf16.mxu0 %v3952
  %5364 = vmatpush2.bf16.msra.mxu0 %v3951
  %5365 = vmatprep.subr.bf16.mxu0 %v3948
  %5366 = vmatpush2.bf16.msra.mxu0 %v3947
  %5367 = vmatprep.subr.bf16.mxu0 %v3944
  %5368 = vmatpush2.bf16.msra.mxu0 %v3943
  %5369 = vmatprep.subr.bf16.mxu0 %v3940
  %5370 = vmatpush2.bf16.msra.mxu0 %v3939
  %5371 = vmatprep.mubr.bf16.mxu0 %v962
  %5372 = vmatmul.mubr.bf16.gmra.mxu0 %v961
  %v5373 = vpop.f32.mrf.mxu0
  %v5374 = vadd.f32 %v5331, %v5373
  %v5375 = vpop.f32.mrf.mxu0
  %v5376 = vadd.f32 %v5333, %v5375
  %v5377 = vpop.f32.mrf.mxu0
  %v5378 = vadd.f32 %v5335, %v5377
  %v5379 = vpop.f32.mrf.mxu0
  %v5380 = vadd.f32 %v5337, %v5379
  %5381 = vdwg.mxu0
  %5382 = vmatprep.subr.bf16.mxu0 %v4000
  %5383 = vmatpush1.bf16.msra.mxu0 %v3999
  %5384 = vmatprep.subr.bf16.mxu0 %v3996
  %5385 = vmatpush1.bf16.msra.mxu0 %v3995
  %5386 = vmatprep.subr.bf16.mxu0 %v3992
  %5387 = vmatpush1.bf16.msra.mxu0 %v3991
  %5388 = vmatprep.subr.bf16.mxu0 %v3988
  %5389 = vmatpush1.bf16.msra.mxu0 %v3987
  %5390 = vmatprep.subr.bf16.mxu0 %v3984
  %5391 = vmatpush1.bf16.msra.mxu0 %v3983
  %5392 = vmatprep.subr.bf16.mxu0 %v3980
  %5393 = vmatpush1.bf16.msra.mxu0 %v3979
  %5394 = vmatprep.subr.bf16.mxu0 %v3976
  %5395 = vmatpush1.bf16.msra.mxu0 %v3975
  %5396 = vmatprep.subr.bf16.mxu0 %v3972
  %5397 = vmatpush1.bf16.msra.mxu0 %v3971
  %5398 = vmatprep.subr.bf16.mxu0 %v4032
  %5399 = vmatpush2.bf16.msra.mxu0 %v4031
  %5400 = vmatprep.subr.bf16.mxu0 %v4028
  %5401 = vmatpush2.bf16.msra.mxu0 %v4027
  %5402 = vmatprep.subr.bf16.mxu0 %v4024
  %5403 = vmatpush2.bf16.msra.mxu0 %v4023
  %5404 = vmatprep.subr.bf16.mxu0 %v4020
  %5405 = vmatpush2.bf16.msra.mxu0 %v4019
  %5406 = vmatprep.subr.bf16.mxu0 %v4016
  %5407 = vmatpush2.bf16.msra.mxu0 %v4015
  %5408 = vmatprep.subr.bf16.mxu0 %v4012
  %5409 = vmatpush2.bf16.msra.mxu0 %v4011
  %5410 = vmatprep.subr.bf16.mxu0 %v4008
  %5411 = vmatpush2.bf16.msra.mxu0 %v4007
  %5412 = vmatprep.subr.bf16.mxu0 %v4004
  %5413 = vmatpush2.bf16.msra.mxu0 %v4003
  %5414 = vmatprep.mubr.bf16.mxu0 %v964
  %5415 = vmatmul.mubr.bf16.gmra.mxu0 %v963
  %v5416 = vpop.f32.mrf.mxu0
  %v5417 = vadd.f32 %v5374, %v5416
  %v5418 = vpop.f32.mrf.mxu0
  %v5419 = vadd.f32 %v5376, %v5418
  %v5420 = vpop.f32.mrf.mxu0
  %v5421 = vadd.f32 %v5378, %v5420
  %v5422 = vpop.f32.mrf.mxu0
  %v5423 = vadd.f32 %v5380, %v5422
  %5424 = vdwg.mxu0
  %5425 = vmatprep.subr.bf16.mxu0 %v4064
  %5426 = vmatpush1.bf16.msra.mxu0 %v4063
  %5427 = vmatprep.subr.bf16.mxu0 %v4060
  %5428 = vmatpush1.bf16.msra.mxu0 %v4059
  %5429 = vmatprep.subr.bf16.mxu0 %v4056
  %5430 = vmatpush1.bf16.msra.mxu0 %v4055
  %5431 = vmatprep.subr.bf16.mxu0 %v4052
  %5432 = vmatpush1.bf16.msra.mxu0 %v4051
  %5433 = vmatprep.subr.bf16.mxu0 %v4048
  %5434 = vmatpush1.bf16.msra.mxu0 %v4047
  %5435 = vmatprep.subr.bf16.mxu0 %v4044
  %5436 = vmatpush1.bf16.msra.mxu0 %v4043
  %5437 = vmatprep.subr.bf16.mxu0 %v4040
  %5438 = vmatpush1.bf16.msra.mxu0 %v4039
  %5439 = vmatprep.subr.bf16.mxu0 %v4036
  %5440 = vmatpush1.bf16.msra.mxu0 %v4035
  %5441 = vmatprep.subr.bf16.mxu0 %v4096
  %5442 = vmatpush2.bf16.msra.mxu0 %v4095
  %5443 = vmatprep.subr.bf16.mxu0 %v4092
  %5444 = vmatpush2.bf16.msra.mxu0 %v4091
  %5445 = vmatprep.subr.bf16.mxu0 %v4088
  %5446 = vmatpush2.bf16.msra.mxu0 %v4087
  %5447 = vmatprep.subr.bf16.mxu0 %v4084
  %5448 = vmatpush2.bf16.msra.mxu0 %v4083
  %5449 = vmatprep.subr.bf16.mxu0 %v4080
  %5450 = vmatpush2.bf16.msra.mxu0 %v4079
  %5451 = vmatprep.subr.bf16.mxu0 %v4076
  %5452 = vmatpush2.bf16.msra.mxu0 %v4075
  %5453 = vmatprep.subr.bf16.mxu0 %v4072
  %5454 = vmatpush2.bf16.msra.mxu0 %v4071
  %5455 = vmatprep.subr.bf16.mxu0 %v4068
  %5456 = vmatpush2.bf16.msra.mxu0 %v4067
  %5457 = vmatprep.mubr.bf16.mxu0 %v966
  %5458 = vmatmul.mubr.bf16.gmra.mxu0 %v965
  %v5459 = vpop.f32.mrf.mxu0
  %v5460 = vadd.f32 %v5417, %v5459
  %v5461 = vpop.f32.mrf.mxu0
  %v5462 = vadd.f32 %v5419, %v5461
  %v5463 = vpop.f32.mrf.mxu0
  %v5464 = vadd.f32 %v5421, %v5463
  %v5465 = vpop.f32.mrf.mxu0
  %v5466 = vadd.f32 %v5423, %v5465
  %5467 = vdwg.mxu0
  %5468 = vmatprep.subr.bf16.mxu0 %v4128
  %5469 = vmatpush1.bf16.msra.mxu0 %v4127
  %5470 = vmatprep.subr.bf16.mxu0 %v4124
  %5471 = vmatpush1.bf16.msra.mxu0 %v4123
  %5472 = vmatprep.subr.bf16.mxu0 %v4120
  %5473 = vmatpush1.bf16.msra.mxu0 %v4119
  %5474 = vmatprep.subr.bf16.mxu0 %v4116
  %5475 = vmatpush1.bf16.msra.mxu0 %v4115
  %5476 = vmatprep.subr.bf16.mxu0 %v4112
  %5477 = vmatpush1.bf16.msra.mxu0 %v4111
  %5478 = vmatprep.subr.bf16.mxu0 %v4108
  %5479 = vmatpush1.bf16.msra.mxu0 %v4107
  %5480 = vmatprep.subr.bf16.mxu0 %v4104
  %5481 = vmatpush1.bf16.msra.mxu0 %v4103
  %5482 = vmatprep.subr.bf16.mxu0 %v4100
  %5483 = vmatpush1.bf16.msra.mxu0 %v4099
  %5484 = vmatprep.subr.bf16.mxu0 %v4160
  %5485 = vmatpush2.bf16.msra.mxu0 %v4159
  %5486 = vmatprep.subr.bf16.mxu0 %v4156
  %5487 = vmatpush2.bf16.msra.mxu0 %v4155
  %5488 = vmatprep.subr.bf16.mxu0 %v4152
  %5489 = vmatpush2.bf16.msra.mxu0 %v4151
  %5490 = vmatprep.subr.bf16.mxu0 %v4148
  %5491 = vmatpush2.bf16.msra.mxu0 %v4147
  %5492 = vmatprep.subr.bf16.mxu0 %v4144
  %5493 = vmatpush2.bf16.msra.mxu0 %v4143
  %5494 = vmatprep.subr.bf16.mxu0 %v4140
  %5495 = vmatpush2.bf16.msra.mxu0 %v4139
  %5496 = vmatprep.subr.bf16.mxu0 %v4136
  %5497 = vmatpush2.bf16.msra.mxu0 %v4135
  %5498 = vmatprep.subr.bf16.mxu0 %v4132
  %5499 = vmatpush2.bf16.msra.mxu0 %v4131
  %5500 = vmatprep.mubr.bf16.mxu0 %v968
  %5501 = vmatmul.mubr.bf16.gmra.mxu0 %v967
  %v5502 = vpop.f32.mrf.mxu0
  %v5503 = vadd.f32 %v5460, %v5502
  %v5504 = vpop.f32.mrf.mxu0
  %v5505 = vadd.f32 %v5462, %v5504
  %v5506 = vpop.f32.mrf.mxu0
  %v5507 = vadd.f32 %v5464, %v5506
  %v5508 = vpop.f32.mrf.mxu0
  %v5509 = vadd.f32 %v5466, %v5508
  %5510 = vdwg.mxu0
  %5511 = vmatprep.subr.bf16.mxu0 %v4192
  %5512 = vmatpush1.bf16.msra.mxu0 %v4191
  %5513 = vmatprep.subr.bf16.mxu0 %v4188
  %5514 = vmatpush1.bf16.msra.mxu0 %v4187
  %5515 = vmatprep.subr.bf16.mxu0 %v4184
  %5516 = vmatpush1.bf16.msra.mxu0 %v4183
  %5517 = vmatprep.subr.bf16.mxu0 %v4180
  %5518 = vmatpush1.bf16.msra.mxu0 %v4179
  %5519 = vmatprep.subr.bf16.mxu0 %v4176
  %5520 = vmatpush1.bf16.msra.mxu0 %v4175
  %5521 = vmatprep.subr.bf16.mxu0 %v4172
  %5522 = vmatpush1.bf16.msra.mxu0 %v4171
  %5523 = vmatprep.subr.bf16.mxu0 %v4168
  %5524 = vmatpush1.bf16.msra.mxu0 %v4167
  %5525 = vmatprep.subr.bf16.mxu0 %v4164
  %5526 = vmatpush1.bf16.msra.mxu0 %v4163
  %5527 = vmatprep.subr.bf16.mxu0 0
  %5528 = vmatpush2.bf16.msra.mxu0 0
  %5529 = vmatprep.subr.bf16.mxu0 0
  %5530 = vmatpush2.bf16.msra.mxu0 0
  %5531 = vmatprep.subr.bf16.mxu0 0
  %5532 = vmatpush2.bf16.msra.mxu0 0
  %5533 = vmatprep.subr.bf16.mxu0 0
  %5534 = vmatpush2.bf16.msra.mxu0 0
  %5535 = vmatprep.subr.bf16.mxu0 0
  %5536 = vmatpush2.bf16.msra.mxu0 0
  %5537 = vmatprep.subr.bf16.mxu0 0
  %5538 = vmatpush2.bf16.msra.mxu0 0
  %5539 = vmatprep.subr.bf16.mxu0 0
  %5540 = vmatpush2.bf16.msra.mxu0 0
  %5541 = vmatprep.subr.bf16.mxu0 0
  %5542 = vmatpush2.bf16.msra.mxu0 0
  %5543 = vmatprep.mubr.bf16.mxu0 0
  %5544 = vmatmul.mubr.bf16.gmra.mxu0 %v969
  %v5545 = vpop.f32.mrf.mxu0
  %v5546 = vadd.f32 %v5503, %v5545
  %v5547 = vpop.f32.mrf.mxu0
  %v5548 = vadd.f32 %v5505, %v5547
  %v5549 = vpop.f32.mrf.mxu0
  %v5550 = vadd.f32 %v5507, %v5549
  %v5551 = vpop.f32.mrf.mxu0
  %v5552 = vadd.f32 %v5509, %v5551
  %5553 = vdwg.mxu0
  %5554 = vmatprep.subr.bf16.mxu0 %v3426
  %5555 = vmatpush1.bf16.msra.mxu0 %v3425
  %5556 = vmatprep.subr.bf16.mxu0 %v3422
  %5557 = vmatpush1.bf16.msra.mxu0 %v3421
  %5558 = vmatprep.subr.bf16.mxu0 %v3418
  %5559 = vmatpush1.bf16.msra.mxu0 %v3417
  %5560 = vmatprep.subr.bf16.mxu0 %v3414
  %5561 = vmatpush1.bf16.msra.mxu0 %v3413
  %5562 = vmatprep.subr.bf16.mxu0 %v3410
  %5563 = vmatpush1.bf16.msra.mxu0 %v3409
  %5564 = vmatprep.subr.bf16.mxu0 %v3406
  %5565 = vmatpush1.bf16.msra.mxu0 %v3405
  %5566 = vmatprep.subr.bf16.mxu0 %v3402
  %5567 = vmatpush1.bf16.msra.mxu0 %v3401
  %5568 = vmatprep.subr.bf16.mxu0 %v3398
  %5569 = vmatpush1.bf16.msra.mxu0 %v3397
  %5570 = vmatprep.subr.bf16.mxu0 %v3458
  %5571 = vmatpush2.bf16.msra.mxu0 %v3457
  %5572 = vmatprep.subr.bf16.mxu0 %v3454
  %5573 = vmatpush2.bf16.msra.mxu0 %v3453
  %5574 = vmatprep.subr.bf16.mxu0 %v3450
  %5575 = vmatpush2.bf16.msra.mxu0 %v3449
  %5576 = vmatprep.subr.bf16.mxu0 %v3446
  %5577 = vmatpush2.bf16.msra.mxu0 %v3445
  %5578 = vmatprep.subr.bf16.mxu0 %v3442
  %5579 = vmatpush2.bf16.msra.mxu0 %v3441
  %5580 = vmatprep.subr.bf16.mxu0 %v3438
  %5581 = vmatpush2.bf16.msra.mxu0 %v3437
  %5582 = vmatprep.subr.bf16.mxu0 %v3434
  %5583 = vmatpush2.bf16.msra.mxu0 %v3433
  %5584 = vmatprep.subr.bf16.mxu0 %v3430
  %5585 = vmatpush2.bf16.msra.mxu0 %v3429
  %5586 = vmatprep.mubr.bf16.mxu0 %v946
  %5587 = vmatmul.mubr.bf16.gmra.mxu0 %v945
  %v5588 = vpop.f32.mrf.mxu0
  %v5589 = vadd.f32 %v860, %v5588
  %v5590 = vpop.f32.mrf.mxu0
  %v5591 = vadd.f32 %v864, %v5590
  %v5592 = vpop.f32.mrf.mxu0
  %v5593 = vadd.f32 %v860, %v5592
  %v5594 = vpop.f32.mrf.mxu0
  %v5595 = vadd.f32 %v864, %v5594
  %5596 = vdwg.mxu0
  %5597 = vmatprep.subr.bf16.mxu0 %v3490
  %5598 = vmatpush1.bf16.msra.mxu0 %v3489
  %5599 = vmatprep.subr.bf16.mxu0 %v3486
  %5600 = vmatpush1.bf16.msra.mxu0 %v3485
  %5601 = vmatprep.subr.bf16.mxu0 %v3482
  %5602 = vmatpush1.bf16.msra.mxu0 %v3481
  %5603 = vmatprep.subr.bf16.mxu0 %v3478
  %5604 = vmatpush1.bf16.msra.mxu0 %v3477
  %5605 = vmatprep.subr.bf16.mxu0 %v3474
  %5606 = vmatpush1.bf16.msra.mxu0 %v3473
  %5607 = vmatprep.subr.bf16.mxu0 %v3470
  %5608 = vmatpush1.bf16.msra.mxu0 %v3469
  %5609 = vmatprep.subr.bf16.mxu0 %v3466
  %5610 = vmatpush1.bf16.msra.mxu0 %v3465
  %5611 = vmatprep.subr.bf16.mxu0 %v3462
  %5612 = vmatpush1.bf16.msra.mxu0 %v3461
  %5613 = vmatprep.subr.bf16.mxu0 %v3522
  %5614 = vmatpush2.bf16.msra.mxu0 %v3521
  %5615 = vmatprep.subr.bf16.mxu0 %v3518
  %5616 = vmatpush2.bf16.msra.mxu0 %v3517
  %5617 = vmatprep.subr.bf16.mxu0 %v3514
  %5618 = vmatpush2.bf16.msra.mxu0 %v3513
  %5619 = vmatprep.subr.bf16.mxu0 %v3510
  %5620 = vmatpush2.bf16.msra.mxu0 %v3509
  %5621 = vmatprep.subr.bf16.mxu0 %v3506
  %5622 = vmatpush2.bf16.msra.mxu0 %v3505
  %5623 = vmatprep.subr.bf16.mxu0 %v3502
  %5624 = vmatpush2.bf16.msra.mxu0 %v3501
  %5625 = vmatprep.subr.bf16.mxu0 %v3498
  %5626 = vmatpush2.bf16.msra.mxu0 %v3497
  %5627 = vmatprep.subr.bf16.mxu0 %v3494
  %5628 = vmatpush2.bf16.msra.mxu0 %v3493
  %5629 = vmatprep.mubr.bf16.mxu0 %v948
  %5630 = vmatmul.mubr.bf16.gmra.mxu0 %v947
  %v5631 = vpop.f32.mrf.mxu0
  %v5632 = vadd.f32 %v5589, %v5631
  %v5633 = vpop.f32.mrf.mxu0
  %v5634 = vadd.f32 %v5591, %v5633
  %v5635 = vpop.f32.mrf.mxu0
  %v5636 = vadd.f32 %v5593, %v5635
  %v5637 = vpop.f32.mrf.mxu0
  %v5638 = vadd.f32 %v5595, %v5637
  %5639 = vdwg.mxu0
  %5640 = vmatprep.subr.bf16.mxu0 %v3554
  %5641 = vmatpush1.bf16.msra.mxu0 %v3553
  %5642 = vmatprep.subr.bf16.mxu0 %v3550
  %5643 = vmatpush1.bf16.msra.mxu0 %v3549
  %5644 = vmatprep.subr.bf16.mxu0 %v3546
  %5645 = vmatpush1.bf16.msra.mxu0 %v3545
  %5646 = vmatprep.subr.bf16.mxu0 %v3542
  %5647 = vmatpush1.bf16.msra.mxu0 %v3541
  %5648 = vmatprep.subr.bf16.mxu0 %v3538
  %5649 = vmatpush1.bf16.msra.mxu0 %v3537
  %5650 = vmatprep.subr.bf16.mxu0 %v3534
  %5651 = vmatpush1.bf16.msra.mxu0 %v3533
  %5652 = vmatprep.subr.bf16.mxu0 %v3530
  %5653 = vmatpush1.bf16.msra.mxu0 %v3529
  %5654 = vmatprep.subr.bf16.mxu0 %v3526
  %5655 = vmatpush1.bf16.msra.mxu0 %v3525
  %5656 = vmatprep.subr.bf16.mxu0 %v3586
  %5657 = vmatpush2.bf16.msra.mxu0 %v3585
  %5658 = vmatprep.subr.bf16.mxu0 %v3582
  %5659 = vmatpush2.bf16.msra.mxu0 %v3581
  %5660 = vmatprep.subr.bf16.mxu0 %v3578
  %5661 = vmatpush2.bf16.msra.mxu0 %v3577
  %5662 = vmatprep.subr.bf16.mxu0 %v3574
  %5663 = vmatpush2.bf16.msra.mxu0 %v3573
  %5664 = vmatprep.subr.bf16.mxu0 %v3570
  %5665 = vmatpush2.bf16.msra.mxu0 %v3569
  %5666 = vmatprep.subr.bf16.mxu0 %v3566
  %5667 = vmatpush2.bf16.msra.mxu0 %v3565
  %5668 = vmatprep.subr.bf16.mxu0 %v3562
  %5669 = vmatpush2.bf16.msra.mxu0 %v3561
  %5670 = vmatprep.subr.bf16.mxu0 %v3558
  %5671 = vmatpush2.bf16.msra.mxu0 %v3557
  %5672 = vmatprep.mubr.bf16.mxu0 %v950
  %5673 = vmatmul.mubr.bf16.gmra.mxu0 %v949
  %v5674 = vpop.f32.mrf.mxu0
  %v5675 = vadd.f32 %v5632, %v5674
  %v5676 = vpop.f32.mrf.mxu0
  %v5677 = vadd.f32 %v5634, %v5676
  %v5678 = vpop.f32.mrf.mxu0
  %v5679 = vadd.f32 %v5636, %v5678
  %v5680 = vpop.f32.mrf.mxu0
  %v5681 = vadd.f32 %v5638, %v5680
  %5682 = vdwg.mxu0
  %5683 = vmatprep.subr.bf16.mxu0 %v3618
  %5684 = vmatpush1.bf16.msra.mxu0 %v3617
  %5685 = vmatprep.subr.bf16.mxu0 %v3614
  %5686 = vmatpush1.bf16.msra.mxu0 %v3613
  %5687 = vmatprep.subr.bf16.mxu0 %v3610
  %5688 = vmatpush1.bf16.msra.mxu0 %v3609
  %5689 = vmatprep.subr.bf16.mxu0 %v3606
  %5690 = vmatpush1.bf16.msra.mxu0 %v3605
  %5691 = vmatprep.subr.bf16.mxu0 %v3602
  %5692 = vmatpush1.bf16.msra.mxu0 %v3601
  %5693 = vmatprep.subr.bf16.mxu0 %v3598
  %5694 = vmatpush1.bf16.msra.mxu0 %v3597
  %5695 = vmatprep.subr.bf16.mxu0 %v3594
  %5696 = vmatpush1.bf16.msra.mxu0 %v3593
  %5697 = vmatprep.subr.bf16.mxu0 %v3590
  %5698 = vmatpush1.bf16.msra.mxu0 %v3589
  %5699 = vmatprep.subr.bf16.mxu0 %v3650
  %5700 = vmatpush2.bf16.msra.mxu0 %v3649
  %5701 = vmatprep.subr.bf16.mxu0 %v3646
  %5702 = vmatpush2.bf16.msra.mxu0 %v3645
  %5703 = vmatprep.subr.bf16.mxu0 %v3642
  %5704 = vmatpush2.bf16.msra.mxu0 %v3641
  %5705 = vmatprep.subr.bf16.mxu0 %v3638
  %5706 = vmatpush2.bf16.msra.mxu0 %v3637
  %5707 = vmatprep.subr.bf16.mxu0 %v3634
  %5708 = vmatpush2.bf16.msra.mxu0 %v3633
  %5709 = vmatprep.subr.bf16.mxu0 %v3630
  %5710 = vmatpush2.bf16.msra.mxu0 %v3629
  %5711 = vmatprep.subr.bf16.mxu0 %v3626
  %5712 = vmatpush2.bf16.msra.mxu0 %v3625
  %5713 = vmatprep.subr.bf16.mxu0 %v3622
  %5714 = vmatpush2.bf16.msra.mxu0 %v3621
  %5715 = vmatprep.mubr.bf16.mxu0 %v952
  %5716 = vmatmul.mubr.bf16.gmra.mxu0 %v951
  %v5717 = vpop.f32.mrf.mxu0
  %v5718 = vadd.f32 %v5675, %v5717
  %v5719 = vpop.f32.mrf.mxu0
  %v5720 = vadd.f32 %v5677, %v5719
  %v5721 = vpop.f32.mrf.mxu0
  %v5722 = vadd.f32 %v5679, %v5721
  %v5723 = vpop.f32.mrf.mxu0
  %v5724 = vadd.f32 %v5681, %v5723
  %5725 = vdwg.mxu0
  %5726 = vmatprep.subr.bf16.mxu0 %v3682
  %5727 = vmatpush1.bf16.msra.mxu0 %v3681
  %5728 = vmatprep.subr.bf16.mxu0 %v3678
  %5729 = vmatpush1.bf16.msra.mxu0 %v3677
  %5730 = vmatprep.subr.bf16.mxu0 %v3674
  %5731 = vmatpush1.bf16.msra.mxu0 %v3673
  %5732 = vmatprep.subr.bf16.mxu0 %v3670
  %5733 = vmatpush1.bf16.msra.mxu0 %v3669
  %5734 = vmatprep.subr.bf16.mxu0 %v3666
  %5735 = vmatpush1.bf16.msra.mxu0 %v3665
  %5736 = vmatprep.subr.bf16.mxu0 %v3662
  %5737 = vmatpush1.bf16.msra.mxu0 %v3661
  %5738 = vmatprep.subr.bf16.mxu0 %v3658
  %5739 = vmatpush1.bf16.msra.mxu0 %v3657
  %5740 = vmatprep.subr.bf16.mxu0 %v3654
  %5741 = vmatpush1.bf16.msra.mxu0 %v3653
  %5742 = vmatprep.subr.bf16.mxu0 %v3714
  %5743 = vmatpush2.bf16.msra.mxu0 %v3713
  %5744 = vmatprep.subr.bf16.mxu0 %v3710
  %5745 = vmatpush2.bf16.msra.mxu0 %v3709
  %5746 = vmatprep.subr.bf16.mxu0 %v3706
  %5747 = vmatpush2.bf16.msra.mxu0 %v3705
  %5748 = vmatprep.subr.bf16.mxu0 %v3702
  %5749 = vmatpush2.bf16.msra.mxu0 %v3701
  %5750 = vmatprep.subr.bf16.mxu0 %v3698
  %5751 = vmatpush2.bf16.msra.mxu0 %v3697
  %5752 = vmatprep.subr.bf16.mxu0 %v3694
  %5753 = vmatpush2.bf16.msra.mxu0 %v3693
  %5754 = vmatprep.subr.bf16.mxu0 %v3690
  %5755 = vmatpush2.bf16.msra.mxu0 %v3689
  %5756 = vmatprep.subr.bf16.mxu0 %v3686
  %5757 = vmatpush2.bf16.msra.mxu0 %v3685
  %5758 = vmatprep.mubr.bf16.mxu0 %v954
  %5759 = vmatmul.mubr.bf16.gmra.mxu0 %v953
  %v5760 = vpop.f32.mrf.mxu0
  %v5761 = vadd.f32 %v5718, %v5760
  %v5762 = vpop.f32.mrf.mxu0
  %v5763 = vadd.f32 %v5720, %v5762
  %v5764 = vpop.f32.mrf.mxu0
  %v5765 = vadd.f32 %v5722, %v5764
  %v5766 = vpop.f32.mrf.mxu0
  %v5767 = vadd.f32 %v5724, %v5766
  %5768 = vdwg.mxu0
  %5769 = vmatprep.subr.bf16.mxu0 %v3746
  %5770 = vmatpush1.bf16.msra.mxu0 %v3745
  %5771 = vmatprep.subr.bf16.mxu0 %v3742
  %5772 = vmatpush1.bf16.msra.mxu0 %v3741
  %5773 = vmatprep.subr.bf16.mxu0 %v3738
  %5774 = vmatpush1.bf16.msra.mxu0 %v3737
  %5775 = vmatprep.subr.bf16.mxu0 %v3734
  %5776 = vmatpush1.bf16.msra.mxu0 %v3733
  %5777 = vmatprep.subr.bf16.mxu0 %v3730
  %5778 = vmatpush1.bf16.msra.mxu0 %v3729
  %5779 = vmatprep.subr.bf16.mxu0 %v3726
  %5780 = vmatpush1.bf16.msra.mxu0 %v3725
  %5781 = vmatprep.subr.bf16.mxu0 %v3722
  %5782 = vmatpush1.bf16.msra.mxu0 %v3721
  %5783 = vmatprep.subr.bf16.mxu0 %v3718
  %5784 = vmatpush1.bf16.msra.mxu0 %v3717
  %5785 = vmatprep.subr.bf16.mxu0 %v3778
  %5786 = vmatpush2.bf16.msra.mxu0 %v3777
  %5787 = vmatprep.subr.bf16.mxu0 %v3774
  %5788 = vmatpush2.bf16.msra.mxu0 %v3773
  %5789 = vmatprep.subr.bf16.mxu0 %v3770
  %5790 = vmatpush2.bf16.msra.mxu0 %v3769
  %5791 = vmatprep.subr.bf16.mxu0 %v3766
  %5792 = vmatpush2.bf16.msra.mxu0 %v3765
  %5793 = vmatprep.subr.bf16.mxu0 %v3762
  %5794 = vmatpush2.bf16.msra.mxu0 %v3761
  %5795 = vmatprep.subr.bf16.mxu0 %v3758
  %5796 = vmatpush2.bf16.msra.mxu0 %v3757
  %5797 = vmatprep.subr.bf16.mxu0 %v3754
  %5798 = vmatpush2.bf16.msra.mxu0 %v3753
  %5799 = vmatprep.subr.bf16.mxu0 %v3750
  %5800 = vmatpush2.bf16.msra.mxu0 %v3749
  %5801 = vmatprep.mubr.bf16.mxu0 %v956
  %5802 = vmatmul.mubr.bf16.gmra.mxu0 %v955
  %v5803 = vpop.f32.mrf.mxu0
  %v5804 = vadd.f32 %v5761, %v5803
  %v5805 = vpop.f32.mrf.mxu0
  %v5806 = vadd.f32 %v5763, %v5805
  %v5807 = vpop.f32.mrf.mxu0
  %v5808 = vadd.f32 %v5765, %v5807
  %v5809 = vpop.f32.mrf.mxu0
  %v5810 = vadd.f32 %v5767, %v5809
  %5811 = vdwg.mxu0
  %5812 = vmatprep.subr.bf16.mxu0 %v3810
  %5813 = vmatpush1.bf16.msra.mxu0 %v3809
  %5814 = vmatprep.subr.bf16.mxu0 %v3806
  %5815 = vmatpush1.bf16.msra.mxu0 %v3805
  %5816 = vmatprep.subr.bf16.mxu0 %v3802
  %5817 = vmatpush1.bf16.msra.mxu0 %v3801
  %5818 = vmatprep.subr.bf16.mxu0 %v3798
  %5819 = vmatpush1.bf16.msra.mxu0 %v3797
  %5820 = vmatprep.subr.bf16.mxu0 %v3794
  %5821 = vmatpush1.bf16.msra.mxu0 %v3793
  %5822 = vmatprep.subr.bf16.mxu0 %v3790
  %5823 = vmatpush1.bf16.msra.mxu0 %v3789
  %5824 = vmatprep.subr.bf16.mxu0 %v3786
  %5825 = vmatpush1.bf16.msra.mxu0 %v3785
  %5826 = vmatprep.subr.bf16.mxu0 %v3782
  %5827 = vmatpush1.bf16.msra.mxu0 %v3781
  %5828 = vmatprep.subr.bf16.mxu0 %v3842
  %5829 = vmatpush2.bf16.msra.mxu0 %v3841
  %5830 = vmatprep.subr.bf16.mxu0 %v3838
  %5831 = vmatpush2.bf16.msra.mxu0 %v3837
  %5832 = vmatprep.subr.bf16.mxu0 %v3834
  %5833 = vmatpush2.bf16.msra.mxu0 %v3833
  %5834 = vmatprep.subr.bf16.mxu0 %v3830
  %5835 = vmatpush2.bf16.msra.mxu0 %v3829
  %5836 = vmatprep.subr.bf16.mxu0 %v3826
  %5837 = vmatpush2.bf16.msra.mxu0 %v3825
  %5838 = vmatprep.subr.bf16.mxu0 %v3822
  %5839 = vmatpush2.bf16.msra.mxu0 %v3821
  %5840 = vmatprep.subr.bf16.mxu0 %v3818
  %5841 = vmatpush2.bf16.msra.mxu0 %v3817
  %5842 = vmatprep.subr.bf16.mxu0 %v3814
  %5843 = vmatpush2.bf16.msra.mxu0 %v3813
  %5844 = vmatprep.mubr.bf16.mxu0 %v958
  %5845 = vmatmul.mubr.bf16.gmra.mxu0 %v957
  %v5846 = vpop.f32.mrf.mxu0
  %v5847 = vadd.f32 %v5804, %v5846
  %v5848 = vpop.f32.mrf.mxu0
  %v5849 = vadd.f32 %v5806, %v5848
  %v5850 = vpop.f32.mrf.mxu0
  %v5851 = vadd.f32 %v5808, %v5850
  %v5852 = vpop.f32.mrf.mxu0
  %v5853 = vadd.f32 %v5810, %v5852
  %5854 = vdwg.mxu0
  %5855 = vmatprep.subr.bf16.mxu0 %v3874
  %5856 = vmatpush1.bf16.msra.mxu0 %v3873
  %5857 = vmatprep.subr.bf16.mxu0 %v3870
  %5858 = vmatpush1.bf16.msra.mxu0 %v3869
  %5859 = vmatprep.subr.bf16.mxu0 %v3866
  %5860 = vmatpush1.bf16.msra.mxu0 %v3865
  %5861 = vmatprep.subr.bf16.mxu0 %v3862
  %5862 = vmatpush1.bf16.msra.mxu0 %v3861
  %5863 = vmatprep.subr.bf16.mxu0 %v3858
  %5864 = vmatpush1.bf16.msra.mxu0 %v3857
  %5865 = vmatprep.subr.bf16.mxu0 %v3854
  %5866 = vmatpush1.bf16.msra.mxu0 %v3853
  %5867 = vmatprep.subr.bf16.mxu0 %v3850
  %5868 = vmatpush1.bf16.msra.mxu0 %v3849
  %5869 = vmatprep.subr.bf16.mxu0 %v3846
  %5870 = vmatpush1.bf16.msra.mxu0 %v3845
  %5871 = vmatprep.subr.bf16.mxu0 %v3906
  %5872 = vmatpush2.bf16.msra.mxu0 %v3905
  %5873 = vmatprep.subr.bf16.mxu0 %v3902
  %5874 = vmatpush2.bf16.msra.mxu0 %v3901
  %5875 = vmatprep.subr.bf16.mxu0 %v3898
  %5876 = vmatpush2.bf16.msra.mxu0 %v3897
  %5877 = vmatprep.subr.bf16.mxu0 %v3894
  %5878 = vmatpush2.bf16.msra.mxu0 %v3893
  %5879 = vmatprep.subr.bf16.mxu0 %v3890
  %5880 = vmatpush2.bf16.msra.mxu0 %v3889
  %5881 = vmatprep.subr.bf16.mxu0 %v3886
  %5882 = vmatpush2.bf16.msra.mxu0 %v3885
  %5883 = vmatprep.subr.bf16.mxu0 %v3882
  %5884 = vmatpush2.bf16.msra.mxu0 %v3881
  %5885 = vmatprep.subr.bf16.mxu0 %v3878
  %5886 = vmatpush2.bf16.msra.mxu0 %v3877
  %5887 = vmatprep.mubr.bf16.mxu0 %v960
  %5888 = vmatmul.mubr.bf16.gmra.mxu0 %v959
  %v5889 = vpop.f32.mrf.mxu0
  %v5890 = vadd.f32 %v5847, %v5889
  %v5891 = vpop.f32.mrf.mxu0
  %v5892 = vadd.f32 %v5849, %v5891
  %v5893 = vpop.f32.mrf.mxu0
  %v5894 = vadd.f32 %v5851, %v5893
  %v5895 = vpop.f32.mrf.mxu0
  %v5896 = vadd.f32 %v5853, %v5895
  %5897 = vdwg.mxu0
  %5898 = vmatprep.subr.bf16.mxu0 %v3938
  %5899 = vmatpush1.bf16.msra.mxu0 %v3937
  %5900 = vmatprep.subr.bf16.mxu0 %v3934
  %5901 = vmatpush1.bf16.msra.mxu0 %v3933
  %5902 = vmatprep.subr.bf16.mxu0 %v3930
  %5903 = vmatpush1.bf16.msra.mxu0 %v3929
  %5904 = vmatprep.subr.bf16.mxu0 %v3926
  %5905 = vmatpush1.bf16.msra.mxu0 %v3925
  %5906 = vmatprep.subr.bf16.mxu0 %v3922
  %5907 = vmatpush1.bf16.msra.mxu0 %v3921
  %5908 = vmatprep.subr.bf16.mxu0 %v3918
  %5909 = vmatpush1.bf16.msra.mxu0 %v3917
  %5910 = vmatprep.subr.bf16.mxu0 %v3914
  %5911 = vmatpush1.bf16.msra.mxu0 %v3913
  %5912 = vmatprep.subr.bf16.mxu0 %v3910
  %5913 = vmatpush1.bf16.msra.mxu0 %v3909
  %5914 = vmatprep.subr.bf16.mxu0 %v3970
  %5915 = vmatpush2.bf16.msra.mxu0 %v3969
  %5916 = vmatprep.subr.bf16.mxu0 %v3966
  %5917 = vmatpush2.bf16.msra.mxu0 %v3965
  %5918 = vmatprep.subr.bf16.mxu0 %v3962
  %5919 = vmatpush2.bf16.msra.mxu0 %v3961
  %5920 = vmatprep.subr.bf16.mxu0 %v3958
  %5921 = vmatpush2.bf16.msra.mxu0 %v3957
  %5922 = vmatprep.subr.bf16.mxu0 %v3954
  %5923 = vmatpush2.bf16.msra.mxu0 %v3953
  %5924 = vmatprep.subr.bf16.mxu0 %v3950
  %5925 = vmatpush2.bf16.msra.mxu0 %v3949
  %5926 = vmatprep.subr.bf16.mxu0 %v3946
  %5927 = vmatpush2.bf16.msra.mxu0 %v3945
  %5928 = vmatprep.subr.bf16.mxu0 %v3942
  %5929 = vmatpush2.bf16.msra.mxu0 %v3941
  %5930 = vmatprep.mubr.bf16.mxu0 %v962
  %5931 = vmatmul.mubr.bf16.gmra.mxu0 %v961
  %v5932 = vpop.f32.mrf.mxu0
  %v5933 = vadd.f32 %v5890, %v5932
  %v5934 = vpop.f32.mrf.mxu0
  %v5935 = vadd.f32 %v5892, %v5934
  %v5936 = vpop.f32.mrf.mxu0
  %v5937 = vadd.f32 %v5894, %v5936
  %v5938 = vpop.f32.mrf.mxu0
  %v5939 = vadd.f32 %v5896, %v5938
  %5940 = vdwg.mxu0
  %5941 = vmatprep.subr.bf16.mxu0 %v4002
  %5942 = vmatpush1.bf16.msra.mxu0 %v4001
  %5943 = vmatprep.subr.bf16.mxu0 %v3998
  %5944 = vmatpush1.bf16.msra.mxu0 %v3997
  %5945 = vmatprep.subr.bf16.mxu0 %v3994
  %5946 = vmatpush1.bf16.msra.mxu0 %v3993
  %5947 = vmatprep.subr.bf16.mxu0 %v3990
  %5948 = vmatpush1.bf16.msra.mxu0 %v3989
  %5949 = vmatprep.subr.bf16.mxu0 %v3986
  %5950 = vmatpush1.bf16.msra.mxu0 %v3985
  %5951 = vmatprep.subr.bf16.mxu0 %v3982
  %5952 = vmatpush1.bf16.msra.mxu0 %v3981
  %5953 = vmatprep.subr.bf16.mxu0 %v3978
  %5954 = vmatpush1.bf16.msra.mxu0 %v3977
  %5955 = vmatprep.subr.bf16.mxu0 %v3974
  %5956 = vmatpush1.bf16.msra.mxu0 %v3973
  %5957 = vmatprep.subr.bf16.mxu0 %v4034
  %5958 = vmatpush2.bf16.msra.mxu0 %v4033
  %5959 = vmatprep.subr.bf16.mxu0 %v4030
  %5960 = vmatpush2.bf16.msra.mxu0 %v4029
  %5961 = vmatprep.subr.bf16.mxu0 %v4026
  %5962 = vmatpush2.bf16.msra.mxu0 %v4025
  %5963 = vmatprep.subr.bf16.mxu0 %v4022
  %5964 = vmatpush2.bf16.msra.mxu0 %v4021
  %5965 = vmatprep.subr.bf16.mxu0 %v4018
  %5966 = vmatpush2.bf16.msra.mxu0 %v4017
  %5967 = vmatprep.subr.bf16.mxu0 %v4014
  %5968 = vmatpush2.bf16.msra.mxu0 %v4013
  %5969 = vmatprep.subr.bf16.mxu0 %v4010
  %5970 = vmatpush2.bf16.msra.mxu0 %v4009
  %5971 = vmatprep.subr.bf16.mxu0 %v4006
  %5972 = vmatpush2.bf16.msra.mxu0 %v4005
  %5973 = vmatprep.mubr.bf16.mxu0 %v964
  %5974 = vmatmul.mubr.bf16.gmra.mxu0 %v963
  %v5975 = vpop.f32.mrf.mxu0
  %v5976 = vadd.f32 %v5933, %v5975
  %v5977 = vpop.f32.mrf.mxu0
  %v5978 = vadd.f32 %v5935, %v5977
  %v5979 = vpop.f32.mrf.mxu0
  %v5980 = vadd.f32 %v5937, %v5979
  %v5981 = vpop.f32.mrf.mxu0
  %v5982 = vadd.f32 %v5939, %v5981
  %5983 = vdwg.mxu0
  %5984 = vmatprep.subr.bf16.mxu0 %v4066
  %5985 = vmatpush1.bf16.msra.mxu0 %v4065
  %5986 = vmatprep.subr.bf16.mxu0 %v4062
  %5987 = vmatpush1.bf16.msra.mxu0 %v4061
  %5988 = vmatprep.subr.bf16.mxu0 %v4058
  %5989 = vmatpush1.bf16.msra.mxu0 %v4057
  %5990 = vmatprep.subr.bf16.mxu0 %v4054
  %5991 = vmatpush1.bf16.msra.mxu0 %v4053
  %5992 = vmatprep.subr.bf16.mxu0 %v4050
  %5993 = vmatpush1.bf16.msra.mxu0 %v4049
  %5994 = vmatprep.subr.bf16.mxu0 %v4046
  %5995 = vmatpush1.bf16.msra.mxu0 %v4045
  %5996 = vmatprep.subr.bf16.mxu0 %v4042
  %5997 = vmatpush1.bf16.msra.mxu0 %v4041
  %5998 = vmatprep.subr.bf16.mxu0 %v4038
  %5999 = vmatpush1.bf16.msra.mxu0 %v4037
  %6000 = vmatprep.subr.bf16.mxu0 %v4098
  %6001 = vmatpush2.bf16.msra.mxu0 %v4097
  %6002 = vmatprep.subr.bf16.mxu0 %v4094
  %6003 = vmatpush2.bf16.msra.mxu0 %v4093
  %6004 = vmatprep.subr.bf16.mxu0 %v4090
  %6005 = vmatpush2.bf16.msra.mxu0 %v4089
  %6006 = vmatprep.subr.bf16.mxu0 %v4086
  %6007 = vmatpush2.bf16.msra.mxu0 %v4085
  %6008 = vmatprep.subr.bf16.mxu0 %v4082
  %6009 = vmatpush2.bf16.msra.mxu0 %v4081
  %6010 = vmatprep.subr.bf16.mxu0 %v4078
  %6011 = vmatpush2.bf16.msra.mxu0 %v4077
  %6012 = vmatprep.subr.bf16.mxu0 %v4074
  %6013 = vmatpush2.bf16.msra.mxu0 %v4073
  %6014 = vmatprep.subr.bf16.mxu0 %v4070
  %6015 = vmatpush2.bf16.msra.mxu0 %v4069
  %6016 = vmatprep.mubr.bf16.mxu0 %v966
  %6017 = vmatmul.mubr.bf16.gmra.mxu0 %v965
  %v6018 = vpop.f32.mrf.mxu0
  %v6019 = vadd.f32 %v5976, %v6018
  %v6020 = vpop.f32.mrf.mxu0
  %v6021 = vadd.f32 %v5978, %v6020
  %v6022 = vpop.f32.mrf.mxu0
  %v6023 = vadd.f32 %v5980, %v6022
  %v6024 = vpop.f32.mrf.mxu0
  %v6025 = vadd.f32 %v5982, %v6024
  %6026 = vdwg.mxu0
  %6027 = vmatprep.subr.bf16.mxu0 %v4130
  %6028 = vmatpush1.bf16.msra.mxu0 %v4129
  %6029 = vmatprep.subr.bf16.mxu0 %v4126
  %6030 = vmatpush1.bf16.msra.mxu0 %v4125
  %6031 = vmatprep.subr.bf16.mxu0 %v4122
  %6032 = vmatpush1.bf16.msra.mxu0 %v4121
  %6033 = vmatprep.subr.bf16.mxu0 %v4118
  %6034 = vmatpush1.bf16.msra.mxu0 %v4117
  %6035 = vmatprep.subr.bf16.mxu0 %v4114
  %6036 = vmatpush1.bf16.msra.mxu0 %v4113
  %6037 = vmatprep.subr.bf16.mxu0 %v4110
  %6038 = vmatpush1.bf16.msra.mxu0 %v4109
  %6039 = vmatprep.subr.bf16.mxu0 %v4106
  %6040 = vmatpush1.bf16.msra.mxu0 %v4105
  %6041 = vmatprep.subr.bf16.mxu0 %v4102
  %6042 = vmatpush1.bf16.msra.mxu0 %v4101
  %6043 = vmatprep.subr.bf16.mxu0 %v4162
  %6044 = vmatpush2.bf16.msra.mxu0 %v4161
  %6045 = vmatprep.subr.bf16.mxu0 %v4158
  %6046 = vmatpush2.bf16.msra.mxu0 %v4157
  %6047 = vmatprep.subr.bf16.mxu0 %v4154
  %6048 = vmatpush2.bf16.msra.mxu0 %v4153
  %6049 = vmatprep.subr.bf16.mxu0 %v4150
  %6050 = vmatpush2.bf16.msra.mxu0 %v4149
  %6051 = vmatprep.subr.bf16.mxu0 %v4146
  %6052 = vmatpush2.bf16.msra.mxu0 %v4145
  %6053 = vmatprep.subr.bf16.mxu0 %v4142
  %6054 = vmatpush2.bf16.msra.mxu0 %v4141
  %6055 = vmatprep.subr.bf16.mxu0 %v4138
  %6056 = vmatpush2.bf16.msra.mxu0 %v4137
  %6057 = vmatprep.subr.bf16.mxu0 %v4134
  %6058 = vmatpush2.bf16.msra.mxu0 %v4133
  %6059 = vmatprep.mubr.bf16.mxu0 %v968
  %6060 = vmatmul.mubr.bf16.gmra.mxu0 %v967
  %v6061 = vpop.f32.mrf.mxu0
  %v6062 = vadd.f32 %v6019, %v6061
  %v6063 = vpop.f32.mrf.mxu0
  %v6064 = vadd.f32 %v6021, %v6063
  %v6065 = vpop.f32.mrf.mxu0
  %v6066 = vadd.f32 %v6023, %v6065
  %v6067 = vpop.f32.mrf.mxu0
  %v6068 = vadd.f32 %v6025, %v6067
  %6069 = vdwg.mxu0
  %6070 = vmatprep.subr.bf16.mxu0 %v4194
  %6071 = vmatpush1.bf16.msra.mxu0 %v4193
  %6072 = vmatprep.subr.bf16.mxu0 %v4190
  %6073 = vmatpush1.bf16.msra.mxu0 %v4189
  %6074 = vmatprep.subr.bf16.mxu0 %v4186
  %6075 = vmatpush1.bf16.msra.mxu0 %v4185
  %6076 = vmatprep.subr.bf16.mxu0 %v4182
  %6077 = vmatpush1.bf16.msra.mxu0 %v4181
  %6078 = vmatprep.subr.bf16.mxu0 %v4178
  %6079 = vmatpush1.bf16.msra.mxu0 %v4177
  %6080 = vmatprep.subr.bf16.mxu0 %v4174
  %6081 = vmatpush1.bf16.msra.mxu0 %v4173
  %6082 = vmatprep.subr.bf16.mxu0 %v4170
  %6083 = vmatpush1.bf16.msra.mxu0 %v4169
  %6084 = vmatprep.subr.bf16.mxu0 %v4166
  %6085 = vmatpush1.bf16.msra.mxu0 %v4165
  %6086 = vmatprep.subr.bf16.mxu0 0
  %6087 = vmatpush2.bf16.msra.mxu0 0
  %6088 = vmatprep.subr.bf16.mxu0 0
  %6089 = vmatpush2.bf16.msra.mxu0 0
  %6090 = vmatprep.subr.bf16.mxu0 0
  %6091 = vmatpush2.bf16.msra.mxu0 0
  %6092 = vmatprep.subr.bf16.mxu0 0
  %6093 = vmatpush2.bf16.msra.mxu0 0
  %6094 = vmatprep.subr.bf16.mxu0 0
  %6095 = vmatpush2.bf16.msra.mxu0 0
  %6096 = vmatprep.subr.bf16.mxu0 0
  %6097 = vmatpush2.bf16.msra.mxu0 0
  %6098 = vmatprep.subr.bf16.mxu0 0
  %6099 = vmatpush2.bf16.msra.mxu0 0
  %6100 = vmatprep.subr.bf16.mxu0 0
  %6101 = vmatpush2.bf16.msra.mxu0 0
  %6102 = vmatprep.mubr.bf16.mxu0 0
  %6103 = vmatmul.mubr.bf16.gmra.mxu0 %v969
  %v6104 = vpop.f32.mrf.mxu0
  %v6105 = vadd.f32 %v6062, %v6104
  %v6106 = vpop.f32.mrf.mxu0
  %v6107 = vadd.f32 %v6064, %v6106
  %v6108 = vpop.f32.mrf.mxu0
  %v6109 = vadd.f32 %v6066, %v6108
  %v6110 = vpop.f32.mrf.mxu0
  %v6111 = vadd.f32 %v6068, %v6110
  %6112 = vdwg.mxu0
  %v6113 = vmax.f32 %v5546, 0.0
  %v6114 = vmax.f32 %v5548, 0.0
  %v6115 = vmax.f32 %v6105, 0.0
  %v6116 = vmax.f32 %v6107, 0.0
  %v6117 = vmax.f32 %v5550, 0.0
  %v6118 = vmax.f32 %v5552, 0.0
  %v6119 = vmax.f32 %v6109, 0.0
  %v6120 = vmax.f32 %v6111, 0.0
  %v6121 = vpack.c.bf16 %v6117, %v6113
  %v6122 = vpack.c.bf16 %v6118, %v6114
  %v6123 = vpack.c.bf16 %v6119, %v6115
  %v6124 = vpack.c.bf16 %v6120, %v6116
  %v6125 = vld [vmem:[%s3] sm:$0xf]
  %v6126 = vld [vmem:[%s3 + $0x4] sm:$0xf]
  %v6127 = vld [vmem:[%s3 + $0x8] sm:$0xf]
  %v6128 = vld [vmem:[%s3 + $0xc] sm:$0xf]
  %v6129 = vld [vmem:[%s3 + $0x10] sm:$0xf]
  %v6130 = vld [vmem:[%s3 + $0x14] sm:$0xf]
  %v6131 = vld [vmem:[%s3 + $0x18] sm:$0xf]
  %v6132 = vld [vmem:[%s3 + $0x1c] sm:$0xf]
  %v6133 = vld [vmem:[%s3 + $0x20] sm:$0xf]
  %v6134 = vld [vmem:[%s3 + $0x24] sm:$0xf]
  %v6135 = vld [vmem:[%s3 + $0x28] sm:$0xf]
  %v6136 = vld [vmem:[%s3 + $0x2c] sm:$0xf]
  %v6137 = vld [vmem:[%s3 + $0x30] sm:$0xf]
  %v6138 = vld [vmem:[%s3 + $0x34] sm:$0xf]
  %v6139 = vld [vmem:[%s3 + $0x38] sm:$0xf]
  %v6140 = vld [vmem:[%s3 + $0x3c] sm:$0xf]
  %v6141 = vld [vmem:[%s3 + $0x40] sm:$0xf]
  %v6142 = vld [vmem:[%s3 + $0x44] sm:$0xf]
  %v6143 = vld [vmem:[%s3 + $0x48] sm:$0xf]
  %v6144 = vld [vmem:[%s3 + $0x4c] sm:$0xf]
  %v6145 = vld [vmem:[%s3 + $0x50] sm:$0xf]
  %v6146 = vld [vmem:[%s3 + $0x54] sm:$0xf]
  %v6147 = vld [vmem:[%s3 + $0x58] sm:$0xf]
  %v6148 = vld [vmem:[%s3 + $0x5c] sm:$0xf]
  %v6149 = vld [vmem:[%s3 + $0x60] sm:$0xf]
  %v6150 = vld [vmem:[%s3 + $0x64] sm:$0xf]
  %v6151 = vld [vmem:[%s3 + $0x68] sm:$0xf]
  %v6152 = vld [vmem:[%s3 + $0x6c] sm:$0xf]
  %v6153 = vld [vmem:[%s3 + $0x70] sm:$0xf]
  %v6154 = vld [vmem:[%s3 + $0x74] sm:$0xf]
  %v6155 = vld [vmem:[%s3 + $0x78] sm:$0xf]
  %v6156 = vld [vmem:[%s3 + $0x7c] sm:$0xf]
  %v6157 = vld [vmem:[%s3 + $0x80] sm:$0xf]
  %v6158 = vld [vmem:[%s3 + $0x84] sm:$0xf]
  %v6159 = vld [vmem:[%s3 + $0x88] sm:$0xf]
  %v6160 = vld [vmem:[%s3 + $0x8c] sm:$0xf]
  %v6161 = vld [vmem:[%s3 + $0x90] sm:$0xf]
  %v6162 = vld [vmem:[%s3 + $0x94] sm:$0xf]
  %v6163 = vld [vmem:[%s3 + $0x98] sm:$0xf]
  %v6164 = vld [vmem:[%s3 + $0x9c] sm:$0xf]
  %v6165 = vld [vmem:[%s3 + $0xa0] sm:$0xf]
  %v6166 = vld [vmem:[%s3 + $0xa4] sm:$0xf]
  %v6167 = vld [vmem:[%s3 + $0xa8] sm:$0xf]
  %v6168 = vld [vmem:[%s3 + $0xac] sm:$0xf]
  %v6169 = vld [vmem:[%s3 + $0xb0] sm:$0xf]
  %v6170 = vld [vmem:[%s3 + $0xb4] sm:$0xf]
  %v6171 = vld [vmem:[%s3 + $0xb8] sm:$0xf]
  %v6172 = vld [vmem:[%s3 + $0xbc] sm:$0xf]
  %v6173 = vld [vmem:[%s3 + $0xc0] sm:$0xf]
  %v6174 = vld [vmem:[%s3 + $0xc4] sm:$0xf]
  %v6175 = vld [vmem:[%s3 + $0xc8] sm:$0xf]
  %v6176 = vld [vmem:[%s3 + $0xcc] sm:$0xf]
  %v6177 = vld [vmem:[%s3 + $0xd0] sm:$0xf]
  %v6178 = vld [vmem:[%s3 + $0xd4] sm:$0xf]
  %v6179 = vld [vmem:[%s3 + $0xd8] sm:$0xf]
  %v6180 = vld [vmem:[%s3 + $0xdc] sm:$0xf]
  %v6181 = vld [vmem:[%s3 + $0xe0] sm:$0xf]
  %v6182 = vld [vmem:[%s3 + $0xe4] sm:$0xf]
  %v6183 = vld [vmem:[%s3 + $0xe8] sm:$0xf]
  %v6184 = vld [vmem:[%s3 + $0xec] sm:$0xf]
  %v6185 = vld [vmem:[%s3 + $0xf0] sm:$0xf]
  %v6186 = vld [vmem:[%s3 + $0xf4] sm:$0xf]
  %v6187 = vld [vmem:[%s3 + $0xf8] sm:$0xf]
  %v6188 = vld [vmem:[%s3 + $0xfc] sm:$0xf]
  %v6189 = vld [vmem:[%s4] sm:$0x1]
  %v6191 = vlaneseq
  %v6192 = vshrl.u32 %v6191, 7
  %v6193 = vsub.s32 0, %v6192
  %v6194 = vrot.slane %v6189, %v6193
  %v6260 = vunpack.c.l.b16 %v6125
  %v6261 = vunpack.c.l.b16 %v6126
  %v6262 = vunpack.c.l.b16 %v6127
  %v6263 = vunpack.c.l.b16 %v6128
  %v6264 = vunpack.c.l.b16 %v6129
  %v6265 = vunpack.c.l.b16 %v6130
  %v6266 = vunpack.c.l.b16 %v6131
  %v6267 = vunpack.c.l.b16 %v6132
  %v6268 = vunpack.c.l.b16 %v6133
  %v6269 = vunpack.c.l.b16 %v6134
  %v6270 = vunpack.c.l.b16 %v6135
  %v6271 = vunpack.c.l.b16 %v6136
  %v6272 = vunpack.c.l.b16 %v6137
  %v6273 = vunpack.c.l.b16 %v6138
  %v6274 = vunpack.c.l.b16 %v6139
  %v6275 = vunpack.c.l.b16 %v6140
  %v6276 = vunpack.c.l.b16 %v6141
  %v6277 = vunpack.c.l.b16 %v6142
  %v6278 = vunpack.c.l.b16 %v6143
  %v6279 = vunpack.c.l.b16 %v6144
  %v6280 = vunpack.c.l.b16 %v6145
  %v6281 = vunpack.c.l.b16 %v6146
  %v6282 = vunpack.c.l.b16 %v6147
  %v6283 = vunpack.c.l.b16 %v6148
  %v6284 = vunpack.c.l.b16 %v6149
  %v6285 = vunpack.c.l.b16 %v6150
  %v6286 = vunpack.c.l.b16 %v6151
  %v6287 = vunpack.c.l.b16 %v6152
  %v6288 = vunpack.c.l.b16 %v6153
  %v6289 = vunpack.c.l.b16 %v6154
  %v6290 = vunpack.c.l.b16 %v6155
  %v6291 = vunpack.c.l.b16 %v6156
  %v6292 = vunpack.c.l.b16 %v6157
  %v6293 = vunpack.c.l.b16 %v6158
  %v6294 = vunpack.c.l.b16 %v6159
  %v6295 = vunpack.c.l.b16 %v6160
  %v6296 = vunpack.c.l.b16 %v6161
  %v6297 = vunpack.c.l.b16 %v6162
  %v6298 = vunpack.c.l.b16 %v6163
  %v6299 = vunpack.c.l.b16 %v6164
  %v6300 = vunpack.c.l.b16 %v6165
  %v6301 = vunpack.c.l.b16 %v6166
  %v6302 = vunpack.c.l.b16 %v6167
  %v6303 = vunpack.c.l.b16 %v6168
  %v6304 = vunpack.c.l.b16 %v6169
  %v6305 = vunpack.c.l.b16 %v6170
  %v6306 = vunpack.c.l.b16 %v6171
  %v6307 = vunpack.c.l.b16 %v6172
  %v6308 = vunpack.c.l.b16 %v6173
  %v6309 = vunpack.c.l.b16 %v6174
  %v6310 = vunpack.c.l.b16 %v6175
  %v6311 = vunpack.c.l.b16 %v6176
  %v6312 = vunpack.c.l.b16 %v6177
  %v6313 = vunpack.c.l.b16 %v6178
  %v6314 = vunpack.c.l.b16 %v6179
  %v6315 = vunpack.c.l.b16 %v6180
  %v6316 = vunpack.c.l.b16 %v6181
  %v6317 = vunpack.c.l.b16 %v6182
  %v6318 = vunpack.c.l.b16 %v6183
  %v6319 = vunpack.c.l.b16 %v6184
  %v6320 = vunpack.c.l.b16 %v6185
  %v6321 = vunpack.c.l.b16 %v6186
  %v6322 = vunpack.c.l.b16 %v6187
  %v6323 = vunpack.c.l.b16 %v6188
  %v6324 = vpack.c.b16 %v6261, %v6260
  %v6325 = vpack.c.b16 %v6263, %v6262
  %v6326 = vpack.c.b16 %v6265, %v6264
  %v6327 = vpack.c.b16 %v6267, %v6266
  %v6328 = vpack.c.b16 %v6269, %v6268
  %v6329 = vpack.c.b16 %v6271, %v6270
  %v6330 = vpack.c.b16 %v6273, %v6272
  %v6331 = vpack.c.b16 %v6275, %v6274
  %v6332 = vpack.c.b16 %v6277, %v6276
  %v6333 = vpack.c.b16 %v6279, %v6278
  %v6334 = vpack.c.b16 %v6281, %v6280
  %v6335 = vpack.c.b16 %v6283, %v6282
  %v6336 = vpack.c.b16 %v6285, %v6284
  %v6337 = vpack.c.b16 %v6287, %v6286
  %v6338 = vpack.c.b16 %v6289, %v6288
  %v6339 = vpack.c.b16 %v6291, %v6290
  %v6340 = vpack.c.b16 %v6293, %v6292
  %v6341 = vpack.c.b16 %v6295, %v6294
  %v6342 = vpack.c.b16 %v6297, %v6296
  %v6343 = vpack.c.b16 %v6299, %v6298
  %v6344 = vpack.c.b16 %v6301, %v6300
  %v6345 = vpack.c.b16 %v6303, %v6302
  %v6346 = vpack.c.b16 %v6305, %v6304
  %v6347 = vpack.c.b16 %v6307, %v6306
  %v6348 = vpack.c.b16 %v6309, %v6308
  %v6349 = vpack.c.b16 %v6311, %v6310
  %v6350 = vpack.c.b16 %v6313, %v6312
  %v6351 = vpack.c.b16 %v6315, %v6314
  %v6352 = vpack.c.b16 %v6317, %v6316
  %v6353 = vpack.c.b16 %v6319, %v6318
  %v6354 = vpack.c.b16 %v6321, %v6320
  %v6355 = vpack.c.b16 %v6323, %v6322
  %6388 = vmatprep.subr.bf16.mxu0 0
  %6389 = vmatpush1.bf16.msra.mxu0 %v6331
  %6390 = vmatprep.subr.bf16.mxu0 0
  %6391 = vmatpush1.bf16.msra.mxu0 %v6330
  %6392 = vmatprep.subr.bf16.mxu0 0
  %6393 = vmatpush1.bf16.msra.mxu0 %v6329
  %6394 = vmatprep.subr.bf16.mxu0 0
  %6395 = vmatpush1.bf16.msra.mxu0 %v6328
  %6396 = vmatprep.subr.bf16.mxu0 0
  %6397 = vmatpush1.bf16.msra.mxu0 %v6327
  %6398 = vmatprep.subr.bf16.mxu0 0
  %6399 = vmatpush1.bf16.msra.mxu0 %v6326
  %6400 = vmatprep.subr.bf16.mxu0 0
  %6401 = vmatpush1.bf16.msra.mxu0 %v6325
  %6402 = vmatprep.subr.bf16.mxu0 0
  %6403 = vmatpush1.bf16.msra.mxu0 %v6324
  %6404 = vmatprep.subr.bf16.mxu0 0
  %6405 = vmatpush2.bf16.msra.mxu0 %v6339
  %6406 = vmatprep.subr.bf16.mxu0 0
  %6407 = vmatpush2.bf16.msra.mxu0 %v6338
  %6408 = vmatprep.subr.bf16.mxu0 0
  %6409 = vmatpush2.bf16.msra.mxu0 %v6337
  %6410 = vmatprep.subr.bf16.mxu0 0
  %6411 = vmatpush2.bf16.msra.mxu0 %v6336
  %6412 = vmatprep.subr.bf16.mxu0 0
  %6413 = vmatpush2.bf16.msra.mxu0 %v6335
  %6414 = vmatprep.subr.bf16.mxu0 0
  %6415 = vmatpush2.bf16.msra.mxu0 %v6334
  %6416 = vmatprep.subr.bf16.mxu0 0
  %6417 = vmatpush2.bf16.msra.mxu0 %v6333
  %6418 = vmatprep.subr.bf16.mxu0 0
  %6419 = vmatpush2.bf16.msra.mxu0 %v6332
  %6420 = vmatprep.mubr.bf16.mxu0 %v6122
  %6421 = vmatmul.mubr.bf16.gmra.mxu0 %v6121
  %v6422 = vpop.f32.mrf.mxu0
  %v6423 = vadd.f32 %v6194, %v6422
  %v6424 = vpop.f32.mrf.mxu0
  %v6425 = vpop.f32.mrf.mxu0
  %v6426 = vadd.f32 %v6194, %v6425
  %v6427 = vpop.f32.mrf.mxu0
  %6428 = vdwg.mxu0
  %6429 = vmatprep.subr.bf16.mxu0 0
  %6430 = vmatpush1.bf16.msra.mxu0 %v6347
  %6431 = vmatprep.subr.bf16.mxu0 0
  %6432 = vmatpush1.bf16.msra.mxu0 %v6346
  %6433 = vmatprep.subr.bf16.mxu0 0
  %6434 = vmatpush1.bf16.msra.mxu0 %v6345
  %6435 = vmatprep.subr.bf16.mxu0 0
  %6436 = vmatpush1.bf16.msra.mxu0 %v6344
  %6437 = vmatprep.subr.bf16.mxu0 0
  %6438 = vmatpush1.bf16.msra.mxu0 %v6343
  %6439 = vmatprep.subr.bf16.mxu0 0
  %6440 = vmatpush1.bf16.msra.mxu0 %v6342
  %6441 = vmatprep.subr.bf16.mxu0 0
  %6442 = vmatpush1.bf16.msra.mxu0 %v6341
  %6443 = vmatprep.subr.bf16.mxu0 0
  %6444 = vmatpush1.bf16.msra.mxu0 %v6340
  %6445 = vmatprep.subr.bf16.mxu0 0
  %6446 = vmatpush2.bf16.msra.mxu0 %v6355
  %6447 = vmatprep.subr.bf16.mxu0 0
  %6448 = vmatpush2.bf16.msra.mxu0 %v6354
  %6449 = vmatprep.subr.bf16.mxu0 0
  %6450 = vmatpush2.bf16.msra.mxu0 %v6353
  %6451 = vmatprep.subr.bf16.mxu0 0
  %6452 = vmatpush2.bf16.msra.mxu0 %v6352
  %6453 = vmatprep.subr.bf16.mxu0 0
  %6454 = vmatpush2.bf16.msra.mxu0 %v6351
  %6455 = vmatprep.subr.bf16.mxu0 0
  %6456 = vmatpush2.bf16.msra.mxu0 %v6350
  %6457 = vmatprep.subr.bf16.mxu0 0
  %6458 = vmatpush2.bf16.msra.mxu0 %v6349
  %6459 = vmatprep.subr.bf16.mxu0 0
  %6460 = vmatpush2.bf16.msra.mxu0 %v6348
  %6461 = vmatprep.mubr.bf16.mxu0 %v6124
  %6462 = vmatmul.mubr.bf16.gmra.mxu0 %v6123
  %v6463 = vpop.f32.mrf.mxu0
  %v6464 = vadd.f32 %v6423, %v6463
  %v6465 = vpop.f32.mrf.mxu0
  %v6466 = vpop.f32.mrf.mxu0
  %v6467 = vadd.f32 %v6426, %v6466
  %v6468 = vpop.f32.mrf.mxu0
  %6469 = vdwg.mxu0
  %6470 = vst [vmem:[%s5] sm:$0xff] %v6464
  %6471 = vst [vmem:[%s5 + $0x8] sm:$0xff] %v6467
  // Predicated region
  $region22: #{_qnet_forward.7} parent=0 // pred_check
    _
  $region23: #{_qnet_forward.7} parent=0 // pred_check_branch
    %6473 = sbr.rel (0) target = $region25
  $region24: #{_qnet_forward.7} parent=0 // pred_region
    _
  $region25: #{_qnet_forward.7} parent=0 // pred_fallthru
    _
  // Predicated region
  $region26: #{_qnet_forward.7} parent=0 // pred_check
    _
  $region27: #{_qnet_forward.7} parent=0 // pred_check_branch
    %6475 = sbr.rel (0) target = $region29
  $region28: #{_qnet_forward.7} parent=0 // pred_region
    _
  $region29: #{_qnet_forward.7} parent=0 // pred_fallthru
    _

</llo_original>
